<compile_context>
chip_gen: v5e
topology: v5e:2x2
jax: 0.10.0
libtpu: 0.0.40
codegen_flags: <defaults>
</compile_context>

<pallas_src>
import functools

import numpy as np
import jax
import jax.numpy as jnp
from jax import lax
from jax.experimental import pallas as pl
from jax.experimental.pallas import tpu as pltpu

CP = 16        # channel padding: one packed bf16 sublane tile
LANES = 128


def _round_up(x, m):
    return (x + m - 1) // m * m


class _Geom:
    """Padded flat-plane geometry of one 3x3x3 / pad-1 conv stage."""

    def __init__(self, d, h, w):
        self.D, self.H, self.W = d, h, w
        self.Dp, self.Hp, self.Wp = d + 2, h + 2, w + 2
        self.needed = (h - 1) * self.Wp + w            # valid flat output lanes
        self.npos = _round_up(self.needed, LANES)      # lane-dense output width
        self.Lp = _round_up(self.npos + 2 * self.Wp + 2, LANES)  # slab lane width


# ----------------------------------------------------------------------------
# In-kernel building blocks
# ----------------------------------------------------------------------------
def _tap_matrix(src_ref, do, wp, npos):
    """(27*CP, npos) bf16: the 27 shifted tap views of the padded slab, stacked
    along K in (dz, dy, dx, cin) order (matches the prefolded weight layout)."""
    rows = [src_ref[do + dz] for dz in range(3)]            # (CP, Lp) each
    pieces = [rows[dz][:, dy * wp + dx:dy * wp + dx + npos]
              for dz in range(3) for dy in range(3) for dx in range(3)]
    return jnp.concatenate(pieces, axis=0)


def _conv_bn_relu_to_slab(src_ref, dst_ref, w, shift, mask, *, wp, npos, n_depth):
    """3x3x3 conv (single K=432 MXU matmul per depth) + folded BN + ReLU over all
    output depths; results are written straight into the next conv's
    zero-initialised padded bf16 slab at lane offset Wp+1."""

    def body(do, carry):
        a = _tap_matrix(src_ref, do, wp, npos)
        acc = jnp.dot(w, a, preferred_element_type=jnp.float32)
        acc = jnp.maximum(acc + shift, 0.0) * mask          # BN shift, ReLU, junk mask
        dst_ref[do + 1, :, pl.ds(wp + 1, npos)] = acc.astype(dst_ref.dtype)
        return carry

    lax.fori_loop(0, n_depth, body, 0)


# ----------------------------------------------------------------------------
# Fused kernels
# ----------------------------------------------------------------------------
def _block_pool_to_slab_kernel(x_ref, w1_ref, s1_ref, w2_ref, s2_ref, w3_ref,
                               s3_ref, g_ref, mask_ref, out_ref, slab2, slab3,
                               *, wp, npos, n_depth, pool_step, n_pool):
    """Residual block (conv1,conv2,conv3 + residual + ReLU) fused with the
    following MaxPool3d((1,2,2), stride (pool_step,2,2), pad (0,1,1)); emits the
    pooled result directly in the NEXT block's padded bf16 slab layout."""
    slab2[...] = jnp.zeros(slab2.shape, slab2.dtype)
    slab3[...] = jnp.zeros(slab3.shape, slab3.dtype)
    out_ref[0] = jnp.zeros(out_ref.shape[1:], out_ref.dtype)                # depth pad
    out_ref[out_ref.shape[0] - 1] = jnp.zeros(out_ref.shape[1:], out_ref.dtype)

    mask = mask_ref[...]
    _conv_bn_relu_to_slab(x_ref, slab2, w1_ref[...], s1_ref[...], mask,
                          wp=wp, npos=npos, n_depth=n_depth)
    _conv_bn_relu_to_slab(slab2, slab3, w2_ref[...], s2_ref[...], mask,
                          wp=wp, npos=npos, n_depth=n_depth)

    w3 = w3_ref[...]
    s3 = s3_ref[...]
    for od in range(n_pool):                      # only the depths the pool keeps
        do = od * pool_step
        a = _tap_matrix(slab3, do, wp, npos)
        acc = jnp.dot(w3, a, preferred_element_type=jnp.float32) + s3
        x1 = slab2[do + 1, :, wp + 1:wp + 1 + npos].astype(jnp.float32)     # residual
        v = jnp.maximum(acc + x1, 0.0).astype(jnp.bfloat16)                 # >= 0
        pooled = None
        for k in range(4):                        # 2x2 window -> 4 gather-matmuls
            pk = jnp.dot(v, g_ref[k], preferred_element_type=jnp.float32)
            pooled = pk if pooled is None else jnp.maximum(pooled, pk)
        out_ref[od + 1] = pooled.astype(out_ref.dtype)


def _block_pool_to_flat_kernel(x_ref, w1_ref, s1_ref, w2_ref, s2_ref, w3_ref,
                               s3_ref, g_ref, mask_ref, out_ref, slab2, slab3,
                               *, wp, npos, n_depth):
    """Second residual block fused with MaxPool3d((1,2,2),(1,2,2),(0,1,1));
    pooled output packed lane-dense as (CP, 128), lane = d*Ho*Wo + hy*Wo + hx."""
    slab2[...] = jnp.zeros(slab2.shape, slab2.dtype)
    slab3[...] = jnp.zeros(slab3.shape, slab3.dtype)

    mask = mask_ref[...]
    _conv_bn_relu_to_slab(x_ref, slab2, w1_ref[...], s1_ref[...], mask,
                          wp=wp, npos=npos, n_depth=n_depth)
    _conv_bn_relu_to_slab(slab2, slab3, w2_ref[...], s2_ref[...], mask,
                          wp=wp, npos=npos, n_depth=n_depth)

    w3 = w3_ref[...]
    s3 = s3_ref[...]
    xacc = jnp.zeros(out_ref.shape, jnp.float32)
    for d in range(n_depth):
        a = _tap_matrix(slab3, d, wp, npos)
        acc = jnp.dot(w3, a, preferred_element_type=jnp.float32) + s3
        x1 = slab2[d + 1, :, wp + 1:wp + 1 + npos].astype(jnp.float32)
        v = jnp.maximum(acc + x1, 0.0).astype(jnp.bfloat16)
        pooled = None
        for k in range(4):
            pk = jnp.dot(v, g_ref[d, k], preferred_element_type=jnp.float32)
            pooled = pk if pooled is None else jnp.maximum(pooled, pk)
        xacc = xacc + pooled                       # disjoint target lanes per depth
    out_ref[...] = xacc.astype(out_ref.dtype)


def _heads_kernel(x_ref, w_ref, o_ref):
    """Fused conv1(1x3x3) + flatten + classifier + fc as one bf16 matmul."""
    o_ref[...] = jnp.dot(x_ref[...], w_ref[...], preferred_element_type=jnp.float32)


# ----------------------------------------------------------------------------
# Host-side (trace-time) parameter / constant preparation
# ----------------------------------------------------------------------------
def _fold_conv_bn(w, scale, shift, cp_in, cp_out):
    """PyTorch (Cout,Cin,3,3,3) conv weight + folded BN -> tap-concatenated
    (cp_out, 27*cp_in) bf16 weight (BN scale folded in) + (cp_out,1) f32 shift."""
    cout, cin = w.shape[0], w.shape[1]
    wf = w * scale[:, None, None, None, None]
    wf = jnp.pad(wf, ((0, cp_out - cout), (0, cp_in - cin), (0, 0), (0, 0), (0, 0)))
    wcat = jnp.transpose(wf, (0, 2, 3, 4, 1)).reshape(cp_out, 27 * cp_in)
    sh = jnp.pad(shift, (0, cp_out - cout)).reshape(cp_out, 1)
    return wcat.astype(jnp.bfloat16), sh.astype(jnp.float32)


def _valid_mask(geom):
    """(1, npos) f32: 1 on valid flat output lanes, 0 on junk lanes."""
    m = np.zeros((1, geom.npos), np.float32)
    for p in range(geom.needed):
        if p % geom.Wp < geom.W:
            m[0, p] = 1.0
    return jnp.asarray(m)


def _pool_gather_to_slab(geom, hpo, wpo, wp_next, lp_next):
    """0/1 matrices implementing 2x2 max-pool (pad 1, stride 2) + re-layout into
    the next block's padded slab lanes, one matrix per window offset."""
    g = np.zeros((4, geom.npos, lp_next), np.float32)
    for iy in range(2):
        for ix in range(2):
            for hy in range(hpo):
                for hx in range(wpo):
                    y, x = 2 * hy - 1 + iy, 2 * hx - 1 + ix
                    if 0 <= y < geom.H and 0 <= x < geom.W:
                        g[iy * 2 + ix, y * geom.Wp + x,
                          (hy + 1) * wp_next + (hx + 1)] = 1.0
    return jnp.asarray(g, jnp.bfloat16)


def _pool_gather_to_flat(geom, hpo, wpo, n_depth):
    """Same as above, but targets the lane-packed (CP, 128) feature layout."""
    g = np.zeros((n_depth, 4, geom.npos, LANES), np.float32)
    for d in range(n_depth):
        for iy in range(2):
            for ix in range(2):
                for hy in range(hpo):
                    for hx in range(wpo):
                        y, x = 2 * hy - 1 + iy, 2 * hx - 1 + ix
                        if 0 <= y < geom.H and 0 <= x < geom.W:
                            g[d, iy * 2 + ix, y * geom.Wp + x,
                              d * hpo * wpo + hy * wpo + hx] = 1.0
    return jnp.asarray(g, jnp.bfloat16)


def _input_slab(x, geom):
    """(B, D, H, W) f32 -> (B, Dp, CP, Lp) bf16 padded flat-plane slab (single
    input channel at channel row 0). Only host-side layout glue in the model."""
    b = x.shape[0]
    xp = jnp.pad(x, ((0, 0), (1, 1), (1, 1), (1, 1)))
    xf = xp.reshape(b, geom.Dp, geom.Hp * geom.Wp)
    xf = jnp.pad(xf, ((0, 0), (0, 0), (0, geom.Lp - geom.Hp * geom.Wp)))
    slab = jnp.pad(xf[:, :, None, :], ((0, 0), (0, 0), (0, CP - 1), (0, 0)))
    return slab.astype(jnp.bfloat16)


# ----------------------------------------------------------------------------
# pallas_call wrappers
# ----------------------------------------------------------------------------
def _run_fused_block(x_slab, p, g, mask, geom, *, slab_out=None, pool_step=1):
    b, dp, _, lp = x_slab.shape
    w1, s1 = _fold_conv_bn(p['w1'], p['s1'], p['b1'], CP, CP)
    w2, s2 = _fold_conv_bn(p['w2'], p['s2'], p['b2'], CP, CP)
    w3, s3 = _fold_conv_bn(p['w3'], p['s3'], p['b3'], CP, CP)

    if slab_out is not None:          # block1: pooled output in block2's slab layout
        dp_next, lp_next = slab_out
        kern = functools.partial(_block_pool_to_slab_kernel, wp=geom.Wp,
                                 npos=geom.npos, n_depth=geom.D,
                                 pool_step=pool_step, n_pool=dp_next - 2)
        out_shape = jax.ShapeDtypeStruct((b, dp_next, CP, lp_next), jnp.bfloat16)
        out_spec = pl.BlockSpec((None, dp_next, CP, lp_next),
                                lambda bb: (bb, 0, 0, 0))
    else:                             # block2: pooled output as lane-packed features
        kern = functools.partial(_block_pool_to_flat_kernel, wp=geom.Wp,
                                 npos=geom.npos, n_depth=geom.D)
        out_shape = jax.ShapeDtypeStruct((b, CP, LANES), jnp.bfloat16)
        out_spec = pl.BlockSpec((None, CP, LANES), lambda bb: (bb, 0, 0))

    def _full(a):
        return pl.BlockSpec(a.shape, lambda *_: (0,) * a.ndim)

    return pl.pallas_call(
        kern,
        out_shape=out_shape,
        grid=(b,),
        in_specs=[pl.BlockSpec((None, dp, CP, lp), lambda bb: (bb, 0, 0, 0)),
                  _full(w1), _full(s1), _full(w2), _full(s2),
                  _full(w3), _full(s3), _full(g), _full(mask)],
        out_specs=out_spec,
        scratch_shapes=[pltpu.VMEM((dp, CP, lp), jnp.bfloat16),   # conv1 out / residual
                        pltpu.VMEM((dp, CP, lp), jnp.bfloat16)],  # conv2 out
        compiler_params=pltpu.CompilerParams(
            dimension_semantics=("parallel",)),
    )(x_slab, w1, s1, w2, s2, w3, s3, g, mask)


def _run_heads(x_packed, params, n_depth, hpo, wpo, oc2, class_num, embed_dim):
    """conv1 + NCDHW flatten + classifier + fc as a single bf16 matmul: all three
    are bias-free linear maps, so their weights are composed on the host."""
    b = x_packed.shape[0]
    nh = class_num + embed_dim
    c3 = params['conv1_w'].shape[0]
    whead = jnp.concatenate([params['cls_w'], params['fc_w']], axis=0)   # (nh, c3*D)
    whr = whead.reshape(nh, c3, n_depth)                                 # o, c3, d
    wc1 = params['conv1_w'][:, :, 0]                                     # (c3, oc2, 3, 3)
    wcomb = jnp.einsum('okd,kchw->ocdhw', whr, wc1)                      # (nh, oc2, d, 3, 3)
    wtmp = jnp.transpose(wcomb, (1, 2, 3, 4, 0)).reshape(oc2, n_depth * hpo * wpo, nh)
    wtmp = jnp.pad(wtmp, ((0, CP - oc2),
                          (0, LANES - n_depth * hpo * wpo),
                          (0, LANES - nh)))
    w_big = wtmp.reshape(CP * LANES, LANES).astype(jnp.bfloat16)

    x_flat = x_packed.reshape(b, CP * LANES)          # contiguous, no transpose
    out = pl.pallas_call(
        _heads_kernel,
        out_shape=jax.ShapeDtypeStruct((b, LANES), jnp.float32),
    )(x_flat, w_big)
    return out[:, :class_num], out[:, class_num:nh]


# ----------------------------------------------------------------------------
# Model forward
# ----------------------------------------------------------------------------
def d_res_3d_cnn_forward(x, params):
    """x: (B, n_bands, patch, patch) — matches the PyTorch module's input."""
    b, n_bands, patch, _ = x.shape
    oc1 = params['block1']['w1'].shape[0]
    oc2 = params['block2']['w1'].shape[0]
    class_num = params['cls_w'].shape[0]
    embed_dim = params['fc_w'].shape[0]
    assert oc1 <= CP and oc2 <= CP and class_num + embed_dim <= LANES

    g1 = _Geom(n_bands, patch, patch)
    d2 = (n_bands - 1) // 4 + 1                   # maxpool1: (1,2,2)/(4,2,2)/(0,1,1)
    h2 = (patch + 2 - 2) // 2 + 1
    g2 = _Geom(d2, h2, h2)
    h3 = (h2 + 2 - 2) // 2 + 1                    # maxpool2: (1,2,2)/(1,2,2)/(0,1,1)
    assert h3 - 2 == 1, "head folding assumes conv1 output is 1x1 (patch_size=9)"
    assert d2 * h3 * h3 <= LANES

    mask1, mask2 = _valid_mask(g1), _valid_mask(g2)
    gth1 = _pool_gather_to_slab(g1, h2, h2, g2.Wp, g2.Lp)
    gth2 = _pool_gather_to_flat(g2, h3, h3, d2)

    x_slab = _input_slab(x, g1)                                           # unsqueeze(1)
    slab_b2 = _run_fused_block(x_slab, params['block1'], gth1, mask1, g1,
                               slab_out=(g2.Dp, g2.Lp), pool_step=4)      # block1+pool1
    x5 = _run_fused_block(slab_b2, params['block2'], gth2, mask2, g2)     # block2+pool2
    return _run_heads(x5, params, d2, h3, h3, oc2, class_num, embed_dim)  # conv1+heads


# ----------------------------------------------------------------------------
# Parameter construction (deterministic, synthetic)
# ----------------------------------------------------------------------------
def _conv_bn_params(key, cin, cout, ksize):
    k1, k2, k3 = jax.random.split(key, 3)
    w = 0.05 * jax.random.normal(k1, (cout, cin) + ksize, jnp.float32)
    gamma = 1.0 + 0.1 * jax.random.normal(k2, (cout,), jnp.float32)
    beta = 0.1 * jax.random.normal(k3, (cout,), jnp.float32)
    eps = 1e-5
    # eval-mode BN with default running stats: mean=0, var=1
    scale = gamma / jnp.sqrt(1.0 + eps)
    shift = beta
    return w, scale, shift


def _residual_params(key, cin, cout):
    k1, k2, k3 = jax.random.split(key, 3)
    w1, s1, b1 = _conv_bn_params(k1, cin, cout, (3, 3, 3))
    w2, s2, b2 = _conv_bn_params(k2, cout, cout, (3, 3, 3))
    w3, s3, b3 = _conv_bn_params(k3, cout, cout, (3, 3, 3))
    return dict(w1=w1, s1=s1, b1=b1, w2=w2, s2=s2, b2=b2, w3=w3, s3=s3, b3=b3)


def compute_feat_size(n_bands, patch_size):
    D, H = n_bands, patch_size
    D1 = (D - 1) // 4 + 1                    # maxpool1 (1,2,2)/(4,2,2)/(0,1,1)
    H1 = (H + 2 - 2) // 2 + 1
    D2 = D1                                  # maxpool2 (1,2,2)/(1,2,2)/(0,1,1)
    H2 = (H1 + 2 - 2) // 2 + 1
    D3, H3 = D2, H2 - 2                      # conv1 (1,3,3), no pad
    return 32 * D3 * H3 * H3


def init_params(key, in_channel, oc1, oc2, class_num, patch_size, n_bands,
                embed_dim):
    k1, k2, k3, k4, k5 = jax.random.split(key, 5)
    feat = compute_feat_size(n_bands, patch_size)
    return dict(
        block1=_residual_params(k1, in_channel, oc1),
        block2=_residual_params(k2, oc1, oc2),
        conv1_w=0.05 * jax.random.normal(k3, (32, oc2, 1, 3, 3), jnp.float32),
        fc_w=0.05 * jax.random.normal(k4, (embed_dim, feat), jnp.float32),
        cls_w=0.05 * jax.random.normal(k5, (class_num, feat), jnp.float32),
    )


# ----------------------------------------------------------------------------
if __name__ == "__main__":
    # D_Res_3d_CNN(in_channel=1, out_channel1=8, out_channel2=16,
    #              CLASS_NUM=5, patch_size=9, n_bands=16, embed_dim=32)
    B, N_BANDS, PATCH = 2, 16, 9
    OC1, OC2, CLASS_NUM, EMBED_DIM = 8, 16, 5, 32

    key = jax.random.PRNGKey(0)
    kx, kp = jax.random.split(key)
    x = jax.random.normal(kx, (B, N_BANDS, PATCH, PATCH), jnp.float32)
    params = init_params(kp, 1, OC1, OC2, CLASS_NUM, PATCH, N_BANDS, EMBED_DIM)

    fwd = jax.jit(d_res_3d_cnn_forward)
    y, proj = fwd(x, params)
    jax.block_until_ready((y, proj))

    assert y.shape == (B, CLASS_NUM), y.shape
    assert proj.shape == (B, EMBED_DIM), proj.shape
    assert bool(jnp.all(jnp.isfinite(y))) and bool(jnp.all(jnp.isfinite(proj)))
    print("KERNEL_OK")
</pallas_src>

<mosaic_0001>
module attributes {stable_mosaic.version = 11 : i64} {
  func.func @_block_pool_to_slab_kernel(%arg0: i32, %arg1: memref<1x18x16x256xbf16, #tpu.memory_space<vmem>>, %arg2: memref<16x432xbf16, #tpu.memory_space<vmem>>, %arg3: memref<16x1xf32, #tpu.memory_space<vmem>>, %arg4: memref<16x432xbf16, #tpu.memory_space<vmem>>, %arg5: memref<16x1xf32, #tpu.memory_space<vmem>>, %arg6: memref<16x432xbf16, #tpu.memory_space<vmem>>, %arg7: memref<16x1xf32, #tpu.memory_space<vmem>>, %arg8: memref<4x128x256xbf16, #tpu.memory_space<vmem>>, %arg9: memref<1x128xf32, #tpu.memory_space<vmem>>, %arg10: memref<1x6x16x256xbf16, #tpu.memory_space<vmem>>, %arg11: memref<18x16x256xbf16, #tpu.memory_space<vmem>>, %arg12: memref<18x16x256xbf16, #tpu.memory_space<vmem>>) attributes {dimension_semantics = [#tpu.dimension_semantics<parallel>], iteration_bounds = array<i64: 2>, scalar_prefetch = 0 : i64, scratch_operands = 2 : i64, tpu.core_type = #tpu.core_type<tc>, window_params = [{transform_indices = @transform_0, window_bounds = array<i64: 1, 18, 16, 256>}, {pipeline_mode = #tpu.pipeline_mode<synchronous>, transform_indices = @transform_1, window_bounds = array<i64: 16, 432>}, {pipeline_mode = #tpu.pipeline_mode<synchronous>, transform_indices = @transform_2, window_bounds = array<i64: 16, 1>}, {pipeline_mode = #tpu.pipeline_mode<synchronous>, transform_indices = @transform_3, window_bounds = array<i64: 16, 432>}, {pipeline_mode = #tpu.pipeline_mode<synchronous>, transform_indices = @transform_4, window_bounds = array<i64: 16, 1>}, {pipeline_mode = #tpu.pipeline_mode<synchronous>, transform_indices = @transform_5, window_bounds = array<i64: 16, 432>}, {pipeline_mode = #tpu.pipeline_mode<synchronous>, transform_indices = @transform_6, window_bounds = array<i64: 16, 1>}, {pipeline_mode = #tpu.pipeline_mode<synchronous>, transform_indices = @transform_7, window_bounds = array<i64: 4, 128, 256>}, {pipeline_mode = #tpu.pipeline_mode<synchronous>, transform_indices = @transform_8, window_bounds = array<i64: 1, 128>}, {transform_indices = @transform_9, window_bounds = array<i64: 1, 6, 16, 256>}]} {
    %cst = arith.constant 0.000000e+00 : bf16
    %0 = vector.broadcast %cst : bf16 to vector<18x16x256xbf16>
    %c0 = arith.constant 0 : index
    %c0_0 = arith.constant 0 : index
    %c0_1 = arith.constant 0 : index
    %1 = vector.load %arg11[%c0, %c0_0, %c0_1] : memref<18x16x256xbf16, #tpu.memory_space<vmem>>, vector<18x16x256xbf16>
    tpu.vector_store %arg11[%c0, %c0_0, %c0_1], %0 {strides = array<i32>} : memref<18x16x256xbf16, #tpu.memory_space<vmem>>, vector<18x16x256xbf16>,
    %cst_2 = arith.constant 0.000000e+00 : bf16
    %2 = vector.broadcast %cst_2 : bf16 to vector<18x16x256xbf16>
    %c0_3 = arith.constant 0 : index
    %c0_4 = arith.constant 0 : index
    %c0_5 = arith.constant 0 : index
    %3 = vector.load %arg12[%c0_3, %c0_4, %c0_5] : memref<18x16x256xbf16, #tpu.memory_space<vmem>>, vector<18x16x256xbf16>
    tpu.vector_store %arg12[%c0_3, %c0_4, %c0_5], %2 {strides = array<i32>} : memref<18x16x256xbf16, #tpu.memory_space<vmem>>, vector<18x16x256xbf16>,
    %cst_6 = arith.constant 0.000000e+00 : bf16
    %4 = vector.broadcast %cst_6 : bf16 to vector<16x256xbf16>
    %c0_7 = arith.constant 0 : index
    %c0_8 = arith.constant 0 : index
    %c0_9 = arith.constant 0 : index
    %c0_10 = arith.constant 0 : index
    %5 = vector.load %arg10[%c0_7, %c0_8, %c0_9, %c0_10] : memref<1x6x16x256xbf16, #tpu.memory_space<vmem>>, vector<1x1x16x256xbf16>
    %6 = vector.shape_cast %5 : vector<1x1x16x256xbf16> to vector<16x256xbf16>
    %7 = vector.shape_cast %4 : vector<16x256xbf16> to vector<1x1x16x256xbf16>
    tpu.vector_store %arg10[%c0_7, %c0_8, %c0_9, %c0_10], %7 {strides = array<i32>} : memref<1x6x16x256xbf16, #tpu.memory_space<vmem>>, vector<1x1x16x256xbf16>,
    %cst_11 = arith.constant 0.000000e+00 : bf16
    %8 = vector.broadcast %cst_11 : bf16 to vector<16x256xbf16>
    %c0_12 = arith.constant 0 : index
    %c5 = arith.constant 5 : index
    %c0_13 = arith.constant 0 : index
    %c0_14 = arith.constant 0 : index
    %9 = vector.load %arg10[%c0_12, %c5, %c0_13, %c0_14] : memref<1x6x16x256xbf16, #tpu.memory_space<vmem>>, vector<1x1x16x256xbf16>
    %10 = vector.shape_cast %9 : vector<1x1x16x256xbf16> to vector<16x256xbf16>
    %11 = vector.shape_cast %8 : vector<16x256xbf16> to vector<1x1x16x256xbf16>
    tpu.vector_store %arg10[%c0_12, %c5, %c0_13, %c0_14], %11 {strides = array<i32>} : memref<1x6x16x256xbf16, #tpu.memory_space<vmem>>, vector<1x1x16x256xbf16>,
    %c0_15 = arith.constant 0 : index
    %c0_16 = arith.constant 0 : index
    %12 = vector.load %arg9[%c0_15, %c0_16] : memref<1x128xf32, #tpu.memory_space<vmem>>, vector<1x128xf32>
    %c0_17 = arith.constant 0 : index
    %c0_18 = arith.constant 0 : index
    %13 = vector.load %arg2[%c0_17, %c0_18] : memref<16x432xbf16, #tpu.memory_space<vmem>>, vector<16x432xbf16>
    %c0_19 = arith.constant 0 : index
    %c0_20 = arith.constant 0 : index
    %14 = vector.load %arg3[%c0_19, %c0_20] : memref<16x1xf32, #tpu.memory_space<vmem>>, vector<16x1xf32>
    %c0_i32 = arith.constant 0 : i32
    %c16_i32 = arith.constant 16 : i32
    %15 = arith.addi %c0_i32, %c16_i32 : i32
    %c1_i32 = arith.constant 1 : i32
    scf.for %arg13 = %c0_i32 to %15 step %c1_i32  : i32 {
      %c0_i32_159 = arith.constant 0 : i32
      %281 = arith.addi %arg13, %c0_i32_159 : i32
      %c0_160 = arith.constant 0 : index
      %282 = arith.index_cast %281 : i32 to index
      %c0_161 = arith.constant 0 : index
      %c0_162 = arith.constant 0 : index
      %283 = vector.load %arg1[%c0_160, %282, %c0_161, %c0_162] : memref<1x18x16x256xbf16, #tpu.memory_space<vmem>>, vector<1x1x16x256xbf16>
      %284 = vector.shape_cast %283 : vector<1x1x16x256xbf16> to vector<16x256xbf16>
      %c1_i32_163 = arith.constant 1 : i32
      %285 = arith.addi %arg13, %c1_i32_163 : i32
      %c0_164 = arith.constant 0 : index
      %286 = arith.index_cast %285 : i32 to index
      %c0_165 = arith.constant 0 : index
      %c0_166 = arith.constant 0 : index
      %287 = vector.load %arg1[%c0_164, %286, %c0_165, %c0_166] : memref<1x18x16x256xbf16, #tpu.memory_space<vmem>>, vector<1x1x16x256xbf16>
      %288 = vector.shape_cast %287 : vector<1x1x16x256xbf16> to vector<16x256xbf16>
      %c2_i32 = arith.constant 2 : i32
      %289 = arith.addi %arg13, %c2_i32 : i32
      %c0_167 = arith.constant 0 : index
      %290 = arith.index_cast %289 : i32 to index
      %c0_168 = arith.constant 0 : index
      %c0_169 = arith.constant 0 : index
      %291 = vector.load %arg1[%c0_167, %290, %c0_168, %c0_169] : memref<1x18x16x256xbf16, #tpu.memory_space<vmem>>, vector<1x1x16x256xbf16>
      %292 = vector.shape_cast %291 : vector<1x1x16x256xbf16> to vector<16x256xbf16>
      %293 = vector.extract_strided_slice %284 {offsets = [0, 0], sizes = [16, 128], strides = [1, 1]} : vector<16x256xbf16> to vector<16x128xbf16>
      %294 = vector.extract_strided_slice %284 {offsets = [0, 1], sizes = [16, 128], strides = [1, 1]} : vector<16x256xbf16> to vector<16x128xbf16>
      %295 = vector.extract_strided_slice %284 {offsets = [0, 2], sizes = [16, 128], strides = [1, 1]} : vector<16x256xbf16> to vector<16x128xbf16>
      %296 = vector.extract_strided_slice %284 {offsets = [0, 11], sizes = [16, 128], strides = [1, 1]} : vector<16x256xbf16> to vector<16x128xbf16>
      %297 = vector.extract_strided_slice %284 {offsets = [0, 12], sizes = [16, 128], strides = [1, 1]} : vector<16x256xbf16> to vector<16x128xbf16>
      %298 = vector.extract_strided_slice %284 {offsets = [0, 13], sizes = [16, 128], strides = [1, 1]} : vector<16x256xbf16> to vector<16x128xbf16>
      %299 = vector.extract_strided_slice %284 {offsets = [0, 22], sizes = [16, 128], strides = [1, 1]} : vector<16x256xbf16> to vector<16x128xbf16>
      %300 = vector.extract_strided_slice %284 {offsets = [0, 23], sizes = [16, 128], strides = [1, 1]} : vector<16x256xbf16> to vector<16x128xbf16>
      %301 = vector.extract_strided_slice %284 {offsets = [0, 24], sizes = [16, 128], strides = [1, 1]} : vector<16x256xbf16> to vector<16x128xbf16>
      %302 = vector.extract_strided_slice %288 {offsets = [0, 0], sizes = [16, 128], strides = [1, 1]} : vector<16x256xbf16> to vector<16x128xbf16>
      %303 = vector.extract_strided_slice %288 {offsets = [0, 1], sizes = [16, 128], strides = [1, 1]} : vector<16x256xbf16> to vector<16x128xbf16>
      %304 = vector.extract_strided_slice %288 {offsets = [0, 2], sizes = [16, 128], strides = [1, 1]} : vector<16x256xbf16> to vector<16x128xbf16>
      %305 = vector.extract_strided_slice %288 {offsets = [0, 11], sizes = [16, 128], strides = [1, 1]} : vector<16x256xbf16> to vector<16x128xbf16>
      %306 = vector.extract_strided_slice %288 {offsets = [0, 12], sizes = [16, 128], strides = [1, 1]} : vector<16x256xbf16> to vector<16x128xbf16>
      %307 = vector.extract_strided_slice %288 {offsets = [0, 13], sizes = [16, 128], strides = [1, 1]} : vector<16x256xbf16> to vector<16x128xbf16>
      %308 = vector.extract_strided_slice %288 {offsets = [0, 22], sizes = [16, 128], strides = [1, 1]} : vector<16x256xbf16> to vector<16x128xbf16>
      %309 = vector.extract_strided_slice %288 {offsets = [0, 23], sizes = [16, 128], strides = [1, 1]} : vector<16x256xbf16> to vector<16x128xbf16>
      %310 = vector.extract_strided_slice %288 {offsets = [0, 24], sizes = [16, 128], strides = [1, 1]} : vector<16x256xbf16> to vector<16x128xbf16>
      %311 = vector.extract_strided_slice %292 {offsets = [0, 0], sizes = [16, 128], strides = [1, 1]} : vector<16x256xbf16> to vector<16x128xbf16>
      %312 = vector.extract_strided_slice %292 {offsets = [0, 1], sizes = [16, 128], strides = [1, 1]} : vector<16x256xbf16> to vector<16x128xbf16>
      %313 = vector.extract_strided_slice %292 {offsets = [0, 2], sizes = [16, 128], strides = [1, 1]} : vector<16x256xbf16> to vector<16x128xbf16>
      %314 = vector.extract_strided_slice %292 {offsets = [0, 11], sizes = [16, 128], strides = [1, 1]} : vector<16x256xbf16> to vector<16x128xbf16>
      %315 = vector.extract_strided_slice %292 {offsets = [0, 12], sizes = [16, 128], strides = [1, 1]} : vector<16x256xbf16> to vector<16x128xbf16>
      %316 = vector.extract_strided_slice %292 {offsets = [0, 13], sizes = [16, 128], strides = [1, 1]} : vector<16x256xbf16> to vector<16x128xbf16>
      %317 = vector.extract_strided_slice %292 {offsets = [0, 22], sizes = [16, 128], strides = [1, 1]} : vector<16x256xbf16> to vector<16x128xbf16>
      %318 = vector.extract_strided_slice %292 {offsets = [0, 23], sizes = [16, 128], strides = [1, 1]} : vector<16x256xbf16> to vector<16x128xbf16>
      %319 = vector.extract_strided_slice %292 {offsets = [0, 24], sizes = [16, 128], strides = [1, 1]} : vector<16x256xbf16> to vector<16x128xbf16>
      %320 = tpu.concatenate %293, %294, %295, %296, %297, %298, %299, %300, %301, %302, %303, %304, %305, %306, %307, %308 in 0 : vector<16x128xbf16>, vector<16x128xbf16>, vector<16x128xbf16>, vector<16x128xbf16>, vector<16x128xbf16>, vector<16x128xbf16>, vector<16x128xbf16>, vector<16x128xbf16>, vector<16x128xbf16>, vector<16x128xbf16>, vector<16x128xbf16>, vector<16x128xbf16>, vector<16x128xbf16>, vector<16x128xbf16>, vector<16x128xbf16>, vector<16x128xbf16> -> vector<256x128xbf16>
      %321 = tpu.concatenate %309, %310, %311, %312, %313, %314, %315, %316, %317, %318, %319 in 0 : vector<16x128xbf16>, vector<16x128xbf16>, vector<16x128xbf16>, vector<16x128xbf16>, vector<16x128xbf16>, vector<16x128xbf16>, vector<16x128xbf16>, vector<16x128xbf16>, vector<16x128xbf16>, vector<16x128xbf16>, vector<16x128xbf16> -> vector<176x128xbf16>
      %322 = tpu.concatenate %320, %321 in 0 : vector<256x128xbf16>, vector<176x128xbf16> -> vector<432x128xbf16>
      %cst_170 = arith.constant dense<0.000000e+00> : vector<16x128xf32>
      %323 = tpu.matmul %13, %322, %cst_170 {dimension_numbers = #tpu.dot_dimension_numbers<[1], [0], [0], [1], [0, 0, 1, 1], [], []>} : vector<16x432xbf16>, vector<432x128xbf16>, vector<16x128xf32> -> vector<16x128xf32>
      %324 = vector.broadcast %14 : vector<16x1xf32> to vector<16x128xf32>
      %325 = arith.addf %323, %324 : vector<16x128xf32>
      %cst_171 = arith.constant 0.000000e+00 : f32
      %326 = vector.broadcast %cst_171 : f32 to vector<16x128xf32>
      %327 = arith.maximumf %325, %326 : vector<16x128xf32>
      %328 = vector.broadcast %12 : vector<1x128xf32> to vector<16x128xf32>
      %329 = arith.mulf %327, %328 : vector<16x128xf32>
      %330 = arith.truncf %329 : vector<16x128xf32> to vector<16x128xbf16>
      %c1_i32_172 = arith.constant 1 : i32
      %331 = arith.addi %arg13, %c1_i32_172 : i32
      %332 = arith.index_cast %331 : i32 to index
      %c0_173 = arith.constant 0 : index
      %c12_174 = arith.constant 12 : index
      %333 = vector.load %arg11[%332, %c0_173, %c12_174] : memref<18x16x256xbf16, #tpu.memory_space<vmem>>, vector<1x16x128xbf16>
      %334 = vector.shape_cast %333 : vector<1x16x128xbf16> to vector<16x128xbf16>
      %335 = vector.shape_cast %330 : vector<16x128xbf16> to vector<1x16x128xbf16>
      tpu.vector_store %arg11[%332, %c0_173, %c12_174], %335 {strides = array<i32>} : memref<18x16x256xbf16, #tpu.memory_space<vmem>>, vector<1x16x128xbf16>,
    }
    %c16_i32_21 = arith.constant 16 : i32
    %c0_22 = arith.constant 0 : index
    %c0_23 = arith.constant 0 : index
    %16 = vector.load %arg4[%c0_22, %c0_23] : memref<16x432xbf16, #tpu.memory_space<vmem>>, vector<16x432xbf16>
    %c0_24 = arith.constant 0 : index
    %c0_25 = arith.constant 0 : index
    %17 = vector.load %arg5[%c0_24, %c0_25] : memref<16x1xf32, #tpu.memory_space<vmem>>, vector<16x1xf32>
    %c0_i32_26 = arith.constant 0 : i32
    %c16_i32_27 = arith.constant 16 : i32
    %18 = arith.addi %c0_i32_26, %c16_i32_27 : i32
    %c1_i32_28 = arith.constant 1 : i32
    scf.for %arg13 = %c0_i32_26 to %18 step %c1_i32_28  : i32 {
      %c0_i32_159 = arith.constant 0 : i32
      %281 = arith.addi %arg13, %c0_i32_159 : i32
      %282 = arith.index_cast %281 : i32 to index
      %c0_160 = arith.constant 0 : index
      %c0_161 = arith.constant 0 : index
      %283 = vector.load %arg11[%282, %c0_160, %c0_161] : memref<18x16x256xbf16, #tpu.memory_space<vmem>>, vector<1x16x256xbf16>
      %284 = vector.shape_cast %283 : vector<1x16x256xbf16> to vector<16x256xbf16>
      %c1_i32_162 = arith.constant 1 : i32
      %285 = arith.addi %arg13, %c1_i32_162 : i32
      %286 = arith.index_cast %285 : i32 to index
      %c0_163 = arith.constant 0 : index
      %c0_164 = arith.constant 0 : index
      %287 = vector.load %arg11[%286, %c0_163, %c0_164] : memref<18x16x256xbf16, #tpu.memory_space<vmem>>, vector<1x16x256xbf16>
      %288 = vector.shape_cast %287 : vector<1x16x256xbf16> to vector<16x256xbf16>
      %c2_i32 = arith.constant 2 : i32
      %289 = arith.addi %arg13, %c2_i32 : i32
      %290 = arith.index_cast %289 : i32 to index
      %c0_165 = arith.constant 0 : index
      %c0_166 = arith.constant 0 : index
      %291 = vector.load %arg11[%290, %c0_165, %c0_166] : memref<18x16x256xbf16, #tpu.memory_space<vmem>>, vector<1x16x256xbf16>
      %292 = vector.shape_cast %291 : vector<1x16x256xbf16> to vector<16x256xbf16>
      %293 = vector.extract_strided_slice %284 {offsets = [0, 0], sizes = [16, 128], strides = [1, 1]} : vector<16x256xbf16> to vector<16x128xbf16>
      %294 = vector.extract_strided_slice %284 {offsets = [0, 1], sizes = [16, 128], strides = [1, 1]} : vector<16x256xbf16> to vector<16x128xbf16>
      %295 = vector.extract_strided_slice %284 {offsets = [0, 2], sizes = [16, 128], strides = [1, 1]} : vector<16x256xbf16> to vector<16x128xbf16>
      %296 = vector.extract_strided_slice %284 {offsets = [0, 11], sizes = [16, 128], strides = [1, 1]} : vector<16x256xbf16> to vector<16x128xbf16>
      %297 = vector.extract_strided_slice %284 {offsets = [0, 12], sizes = [16, 128], strides = [1, 1]} : vector<16x256xbf16> to vector<16x128xbf16>
      %298 = vector.extract_strided_slice %284 {offsets = [0, 13], sizes = [16, 128], strides = [1, 1]} : vector<16x256xbf16> to vector<16x128xbf16>
      %299 = vector.extract_strided_slice %284 {offsets = [0, 22], sizes = [16, 128], strides = [1, 1]} : vector<16x256xbf16> to vector<16x128xbf16>
      %300 = vector.extract_strided_slice %284 {offsets = [0, 23], sizes = [16, 128], strides = [1, 1]} : vector<16x256xbf16> to vector<16x128xbf16>
      %301 = vector.extract_strided_slice %284 {offsets = [0, 24], sizes = [16, 128], strides = [1, 1]} : vector<16x256xbf16> to vector<16x128xbf16>
      %302 = vector.extract_strided_slice %288 {offsets = [0, 0], sizes = [16, 128], strides = [1, 1]} : vector<16x256xbf16> to vector<16x128xbf16>
      %303 = vector.extract_strided_slice %288 {offsets = [0, 1], sizes = [16, 128], strides = [1, 1]} : vector<16x256xbf16> to vector<16x128xbf16>
      %304 = vector.extract_strided_slice %288 {offsets = [0, 2], sizes = [16, 128], strides = [1, 1]} : vector<16x256xbf16> to vector<16x128xbf16>
      %305 = vector.extract_strided_slice %288 {offsets = [0, 11], sizes = [16, 128], strides = [1, 1]} : vector<16x256xbf16> to vector<16x128xbf16>
      %306 = vector.extract_strided_slice %288 {offsets = [0, 12], sizes = [16, 128], strides = [1, 1]} : vector<16x256xbf16> to vector<16x128xbf16>
      %307 = vector.extract_strided_slice %288 {offsets = [0, 13], sizes = [16, 128], strides = [1, 1]} : vector<16x256xbf16> to vector<16x128xbf16>
      %308 = vector.extract_strided_slice %288 {offsets = [0, 22], sizes = [16, 128], strides = [1, 1]} : vector<16x256xbf16> to vector<16x128xbf16>
      %309 = vector.extract_strided_slice %288 {offsets = [0, 23], sizes = [16, 128], strides = [1, 1]} : vector<16x256xbf16> to vector<16x128xbf16>
      %310 = vector.extract_strided_slice %288 {offsets = [0, 24], sizes = [16, 128], strides = [1, 1]} : vector<16x256xbf16> to vector<16x128xbf16>
      %311 = vector.extract_strided_slice %292 {offsets = [0, 0], sizes = [16, 128], strides = [1, 1]} : vector<16x256xbf16> to vector<16x128xbf16>
      %312 = vector.extract_strided_slice %292 {offsets = [0, 1], sizes = [16, 128], strides = [1, 1]} : vector<16x256xbf16> to vector<16x128xbf16>
      %313 = vector.extract_strided_slice %292 {offsets = [0, 2], sizes = [16, 128], strides = [1, 1]} : vector<16x256xbf16> to vector<16x128xbf16>
      %314 = vector.extract_strided_slice %292 {offsets = [0, 11], sizes = [16, 128], strides = [1, 1]} : vector<16x256xbf16> to vector<16x128xbf16>
      %315 = vector.extract_strided_slice %292 {offsets = [0, 12], sizes = [16, 128], strides = [1, 1]} : vector<16x256xbf16> to vector<16x128xbf16>
      %316 = vector.extract_strided_slice %292 {offsets = [0, 13], sizes = [16, 128], strides = [1, 1]} : vector<16x256xbf16> to vector<16x128xbf16>
      %317 = vector.extract_strided_slice %292 {offsets = [0, 22], sizes = [16, 128], strides = [1, 1]} : vector<16x256xbf16> to vector<16x128xbf16>
      %318 = vector.extract_strided_slice %292 {offsets = [0, 23], sizes = [16, 128], strides = [1, 1]} : vector<16x256xbf16> to vector<16x128xbf16>
      %319 = vector.extract_strided_slice %292 {offsets = [0, 24], sizes = [16, 128], strides = [1, 1]} : vector<16x256xbf16> to vector<16x128xbf16>
      %320 = tpu.concatenate %293, %294, %295, %296, %297, %298, %299, %300, %301, %302, %303, %304, %305, %306, %307, %308 in 0 : vector<16x128xbf16>, vector<16x128xbf16>, vector<16x128xbf16>, vector<16x128xbf16>, vector<16x128xbf16>, vector<16x128xbf16>, vector<16x128xbf16>, vector<16x128xbf16>, vector<16x128xbf16>, vector<16x128xbf16>, vector<16x128xbf16>, vector<16x128xbf16>, vector<16x128xbf16>, vector<16x128xbf16>, vector<16x128xbf16>, vector<16x128xbf16> -> vector<256x128xbf16>
      %321 = tpu.concatenate %309, %310, %311, %312, %313, %314, %315, %316, %317, %318, %319 in 0 : vector<16x128xbf16>, vector<16x128xbf16>, vector<16x128xbf16>, vector<16x128xbf16>, vector<16x128xbf16>, vector<16x128xbf16>, vector<16x128xbf16>, vector<16x128xbf16>, vector<16x128xbf16>, vector<16x128xbf16>, vector<16x128xbf16> -> vector<176x128xbf16>
      %322 = tpu.concatenate %320, %321 in 0 : vector<256x128xbf16>, vector<176x128xbf16> -> vector<432x128xbf16>
      %cst_167 = arith.constant dense<0.000000e+00> : vector<16x128xf32>
      %323 = tpu.matmul %16, %322, %cst_167 {dimension_numbers = #tpu.dot_dimension_numbers<[1], [0], [0], [1], [0, 0, 1, 1], [], []>} : vector<16x432xbf16>, vector<432x128xbf16>, vector<16x128xf32> -> vector<16x128xf32>
      %324 = vector.broadcast %17 : vector<16x1xf32> to vector<16x128xf32>
      %325 = arith.addf %323, %324 : vector<16x128xf32>
      %cst_168 = arith.constant 0.000000e+00 : f32
      %326 = vector.broadcast %cst_168 : f32 to vector<16x128xf32>
      %327 = arith.maximumf %325, %326 : vector<16x128xf32>
      %328 = vector.broadcast %12 : vector<1x128xf32> to vector<16x128xf32>
      %329 = arith.mulf %327, %328 : vector<16x128xf32>
      %330 = arith.truncf %329 : vector<16x128xf32> to vector<16x128xbf16>
      %c1_i32_169 = arith.constant 1 : i32
      %331 = arith.addi %arg13, %c1_i32_169 : i32
      %332 = arith.index_cast %331 : i32 to index
      %c0_170 = arith.constant 0 : index
      %c12_171 = arith.constant 12 : index
      %333 = vector.load %arg12[%332, %c0_170, %c12_171] : memref<18x16x256xbf16, #tpu.memory_space<vmem>>, vector<1x16x128xbf16>
      %334 = vector.shape_cast %333 : vector<1x16x128xbf16> to vector<16x128xbf16>
      %335 = vector.shape_cast %330 : vector<16x128xbf16> to vector<1x16x128xbf16>
      tpu.vector_store %arg12[%332, %c0_170, %c12_171], %335 {strides = array<i32>} : memref<18x16x256xbf16, #tpu.memory_space<vmem>>, vector<1x16x128xbf16>,
    }
    %c16_i32_29 = arith.constant 16 : i32
    %c0_30 = arith.constant 0 : index
    %c0_31 = arith.constant 0 : index
    %19 = vector.load %arg6[%c0_30, %c0_31] : memref<16x432xbf16, #tpu.memory_space<vmem>>, vector<16x432xbf16>
    %c0_32 = arith.constant 0 : index
    %c0_33 = arith.constant 0 : index
    %20 = vector.load %arg7[%c0_32, %c0_33] : memref<16x1xf32, #tpu.memory_space<vmem>>, vector<16x1xf32>
    %c0_34 = arith.constant 0 : index
    %c0_35 = arith.constant 0 : index
    %c0_36 = arith.constant 0 : index
    %21 = vector.load %arg12[%c0_34, %c0_35, %c0_36] : memref<18x16x256xbf16, #tpu.memory_space<vmem>>, vector<1x16x256xbf16>
    %22 = vector.shape_cast %21 : vector<1x16x256xbf16> to vector<16x256xbf16>
    %c1 = arith.constant 1 : index
    %c0_37 = arith.constant 0 : index
    %c0_38 = arith.constant 0 : index
    %23 = vector.load %arg12[%c1, %c0_37, %c0_38] : memref<18x16x256xbf16, #tpu.memory_space<vmem>>, vector<1x16x256xbf16>
    %24 = vector.shape_cast %23 : vector<1x16x256xbf16> to vector<16x256xbf16>
    %c2 = arith.constant 2 : index
    %c0_39 = arith.constant 0 : index
    %c0_40 = arith.constant 0 : index
    %25 = vector.load %arg12[%c2, %c0_39, %c0_40] : memref<18x16x256xbf16, #tpu.memory_space<vmem>>, vector<1x16x256xbf16>
    %26 = vector.shape_cast %25 : vector<1x16x256xbf16> to vector<16x256xbf16>
    %27 = vector.extract_strided_slice %22 {offsets = [0, 0], sizes = [16, 128], strides = [1, 1]} : vector<16x256xbf16> to vector<16x128xbf16>
    %28 = vector.extract_strided_slice %22 {offsets = [0, 1], sizes = [16, 128], strides = [1, 1]} : vector<16x256xbf16> to vector<16x128xbf16>
    %29 = vector.extract_strided_slice %22 {offsets = [0, 2], sizes = [16, 128], strides = [1, 1]} : vector<16x256xbf16> to vector<16x128xbf16>
    %30 = vector.extract_strided_slice %22 {offsets = [0, 11], sizes = [16, 128], strides = [1, 1]} : vector<16x256xbf16> to vector<16x128xbf16>
    %31 = vector.extract_strided_slice %22 {offsets = [0, 12], sizes = [16, 128], strides = [1, 1]} : vector<16x256xbf16> to vector<16x128xbf16>
    %32 = vector.extract_strided_slice %22 {offsets = [0, 13], sizes = [16, 128], strides = [1, 1]} : vector<16x256xbf16> to vector<16x128xbf16>
    %33 = vector.extract_strided_slice %22 {offsets = [0, 22], sizes = [16, 128], strides = [1, 1]} : vector<16x256xbf16> to vector<16x128xbf16>
    %34 = vector.extract_strided_slice %22 {offsets = [0, 23], sizes = [16, 128], strides = [1, 1]} : vector<16x256xbf16> to vector<16x128xbf16>
    %35 = vector.extract_strided_slice %22 {offsets = [0, 24], sizes = [16, 128], strides = [1, 1]} : vector<16x256xbf16> to vector<16x128xbf16>
    %36 = vector.extract_strided_slice %24 {offsets = [0, 0], sizes = [16, 128], strides = [1, 1]} : vector<16x256xbf16> to vector<16x128xbf16>
    %37 = vector.extract_strided_slice %24 {offsets = [0, 1], sizes = [16, 128], strides = [1, 1]} : vector<16x256xbf16> to vector<16x128xbf16>
    %38 = vector.extract_strided_slice %24 {offsets = [0, 2], sizes = [16, 128], strides = [1, 1]} : vector<16x256xbf16> to vector<16x128xbf16>
    %39 = vector.extract_strided_slice %24 {offsets = [0, 11], sizes = [16, 128], strides = [1, 1]} : vector<16x256xbf16> to vector<16x128xbf16>
    %40 = vector.extract_strided_slice %24 {offsets = [0, 12], sizes = [16, 128], strides = [1, 1]} : vector<16x256xbf16> to vector<16x128xbf16>
    %41 = vector.extract_strided_slice %24 {offsets = [0, 13], sizes = [16, 128], strides = [1, 1]} : vector<16x256xbf16> to vector<16x128xbf16>
    %42 = vector.extract_strided_slice %24 {offsets = [0, 22], sizes = [16, 128], strides = [1, 1]} : vector<16x256xbf16> to vector<16x128xbf16>
    %43 = vector.extract_strided_slice %24 {offsets = [0, 23], sizes = [16, 128], strides = [1, 1]} : vector<16x256xbf16> to vector<16x128xbf16>
    %44 = vector.extract_strided_slice %24 {offsets = [0, 24], sizes = [16, 128], strides = [1, 1]} : vector<16x256xbf16> to vector<16x128xbf16>
    %45 = vector.extract_strided_slice %26 {offsets = [0, 0], sizes = [16, 128], strides = [1, 1]} : vector<16x256xbf16> to vector<16x128xbf16>
    %46 = vector.extract_strided_slice %26 {offsets = [0, 1], sizes = [16, 128], strides = [1, 1]} : vector<16x256xbf16> to vector<16x128xbf16>
    %47 = vector.extract_strided_slice %26 {offsets = [0, 2], sizes = [16, 128], strides = [1, 1]} : vector<16x256xbf16> to vector<16x128xbf16>
    %48 = vector.extract_strided_slice %26 {offsets = [0, 11], sizes = [16, 128], strides = [1, 1]} : vector<16x256xbf16> to vector<16x128xbf16>
    %49 = vector.extract_strided_slice %26 {offsets = [0, 12], sizes = [16, 128], strides = [1, 1]} : vector<16x256xbf16> to vector<16x128xbf16>
    %50 = vector.extract_strided_slice %26 {offsets = [0, 13], sizes = [16, 128], strides = [1, 1]} : vector<16x256xbf16> to vector<16x128xbf16>
    %51 = vector.extract_strided_slice %26 {offsets = [0, 22], sizes = [16, 128], strides = [1, 1]} : vector<16x256xbf16> to vector<16x128xbf16>
    %52 = vector.extract_strided_slice %26 {offsets = [0, 23], sizes = [16, 128], strides = [1, 1]} : vector<16x256xbf16> to vector<16x128xbf16>
    %53 = vector.extract_strided_slice %26 {offsets = [0, 24], sizes = [16, 128], strides = [1, 1]} : vector<16x256xbf16> to vector<16x128xbf16>
    %54 = tpu.concatenate %27, %28, %29, %30, %31, %32, %33, %34, %35, %36, %37, %38, %39, %40, %41, %42 in 0 : vector<16x128xbf16>, vector<16x128xbf16>, vector<16x128xbf16>, vector<16x128xbf16>, vector<16x128xbf16>, vector<16x128xbf16>, vector<16x128xbf16>, vector<16x128xbf16>, vector<16x128xbf16>, vector<16x128xbf16>, vector<16x128xbf16>, vector<16x128xbf16>, vector<16x128xbf16>, vector<16x128xbf16>, vector<16x128xbf16>, vector<16x128xbf16> -> vector<256x128xbf16>
    %55 = tpu.concatenate %43, %44, %45, %46, %47, %48, %49, %50, %51, %52, %53 in 0 : vector<16x128xbf16>, vector<16x128xbf16>, vector<16x128xbf16>, vector<16x128xbf16>, vector<16x128xbf16>, vector<16x128xbf16>, vector<16x128xbf16>, vector<16x128xbf16>, vector<16x128xbf16>, vector<16x128xbf16>, vector<16x128xbf16> -> vector<176x128xbf16>
    %56 = tpu.concatenate %54, %55 in 0 : vector<256x128xbf16>, vector<176x128xbf16> -> vector<432x128xbf16>
    %cst_41 = arith.constant dense<0.000000e+00> : vector<16x128xf32>
    %57 = tpu.matmul %19, %56, %cst_41 {dimension_numbers = #tpu.dot_dimension_numbers<[1], [0], [0], [1], [0, 0, 1, 1], [], []>} : vector<16x432xbf16>, vector<432x128xbf16>, vector<16x128xf32> -> vector<16x128xf32>
    %58 = vector.broadcast %20 : vector<16x1xf32> to vector<16x128xf32>
    %59 = arith.addf %57, %58 : vector<16x128xf32>
    %c1_42 = arith.constant 1 : index
    %c0_43 = arith.constant 0 : index
    %c12 = arith.constant 12 : index
    %60 = vector.load %arg11[%c1_42, %c0_43, %c12] : memref<18x16x256xbf16, #tpu.memory_space<vmem>>, vector<1x16x128xbf16>
    %61 = vector.shape_cast %60 : vector<1x16x128xbf16> to vector<16x128xbf16>
    %62 = arith.extf %61 : vector<16x128xbf16> to vector<16x128xf32>
    %63 = arith.addf %59, %62 : vector<16x128xf32>
    %cst_44 = arith.constant 0.000000e+00 : f32
    %64 = vector.broadcast %cst_44 : f32 to vector<16x128xf32>
    %65 = arith.maximumf %63, %64 : vector<16x128xf32>
    %66 = arith.truncf %65 : vector<16x128xf32> to vector<16x128xbf16>
    %c0_45 = arith.constant 0 : index
    %c0_46 = arith.constant 0 : index
    %c0_47 = arith.constant 0 : index
    %67 = vector.load %arg8[%c0_45, %c0_46, %c0_47] : memref<4x128x256xbf16, #tpu.memory_space<vmem>>, vector<1x128x256xbf16>
    %68 = vector.shape_cast %67 : vector<1x128x256xbf16> to vector<128x256xbf16>
    %cst_48 = arith.constant dense<0.000000e+00> : vector<16x256xf32>
    %69 = tpu.matmul %66, %68, %cst_48 {dimension_numbers = #tpu.dot_dimension_numbers<[1], [0], [0], [1], [0, 0, 1, 1], [], []>} : vector<16x128xbf16>, vector<128x256xbf16>, vector<16x256xf32> -> vector<16x256xf32>
    %c1_49 = arith.constant 1 : index
    %c0_50 = arith.constant 0 : index
    %c0_51 = arith.constant 0 : index
    %70 = vector.load %arg8[%c1_49, %c0_50, %c0_51] : memref<4x128x256xbf16, #tpu.memory_space<vmem>>, vector<1x128x256xbf16>
    %71 = vector.shape_cast %70 : vector<1x128x256xbf16> to vector<128x256xbf16>
    %cst_52 = arith.constant dense<0.000000e+00> : vector<16x256xf32>
    %72 = tpu.matmul %66, %71, %cst_52 {dimension_numbers = #tpu.dot_dimension_numbers<[1], [0], [0], [1], [0, 0, 1, 1], [], []>} : vector<16x128xbf16>, vector<128x256xbf16>, vector<16x256xf32> -> vector<16x256xf32>
    %73 = arith.maximumf %69, %72 : vector<16x256xf32>
    %c2_53 = arith.constant 2 : index
    %c0_54 = arith.constant 0 : index
    %c0_55 = arith.constant 0 : index
    %74 = vector.load %arg8[%c2_53, %c0_54, %c0_55] : memref<4x128x256xbf16, #tpu.memory_space<vmem>>, vector<1x128x256xbf16>
    %75 = vector.shape_cast %74 : vector<1x128x256xbf16> to vector<128x256xbf16>
    %cst_56 = arith.constant dense<0.000000e+00> : vector<16x256xf32>
    %76 = tpu.matmul %66, %75, %cst_56 {dimension_numbers = #tpu.dot_dimension_numbers<[1], [0], [0], [1], [0, 0, 1, 1], [], []>} : vector<16x128xbf16>, vector<128x256xbf16>, vector<16x256xf32> -> vector<16x256xf32>
    %77 = arith.maximumf %73, %76 : vector<16x256xf32>
    %c3 = arith.constant 3 : index
    %c0_57 = arith.constant 0 : index
    %c0_58 = arith.constant 0 : index
    %78 = vector.load %arg8[%c3, %c0_57, %c0_58] : memref<4x128x256xbf16, #tpu.memory_space<vmem>>, vector<1x128x256xbf16>
    %79 = vector.shape_cast %78 : vector<1x128x256xbf16> to vector<128x256xbf16>
    %cst_59 = arith.constant dense<0.000000e+00> : vector<16x256xf32>
    %80 = tpu.matmul %66, %79, %cst_59 {dimension_numbers = #tpu.dot_dimension_numbers<[1], [0], [0], [1], [0, 0, 1, 1], [], []>} : vector<16x128xbf16>, vector<128x256xbf16>, vector<16x256xf32> -> vector<16x256xf32>
    %81 = arith.maximumf %77, %80 : vector<16x256xf32>
    %82 = arith.truncf %81 : vector<16x256xf32> to vector<16x256xbf16>
    %c0_60 = arith.constant 0 : index
    %c1_61 = arith.constant 1 : index
    %c0_62 = arith.constant 0 : index
    %c0_63 = arith.constant 0 : index
    %83 = vector.load %arg10[%c0_60, %c1_61, %c0_62, %c0_63] : memref<1x6x16x256xbf16, #tpu.memory_space<vmem>>, vector<1x1x16x256xbf16>
    %84 = vector.shape_cast %83 : vector<1x1x16x256xbf16> to vector<16x256xbf16>
    %85 = vector.shape_cast %82 : vector<16x256xbf16> to vector<1x1x16x256xbf16>
    tpu.vector_store %arg10[%c0_60, %c1_61, %c0_62, %c0_63], %85 {strides = array<i32>} : memref<1x6x16x256xbf16, #tpu.memory_space<vmem>>, vector<1x1x16x256xbf16>,
    %c4 = arith.constant 4 : index
    %c0_64 = arith.constant 0 : index
    %c0_65 = arith.constant 0 : index
    %86 = vector.load %arg12[%c4, %c0_64, %c0_65] : memref<18x16x256xbf16, #tpu.memory_space<vmem>>, vector<1x16x256xbf16>
    %87 = vector.shape_cast %86 : vector<1x16x256xbf16> to vector<16x256xbf16>
    %c5_66 = arith.constant 5 : index
    %c0_67 = arith.constant 0 : index
    %c0_68 = arith.constant 0 : index
    %88 = vector.load %arg12[%c5_66, %c0_67, %c0_68] : memref<18x16x256xbf16, #tpu.memory_space<vmem>>, vector<1x16x256xbf16>
    %89 = vector.shape_cast %88 : vector<1x16x256xbf16> to vector<16x256xbf16>
    %c6 = arith.constant 6 : index
    %c0_69 = arith.constant 0 : index
    %c0_70 = arith.constant 0 : index
    %90 = vector.load %arg12[%c6, %c0_69, %c0_70] : memref<18x16x256xbf16, #tpu.memory_space<vmem>>, vector<1x16x256xbf16>
    %91 = vector.shape_cast %90 : vector<1x16x256xbf16> to vector<16x256xbf16>
    %92 = vector.extract_strided_slice %87 {offsets = [0, 0], sizes = [16, 128], strides = [1, 1]} : vector<16x256xbf16> to vector<16x128xbf16>
    %93 = vector.extract_strided_slice %87 {offsets = [0, 1], sizes = [16, 128], strides = [1, 1]} : vector<16x256xbf16> to vector<16x128xbf16>
    %94 = vector.extract_strided_slice %87 {offsets = [0, 2], sizes = [16, 128], strides = [1, 1]} : vector<16x256xbf16> to vector<16x128xbf16>
    %95 = vector.extract_strided_slice %87 {offsets = [0, 11], sizes = [16, 128], strides = [1, 1]} : vector<16x256xbf16> to vector<16x128xbf16>
    %96 = vector.extract_strided_slice %87 {offsets = [0, 12], sizes = [16, 128], strides = [1, 1]} : vector<16x256xbf16> to vector<16x128xbf16>
    %97 = vector.extract_strided_slice %87 {offsets = [0, 13], sizes = [16, 128], strides = [1, 1]} : vector<16x256xbf16> to vector<16x128xbf16>
    %98 = vector.extract_strided_slice %87 {offsets = [0, 22], sizes = [16, 128], strides = [1, 1]} : vector<16x256xbf16> to vector<16x128xbf16>
    %99 = vector.extract_strided_slice %87 {offsets = [0, 23], sizes = [16, 128], strides = [1, 1]} : vector<16x256xbf16> to vector<16x128xbf16>
    %100 = vector.extract_strided_slice %87 {offsets = [0, 24], sizes = [16, 128], strides = [1, 1]} : vector<16x256xbf16> to vector<16x128xbf16>
    %101 = vector.extract_strided_slice %89 {offsets = [0, 0], sizes = [16, 128], strides = [1, 1]} : vector<16x256xbf16> to vector<16x128xbf16>
    %102 = vector.extract_strided_slice %89 {offsets = [0, 1], sizes = [16, 128], strides = [1, 1]} : vector<16x256xbf16> to vector<16x128xbf16>
    %103 = vector.extract_strided_slice %89 {offsets = [0, 2], sizes = [16, 128], strides = [1, 1]} : vector<16x256xbf16> to vector<16x128xbf16>
    %104 = vector.extract_strided_slice %89 {offsets = [0, 11], sizes = [16, 128], strides = [1, 1]} : vector<16x256xbf16> to vector<16x128xbf16>
    %105 = vector.extract_strided_slice %89 {offsets = [0, 12], sizes = [16, 128], strides = [1, 1]} : vector<16x256xbf16> to vector<16x128xbf16>
    %106 = vector.extract_strided_slice %89 {offsets = [0, 13], sizes = [16, 128], strides = [1, 1]} : vector<16x256xbf16> to vector<16x128xbf16>
    %107 = vector.extract_strided_slice %89 {offsets = [0, 22], sizes = [16, 128], strides = [1, 1]} : vector<16x256xbf16> to vector<16x128xbf16>
    %108 = vector.extract_strided_slice %89 {offsets = [0, 23], sizes = [16, 128], strides = [1, 1]} : vector<16x256xbf16> to vector<16x128xbf16>
    %109 = vector.extract_strided_slice %89 {offsets = [0, 24], sizes = [16, 128], strides = [1, 1]} : vector<16x256xbf16> to vector<16x128xbf16>
    %110 = vector.extract_strided_slice %91 {offsets = [0, 0], sizes = [16, 128], strides = [1, 1]} : vector<16x256xbf16> to vector<16x128xbf16>
    %111 = vector.extract_strided_slice %91 {offsets = [0, 1], sizes = [16, 128], strides = [1, 1]} : vector<16x256xbf16> to vector<16x128xbf16>
    %112 = vector.extract_strided_slice %91 {offsets = [0, 2], sizes = [16, 128], strides = [1, 1]} : vector<16x256xbf16> to vector<16x128xbf16>
    %113 = vector.extract_strided_slice %91 {offsets = [0, 11], sizes = [16, 128], strides = [1, 1]} : vector<16x256xbf16> to vector<16x128xbf16>
    %114 = vector.extract_strided_slice %91 {offsets = [0, 12], sizes = [16, 128], strides = [1, 1]} : vector<16x256xbf16> to vector<16x128xbf16>
    %115 = vector.extract_strided_slice %91 {offsets = [0, 13], sizes = [16, 128], strides = [1, 1]} : vector<16x256xbf16> to vector<16x128xbf16>
    %116 = vector.extract_strided_slice %91 {offsets = [0, 22], sizes = [16, 128], strides = [1, 1]} : vector<16x256xbf16> to vector<16x128xbf16>
    %117 = vector.extract_strided_slice %91 {offsets = [0, 23], sizes = [16, 128], strides = [1, 1]} : vector<16x256xbf16> to vector<16x128xbf16>
    %118 = vector.extract_strided_slice %91 {offsets = [0, 24], sizes = [16, 128], strides = [1, 1]} : vector<16x256xbf16> to vector<16x128xbf16>
    %119 = tpu.concatenate %92, %93, %94, %95, %96, %97, %98, %99, %100, %101, %102, %103, %104, %105, %106, %107 in 0 : vector<16x128xbf16>, vector<16x128xbf16>, vector<16x128xbf16>, vector<16x128xbf16>, vector<16x128xbf16>, vector<16x128xbf16>, vector<16x128xbf16>, vector<16x128xbf16>, vector<16x128xbf16>, vector<16x128xbf16>, vector<16x128xbf16>, vector<16x128xbf16>, vector<16x128xbf16>, vector<16x128xbf16>, vector<16x128xbf16>, vector<16x128xbf16> -> vector<256x128xbf16>
    %120 = tpu.concatenate %108, %109, %110, %111, %112, %113, %114, %115, %116, %117, %118 in 0 : vector<16x128xbf16>, vector<16x128xbf16>, vector<16x128xbf16>, vector<16x128xbf16>, vector<16x128xbf16>, vector<16x128xbf16>, vector<16x128xbf16>, vector<16x128xbf16>, vector<16x128xbf16>, vector<16x128xbf16>, vector<16x128xbf16> -> vector<176x128xbf16>
    %121 = tpu.concatenate %119, %120 in 0 : vector<256x128xbf16>, vector<176x128xbf16> -> vector<432x128xbf16>
    %cst_71 = arith.constant dense<0.000000e+00> : vector<16x128xf32>
    %122 = tpu.matmul %19, %121, %cst_71 {dimension_numbers = #tpu.dot_dimension_numbers<[1], [0], [0], [1], [0, 0, 1, 1], [], []>} : vector<16x432xbf16>, vector<432x128xbf16>, vector<16x128xf32> -> vector<16x128xf32>
    %123 = vector.broadcast %20 : vector<16x1xf32> to vector<16x128xf32>
    %124 = arith.addf %122, %123 : vector<16x128xf32>
    %c5_72 = arith.constant 5 : index
    %c0_73 = arith.constant 0 : index
    %c12_74 = arith.constant 12 : index
    %125 = vector.load %arg11[%c5_72, %c0_73, %c12_74] : memref<18x16x256xbf16, #tpu.memory_space<vmem>>, vector<1x16x128xbf16>
    %126 = vector.shape_cast %125 : vector<1x16x128xbf16> to vector<16x128xbf16>
    %127 = arith.extf %126 : vector<16x128xbf16> to vector<16x128xf32>
    %128 = arith.addf %124, %127 : vector<16x128xf32>
    %cst_75 = arith.constant 0.000000e+00 : f32
    %129 = vector.broadcast %cst_75 : f32 to vector<16x128xf32>
    %130 = arith.maximumf %128, %129 : vector<16x128xf32>
    %131 = arith.truncf %130 : vector<16x128xf32> to vector<16x128xbf16>
    %c0_76 = arith.constant 0 : index
    %c0_77 = arith.constant 0 : index
    %c0_78 = arith.constant 0 : index
    %132 = vector.load %arg8[%c0_76, %c0_77, %c0_78] : memref<4x128x256xbf16, #tpu.memory_space<vmem>>, vector<1x128x256xbf16>
    %133 = vector.shape_cast %132 : vector<1x128x256xbf16> to vector<128x256xbf16>
    %cst_79 = arith.constant dense<0.000000e+00> : vector<16x256xf32>
    %134 = tpu.matmul %131, %133, %cst_79 {dimension_numbers = #tpu.dot_dimension_numbers<[1], [0], [0], [1], [0, 0, 1, 1], [], []>} : vector<16x128xbf16>, vector<128x256xbf16>, vector<16x256xf32> -> vector<16x256xf32>
    %c1_80 = arith.constant 1 : index
    %c0_81 = arith.constant 0 : index
    %c0_82 = arith.constant 0 : index
    %135 = vector.load %arg8[%c1_80, %c0_81, %c0_82] : memref<4x128x256xbf16, #tpu.memory_space<vmem>>, vector<1x128x256xbf16>
    %136 = vector.shape_cast %135 : vector<1x128x256xbf16> to vector<128x256xbf16>
    %cst_83 = arith.constant dense<0.000000e+00> : vector<16x256xf32>
    %137 = tpu.matmul %131, %136, %cst_83 {dimension_numbers = #tpu.dot_dimension_numbers<[1], [0], [0], [1], [0, 0, 1, 1], [], []>} : vector<16x128xbf16>, vector<128x256xbf16>, vector<16x256xf32> -> vector<16x256xf32>
    %138 = arith.maximumf %134, %137 : vector<16x256xf32>
    %c2_84 = arith.constant 2 : index
    %c0_85 = arith.constant 0 : index
    %c0_86 = arith.constant 0 : index
    %139 = vector.load %arg8[%c2_84, %c0_85, %c0_86] : memref<4x128x256xbf16, #tpu.memory_space<vmem>>, vector<1x128x256xbf16>
    %140 = vector.shape_cast %139 : vector<1x128x256xbf16> to vector<128x256xbf16>
    %cst_87 = arith.constant dense<0.000000e+00> : vector<16x256xf32>
    %141 = tpu.matmul %131, %140, %cst_87 {dimension_numbers = #tpu.dot_dimension_numbers<[1], [0], [0], [1], [0, 0, 1, 1], [], []>} : vector<16x128xbf16>, vector<128x256xbf16>, vector<16x256xf32> -> vector<16x256xf32>
    %142 = arith.maximumf %138, %141 : vector<16x256xf32>
    %c3_88 = arith.constant 3 : index
    %c0_89 = arith.constant 0 : index
    %c0_90 = arith.constant 0 : index
    %143 = vector.load %arg8[%c3_88, %c0_89, %c0_90] : memref<4x128x256xbf16, #tpu.memory_space<vmem>>, vector<1x128x256xbf16>
    %144 = vector.shape_cast %143 : vector<1x128x256xbf16> to vector<128x256xbf16>
    %cst_91 = arith.constant dense<0.000000e+00> : vector<16x256xf32>
    %145 = tpu.matmul %131, %144, %cst_91 {dimension_numbers = #tpu.dot_dimension_numbers<[1], [0], [0], [1], [0, 0, 1, 1], [], []>} : vector<16x128xbf16>, vector<128x256xbf16>, vector<16x256xf32> -> vector<16x256xf32>
    %146 = arith.maximumf %142, %145 : vector<16x256xf32>
    %147 = arith.truncf %146 : vector<16x256xf32> to vector<16x256xbf16>
    %c0_92 = arith.constant 0 : index
    %c2_93 = arith.constant 2 : index
    %c0_94 = arith.constant 0 : index
    %c0_95 = arith.constant 0 : index
    %148 = vector.load %arg10[%c0_92, %c2_93, %c0_94, %c0_95] : memref<1x6x16x256xbf16, #tpu.memory_space<vmem>>, vector<1x1x16x256xbf16>
    %149 = vector.shape_cast %148 : vector<1x1x16x256xbf16> to vector<16x256xbf16>
    %150 = vector.shape_cast %147 : vector<16x256xbf16> to vector<1x1x16x256xbf16>
    tpu.vector_store %arg10[%c0_92, %c2_93, %c0_94, %c0_95], %150 {strides = array<i32>} : memref<1x6x16x256xbf16, #tpu.memory_space<vmem>>, vector<1x1x16x256xbf16>,
    %c8 = arith.constant 8 : index
    %c0_96 = arith.constant 0 : index
    %c0_97 = arith.constant 0 : index
    %151 = vector.load %arg12[%c8, %c0_96, %c0_97] : memref<18x16x256xbf16, #tpu.memory_space<vmem>>, vector<1x16x256xbf16>
    %152 = vector.shape_cast %151 : vector<1x16x256xbf16> to vector<16x256xbf16>
    %c9 = arith.constant 9 : index
    %c0_98 = arith.constant 0 : index
    %c0_99 = arith.constant 0 : index
    %153 = vector.load %arg12[%c9, %c0_98, %c0_99] : memref<18x16x256xbf16, #tpu.memory_space<vmem>>, vector<1x16x256xbf16>
    %154 = vector.shape_cast %153 : vector<1x16x256xbf16> to vector<16x256xbf16>
    %c10 = arith.constant 10 : index
    %c0_100 = arith.constant 0 : index
    %c0_101 = arith.constant 0 : index
    %155 = vector.load %arg12[%c10, %c0_100, %c0_101] : memref<18x16x256xbf16, #tpu.memory_space<vmem>>, vector<1x16x256xbf16>
    %156 = vector.shape_cast %155 : vector<1x16x256xbf16> to vector<16x256xbf16>
    %157 = vector.extract_strided_slice %152 {offsets = [0, 0], sizes = [16, 128], strides = [1, 1]} : vector<16x256xbf16> to vector<16x128xbf16>
    %158 = vector.extract_strided_slice %152 {offsets = [0, 1], sizes = [16, 128], strides = [1, 1]} : vector<16x256xbf16> to vector<16x128xbf16>
    %159 = vector.extract_strided_slice %152 {offsets = [0, 2], sizes = [16, 128], strides = [1, 1]} : vector<16x256xbf16> to vector<16x128xbf16>
    %160 = vector.extract_strided_slice %152 {offsets = [0, 11], sizes = [16, 128], strides = [1, 1]} : vector<16x256xbf16> to vector<16x128xbf16>
    %161 = vector.extract_strided_slice %152 {offsets = [0, 12], sizes = [16, 128], strides = [1, 1]} : vector<16x256xbf16> to vector<16x128xbf16>
    %162 = vector.extract_strided_slice %152 {offsets = [0, 13], sizes = [16, 128], strides = [1, 1]} : vector<16x256xbf16> to vector<16x128xbf16>
    %163 = vector.extract_strided_slice %152 {offsets = [0, 22], sizes = [16, 128], strides = [1, 1]} : vector<16x256xbf16> to vector<16x128xbf16>
    %164 = vector.extract_strided_slice %152 {offsets = [0, 23], sizes = [16, 128], strides = [1, 1]} : vector<16x256xbf16> to vector<16x128xbf16>
    %165 = vector.extract_strided_slice %152 {offsets = [0, 24], sizes = [16, 128], strides = [1, 1]} : vector<16x256xbf16> to vector<16x128xbf16>
    %166 = vector.extract_strided_slice %154 {offsets = [0, 0], sizes = [16, 128], strides = [1, 1]} : vector<16x256xbf16> to vector<16x128xbf16>
    %167 = vector.extract_strided_slice %154 {offsets = [0, 1], sizes = [16, 128], strides = [1, 1]} : vector<16x256xbf16> to vector<16x128xbf16>
    %168 = vector.extract_strided_slice %154 {offsets = [0, 2], sizes = [16, 128], strides = [1, 1]} : vector<16x256xbf16> to vector<16x128xbf16>
    %169 = vector.extract_strided_slice %154 {offsets = [0, 11], sizes = [16, 128], strides = [1, 1]} : vector<16x256xbf16> to vector<16x128xbf16>
    %170 = vector.extract_strided_slice %154 {offsets = [0, 12], sizes = [16, 128], strides = [1, 1]} : vector<16x256xbf16> to vector<16x128xbf16>
    %171 = vector.extract_strided_slice %154 {offsets = [0, 13], sizes = [16, 128], strides = [1, 1]} : vector<16x256xbf16> to vector<16x128xbf16>
    %172 = vector.extract_strided_slice %154 {offsets = [0, 22], sizes = [16, 128], strides = [1, 1]} : vector<16x256xbf16> to vector<16x128xbf16>
    %173 = vector.extract_strided_slice %154 {offsets = [0, 23], sizes = [16, 128], strides = [1, 1]} : vector<16x256xbf16> to vector<16x128xbf16>
    %174 = vector.extract_strided_slice %154 {offsets = [0, 24], sizes = [16, 128], strides = [1, 1]} : vector<16x256xbf16> to vector<16x128xbf16>
    %175 = vector.extract_strided_slice %156 {offsets = [0, 0], sizes = [16, 128], strides = [1, 1]} : vector<16x256xbf16> to vector<16x128xbf16>
    %176 = vector.extract_strided_slice %156 {offsets = [0, 1], sizes = [16, 128], strides = [1, 1]} : vector<16x256xbf16> to vector<16x128xbf16>
    %177 = vector.extract_strided_slice %156 {offsets = [0, 2], sizes = [16, 128], strides = [1, 1]} : vector<16x256xbf16> to vector<16x128xbf16>
    %178 = vector.extract_strided_slice %156 {offsets = [0, 11], sizes = [16, 128], strides = [1, 1]} : vector<16x256xbf16> to vector<16x128xbf16>
    %179 = vector.extract_strided_slice %156 {offsets = [0, 12], sizes = [16, 128], strides = [1, 1]} : vector<16x256xbf16> to vector<16x128xbf16>
    %180 = vector.extract_strided_slice %156 {offsets = [0, 13], sizes = [16, 128], strides = [1, 1]} : vector<16x256xbf16> to vector<16x128xbf16>
    %181 = vector.extract_strided_slice %156 {offsets = [0, 22], sizes = [16, 128], strides = [1, 1]} : vector<16x256xbf16> to vector<16x128xbf16>
    %182 = vector.extract_strided_slice %156 {offsets = [0, 23], sizes = [16, 128], strides = [1, 1]} : vector<16x256xbf16> to vector<16x128xbf16>
    %183 = vector.extract_strided_slice %156 {offsets = [0, 24], sizes = [16, 128], strides = [1, 1]} : vector<16x256xbf16> to vector<16x128xbf16>
    %184 = tpu.concatenate %157, %158, %159, %160, %161, %162, %163, %164, %165, %166, %167, %168, %169, %170, %171, %172 in 0 : vector<16x128xbf16>, vector<16x128xbf16>, vector<16x128xbf16>, vector<16x128xbf16>, vector<16x128xbf16>, vector<16x128xbf16>, vector<16x128xbf16>, vector<16x128xbf16>, vector<16x128xbf16>, vector<16x128xbf16>, vector<16x128xbf16>, vector<16x128xbf16>, vector<16x128xbf16>, vector<16x128xbf16>, vector<16x128xbf16>, vector<16x128xbf16> -> vector<256x128xbf16>
    %185 = tpu.concatenate %173, %174, %175, %176, %177, %178, %179, %180, %181, %182, %183 in 0 : vector<16x128xbf16>, vector<16x128xbf16>, vector<16x128xbf16>, vector<16x128xbf16>, vector<16x128xbf16>, vector<16x128xbf16>, vector<16x128xbf16>, vector<16x128xbf16>, vector<16x128xbf16>, vector<16x128xbf16>, vector<16x128xbf16> -> vector<176x128xbf16>
    %186 = tpu.concatenate %184, %185 in 0 : vector<256x128xbf16>, vector<176x128xbf16> -> vector<432x128xbf16>
    %cst_102 = arith.constant dense<0.000000e+00> : vector<16x128xf32>
    %187 = tpu.matmul %19, %186, %cst_102 {dimension_numbers = #tpu.dot_dimension_numbers<[1], [0], [0], [1], [0, 0, 1, 1], [], []>} : vector<16x432xbf16>, vector<432x128xbf16>, vector<16x128xf32> -> vector<16x128xf32>
    %188 = vector.broadcast %20 : vector<16x1xf32> to vector<16x128xf32>
    %189 = arith.addf %187, %188 : vector<16x128xf32>
    %c9_103 = arith.constant 9 : index
    %c0_104 = arith.constant 0 : index
    %c12_105 = arith.constant 12 : index
    %190 = vector.load %arg11[%c9_103, %c0_104, %c12_105] : memref<18x16x256xbf16, #tpu.memory_space<vmem>>, vector<1x16x128xbf16>
    %191 = vector.shape_cast %190 : vector<1x16x128xbf16> to vector<16x128xbf16>
    %192 = arith.extf %191 : vector<16x128xbf16> to vector<16x128xf32>
    %193 = arith.addf %189, %192 : vector<16x128xf32>
    %cst_106 = arith.constant 0.000000e+00 : f32
    %194 = vector.broadcast %cst_106 : f32 to vector<16x128xf32>
    %195 = arith.maximumf %193, %194 : vector<16x128xf32>
    %196 = arith.truncf %195 : vector<16x128xf32> to vector<16x128xbf16>
    %c0_107 = arith.constant 0 : index
    %c0_108 = arith.constant 0 : index
    %c0_109 = arith.constant 0 : index
    %197 = vector.load %arg8[%c0_107, %c0_108, %c0_109] : memref<4x128x256xbf16, #tpu.memory_space<vmem>>, vector<1x128x256xbf16>
    %198 = vector.shape_cast %197 : vector<1x128x256xbf16> to vector<128x256xbf16>
    %cst_110 = arith.constant dense<0.000000e+00> : vector<16x256xf32>
    %199 = tpu.matmul %196, %198, %cst_110 {dimension_numbers = #tpu.dot_dimension_numbers<[1], [0], [0], [1], [0, 0, 1, 1], [], []>} : vector<16x128xbf16>, vector<128x256xbf16>, vector<16x256xf32> -> vector<16x256xf32>
    %c1_111 = arith.constant 1 : index
    %c0_112 = arith.constant 0 : index
    %c0_113 = arith.constant 0 : index
    %200 = vector.load %arg8[%c1_111, %c0_112, %c0_113] : memref<4x128x256xbf16, #tpu.memory_space<vmem>>, vector<1x128x256xbf16>
    %201 = vector.shape_cast %200 : vector<1x128x256xbf16> to vector<128x256xbf16>
    %cst_114 = arith.constant dense<0.000000e+00> : vector<16x256xf32>
    %202 = tpu.matmul %196, %201, %cst_114 {dimension_numbers = #tpu.dot_dimension_numbers<[1], [0], [0], [1], [0, 0, 1, 1], [], []>} : vector<16x128xbf16>, vector<128x256xbf16>, vector<16x256xf32> -> vector<16x256xf32>
    %203 = arith.maximumf %199, %202 : vector<16x256xf32>
    %c2_115 = arith.constant 2 : index
    %c0_116 = arith.constant 0 : index
    %c0_117 = arith.constant 0 : index
    %204 = vector.load %arg8[%c2_115, %c0_116, %c0_117] : memref<4x128x256xbf16, #tpu.memory_space<vmem>>, vector<1x128x256xbf16>
    %205 = vector.shape_cast %204 : vector<1x128x256xbf16> to vector<128x256xbf16>
    %cst_118 = arith.constant dense<0.000000e+00> : vector<16x256xf32>
    %206 = tpu.matmul %196, %205, %cst_118 {dimension_numbers = #tpu.dot_dimension_numbers<[1], [0], [0], [1], [0, 0, 1, 1], [], []>} : vector<16x128xbf16>, vector<128x256xbf16>, vector<16x256xf32> -> vector<16x256xf32>
    %207 = arith.maximumf %203, %206 : vector<16x256xf32>
    %c3_119 = arith.constant 3 : index
    %c0_120 = arith.constant 0 : index
    %c0_121 = arith.constant 0 : index
    %208 = vector.load %arg8[%c3_119, %c0_120, %c0_121] : memref<4x128x256xbf16, #tpu.memory_space<vmem>>, vector<1x128x256xbf16>
    %209 = vector.shape_cast %208 : vector<1x128x256xbf16> to vector<128x256xbf16>
    %cst_122 = arith.constant dense<0.000000e+00> : vector<16x256xf32>
    %210 = tpu.matmul %196, %209, %cst_122 {dimension_numbers = #tpu.dot_dimension_numbers<[1], [0], [0], [1], [0, 0, 1, 1], [], []>} : vector<16x128xbf16>, vector<128x256xbf16>, vector<16x256xf32> -> vector<16x256xf32>
    %211 = arith.maximumf %207, %210 : vector<16x256xf32>
    %212 = arith.truncf %211 : vector<16x256xf32> to vector<16x256xbf16>
    %c0_123 = arith.constant 0 : index
    %c3_124 = arith.constant 3 : index
    %c0_125 = arith.constant 0 : index
    %c0_126 = arith.constant 0 : index
    %213 = vector.load %arg10[%c0_123, %c3_124, %c0_125, %c0_126] : memref<1x6x16x256xbf16, #tpu.memory_space<vmem>>, vector<1x1x16x256xbf16>
    %214 = vector.shape_cast %213 : vector<1x1x16x256xbf16> to vector<16x256xbf16>
    %215 = vector.shape_cast %212 : vector<16x256xbf16> to vector<1x1x16x256xbf16>
    tpu.vector_store %arg10[%c0_123, %c3_124, %c0_125, %c0_126], %215 {strides = array<i32>} : memref<1x6x16x256xbf16, #tpu.memory_space<vmem>>, vector<1x1x16x256xbf16>,
    %c12_127 = arith.constant 12 : index
    %c0_128 = arith.constant 0 : index
    %c0_129 = arith.constant 0 : index
    %216 = vector.load %arg12[%c12_127, %c0_128, %c0_129] : memref<18x16x256xbf16, #tpu.memory_space<vmem>>, vector<1x16x256xbf16>
    %217 = vector.shape_cast %216 : vector<1x16x256xbf16> to vector<16x256xbf16>
    %c13 = arith.constant 13 : index
    %c0_130 = arith.constant 0 : index
    %c0_131 = arith.constant 0 : index
    %218 = vector.load %arg12[%c13, %c0_130, %c0_131] : memref<18x16x256xbf16, #tpu.memory_space<vmem>>, vector<1x16x256xbf16>
    %219 = vector.shape_cast %218 : vector<1x16x256xbf16> to vector<16x256xbf16>
    %c14 = arith.constant 14 : index
    %c0_132 = arith.constant 0 : index
    %c0_133 = arith.constant 0 : index
    %220 = vector.load %arg12[%c14, %c0_132, %c0_133] : memref<18x16x256xbf16, #tpu.memory_space<vmem>>, vector<1x16x256xbf16>
    %221 = vector.shape_cast %220 : vector<1x16x256xbf16> to vector<16x256xbf16>
    %222 = vector.extract_strided_slice %217 {offsets = [0, 0], sizes = [16, 128], strides = [1, 1]} : vector<16x256xbf16> to vector<16x128xbf16>
    %223 = vector.extract_strided_slice %217 {offsets = [0, 1], sizes = [16, 128], strides = [1, 1]} : vector<16x256xbf16> to vector<16x128xbf16>
    %224 = vector.extract_strided_slice %217 {offsets = [0, 2], sizes = [16, 128], strides = [1, 1]} : vector<16x256xbf16> to vector<16x128xbf16>
    %225 = vector.extract_strided_slice %217 {offsets = [0, 11], sizes = [16, 128], strides = [1, 1]} : vector<16x256xbf16> to vector<16x128xbf16>
    %226 = vector.extract_strided_slice %217 {offsets = [0, 12], sizes = [16, 128], strides = [1, 1]} : vector<16x256xbf16> to vector<16x128xbf16>
    %227 = vector.extract_strided_slice %217 {offsets = [0, 13], sizes = [16, 128], strides = [1, 1]} : vector<16x256xbf16> to vector<16x128xbf16>
    %228 = vector.extract_strided_slice %217 {offsets = [0, 22], sizes = [16, 128], strides = [1, 1]} : vector<16x256xbf16> to vector<16x128xbf16>
    %229 = vector.extract_strided_slice %217 {offsets = [0, 23], sizes = [16, 128], strides = [1, 1]} : vector<16x256xbf16> to vector<16x128xbf16>
    %230 = vector.extract_strided_slice %217 {offsets = [0, 24], sizes = [16, 128], strides = [1, 1]} : vector<16x256xbf16> to vector<16x128xbf16>
    %231 = vector.extract_strided_slice %219 {offsets = [0, 0], sizes = [16, 128], strides = [1, 1]} : vector<16x256xbf16> to vector<16x128xbf16>
    %232 = vector.extract_strided_slice %219 {offsets = [0, 1], sizes = [16, 128], strides = [1, 1]} : vector<16x256xbf16> to vector<16x128xbf16>
    %233 = vector.extract_strided_slice %219 {offsets = [0, 2], sizes = [16, 128], strides = [1, 1]} : vector<16x256xbf16> to vector<16x128xbf16>
    %234 = vector.extract_strided_slice %219 {offsets = [0, 11], sizes = [16, 128], strides = [1, 1]} : vector<16x256xbf16> to vector<16x128xbf16>
    %235 = vector.extract_strided_slice %219 {offsets = [0, 12], sizes = [16, 128], strides = [1, 1]} : vector<16x256xbf16> to vector<16x128xbf16>
    %236 = vector.extract_strided_slice %219 {offsets = [0, 13], sizes = [16, 128], strides = [1, 1]} : vector<16x256xbf16> to vector<16x128xbf16>
    %237 = vector.extract_strided_slice %219 {offsets = [0, 22], sizes = [16, 128], strides = [1, 1]} : vector<16x256xbf16> to vector<16x128xbf16>
    %238 = vector.extract_strided_slice %219 {offsets = [0, 23], sizes = [16, 128], strides = [1, 1]} : vector<16x256xbf16> to vector<16x128xbf16>
    %239 = vector.extract_strided_slice %219 {offsets = [0, 24], sizes = [16, 128], strides = [1, 1]} : vector<16x256xbf16> to vector<16x128xbf16>
    %240 = vector.extract_strided_slice %221 {offsets = [0, 0], sizes = [16, 128], strides = [1, 1]} : vector<16x256xbf16> to vector<16x128xbf16>
    %241 = vector.extract_strided_slice %221 {offsets = [0, 1], sizes = [16, 128], strides = [1, 1]} : vector<16x256xbf16> to vector<16x128xbf16>
    %242 = vector.extract_strided_slice %221 {offsets = [0, 2], sizes = [16, 128], strides = [1, 1]} : vector<16x256xbf16> to vector<16x128xbf16>
    %243 = vector.extract_strided_slice %221 {offsets = [0, 11], sizes = [16, 128], strides = [1, 1]} : vector<16x256xbf16> to vector<16x128xbf16>
    %244 = vector.extract_strided_slice %221 {offsets = [0, 12], sizes = [16, 128], strides = [1, 1]} : vector<16x256xbf16> to vector<16x128xbf16>
    %245 = vector.extract_strided_slice %221 {offsets = [0, 13], sizes = [16, 128], strides = [1, 1]} : vector<16x256xbf16> to vector<16x128xbf16>
    %246 = vector.extract_strided_slice %221 {offsets = [0, 22], sizes = [16, 128], strides = [1, 1]} : vector<16x256xbf16> to vector<16x128xbf16>
    %247 = vector.extract_strided_slice %221 {offsets = [0, 23], sizes = [16, 128], strides = [1, 1]} : vector<16x256xbf16> to vector<16x128xbf16>
    %248 = vector.extract_strided_slice %221 {offsets = [0, 24], sizes = [16, 128], strides = [1, 1]} : vector<16x256xbf16> to vector<16x128xbf16>
    %249 = tpu.concatenate %222, %223, %224, %225, %226, %227, %228, %229, %230, %231, %232, %233, %234, %235, %236, %237 in 0 : vector<16x128xbf16>, vector<16x128xbf16>, vector<16x128xbf16>, vector<16x128xbf16>, vector<16x128xbf16>, vector<16x128xbf16>, vector<16x128xbf16>, vector<16x128xbf16>, vector<16x128xbf16>, vector<16x128xbf16>, vector<16x128xbf16>, vector<16x128xbf16>, vector<16x128xbf16>, vector<16x128xbf16>, vector<16x128xbf16>, vector<16x128xbf16> -> vector<256x128xbf16>
    %250 = tpu.concatenate %238, %239, %240, %241, %242, %243, %244, %245, %246, %247, %248 in 0 : vector<16x128xbf16>, vector<16x128xbf16>, vector<16x128xbf16>, vector<16x128xbf16>, vector<16x128xbf16>, vector<16x128xbf16>, vector<16x128xbf16>, vector<16x128xbf16>, vector<16x128xbf16>, vector<16x128xbf16>, vector<16x128xbf16> -> vector<176x128xbf16>
    %251 = tpu.concatenate %249, %250 in 0 : vector<256x128xbf16>, vector<176x128xbf16> -> vector<432x128xbf16>
    %cst_134 = arith.constant dense<0.000000e+00> : vector<16x128xf32>
    %252 = tpu.matmul %19, %251, %cst_134 {dimension_numbers = #tpu.dot_dimension_numbers<[1], [0], [0], [1], [0, 0, 1, 1], [], []>} : vector<16x432xbf16>, vector<432x128xbf16>, vector<16x128xf32> -> vector<16x128xf32>
    %253 = vector.broadcast %20 : vector<16x1xf32> to vector<16x128xf32>
    %254 = arith.addf %252, %253 : vector<16x128xf32>
    %c13_135 = arith.constant 13 : index
    %c0_136 = arith.constant 0 : index
    %c12_137 = arith.constant 12 : index
    %255 = vector.load %arg11[%c13_135, %c0_136, %c12_137] : memref<18x16x256xbf16, #tpu.memory_space<vmem>>, vector<1x16x128xbf16>
    %256 = vector.shape_cast %255 : vector<1x16x128xbf16> to vector<16x128xbf16>
    %257 = arith.extf %256 : vector<16x128xbf16> to vector<16x128xf32>
    %258 = arith.addf %254, %257 : vector<16x128xf32>
    %cst_138 = arith.constant 0.000000e+00 : f32
    %259 = vector.broadcast %cst_138 : f32 to vector<16x128xf32>
    %260 = arith.maximumf %258, %259 : vector<16x128xf32>
    %261 = arith.truncf %260 : vector<16x128xf32> to vector<16x128xbf16>
    %c0_139 = arith.constant 0 : index
    %c0_140 = arith.constant 0 : index
    %c0_141 = arith.constant 0 : index
    %262 = vector.load %arg8[%c0_139, %c0_140, %c0_141] : memref<4x128x256xbf16, #tpu.memory_space<vmem>>, vector<1x128x256xbf16>
    %263 = vector.shape_cast %262 : vector<1x128x256xbf16> to vector<128x256xbf16>
    %cst_142 = arith.constant dense<0.000000e+00> : vector<16x256xf32>
    %264 = tpu.matmul %261, %263, %cst_142 {dimension_numbers = #tpu.dot_dimension_numbers<[1], [0], [0], [1], [0, 0, 1, 1], [], []>} : vector<16x128xbf16>, vector<128x256xbf16>, vector<16x256xf32> -> vector<16x256xf32>
    %c1_143 = arith.constant 1 : index
    %c0_144 = arith.constant 0 : index
    %c0_145 = arith.constant 0 : index
    %265 = vector.load %arg8[%c1_143, %c0_144, %c0_145] : memref<4x128x256xbf16, #tpu.memory_space<vmem>>, vector<1x128x256xbf16>
    %266 = vector.shape_cast %265 : vector<1x128x256xbf16> to vector<128x256xbf16>
    %cst_146 = arith.constant dense<0.000000e+00> : vector<16x256xf32>
    %267 = tpu.matmul %261, %266, %cst_146 {dimension_numbers = #tpu.dot_dimension_numbers<[1], [0], [0], [1], [0, 0, 1, 1], [], []>} : vector<16x128xbf16>, vector<128x256xbf16>, vector<16x256xf32> -> vector<16x256xf32>
    %268 = arith.maximumf %264, %267 : vector<16x256xf32>
    %c2_147 = arith.constant 2 : index
    %c0_148 = arith.constant 0 : index
    %c0_149 = arith.constant 0 : index
    %269 = vector.load %arg8[%c2_147, %c0_148, %c0_149] : memref<4x128x256xbf16, #tpu.memory_space<vmem>>, vector<1x128x256xbf16>
    %270 = vector.shape_cast %269 : vector<1x128x256xbf16> to vector<128x256xbf16>
    %cst_150 = arith.constant dense<0.000000e+00> : vector<16x256xf32>
    %271 = tpu.matmul %261, %270, %cst_150 {dimension_numbers = #tpu.dot_dimension_numbers<[1], [0], [0], [1], [0, 0, 1, 1], [], []>} : vector<16x128xbf16>, vector<128x256xbf16>, vector<16x256xf32> -> vector<16x256xf32>
    %272 = arith.maximumf %268, %271 : vector<16x256xf32>
    %c3_151 = arith.constant 3 : index
    %c0_152 = arith.constant 0 : index
    %c0_153 = arith.constant 0 : index
    %273 = vector.load %arg8[%c3_151, %c0_152, %c0_153] : memref<4x128x256xbf16, #tpu.memory_space<vmem>>, vector<1x128x256xbf16>
    %274 = vector.shape_cast %273 : vector<1x128x256xbf16> to vector<128x256xbf16>
    %cst_154 = arith.constant dense<0.000000e+00> : vector<16x256xf32>
    %275 = tpu.matmul %261, %274, %cst_154 {dimension_numbers = #tpu.dot_dimension_numbers<[1], [0], [0], [1], [0, 0, 1, 1], [], []>} : vector<16x128xbf16>, vector<128x256xbf16>, vector<16x256xf32> -> vector<16x256xf32>
    %276 = arith.maximumf %272, %275 : vector<16x256xf32>
    %277 = arith.truncf %276 : vector<16x256xf32> to vector<16x256xbf16>
    %c0_155 = arith.constant 0 : index
    %c4_156 = arith.constant 4 : index
    %c0_157 = arith.constant 0 : index
    %c0_158 = arith.constant 0 : index
    %278 = vector.load %arg10[%c0_155, %c4_156, %c0_157, %c0_158] : memref<1x6x16x256xbf16, #tpu.memory_space<vmem>>, vector<1x1x16x256xbf16>
    %279 = vector.shape_cast %278 : vector<1x1x16x256xbf16> to vector<16x256xbf16>
    %280 = vector.shape_cast %277 : vector<16x256xbf16> to vector<1x1x16x256xbf16>
    tpu.vector_store %arg10[%c0_155, %c4_156, %c0_157, %c0_158], %280 {strides = array<i32>} : memref<1x6x16x256xbf16, #tpu.memory_space<vmem>>, vector<1x1x16x256xbf16>,
    return
  }
  func.func @transform_0(%arg0: i32) -> (i32, i32, i32, i32) {
    %c0_i32 = arith.constant 0 : i32
    %c0_i32_0 = arith.constant 0 : i32
    %c0_i32_1 = arith.constant 0 : i32
    %c0_i32_2 = arith.constant 0 : i32
    return %arg0, %c0_i32, %c0_i32_0, %c0_i32_1 : i32, i32, i32, i32
  }
  func.func @transform_1(%arg0: i32) -> (i32, i32) {
    %c0_i32 = arith.constant 0 : i32
    %c0_i32_0 = arith.constant 0 : i32
    %c0_i32_1 = arith.constant 0 : i32
    return %c0_i32, %c0_i32_0 : i32, i32
  }
  func.func @transform_2(%arg0: i32) -> (i32, i32) {
    %c0_i32 = arith.constant 0 : i32
    %c0_i32_0 = arith.constant 0 : i32
    %c0_i32_1 = arith.constant 0 : i32
    return %c0_i32, %c0_i32_0 : i32, i32
  }
  func.func @transform_3(%arg0: i32) -> (i32, i32) {
    %c0_i32 = arith.constant 0 : i32
    %c0_i32_0 = arith.constant 0 : i32
    %c0_i32_1 = arith.constant 0 : i32
    return %c0_i32, %c0_i32_0 : i32, i32
  }
  func.func @transform_4(%arg0: i32) -> (i32, i32) {
    %c0_i32 = arith.constant 0 : i32
    %c0_i32_0 = arith.constant 0 : i32
    %c0_i32_1 = arith.constant 0 : i32
    return %c0_i32, %c0_i32_0 : i32, i32
  }
  func.func @transform_5(%arg0: i32) -> (i32, i32) {
    %c0_i32 = arith.constant 0 : i32
    %c0_i32_0 = arith.constant 0 : i32
    %c0_i32_1 = arith.constant 0 : i32
    return %c0_i32, %c0_i32_0 : i32, i32
  }
  func.func @transform_6(%arg0: i32) -> (i32, i32) {
    %c0_i32 = arith.constant 0 : i32
    %c0_i32_0 = arith.constant 0 : i32
    %c0_i32_1 = arith.constant 0 : i32
    return %c0_i32, %c0_i32_0 : i32, i32
  }
  func.func @transform_7(%arg0: i32) -> (i32, i32, i32) {
    %c0_i32 = arith.constant 0 : i32
    %c0_i32_0 = arith.constant 0 : i32
    %c0_i32_1 = arith.constant 0 : i32
    %c0_i32_2 = arith.constant 0 : i32
    return %c0_i32, %c0_i32_0, %c0_i32_1 : i32, i32, i32
  }
  func.func @transform_8(%arg0: i32) -> (i32, i32) {
    %c0_i32 = arith.constant 0 : i32
    %c0_i32_0 = arith.constant 0 : i32
    %c0_i32_1 = arith.constant 0 : i32
    return %c0_i32, %c0_i32_0 : i32, i32
  }
  func.func @transform_9(%arg0: i32) -> (i32, i32, i32, i32) {
    %c0_i32 = arith.constant 0 : i32
    %c0_i32_0 = arith.constant 0 : i32
    %c0_i32_1 = arith.constant 0 : i32
    %c0_i32_2 = arith.constant 0 : i32
    return %arg0, %c0_i32, %c0_i32_0, %c0_i32_1 : i32, i32, i32, i32
  }
}

module attributes {stable_mosaic.version = 11 : i64} {
  func.func @_block_pool_to_flat_kernel(%arg0: i32, %arg1: memref<1x6x16x256xbf16, #tpu.memory_space<vmem>>, %arg2: memref<16x432xbf16, #tpu.memory_space<vmem>>, %arg3: memref<16x1xf32, #tpu.memory_space<vmem>>, %arg4: memref<16x432xbf16, #tpu.memory_space<vmem>>, %arg5: memref<16x1xf32, #tpu.memory_space<vmem>>, %arg6: memref<16x432xbf16, #tpu.memory_space<vmem>>, %arg7: memref<16x1xf32, #tpu.memory_space<vmem>>, %arg8: memref<4x4x128x128xbf16, #tpu.memory_space<vmem>>, %arg9: memref<1x128xf32, #tpu.memory_space<vmem>>, %arg10: memref<1x16x128xbf16, #tpu.memory_space<vmem>>, %arg11: memref<6x16x256xbf16, #tpu.memory_space<vmem>>, %arg12: memref<6x16x256xbf16, #tpu.memory_space<vmem>>) attributes {dimension_semantics = [#tpu.dimension_semantics<parallel>], iteration_bounds = array<i64: 2>, scalar_prefetch = 0 : i64, scratch_operands = 2 : i64, tpu.core_type = #tpu.core_type<tc>, window_params = [{transform_indices = @transform_0, window_bounds = array<i64: 1, 6, 16, 256>}, {pipeline_mode = #tpu.pipeline_mode<synchronous>, transform_indices = @transform_1, window_bounds = array<i64: 16, 432>}, {pipeline_mode = #tpu.pipeline_mode<synchronous>, transform_indices = @transform_2, window_bounds = array<i64: 16, 1>}, {pipeline_mode = #tpu.pipeline_mode<synchronous>, transform_indices = @transform_3, window_bounds = array<i64: 16, 432>}, {pipeline_mode = #tpu.pipeline_mode<synchronous>, transform_indices = @transform_4, window_bounds = array<i64: 16, 1>}, {pipeline_mode = #tpu.pipeline_mode<synchronous>, transform_indices = @transform_5, window_bounds = array<i64: 16, 432>}, {pipeline_mode = #tpu.pipeline_mode<synchronous>, transform_indices = @transform_6, window_bounds = array<i64: 16, 1>}, {pipeline_mode = #tpu.pipeline_mode<synchronous>, transform_indices = @transform_7, window_bounds = array<i64: 4, 4, 128, 128>}, {pipeline_mode = #tpu.pipeline_mode<synchronous>, transform_indices = @transform_8, window_bounds = array<i64: 1, 128>}, {transform_indices = @transform_9, window_bounds = array<i64: 1, 16, 128>}]} {
    %cst = arith.constant 0.000000e+00 : bf16
    %0 = vector.broadcast %cst : bf16 to vector<6x16x256xbf16>
    %c0 = arith.constant 0 : index
    %c0_0 = arith.constant 0 : index
    %c0_1 = arith.constant 0 : index
    %1 = vector.load %arg11[%c0, %c0_0, %c0_1] : memref<6x16x256xbf16, #tpu.memory_space<vmem>>, vector<6x16x256xbf16>
    tpu.vector_store %arg11[%c0, %c0_0, %c0_1], %0 {strides = array<i32>} : memref<6x16x256xbf16, #tpu.memory_space<vmem>>, vector<6x16x256xbf16>,
    %cst_2 = arith.constant 0.000000e+00 : bf16
    %2 = vector.broadcast %cst_2 : bf16 to vector<6x16x256xbf16>
    %c0_3 = arith.constant 0 : index
    %c0_4 = arith.constant 0 : index
    %c0_5 = arith.constant 0 : index
    %3 = vector.load %arg12[%c0_3, %c0_4, %c0_5] : memref<6x16x256xbf16, #tpu.memory_space<vmem>>, vector<6x16x256xbf16>
    tpu.vector_store %arg12[%c0_3, %c0_4, %c0_5], %2 {strides = array<i32>} : memref<6x16x256xbf16, #tpu.memory_space<vmem>>, vector<6x16x256xbf16>,
    %c0_6 = arith.constant 0 : index
    %c0_7 = arith.constant 0 : index
    %4 = vector.load %arg9[%c0_6, %c0_7] : memref<1x128xf32, #tpu.memory_space<vmem>>, vector<1x128xf32>
    %c0_8 = arith.constant 0 : index
    %c0_9 = arith.constant 0 : index
    %5 = vector.load %arg2[%c0_8, %c0_9] : memref<16x432xbf16, #tpu.memory_space<vmem>>, vector<16x432xbf16>
    %c0_10 = arith.constant 0 : index
    %c0_11 = arith.constant 0 : index
    %6 = vector.load %arg3[%c0_10, %c0_11] : memref<16x1xf32, #tpu.memory_space<vmem>>, vector<16x1xf32>
    %c0_i32 = arith.constant 0 : i32
    %c4_i32 = arith.constant 4 : i32
    %7 = arith.addi %c0_i32, %c4_i32 : i32
    %c1_i32 = arith.constant 1 : i32
    scf.for %arg13 = %c0_i32 to %7 step %c1_i32  : i32 {
      %c0_i32_159 = arith.constant 0 : i32
      %266 = arith.addi %arg13, %c0_i32_159 : i32
      %c0_160 = arith.constant 0 : index
      %267 = arith.index_cast %266 : i32 to index
      %c0_161 = arith.constant 0 : index
      %c0_162 = arith.constant 0 : index
      %268 = vector.load %arg1[%c0_160, %267, %c0_161, %c0_162] : memref<1x6x16x256xbf16, #tpu.memory_space<vmem>>, vector<1x1x16x256xbf16>
      %269 = vector.shape_cast %268 : vector<1x1x16x256xbf16> to vector<16x256xbf16>
      %c1_i32_163 = arith.constant 1 : i32
      %270 = arith.addi %arg13, %c1_i32_163 : i32
      %c0_164 = arith.constant 0 : index
      %271 = arith.index_cast %270 : i32 to index
      %c0_165 = arith.constant 0 : index
      %c0_166 = arith.constant 0 : index
      %272 = vector.load %arg1[%c0_164, %271, %c0_165, %c0_166] : memref<1x6x16x256xbf16, #tpu.memory_space<vmem>>, vector<1x1x16x256xbf16>
      %273 = vector.shape_cast %272 : vector<1x1x16x256xbf16> to vector<16x256xbf16>
      %c2_i32 = arith.constant 2 : i32
      %274 = arith.addi %arg13, %c2_i32 : i32
      %c0_167 = arith.constant 0 : index
      %275 = arith.index_cast %274 : i32 to index
      %c0_168 = arith.constant 0 : index
      %c0_169 = arith.constant 0 : index
      %276 = vector.load %arg1[%c0_167, %275, %c0_168, %c0_169] : memref<1x6x16x256xbf16, #tpu.memory_space<vmem>>, vector<1x1x16x256xbf16>
      %277 = vector.shape_cast %276 : vector<1x1x16x256xbf16> to vector<16x256xbf16>
      %278 = vector.extract_strided_slice %269 {offsets = [0, 0], sizes = [16, 128], strides = [1, 1]} : vector<16x256xbf16> to vector<16x128xbf16>
      %279 = vector.extract_strided_slice %269 {offsets = [0, 1], sizes = [16, 128], strides = [1, 1]} : vector<16x256xbf16> to vector<16x128xbf16>
      %280 = vector.extract_strided_slice %269 {offsets = [0, 2], sizes = [16, 128], strides = [1, 1]} : vector<16x256xbf16> to vector<16x128xbf16>
      %281 = vector.extract_strided_slice %269 {offsets = [0, 7], sizes = [16, 128], strides = [1, 1]} : vector<16x256xbf16> to vector<16x128xbf16>
      %282 = vector.extract_strided_slice %269 {offsets = [0, 8], sizes = [16, 128], strides = [1, 1]} : vector<16x256xbf16> to vector<16x128xbf16>
      %283 = vector.extract_strided_slice %269 {offsets = [0, 9], sizes = [16, 128], strides = [1, 1]} : vector<16x256xbf16> to vector<16x128xbf16>
      %284 = vector.extract_strided_slice %269 {offsets = [0, 14], sizes = [16, 128], strides = [1, 1]} : vector<16x256xbf16> to vector<16x128xbf16>
      %285 = vector.extract_strided_slice %269 {offsets = [0, 15], sizes = [16, 128], strides = [1, 1]} : vector<16x256xbf16> to vector<16x128xbf16>
      %286 = vector.extract_strided_slice %269 {offsets = [0, 16], sizes = [16, 128], strides = [1, 1]} : vector<16x256xbf16> to vector<16x128xbf16>
      %287 = vector.extract_strided_slice %273 {offsets = [0, 0], sizes = [16, 128], strides = [1, 1]} : vector<16x256xbf16> to vector<16x128xbf16>
      %288 = vector.extract_strided_slice %273 {offsets = [0, 1], sizes = [16, 128], strides = [1, 1]} : vector<16x256xbf16> to vector<16x128xbf16>
      %289 = vector.extract_strided_slice %273 {offsets = [0, 2], sizes = [16, 128], strides = [1, 1]} : vector<16x256xbf16> to vector<16x128xbf16>
      %290 = vector.extract_strided_slice %273 {offsets = [0, 7], sizes = [16, 128], strides = [1, 1]} : vector<16x256xbf16> to vector<16x128xbf16>
      %291 = vector.extract_strided_slice %273 {offsets = [0, 8], sizes = [16, 128], strides = [1, 1]} : vector<16x256xbf16> to vector<16x128xbf16>
      %292 = vector.extract_strided_slice %273 {offsets = [0, 9], sizes = [16, 128], strides = [1, 1]} : vector<16x256xbf16> to vector<16x128xbf16>
      %293 = vector.extract_strided_slice %273 {offsets = [0, 14], sizes = [16, 128], strides = [1, 1]} : vector<16x256xbf16> to vector<16x128xbf16>
      %294 = vector.extract_strided_slice %273 {offsets = [0, 15], sizes = [16, 128], strides = [1, 1]} : vector<16x256xbf16> to vector<16x128xbf16>
      %295 = vector.extract_strided_slice %273 {offsets = [0, 16], sizes = [16, 128], strides = [1, 1]} : vector<16x256xbf16> to vector<16x128xbf16>
      %296 = vector.extract_strided_slice %277 {offsets = [0, 0], sizes = [16, 128], strides = [1, 1]} : vector<16x256xbf16> to vector<16x128xbf16>
      %297 = vector.extract_strided_slice %277 {offsets = [0, 1], sizes = [16, 128], strides = [1, 1]} : vector<16x256xbf16> to vector<16x128xbf16>
      %298 = vector.extract_strided_slice %277 {offsets = [0, 2], sizes = [16, 128], strides = [1, 1]} : vector<16x256xbf16> to vector<16x128xbf16>
      %299 = vector.extract_strided_slice %277 {offsets = [0, 7], sizes = [16, 128], strides = [1, 1]} : vector<16x256xbf16> to vector<16x128xbf16>
      %300 = vector.extract_strided_slice %277 {offsets = [0, 8], sizes = [16, 128], strides = [1, 1]} : vector<16x256xbf16> to vector<16x128xbf16>
      %301 = vector.extract_strided_slice %277 {offsets = [0, 9], sizes = [16, 128], strides = [1, 1]} : vector<16x256xbf16> to vector<16x128xbf16>
      %302 = vector.extract_strided_slice %277 {offsets = [0, 14], sizes = [16, 128], strides = [1, 1]} : vector<16x256xbf16> to vector<16x128xbf16>
      %303 = vector.extract_strided_slice %277 {offsets = [0, 15], sizes = [16, 128], strides = [1, 1]} : vector<16x256xbf16> to vector<16x128xbf16>
      %304 = vector.extract_strided_slice %277 {offsets = [0, 16], sizes = [16, 128], strides = [1, 1]} : vector<16x256xbf16> to vector<16x128xbf16>
      %305 = tpu.concatenate %278, %279, %280, %281, %282, %283, %284, %285, %286, %287, %288, %289, %290, %291, %292, %293 in 0 : vector<16x128xbf16>, vector<16x128xbf16>, vector<16x128xbf16>, vector<16x128xbf16>, vector<16x128xbf16>, vector<16x128xbf16>, vector<16x128xbf16>, vector<16x128xbf16>, vector<16x128xbf16>, vector<16x128xbf16>, vector<16x128xbf16>, vector<16x128xbf16>, vector<16x128xbf16>, vector<16x128xbf16>, vector<16x128xbf16>, vector<16x128xbf16> -> vector<256x128xbf16>
      %306 = tpu.concatenate %294, %295, %296, %297, %298, %299, %300, %301, %302, %303, %304 in 0 : vector<16x128xbf16>, vector<16x128xbf16>, vector<16x128xbf16>, vector<16x128xbf16>, vector<16x128xbf16>, vector<16x128xbf16>, vector<16x128xbf16>, vector<16x128xbf16>, vector<16x128xbf16>, vector<16x128xbf16>, vector<16x128xbf16> -> vector<176x128xbf16>
      %307 = tpu.concatenate %305, %306 in 0 : vector<256x128xbf16>, vector<176x128xbf16> -> vector<432x128xbf16>
      %cst_170 = arith.constant dense<0.000000e+00> : vector<16x128xf32>
      %308 = tpu.matmul %5, %307, %cst_170 {dimension_numbers = #tpu.dot_dimension_numbers<[1], [0], [0], [1], [0, 0, 1, 1], [], []>} : vector<16x432xbf16>, vector<432x128xbf16>, vector<16x128xf32> -> vector<16x128xf32>
      %309 = vector.broadcast %6 : vector<16x1xf32> to vector<16x128xf32>
      %310 = arith.addf %308, %309 : vector<16x128xf32>
      %cst_171 = arith.constant 0.000000e+00 : f32
      %311 = vector.broadcast %cst_171 : f32 to vector<16x128xf32>
      %312 = arith.maximumf %310, %311 : vector<16x128xf32>
      %313 = vector.broadcast %4 : vector<1x128xf32> to vector<16x128xf32>
      %314 = arith.mulf %312, %313 : vector<16x128xf32>
      %315 = arith.truncf %314 : vector<16x128xf32> to vector<16x128xbf16>
      %c1_i32_172 = arith.constant 1 : i32
      %316 = arith.addi %arg13, %c1_i32_172 : i32
      %317 = arith.index_cast %316 : i32 to index
      %c0_173 = arith.constant 0 : index
      %c8_174 = arith.constant 8 : index
      %318 = vector.load %arg11[%317, %c0_173, %c8_174] : memref<6x16x256xbf16, #tpu.memory_space<vmem>>, vector<1x16x128xbf16>
      %319 = vector.shape_cast %318 : vector<1x16x128xbf16> to vector<16x128xbf16>
      %320 = vector.shape_cast %315 : vector<16x128xbf16> to vector<1x16x128xbf16>
      tpu.vector_store %arg11[%317, %c0_173, %c8_174], %320 {strides = array<i32>} : memref<6x16x256xbf16, #tpu.memory_space<vmem>>, vector<1x16x128xbf16>,
    }
    %c4_i32_12 = arith.constant 4 : i32
    %c0_13 = arith.constant 0 : index
    %c0_14 = arith.constant 0 : index
    %8 = vector.load %arg4[%c0_13, %c0_14] : memref<16x432xbf16, #tpu.memory_space<vmem>>, vector<16x432xbf16>
    %c0_15 = arith.constant 0 : index
    %c0_16 = arith.constant 0 : index
    %9 = vector.load %arg5[%c0_15, %c0_16] : memref<16x1xf32, #tpu.memory_space<vmem>>, vector<16x1xf32>
    %c0_i32_17 = arith.constant 0 : i32
    %c4_i32_18 = arith.constant 4 : i32
    %10 = arith.addi %c0_i32_17, %c4_i32_18 : i32
    %c1_i32_19 = arith.constant 1 : i32
    scf.for %arg13 = %c0_i32_17 to %10 step %c1_i32_19  : i32 {
      %c0_i32_159 = arith.constant 0 : i32
      %266 = arith.addi %arg13, %c0_i32_159 : i32
      %267 = arith.index_cast %266 : i32 to index
      %c0_160 = arith.constant 0 : index
      %c0_161 = arith.constant 0 : index
      %268 = vector.load %arg11[%267, %c0_160, %c0_161] : memref<6x16x256xbf16, #tpu.memory_space<vmem>>, vector<1x16x256xbf16>
      %269 = vector.shape_cast %268 : vector<1x16x256xbf16> to vector<16x256xbf16>
      %c1_i32_162 = arith.constant 1 : i32
      %270 = arith.addi %arg13, %c1_i32_162 : i32
      %271 = arith.index_cast %270 : i32 to index
      %c0_163 = arith.constant 0 : index
      %c0_164 = arith.constant 0 : index
      %272 = vector.load %arg11[%271, %c0_163, %c0_164] : memref<6x16x256xbf16, #tpu.memory_space<vmem>>, vector<1x16x256xbf16>
      %273 = vector.shape_cast %272 : vector<1x16x256xbf16> to vector<16x256xbf16>
      %c2_i32 = arith.constant 2 : i32
      %274 = arith.addi %arg13, %c2_i32 : i32
      %275 = arith.index_cast %274 : i32 to index
      %c0_165 = arith.constant 0 : index
      %c0_166 = arith.constant 0 : index
      %276 = vector.load %arg11[%275, %c0_165, %c0_166] : memref<6x16x256xbf16, #tpu.memory_space<vmem>>, vector<1x16x256xbf16>
      %277 = vector.shape_cast %276 : vector<1x16x256xbf16> to vector<16x256xbf16>
      %278 = vector.extract_strided_slice %269 {offsets = [0, 0], sizes = [16, 128], strides = [1, 1]} : vector<16x256xbf16> to vector<16x128xbf16>
      %279 = vector.extract_strided_slice %269 {offsets = [0, 1], sizes = [16, 128], strides = [1, 1]} : vector<16x256xbf16> to vector<16x128xbf16>
      %280 = vector.extract_strided_slice %269 {offsets = [0, 2], sizes = [16, 128], strides = [1, 1]} : vector<16x256xbf16> to vector<16x128xbf16>
      %281 = vector.extract_strided_slice %269 {offsets = [0, 7], sizes = [16, 128], strides = [1, 1]} : vector<16x256xbf16> to vector<16x128xbf16>
      %282 = vector.extract_strided_slice %269 {offsets = [0, 8], sizes = [16, 128], strides = [1, 1]} : vector<16x256xbf16> to vector<16x128xbf16>
      %283 = vector.extract_strided_slice %269 {offsets = [0, 9], sizes = [16, 128], strides = [1, 1]} : vector<16x256xbf16> to vector<16x128xbf16>
      %284 = vector.extract_strided_slice %269 {offsets = [0, 14], sizes = [16, 128], strides = [1, 1]} : vector<16x256xbf16> to vector<16x128xbf16>
      %285 = vector.extract_strided_slice %269 {offsets = [0, 15], sizes = [16, 128], strides = [1, 1]} : vector<16x256xbf16> to vector<16x128xbf16>
      %286 = vector.extract_strided_slice %269 {offsets = [0, 16], sizes = [16, 128], strides = [1, 1]} : vector<16x256xbf16> to vector<16x128xbf16>
      %287 = vector.extract_strided_slice %273 {offsets = [0, 0], sizes = [16, 128], strides = [1, 1]} : vector<16x256xbf16> to vector<16x128xbf16>
      %288 = vector.extract_strided_slice %273 {offsets = [0, 1], sizes = [16, 128], strides = [1, 1]} : vector<16x256xbf16> to vector<16x128xbf16>
      %289 = vector.extract_strided_slice %273 {offsets = [0, 2], sizes = [16, 128], strides = [1, 1]} : vector<16x256xbf16> to vector<16x128xbf16>
      %290 = vector.extract_strided_slice %273 {offsets = [0, 7], sizes = [16, 128], strides = [1, 1]} : vector<16x256xbf16> to vector<16x128xbf16>
      %291 = vector.extract_strided_slice %273 {offsets = [0, 8], sizes = [16, 128], strides = [1, 1]} : vector<16x256xbf16> to vector<16x128xbf16>
      %292 = vector.extract_strided_slice %273 {offsets = [0, 9], sizes = [16, 128], strides = [1, 1]} : vector<16x256xbf16> to vector<16x128xbf16>
      %293 = vector.extract_strided_slice %273 {offsets = [0, 14], sizes = [16, 128], strides = [1, 1]} : vector<16x256xbf16> to vector<16x128xbf16>
      %294 = vector.extract_strided_slice %273 {offsets = [0, 15], sizes = [16, 128], strides = [1, 1]} : vector<16x256xbf16> to vector<16x128xbf16>
      %295 = vector.extract_strided_slice %273 {offsets = [0, 16], sizes = [16, 128], strides = [1, 1]} : vector<16x256xbf16> to vector<16x128xbf16>
      %296 = vector.extract_strided_slice %277 {offsets = [0, 0], sizes = [16, 128], strides = [1, 1]} : vector<16x256xbf16> to vector<16x128xbf16>
      %297 = vector.extract_strided_slice %277 {offsets = [0, 1], sizes = [16, 128], strides = [1, 1]} : vector<16x256xbf16> to vector<16x128xbf16>
      %298 = vector.extract_strided_slice %277 {offsets = [0, 2], sizes = [16, 128], strides = [1, 1]} : vector<16x256xbf16> to vector<16x128xbf16>
      %299 = vector.extract_strided_slice %277 {offsets = [0, 7], sizes = [16, 128], strides = [1, 1]} : vector<16x256xbf16> to vector<16x128xbf16>
      %300 = vector.extract_strided_slice %277 {offsets = [0, 8], sizes = [16, 128], strides = [1, 1]} : vector<16x256xbf16> to vector<16x128xbf16>
      %301 = vector.extract_strided_slice %277 {offsets = [0, 9], sizes = [16, 128], strides = [1, 1]} : vector<16x256xbf16> to vector<16x128xbf16>
      %302 = vector.extract_strided_slice %277 {offsets = [0, 14], sizes = [16, 128], strides = [1, 1]} : vector<16x256xbf16> to vector<16x128xbf16>
      %303 = vector.extract_strided_slice %277 {offsets = [0, 15], sizes = [16, 128], strides = [1, 1]} : vector<16x256xbf16> to vector<16x128xbf16>
      %304 = vector.extract_strided_slice %277 {offsets = [0, 16], sizes = [16, 128], strides = [1, 1]} : vector<16x256xbf16> to vector<16x128xbf16>
      %305 = tpu.concatenate %278, %279, %280, %281, %282, %283, %284, %285, %286, %287, %288, %289, %290, %291, %292, %293 in 0 : vector<16x128xbf16>, vector<16x128xbf16>, vector<16x128xbf16>, vector<16x128xbf16>, vector<16x128xbf16>, vector<16x128xbf16>, vector<16x128xbf16>, vector<16x128xbf16>, vector<16x128xbf16>, vector<16x128xbf16>, vector<16x128xbf16>, vector<16x128xbf16>, vector<16x128xbf16>, vector<16x128xbf16>, vector<16x128xbf16>, vector<16x128xbf16> -> vector<256x128xbf16>
      %306 = tpu.concatenate %294, %295, %296, %297, %298, %299, %300, %301, %302, %303, %304 in 0 : vector<16x128xbf16>, vector<16x128xbf16>, vector<16x128xbf16>, vector<16x128xbf16>, vector<16x128xbf16>, vector<16x128xbf16>, vector<16x128xbf16>, vector<16x128xbf16>, vector<16x128xbf16>, vector<16x128xbf16>, vector<16x128xbf16> -> vector<176x128xbf16>
      %307 = tpu.concatenate %305, %306 in 0 : vector<256x128xbf16>, vector<176x128xbf16> -> vector<432x128xbf16>
      %cst_167 = arith.constant dense<0.000000e+00> : vector<16x128xf32>
      %308 = tpu.matmul %8, %307, %cst_167 {dimension_numbers = #tpu.dot_dimension_numbers<[1], [0], [0], [1], [0, 0, 1, 1], [], []>} : vector<16x432xbf16>, vector<432x128xbf16>, vector<16x128xf32> -> vector<16x128xf32>
      %309 = vector.broadcast %9 : vector<16x1xf32> to vector<16x128xf32>
      %310 = arith.addf %308, %309 : vector<16x128xf32>
      %cst_168 = arith.constant 0.000000e+00 : f32
      %311 = vector.broadcast %cst_168 : f32 to vector<16x128xf32>
      %312 = arith.maximumf %310, %311 : vector<16x128xf32>
      %313 = vector.broadcast %4 : vector<1x128xf32> to vector<16x128xf32>
      %314 = arith.mulf %312, %313 : vector<16x128xf32>
      %315 = arith.truncf %314 : vector<16x128xf32> to vector<16x128xbf16>
      %c1_i32_169 = arith.constant 1 : i32
      %316 = arith.addi %arg13, %c1_i32_169 : i32
      %317 = arith.index_cast %316 : i32 to index
      %c0_170 = arith.constant 0 : index
      %c8_171 = arith.constant 8 : index
      %318 = vector.load %arg12[%317, %c0_170, %c8_171] : memref<6x16x256xbf16, #tpu.memory_space<vmem>>, vector<1x16x128xbf16>
      %319 = vector.shape_cast %318 : vector<1x16x128xbf16> to vector<16x128xbf16>
      %320 = vector.shape_cast %315 : vector<16x128xbf16> to vector<1x16x128xbf16>
      tpu.vector_store %arg12[%317, %c0_170, %c8_171], %320 {strides = array<i32>} : memref<6x16x256xbf16, #tpu.memory_space<vmem>>, vector<1x16x128xbf16>,
    }
    %c4_i32_20 = arith.constant 4 : i32
    %c0_21 = arith.constant 0 : index
    %c0_22 = arith.constant 0 : index
    %11 = vector.load %arg6[%c0_21, %c0_22] : memref<16x432xbf16, #tpu.memory_space<vmem>>, vector<16x432xbf16>
    %c0_23 = arith.constant 0 : index
    %c0_24 = arith.constant 0 : index
    %12 = vector.load %arg7[%c0_23, %c0_24] : memref<16x1xf32, #tpu.memory_space<vmem>>, vector<16x1xf32>
    %cst_25 = arith.constant 0.000000e+00 : f32
    %13 = vector.broadcast %cst_25 : f32 to vector<16x128xf32>
    %c0_26 = arith.constant 0 : index
    %c0_27 = arith.constant 0 : index
    %c0_28 = arith.constant 0 : index
    %14 = vector.load %arg12[%c0_26, %c0_27, %c0_28] : memref<6x16x256xbf16, #tpu.memory_space<vmem>>, vector<1x16x256xbf16>
    %15 = vector.shape_cast %14 : vector<1x16x256xbf16> to vector<16x256xbf16>
    %c1 = arith.constant 1 : index
    %c0_29 = arith.constant 0 : index
    %c0_30 = arith.constant 0 : index
    %16 = vector.load %arg12[%c1, %c0_29, %c0_30] : memref<6x16x256xbf16, #tpu.memory_space<vmem>>, vector<1x16x256xbf16>
    %17 = vector.shape_cast %16 : vector<1x16x256xbf16> to vector<16x256xbf16>
    %c2 = arith.constant 2 : index
    %c0_31 = arith.constant 0 : index
    %c0_32 = arith.constant 0 : index
    %18 = vector.load %arg12[%c2, %c0_31, %c0_32] : memref<6x16x256xbf16, #tpu.memory_space<vmem>>, vector<1x16x256xbf16>
    %19 = vector.shape_cast %18 : vector<1x16x256xbf16> to vector<16x256xbf16>
    %20 = vector.extract_strided_slice %15 {offsets = [0, 0], sizes = [16, 128], strides = [1, 1]} : vector<16x256xbf16> to vector<16x128xbf16>
    %21 = vector.extract_strided_slice %15 {offsets = [0, 1], sizes = [16, 128], strides = [1, 1]} : vector<16x256xbf16> to vector<16x128xbf16>
    %22 = vector.extract_strided_slice %15 {offsets = [0, 2], sizes = [16, 128], strides = [1, 1]} : vector<16x256xbf16> to vector<16x128xbf16>
    %23 = vector.extract_strided_slice %15 {offsets = [0, 7], sizes = [16, 128], strides = [1, 1]} : vector<16x256xbf16> to vector<16x128xbf16>
    %24 = vector.extract_strided_slice %15 {offsets = [0, 8], sizes = [16, 128], strides = [1, 1]} : vector<16x256xbf16> to vector<16x128xbf16>
    %25 = vector.extract_strided_slice %15 {offsets = [0, 9], sizes = [16, 128], strides = [1, 1]} : vector<16x256xbf16> to vector<16x128xbf16>
    %26 = vector.extract_strided_slice %15 {offsets = [0, 14], sizes = [16, 128], strides = [1, 1]} : vector<16x256xbf16> to vector<16x128xbf16>
    %27 = vector.extract_strided_slice %15 {offsets = [0, 15], sizes = [16, 128], strides = [1, 1]} : vector<16x256xbf16> to vector<16x128xbf16>
    %28 = vector.extract_strided_slice %15 {offsets = [0, 16], sizes = [16, 128], strides = [1, 1]} : vector<16x256xbf16> to vector<16x128xbf16>
    %29 = vector.extract_strided_slice %17 {offsets = [0, 0], sizes = [16, 128], strides = [1, 1]} : vector<16x256xbf16> to vector<16x128xbf16>
    %30 = vector.extract_strided_slice %17 {offsets = [0, 1], sizes = [16, 128], strides = [1, 1]} : vector<16x256xbf16> to vector<16x128xbf16>
    %31 = vector.extract_strided_slice %17 {offsets = [0, 2], sizes = [16, 128], strides = [1, 1]} : vector<16x256xbf16> to vector<16x128xbf16>
    %32 = vector.extract_strided_slice %17 {offsets = [0, 7], sizes = [16, 128], strides = [1, 1]} : vector<16x256xbf16> to vector<16x128xbf16>
    %33 = vector.extract_strided_slice %17 {offsets = [0, 8], sizes = [16, 128], strides = [1, 1]} : vector<16x256xbf16> to vector<16x128xbf16>
    %34 = vector.extract_strided_slice %17 {offsets = [0, 9], sizes = [16, 128], strides = [1, 1]} : vector<16x256xbf16> to vector<16x128xbf16>
    %35 = vector.extract_strided_slice %17 {offsets = [0, 14], sizes = [16, 128], strides = [1, 1]} : vector<16x256xbf16> to vector<16x128xbf16>
    %36 = vector.extract_strided_slice %17 {offsets = [0, 15], sizes = [16, 128], strides = [1, 1]} : vector<16x256xbf16> to vector<16x128xbf16>
    %37 = vector.extract_strided_slice %17 {offsets = [0, 16], sizes = [16, 128], strides = [1, 1]} : vector<16x256xbf16> to vector<16x128xbf16>
    %38 = vector.extract_strided_slice %19 {offsets = [0, 0], sizes = [16, 128], strides = [1, 1]} : vector<16x256xbf16> to vector<16x128xbf16>
    %39 = vector.extract_strided_slice %19 {offsets = [0, 1], sizes = [16, 128], strides = [1, 1]} : vector<16x256xbf16> to vector<16x128xbf16>
    %40 = vector.extract_strided_slice %19 {offsets = [0, 2], sizes = [16, 128], strides = [1, 1]} : vector<16x256xbf16> to vector<16x128xbf16>
    %41 = vector.extract_strided_slice %19 {offsets = [0, 7], sizes = [16, 128], strides = [1, 1]} : vector<16x256xbf16> to vector<16x128xbf16>
    %42 = vector.extract_strided_slice %19 {offsets = [0, 8], sizes = [16, 128], strides = [1, 1]} : vector<16x256xbf16> to vector<16x128xbf16>
    %43 = vector.extract_strided_slice %19 {offsets = [0, 9], sizes = [16, 128], strides = [1, 1]} : vector<16x256xbf16> to vector<16x128xbf16>
    %44 = vector.extract_strided_slice %19 {offsets = [0, 14], sizes = [16, 128], strides = [1, 1]} : vector<16x256xbf16> to vector<16x128xbf16>
    %45 = vector.extract_strided_slice %19 {offsets = [0, 15], sizes = [16, 128], strides = [1, 1]} : vector<16x256xbf16> to vector<16x128xbf16>
    %46 = vector.extract_strided_slice %19 {offsets = [0, 16], sizes = [16, 128], strides = [1, 1]} : vector<16x256xbf16> to vector<16x128xbf16>
    %47 = tpu.concatenate %20, %21, %22, %23, %24, %25, %26, %27, %28, %29, %30, %31, %32, %33, %34, %35 in 0 : vector<16x128xbf16>, vector<16x128xbf16>, vector<16x128xbf16>, vector<16x128xbf16>, vector<16x128xbf16>, vector<16x128xbf16>, vector<16x128xbf16>, vector<16x128xbf16>, vector<16x128xbf16>, vector<16x128xbf16>, vector<16x128xbf16>, vector<16x128xbf16>, vector<16x128xbf16>, vector<16x128xbf16>, vector<16x128xbf16>, vector<16x128xbf16> -> vector<256x128xbf16>
    %48 = tpu.concatenate %36, %37, %38, %39, %40, %41, %42, %43, %44, %45, %46 in 0 : vector<16x128xbf16>, vector<16x128xbf16>, vector<16x128xbf16>, vector<16x128xbf16>, vector<16x128xbf16>, vector<16x128xbf16>, vector<16x128xbf16>, vector<16x128xbf16>, vector<16x128xbf16>, vector<16x128xbf16>, vector<16x128xbf16> -> vector<176x128xbf16>
    %49 = tpu.concatenate %47, %48 in 0 : vector<256x128xbf16>, vector<176x128xbf16> -> vector<432x128xbf16>
    %cst_33 = arith.constant dense<0.000000e+00> : vector<16x128xf32>
    %50 = tpu.matmul %11, %49, %cst_33 {dimension_numbers = #tpu.dot_dimension_numbers<[1], [0], [0], [1], [0, 0, 1, 1], [], []>} : vector<16x432xbf16>, vector<432x128xbf16>, vector<16x128xf32> -> vector<16x128xf32>
    %51 = vector.broadcast %12 : vector<16x1xf32> to vector<16x128xf32>
    %52 = arith.addf %50, %51 : vector<16x128xf32>
    %c1_34 = arith.constant 1 : index
    %c0_35 = arith.constant 0 : index
    %c8 = arith.constant 8 : index
    %53 = vector.load %arg11[%c1_34, %c0_35, %c8] : memref<6x16x256xbf16, #tpu.memory_space<vmem>>, vector<1x16x128xbf16>
    %54 = vector.shape_cast %53 : vector<1x16x128xbf16> to vector<16x128xbf16>
    %55 = arith.extf %54 : vector<16x128xbf16> to vector<16x128xf32>
    %56 = arith.addf %52, %55 : vector<16x128xf32>
    %cst_36 = arith.constant 0.000000e+00 : f32
    %57 = vector.broadcast %cst_36 : f32 to vector<16x128xf32>
    %58 = arith.maximumf %56, %57 : vector<16x128xf32>
    %59 = arith.truncf %58 : vector<16x128xf32> to vector<16x128xbf16>
    %c0_37 = arith.constant 0 : index
    %c0_38 = arith.constant 0 : index
    %c0_39 = arith.constant 0 : index
    %c0_40 = arith.constant 0 : index
    %60 = vector.load %arg8[%c0_37, %c0_38, %c0_39, %c0_40] : memref<4x4x128x128xbf16, #tpu.memory_space<vmem>>, vector<1x1x128x128xbf16>
    %61 = vector.shape_cast %60 : vector<1x1x128x128xbf16> to vector<128x128xbf16>
    %cst_41 = arith.constant dense<0.000000e+00> : vector<16x128xf32>
    %62 = tpu.matmul %59, %61, %cst_41 {dimension_numbers = #tpu.dot_dimension_numbers<[1], [0], [0], [1], [0, 0, 1, 1], [], []>} : vector<16x128xbf16>, vector<128x128xbf16>, vector<16x128xf32> -> vector<16x128xf32>
    %c0_42 = arith.constant 0 : index
    %c1_43 = arith.constant 1 : index
    %c0_44 = arith.constant 0 : index
    %c0_45 = arith.constant 0 : index
    %63 = vector.load %arg8[%c0_42, %c1_43, %c0_44, %c0_45] : memref<4x4x128x128xbf16, #tpu.memory_space<vmem>>, vector<1x1x128x128xbf16>
    %64 = vector.shape_cast %63 : vector<1x1x128x128xbf16> to vector<128x128xbf16>
    %cst_46 = arith.constant dense<0.000000e+00> : vector<16x128xf32>
    %65 = tpu.matmul %59, %64, %cst_46 {dimension_numbers = #tpu.dot_dimension_numbers<[1], [0], [0], [1], [0, 0, 1, 1], [], []>} : vector<16x128xbf16>, vector<128x128xbf16>, vector<16x128xf32> -> vector<16x128xf32>
    %66 = arith.maximumf %62, %65 : vector<16x128xf32>
    %c0_47 = arith.constant 0 : index
    %c2_48 = arith.constant 2 : index
    %c0_49 = arith.constant 0 : index
    %c0_50 = arith.constant 0 : index
    %67 = vector.load %arg8[%c0_47, %c2_48, %c0_49, %c0_50] : memref<4x4x128x128xbf16, #tpu.memory_space<vmem>>, vector<1x1x128x128xbf16>
    %68 = vector.shape_cast %67 : vector<1x1x128x128xbf16> to vector<128x128xbf16>
    %cst_51 = arith.constant dense<0.000000e+00> : vector<16x128xf32>
    %69 = tpu.matmul %59, %68, %cst_51 {dimension_numbers = #tpu.dot_dimension_numbers<[1], [0], [0], [1], [0, 0, 1, 1], [], []>} : vector<16x128xbf16>, vector<128x128xbf16>, vector<16x128xf32> -> vector<16x128xf32>
    %70 = arith.maximumf %66, %69 : vector<16x128xf32>
    %c0_52 = arith.constant 0 : index
    %c3 = arith.constant 3 : index
    %c0_53 = arith.constant 0 : index
    %c0_54 = arith.constant 0 : index
    %71 = vector.load %arg8[%c0_52, %c3, %c0_53, %c0_54] : memref<4x4x128x128xbf16, #tpu.memory_space<vmem>>, vector<1x1x128x128xbf16>
    %72 = vector.shape_cast %71 : vector<1x1x128x128xbf16> to vector<128x128xbf16>
    %cst_55 = arith.constant dense<0.000000e+00> : vector<16x128xf32>
    %73 = tpu.matmul %59, %72, %cst_55 {dimension_numbers = #tpu.dot_dimension_numbers<[1], [0], [0], [1], [0, 0, 1, 1], [], []>} : vector<16x128xbf16>, vector<128x128xbf16>, vector<16x128xf32> -> vector<16x128xf32>
    %74 = arith.maximumf %70, %73 : vector<16x128xf32>
    %75 = arith.addf %13, %74 : vector<16x128xf32>
    %c1_56 = arith.constant 1 : index
    %c0_57 = arith.constant 0 : index
    %c0_58 = arith.constant 0 : index
    %76 = vector.load %arg12[%c1_56, %c0_57, %c0_58] : memref<6x16x256xbf16, #tpu.memory_space<vmem>>, vector<1x16x256xbf16>
    %77 = vector.shape_cast %76 : vector<1x16x256xbf16> to vector<16x256xbf16>
    %c2_59 = arith.constant 2 : index
    %c0_60 = arith.constant 0 : index
    %c0_61 = arith.constant 0 : index
    %78 = vector.load %arg12[%c2_59, %c0_60, %c0_61] : memref<6x16x256xbf16, #tpu.memory_space<vmem>>, vector<1x16x256xbf16>
    %79 = vector.shape_cast %78 : vector<1x16x256xbf16> to vector<16x256xbf16>
    %c3_62 = arith.constant 3 : index
    %c0_63 = arith.constant 0 : index
    %c0_64 = arith.constant 0 : index
    %80 = vector.load %arg12[%c3_62, %c0_63, %c0_64] : memref<6x16x256xbf16, #tpu.memory_space<vmem>>, vector<1x16x256xbf16>
    %81 = vector.shape_cast %80 : vector<1x16x256xbf16> to vector<16x256xbf16>
    %82 = vector.extract_strided_slice %77 {offsets = [0, 0], sizes = [16, 128], strides = [1, 1]} : vector<16x256xbf16> to vector<16x128xbf16>
    %83 = vector.extract_strided_slice %77 {offsets = [0, 1], sizes = [16, 128], strides = [1, 1]} : vector<16x256xbf16> to vector<16x128xbf16>
    %84 = vector.extract_strided_slice %77 {offsets = [0, 2], sizes = [16, 128], strides = [1, 1]} : vector<16x256xbf16> to vector<16x128xbf16>
    %85 = vector.extract_strided_slice %77 {offsets = [0, 7], sizes = [16, 128], strides = [1, 1]} : vector<16x256xbf16> to vector<16x128xbf16>
    %86 = vector.extract_strided_slice %77 {offsets = [0, 8], sizes = [16, 128], strides = [1, 1]} : vector<16x256xbf16> to vector<16x128xbf16>
    %87 = vector.extract_strided_slice %77 {offsets = [0, 9], sizes = [16, 128], strides = [1, 1]} : vector<16x256xbf16> to vector<16x128xbf16>
    %88 = vector.extract_strided_slice %77 {offsets = [0, 14], sizes = [16, 128], strides = [1, 1]} : vector<16x256xbf16> to vector<16x128xbf16>
    %89 = vector.extract_strided_slice %77 {offsets = [0, 15], sizes = [16, 128], strides = [1, 1]} : vector<16x256xbf16> to vector<16x128xbf16>
    %90 = vector.extract_strided_slice %77 {offsets = [0, 16], sizes = [16, 128], strides = [1, 1]} : vector<16x256xbf16> to vector<16x128xbf16>
    %91 = vector.extract_strided_slice %79 {offsets = [0, 0], sizes = [16, 128], strides = [1, 1]} : vector<16x256xbf16> to vector<16x128xbf16>
    %92 = vector.extract_strided_slice %79 {offsets = [0, 1], sizes = [16, 128], strides = [1, 1]} : vector<16x256xbf16> to vector<16x128xbf16>
    %93 = vector.extract_strided_slice %79 {offsets = [0, 2], sizes = [16, 128], strides = [1, 1]} : vector<16x256xbf16> to vector<16x128xbf16>
    %94 = vector.extract_strided_slice %79 {offsets = [0, 7], sizes = [16, 128], strides = [1, 1]} : vector<16x256xbf16> to vector<16x128xbf16>
    %95 = vector.extract_strided_slice %79 {offsets = [0, 8], sizes = [16, 128], strides = [1, 1]} : vector<16x256xbf16> to vector<16x128xbf16>
    %96 = vector.extract_strided_slice %79 {offsets = [0, 9], sizes = [16, 128], strides = [1, 1]} : vector<16x256xbf16> to vector<16x128xbf16>
    %97 = vector.extract_strided_slice %79 {offsets = [0, 14], sizes = [16, 128], strides = [1, 1]} : vector<16x256xbf16> to vector<16x128xbf16>
    %98 = vector.extract_strided_slice %79 {offsets = [0, 15], sizes = [16, 128], strides = [1, 1]} : vector<16x256xbf16> to vector<16x128xbf16>
    %99 = vector.extract_strided_slice %79 {offsets = [0, 16], sizes = [16, 128], strides = [1, 1]} : vector<16x256xbf16> to vector<16x128xbf16>
    %100 = vector.extract_strided_slice %81 {offsets = [0, 0], sizes = [16, 128], strides = [1, 1]} : vector<16x256xbf16> to vector<16x128xbf16>
    %101 = vector.extract_strided_slice %81 {offsets = [0, 1], sizes = [16, 128], strides = [1, 1]} : vector<16x256xbf16> to vector<16x128xbf16>
    %102 = vector.extract_strided_slice %81 {offsets = [0, 2], sizes = [16, 128], strides = [1, 1]} : vector<16x256xbf16> to vector<16x128xbf16>
    %103 = vector.extract_strided_slice %81 {offsets = [0, 7], sizes = [16, 128], strides = [1, 1]} : vector<16x256xbf16> to vector<16x128xbf16>
    %104 = vector.extract_strided_slice %81 {offsets = [0, 8], sizes = [16, 128], strides = [1, 1]} : vector<16x256xbf16> to vector<16x128xbf16>
    %105 = vector.extract_strided_slice %81 {offsets = [0, 9], sizes = [16, 128], strides = [1, 1]} : vector<16x256xbf16> to vector<16x128xbf16>
    %106 = vector.extract_strided_slice %81 {offsets = [0, 14], sizes = [16, 128], strides = [1, 1]} : vector<16x256xbf16> to vector<16x128xbf16>
    %107 = vector.extract_strided_slice %81 {offsets = [0, 15], sizes = [16, 128], strides = [1, 1]} : vector<16x256xbf16> to vector<16x128xbf16>
    %108 = vector.extract_strided_slice %81 {offsets = [0, 16], sizes = [16, 128], strides = [1, 1]} : vector<16x256xbf16> to vector<16x128xbf16>
    %109 = tpu.concatenate %82, %83, %84, %85, %86, %87, %88, %89, %90, %91, %92, %93, %94, %95, %96, %97 in 0 : vector<16x128xbf16>, vector<16x128xbf16>, vector<16x128xbf16>, vector<16x128xbf16>, vector<16x128xbf16>, vector<16x128xbf16>, vector<16x128xbf16>, vector<16x128xbf16>, vector<16x128xbf16>, vector<16x128xbf16>, vector<16x128xbf16>, vector<16x128xbf16>, vector<16x128xbf16>, vector<16x128xbf16>, vector<16x128xbf16>, vector<16x128xbf16> -> vector<256x128xbf16>
    %110 = tpu.concatenate %98, %99, %100, %101, %102, %103, %104, %105, %106, %107, %108 in 0 : vector<16x128xbf16>, vector<16x128xbf16>, vector<16x128xbf16>, vector<16x128xbf16>, vector<16x128xbf16>, vector<16x128xbf16>, vector<16x128xbf16>, vector<16x128xbf16>, vector<16x128xbf16>, vector<16x128xbf16>, vector<16x128xbf16> -> vector<176x128xbf16>
    %111 = tpu.concatenate %109, %110 in 0 : vector<256x128xbf16>, vector<176x128xbf16> -> vector<432x128xbf16>
    %cst_65 = arith.constant dense<0.000000e+00> : vector<16x128xf32>
    %112 = tpu.matmul %11, %111, %cst_65 {dimension_numbers = #tpu.dot_dimension_numbers<[1], [0], [0], [1], [0, 0, 1, 1], [], []>} : vector<16x432xbf16>, vector<432x128xbf16>, vector<16x128xf32> -> vector<16x128xf32>
    %113 = vector.broadcast %12 : vector<16x1xf32> to vector<16x128xf32>
    %114 = arith.addf %112, %113 : vector<16x128xf32>
    %c2_66 = arith.constant 2 : index
    %c0_67 = arith.constant 0 : index
    %c8_68 = arith.constant 8 : index
    %115 = vector.load %arg11[%c2_66, %c0_67, %c8_68] : memref<6x16x256xbf16, #tpu.memory_space<vmem>>, vector<1x16x128xbf16>
    %116 = vector.shape_cast %115 : vector<1x16x128xbf16> to vector<16x128xbf16>
    %117 = arith.extf %116 : vector<16x128xbf16> to vector<16x128xf32>
    %118 = arith.addf %114, %117 : vector<16x128xf32>
    %cst_69 = arith.constant 0.000000e+00 : f32
    %119 = vector.broadcast %cst_69 : f32 to vector<16x128xf32>
    %120 = arith.maximumf %118, %119 : vector<16x128xf32>
    %121 = arith.truncf %120 : vector<16x128xf32> to vector<16x128xbf16>
    %c1_70 = arith.constant 1 : index
    %c0_71 = arith.constant 0 : index
    %c0_72 = arith.constant 0 : index
    %c0_73 = arith.constant 0 : index
    %122 = vector.load %arg8[%c1_70, %c0_71, %c0_72, %c0_73] : memref<4x4x128x128xbf16, #tpu.memory_space<vmem>>, vector<1x1x128x128xbf16>
    %123 = vector.shape_cast %122 : vector<1x1x128x128xbf16> to vector<128x128xbf16>
    %cst_74 = arith.constant dense<0.000000e+00> : vector<16x128xf32>
    %124 = tpu.matmul %121, %123, %cst_74 {dimension_numbers = #tpu.dot_dimension_numbers<[1], [0], [0], [1], [0, 0, 1, 1], [], []>} : vector<16x128xbf16>, vector<128x128xbf16>, vector<16x128xf32> -> vector<16x128xf32>
    %c1_75 = arith.constant 1 : index
    %c1_76 = arith.constant 1 : index
    %c0_77 = arith.constant 0 : index
    %c0_78 = arith.constant 0 : index
    %125 = vector.load %arg8[%c1_75, %c1_76, %c0_77, %c0_78] : memref<4x4x128x128xbf16, #tpu.memory_space<vmem>>, vector<1x1x128x128xbf16>
    %126 = vector.shape_cast %125 : vector<1x1x128x128xbf16> to vector<128x128xbf16>
    %cst_79 = arith.constant dense<0.000000e+00> : vector<16x128xf32>
    %127 = tpu.matmul %121, %126, %cst_79 {dimension_numbers = #tpu.dot_dimension_numbers<[1], [0], [0], [1], [0, 0, 1, 1], [], []>} : vector<16x128xbf16>, vector<128x128xbf16>, vector<16x128xf32> -> vector<16x128xf32>
    %128 = arith.maximumf %124, %127 : vector<16x128xf32>
    %c1_80 = arith.constant 1 : index
    %c2_81 = arith.constant 2 : index
    %c0_82 = arith.constant 0 : index
    %c0_83 = arith.constant 0 : index
    %129 = vector.load %arg8[%c1_80, %c2_81, %c0_82, %c0_83] : memref<4x4x128x128xbf16, #tpu.memory_space<vmem>>, vector<1x1x128x128xbf16>
    %130 = vector.shape_cast %129 : vector<1x1x128x128xbf16> to vector<128x128xbf16>
    %cst_84 = arith.constant dense<0.000000e+00> : vector<16x128xf32>
    %131 = tpu.matmul %121, %130, %cst_84 {dimension_numbers = #tpu.dot_dimension_numbers<[1], [0], [0], [1], [0, 0, 1, 1], [], []>} : vector<16x128xbf16>, vector<128x128xbf16>, vector<16x128xf32> -> vector<16x128xf32>
    %132 = arith.maximumf %128, %131 : vector<16x128xf32>
    %c1_85 = arith.constant 1 : index
    %c3_86 = arith.constant 3 : index
    %c0_87 = arith.constant 0 : index
    %c0_88 = arith.constant 0 : index
    %133 = vector.load %arg8[%c1_85, %c3_86, %c0_87, %c0_88] : memref<4x4x128x128xbf16, #tpu.memory_space<vmem>>, vector<1x1x128x128xbf16>
    %134 = vector.shape_cast %133 : vector<1x1x128x128xbf16> to vector<128x128xbf16>
    %cst_89 = arith.constant dense<0.000000e+00> : vector<16x128xf32>
    %135 = tpu.matmul %121, %134, %cst_89 {dimension_numbers = #tpu.dot_dimension_numbers<[1], [0], [0], [1], [0, 0, 1, 1], [], []>} : vector<16x128xbf16>, vector<128x128xbf16>, vector<16x128xf32> -> vector<16x128xf32>
    %136 = arith.maximumf %132, %135 : vector<16x128xf32>
    %137 = arith.addf %75, %136 : vector<16x128xf32>
    %c2_90 = arith.constant 2 : index
    %c0_91 = arith.constant 0 : index
    %c0_92 = arith.constant 0 : index
    %138 = vector.load %arg12[%c2_90, %c0_91, %c0_92] : memref<6x16x256xbf16, #tpu.memory_space<vmem>>, vector<1x16x256xbf16>
    %139 = vector.shape_cast %138 : vector<1x16x256xbf16> to vector<16x256xbf16>
    %c3_93 = arith.constant 3 : index
    %c0_94 = arith.constant 0 : index
    %c0_95 = arith.constant 0 : index
    %140 = vector.load %arg12[%c3_93, %c0_94, %c0_95] : memref<6x16x256xbf16, #tpu.memory_space<vmem>>, vector<1x16x256xbf16>
    %141 = vector.shape_cast %140 : vector<1x16x256xbf16> to vector<16x256xbf16>
    %c4 = arith.constant 4 : index
    %c0_96 = arith.constant 0 : index
    %c0_97 = arith.constant 0 : index
    %142 = vector.load %arg12[%c4, %c0_96, %c0_97] : memref<6x16x256xbf16, #tpu.memory_space<vmem>>, vector<1x16x256xbf16>
    %143 = vector.shape_cast %142 : vector<1x16x256xbf16> to vector<16x256xbf16>
    %144 = vector.extract_strided_slice %139 {offsets = [0, 0], sizes = [16, 128], strides = [1, 1]} : vector<16x256xbf16> to vector<16x128xbf16>
    %145 = vector.extract_strided_slice %139 {offsets = [0, 1], sizes = [16, 128], strides = [1, 1]} : vector<16x256xbf16> to vector<16x128xbf16>
    %146 = vector.extract_strided_slice %139 {offsets = [0, 2], sizes = [16, 128], strides = [1, 1]} : vector<16x256xbf16> to vector<16x128xbf16>
    %147 = vector.extract_strided_slice %139 {offsets = [0, 7], sizes = [16, 128], strides = [1, 1]} : vector<16x256xbf16> to vector<16x128xbf16>
    %148 = vector.extract_strided_slice %139 {offsets = [0, 8], sizes = [16, 128], strides = [1, 1]} : vector<16x256xbf16> to vector<16x128xbf16>
    %149 = vector.extract_strided_slice %139 {offsets = [0, 9], sizes = [16, 128], strides = [1, 1]} : vector<16x256xbf16> to vector<16x128xbf16>
    %150 = vector.extract_strided_slice %139 {offsets = [0, 14], sizes = [16, 128], strides = [1, 1]} : vector<16x256xbf16> to vector<16x128xbf16>
    %151 = vector.extract_strided_slice %139 {offsets = [0, 15], sizes = [16, 128], strides = [1, 1]} : vector<16x256xbf16> to vector<16x128xbf16>
    %152 = vector.extract_strided_slice %139 {offsets = [0, 16], sizes = [16, 128], strides = [1, 1]} : vector<16x256xbf16> to vector<16x128xbf16>
    %153 = vector.extract_strided_slice %141 {offsets = [0, 0], sizes = [16, 128], strides = [1, 1]} : vector<16x256xbf16> to vector<16x128xbf16>
    %154 = vector.extract_strided_slice %141 {offsets = [0, 1], sizes = [16, 128], strides = [1, 1]} : vector<16x256xbf16> to vector<16x128xbf16>
    %155 = vector.extract_strided_slice %141 {offsets = [0, 2], sizes = [16, 128], strides = [1, 1]} : vector<16x256xbf16> to vector<16x128xbf16>
    %156 = vector.extract_strided_slice %141 {offsets = [0, 7], sizes = [16, 128], strides = [1, 1]} : vector<16x256xbf16> to vector<16x128xbf16>
    %157 = vector.extract_strided_slice %141 {offsets = [0, 8], sizes = [16, 128], strides = [1, 1]} : vector<16x256xbf16> to vector<16x128xbf16>
    %158 = vector.extract_strided_slice %141 {offsets = [0, 9], sizes = [16, 128], strides = [1, 1]} : vector<16x256xbf16> to vector<16x128xbf16>
    %159 = vector.extract_strided_slice %141 {offsets = [0, 14], sizes = [16, 128], strides = [1, 1]} : vector<16x256xbf16> to vector<16x128xbf16>
    %160 = vector.extract_strided_slice %141 {offsets = [0, 15], sizes = [16, 128], strides = [1, 1]} : vector<16x256xbf16> to vector<16x128xbf16>
    %161 = vector.extract_strided_slice %141 {offsets = [0, 16], sizes = [16, 128], strides = [1, 1]} : vector<16x256xbf16> to vector<16x128xbf16>
    %162 = vector.extract_strided_slice %143 {offsets = [0, 0], sizes = [16, 128], strides = [1, 1]} : vector<16x256xbf16> to vector<16x128xbf16>
    %163 = vector.extract_strided_slice %143 {offsets = [0, 1], sizes = [16, 128], strides = [1, 1]} : vector<16x256xbf16> to vector<16x128xbf16>
    %164 = vector.extract_strided_slice %143 {offsets = [0, 2], sizes = [16, 128], strides = [1, 1]} : vector<16x256xbf16> to vector<16x128xbf16>
    %165 = vector.extract_strided_slice %143 {offsets = [0, 7], sizes = [16, 128], strides = [1, 1]} : vector<16x256xbf16> to vector<16x128xbf16>
    %166 = vector.extract_strided_slice %143 {offsets = [0, 8], sizes = [16, 128], strides = [1, 1]} : vector<16x256xbf16> to vector<16x128xbf16>
    %167 = vector.extract_strided_slice %143 {offsets = [0, 9], sizes = [16, 128], strides = [1, 1]} : vector<16x256xbf16> to vector<16x128xbf16>
    %168 = vector.extract_strided_slice %143 {offsets = [0, 14], sizes = [16, 128], strides = [1, 1]} : vector<16x256xbf16> to vector<16x128xbf16>
    %169 = vector.extract_strided_slice %143 {offsets = [0, 15], sizes = [16, 128], strides = [1, 1]} : vector<16x256xbf16> to vector<16x128xbf16>
    %170 = vector.extract_strided_slice %143 {offsets = [0, 16], sizes = [16, 128], strides = [1, 1]} : vector<16x256xbf16> to vector<16x128xbf16>
    %171 = tpu.concatenate %144, %145, %146, %147, %148, %149, %150, %151, %152, %153, %154, %155, %156, %157, %158, %159 in 0 : vector<16x128xbf16>, vector<16x128xbf16>, vector<16x128xbf16>, vector<16x128xbf16>, vector<16x128xbf16>, vector<16x128xbf16>, vector<16x128xbf16>, vector<16x128xbf16>, vector<16x128xbf16>, vector<16x128xbf16>, vector<16x128xbf16>, vector<16x128xbf16>, vector<16x128xbf16>, vector<16x128xbf16>, vector<16x128xbf16>, vector<16x128xbf16> -> vector<256x128xbf16>
    %172 = tpu.concatenate %160, %161, %162, %163, %164, %165, %166, %167, %168, %169, %170 in 0 : vector<16x128xbf16>, vector<16x128xbf16>, vector<16x128xbf16>, vector<16x128xbf16>, vector<16x128xbf16>, vector<16x128xbf16>, vector<16x128xbf16>, vector<16x128xbf16>, vector<16x128xbf16>, vector<16x128xbf16>, vector<16x128xbf16> -> vector<176x128xbf16>
    %173 = tpu.concatenate %171, %172 in 0 : vector<256x128xbf16>, vector<176x128xbf16> -> vector<432x128xbf16>
    %cst_98 = arith.constant dense<0.000000e+00> : vector<16x128xf32>
    %174 = tpu.matmul %11, %173, %cst_98 {dimension_numbers = #tpu.dot_dimension_numbers<[1], [0], [0], [1], [0, 0, 1, 1], [], []>} : vector<16x432xbf16>, vector<432x128xbf16>, vector<16x128xf32> -> vector<16x128xf32>
    %175 = vector.broadcast %12 : vector<16x1xf32> to vector<16x128xf32>
    %176 = arith.addf %174, %175 : vector<16x128xf32>
    %c3_99 = arith.constant 3 : index
    %c0_100 = arith.constant 0 : index
    %c8_101 = arith.constant 8 : index
    %177 = vector.load %arg11[%c3_99, %c0_100, %c8_101] : memref<6x16x256xbf16, #tpu.memory_space<vmem>>, vector<1x16x128xbf16>
    %178 = vector.shape_cast %177 : vector<1x16x128xbf16> to vector<16x128xbf16>
    %179 = arith.extf %178 : vector<16x128xbf16> to vector<16x128xf32>
    %180 = arith.addf %176, %179 : vector<16x128xf32>
    %cst_102 = arith.constant 0.000000e+00 : f32
    %181 = vector.broadcast %cst_102 : f32 to vector<16x128xf32>
    %182 = arith.maximumf %180, %181 : vector<16x128xf32>
    %183 = arith.truncf %182 : vector<16x128xf32> to vector<16x128xbf16>
    %c2_103 = arith.constant 2 : index
    %c0_104 = arith.constant 0 : index
    %c0_105 = arith.constant 0 : index
    %c0_106 = arith.constant 0 : index
    %184 = vector.load %arg8[%c2_103, %c0_104, %c0_105, %c0_106] : memref<4x4x128x128xbf16, #tpu.memory_space<vmem>>, vector<1x1x128x128xbf16>
    %185 = vector.shape_cast %184 : vector<1x1x128x128xbf16> to vector<128x128xbf16>
    %cst_107 = arith.constant dense<0.000000e+00> : vector<16x128xf32>
    %186 = tpu.matmul %183, %185, %cst_107 {dimension_numbers = #tpu.dot_dimension_numbers<[1], [0], [0], [1], [0, 0, 1, 1], [], []>} : vector<16x128xbf16>, vector<128x128xbf16>, vector<16x128xf32> -> vector<16x128xf32>
    %c2_108 = arith.constant 2 : index
    %c1_109 = arith.constant 1 : index
    %c0_110 = arith.constant 0 : index
    %c0_111 = arith.constant 0 : index
    %187 = vector.load %arg8[%c2_108, %c1_109, %c0_110, %c0_111] : memref<4x4x128x128xbf16, #tpu.memory_space<vmem>>, vector<1x1x128x128xbf16>
    %188 = vector.shape_cast %187 : vector<1x1x128x128xbf16> to vector<128x128xbf16>
    %cst_112 = arith.constant dense<0.000000e+00> : vector<16x128xf32>
    %189 = tpu.matmul %183, %188, %cst_112 {dimension_numbers = #tpu.dot_dimension_numbers<[1], [0], [0], [1], [0, 0, 1, 1], [], []>} : vector<16x128xbf16>, vector<128x128xbf16>, vector<16x128xf32> -> vector<16x128xf32>
    %190 = arith.maximumf %186, %189 : vector<16x128xf32>
    %c2_113 = arith.constant 2 : index
    %c2_114 = arith.constant 2 : index
    %c0_115 = arith.constant 0 : index
    %c0_116 = arith.constant 0 : index
    %191 = vector.load %arg8[%c2_113, %c2_114, %c0_115, %c0_116] : memref<4x4x128x128xbf16, #tpu.memory_space<vmem>>, vector<1x1x128x128xbf16>
    %192 = vector.shape_cast %191 : vector<1x1x128x128xbf16> to vector<128x128xbf16>
    %cst_117 = arith.constant dense<0.000000e+00> : vector<16x128xf32>
    %193 = tpu.matmul %183, %192, %cst_117 {dimension_numbers = #tpu.dot_dimension_numbers<[1], [0], [0], [1], [0, 0, 1, 1], [], []>} : vector<16x128xbf16>, vector<128x128xbf16>, vector<16x128xf32> -> vector<16x128xf32>
    %194 = arith.maximumf %190, %193 : vector<16x128xf32>
    %c2_118 = arith.constant 2 : index
    %c3_119 = arith.constant 3 : index
    %c0_120 = arith.constant 0 : index
    %c0_121 = arith.constant 0 : index
    %195 = vector.load %arg8[%c2_118, %c3_119, %c0_120, %c0_121] : memref<4x4x128x128xbf16, #tpu.memory_space<vmem>>, vector<1x1x128x128xbf16>
    %196 = vector.shape_cast %195 : vector<1x1x128x128xbf16> to vector<128x128xbf16>
    %cst_122 = arith.constant dense<0.000000e+00> : vector<16x128xf32>
    %197 = tpu.matmul %183, %196, %cst_122 {dimension_numbers = #tpu.dot_dimension_numbers<[1], [0], [0], [1], [0, 0, 1, 1], [], []>} : vector<16x128xbf16>, vector<128x128xbf16>, vector<16x128xf32> -> vector<16x128xf32>
    %198 = arith.maximumf %194, %197 : vector<16x128xf32>
    %199 = arith.addf %137, %198 : vector<16x128xf32>
    %c3_123 = arith.constant 3 : index
    %c0_124 = arith.constant 0 : index
    %c0_125 = arith.constant 0 : index
    %200 = vector.load %arg12[%c3_123, %c0_124, %c0_125] : memref<6x16x256xbf16, #tpu.memory_space<vmem>>, vector<1x16x256xbf16>
    %201 = vector.shape_cast %200 : vector<1x16x256xbf16> to vector<16x256xbf16>
    %c4_126 = arith.constant 4 : index
    %c0_127 = arith.constant 0 : index
    %c0_128 = arith.constant 0 : index
    %202 = vector.load %arg12[%c4_126, %c0_127, %c0_128] : memref<6x16x256xbf16, #tpu.memory_space<vmem>>, vector<1x16x256xbf16>
    %203 = vector.shape_cast %202 : vector<1x16x256xbf16> to vector<16x256xbf16>
    %c5 = arith.constant 5 : index
    %c0_129 = arith.constant 0 : index
    %c0_130 = arith.constant 0 : index
    %204 = vector.load %arg12[%c5, %c0_129, %c0_130] : memref<6x16x256xbf16, #tpu.memory_space<vmem>>, vector<1x16x256xbf16>
    %205 = vector.shape_cast %204 : vector<1x16x256xbf16> to vector<16x256xbf16>
    %206 = vector.extract_strided_slice %201 {offsets = [0, 0], sizes = [16, 128], strides = [1, 1]} : vector<16x256xbf16> to vector<16x128xbf16>
    %207 = vector.extract_strided_slice %201 {offsets = [0, 1], sizes = [16, 128], strides = [1, 1]} : vector<16x256xbf16> to vector<16x128xbf16>
    %208 = vector.extract_strided_slice %201 {offsets = [0, 2], sizes = [16, 128], strides = [1, 1]} : vector<16x256xbf16> to vector<16x128xbf16>
    %209 = vector.extract_strided_slice %201 {offsets = [0, 7], sizes = [16, 128], strides = [1, 1]} : vector<16x256xbf16> to vector<16x128xbf16>
    %210 = vector.extract_strided_slice %201 {offsets = [0, 8], sizes = [16, 128], strides = [1, 1]} : vector<16x256xbf16> to vector<16x128xbf16>
    %211 = vector.extract_strided_slice %201 {offsets = [0, 9], sizes = [16, 128], strides = [1, 1]} : vector<16x256xbf16> to vector<16x128xbf16>
    %212 = vector.extract_strided_slice %201 {offsets = [0, 14], sizes = [16, 128], strides = [1, 1]} : vector<16x256xbf16> to vector<16x128xbf16>
    %213 = vector.extract_strided_slice %201 {offsets = [0, 15], sizes = [16, 128], strides = [1, 1]} : vector<16x256xbf16> to vector<16x128xbf16>
    %214 = vector.extract_strided_slice %201 {offsets = [0, 16], sizes = [16, 128], strides = [1, 1]} : vector<16x256xbf16> to vector<16x128xbf16>
    %215 = vector.extract_strided_slice %203 {offsets = [0, 0], sizes = [16, 128], strides = [1, 1]} : vector<16x256xbf16> to vector<16x128xbf16>
    %216 = vector.extract_strided_slice %203 {offsets = [0, 1], sizes = [16, 128], strides = [1, 1]} : vector<16x256xbf16> to vector<16x128xbf16>
    %217 = vector.extract_strided_slice %203 {offsets = [0, 2], sizes = [16, 128], strides = [1, 1]} : vector<16x256xbf16> to vector<16x128xbf16>
    %218 = vector.extract_strided_slice %203 {offsets = [0, 7], sizes = [16, 128], strides = [1, 1]} : vector<16x256xbf16> to vector<16x128xbf16>
    %219 = vector.extract_strided_slice %203 {offsets = [0, 8], sizes = [16, 128], strides = [1, 1]} : vector<16x256xbf16> to vector<16x128xbf16>
    %220 = vector.extract_strided_slice %203 {offsets = [0, 9], sizes = [16, 128], strides = [1, 1]} : vector<16x256xbf16> to vector<16x128xbf16>
    %221 = vector.extract_strided_slice %203 {offsets = [0, 14], sizes = [16, 128], strides = [1, 1]} : vector<16x256xbf16> to vector<16x128xbf16>
    %222 = vector.extract_strided_slice %203 {offsets = [0, 15], sizes = [16, 128], strides = [1, 1]} : vector<16x256xbf16> to vector<16x128xbf16>
    %223 = vector.extract_strided_slice %203 {offsets = [0, 16], sizes = [16, 128], strides = [1, 1]} : vector<16x256xbf16> to vector<16x128xbf16>
    %224 = vector.extract_strided_slice %205 {offsets = [0, 0], sizes = [16, 128], strides = [1, 1]} : vector<16x256xbf16> to vector<16x128xbf16>
    %225 = vector.extract_strided_slice %205 {offsets = [0, 1], sizes = [16, 128], strides = [1, 1]} : vector<16x256xbf16> to vector<16x128xbf16>
    %226 = vector.extract_strided_slice %205 {offsets = [0, 2], sizes = [16, 128], strides = [1, 1]} : vector<16x256xbf16> to vector<16x128xbf16>
    %227 = vector.extract_strided_slice %205 {offsets = [0, 7], sizes = [16, 128], strides = [1, 1]} : vector<16x256xbf16> to vector<16x128xbf16>
    %228 = vector.extract_strided_slice %205 {offsets = [0, 8], sizes = [16, 128], strides = [1, 1]} : vector<16x256xbf16> to vector<16x128xbf16>
    %229 = vector.extract_strided_slice %205 {offsets = [0, 9], sizes = [16, 128], strides = [1, 1]} : vector<16x256xbf16> to vector<16x128xbf16>
    %230 = vector.extract_strided_slice %205 {offsets = [0, 14], sizes = [16, 128], strides = [1, 1]} : vector<16x256xbf16> to vector<16x128xbf16>
    %231 = vector.extract_strided_slice %205 {offsets = [0, 15], sizes = [16, 128], strides = [1, 1]} : vector<16x256xbf16> to vector<16x128xbf16>
    %232 = vector.extract_strided_slice %205 {offsets = [0, 16], sizes = [16, 128], strides = [1, 1]} : vector<16x256xbf16> to vector<16x128xbf16>
    %233 = tpu.concatenate %206, %207, %208, %209, %210, %211, %212, %213, %214, %215, %216, %217, %218, %219, %220, %221 in 0 : vector<16x128xbf16>, vector<16x128xbf16>, vector<16x128xbf16>, vector<16x128xbf16>, vector<16x128xbf16>, vector<16x128xbf16>, vector<16x128xbf16>, vector<16x128xbf16>, vector<16x128xbf16>, vector<16x128xbf16>, vector<16x128xbf16>, vector<16x128xbf16>, vector<16x128xbf16>, vector<16x128xbf16>, vector<16x128xbf16>, vector<16x128xbf16> -> vector<256x128xbf16>
    %234 = tpu.concatenate %222, %223, %224, %225, %226, %227, %228, %229, %230, %231, %232 in 0 : vector<16x128xbf16>, vector<16x128xbf16>, vector<16x128xbf16>, vector<16x128xbf16>, vector<16x128xbf16>, vector<16x128xbf16>, vector<16x128xbf16>, vector<16x128xbf16>, vector<16x128xbf16>, vector<16x128xbf16>, vector<16x128xbf16> -> vector<176x128xbf16>
    %235 = tpu.concatenate %233, %234 in 0 : vector<256x128xbf16>, vector<176x128xbf16> -> vector<432x128xbf16>
    %cst_131 = arith.constant dense<0.000000e+00> : vector<16x128xf32>
    %236 = tpu.matmul %11, %235, %cst_131 {dimension_numbers = #tpu.dot_dimension_numbers<[1], [0], [0], [1], [0, 0, 1, 1], [], []>} : vector<16x432xbf16>, vector<432x128xbf16>, vector<16x128xf32> -> vector<16x128xf32>
    %237 = vector.broadcast %12 : vector<16x1xf32> to vector<16x128xf32>
    %238 = arith.addf %236, %237 : vector<16x128xf32>
    %c4_132 = arith.constant 4 : index
    %c0_133 = arith.constant 0 : index
    %c8_134 = arith.constant 8 : index
    %239 = vector.load %arg11[%c4_132, %c0_133, %c8_134] : memref<6x16x256xbf16, #tpu.memory_space<vmem>>, vector<1x16x128xbf16>
    %240 = vector.shape_cast %239 : vector<1x16x128xbf16> to vector<16x128xbf16>
    %241 = arith.extf %240 : vector<16x128xbf16> to vector<16x128xf32>
    %242 = arith.addf %238, %241 : vector<16x128xf32>
    %cst_135 = arith.constant 0.000000e+00 : f32
    %243 = vector.broadcast %cst_135 : f32 to vector<16x128xf32>
    %244 = arith.maximumf %242, %243 : vector<16x128xf32>
    %245 = arith.truncf %244 : vector<16x128xf32> to vector<16x128xbf16>
    %c3_136 = arith.constant 3 : index
    %c0_137 = arith.constant 0 : index
    %c0_138 = arith.constant 0 : index
    %c0_139 = arith.constant 0 : index
    %246 = vector.load %arg8[%c3_136, %c0_137, %c0_138, %c0_139] : memref<4x4x128x128xbf16, #tpu.memory_space<vmem>>, vector<1x1x128x128xbf16>
    %247 = vector.shape_cast %246 : vector<1x1x128x128xbf16> to vector<128x128xbf16>
    %cst_140 = arith.constant dense<0.000000e+00> : vector<16x128xf32>
    %248 = tpu.matmul %245, %247, %cst_140 {dimension_numbers = #tpu.dot_dimension_numbers<[1], [0], [0], [1], [0, 0, 1, 1], [], []>} : vector<16x128xbf16>, vector<128x128xbf16>, vector<16x128xf32> -> vector<16x128xf32>
    %c3_141 = arith.constant 3 : index
    %c1_142 = arith.constant 1 : index
    %c0_143 = arith.constant 0 : index
    %c0_144 = arith.constant 0 : index
    %249 = vector.load %arg8[%c3_141, %c1_142, %c0_143, %c0_144] : memref<4x4x128x128xbf16, #tpu.memory_space<vmem>>, vector<1x1x128x128xbf16>
    %250 = vector.shape_cast %249 : vector<1x1x128x128xbf16> to vector<128x128xbf16>
    %cst_145 = arith.constant dense<0.000000e+00> : vector<16x128xf32>
    %251 = tpu.matmul %245, %250, %cst_145 {dimension_numbers = #tpu.dot_dimension_numbers<[1], [0], [0], [1], [0, 0, 1, 1], [], []>} : vector<16x128xbf16>, vector<128x128xbf16>, vector<16x128xf32> -> vector<16x128xf32>
    %252 = arith.maximumf %248, %251 : vector<16x128xf32>
    %c3_146 = arith.constant 3 : index
    %c2_147 = arith.constant 2 : index
    %c0_148 = arith.constant 0 : index
    %c0_149 = arith.constant 0 : index
    %253 = vector.load %arg8[%c3_146, %c2_147, %c0_148, %c0_149] : memref<4x4x128x128xbf16, #tpu.memory_space<vmem>>, vector<1x1x128x128xbf16>
    %254 = vector.shape_cast %253 : vector<1x1x128x128xbf16> to vector<128x128xbf16>
    %cst_150 = arith.constant dense<0.000000e+00> : vector<16x128xf32>
    %255 = tpu.matmul %245, %254, %cst_150 {dimension_numbers = #tpu.dot_dimension_numbers<[1], [0], [0], [1], [0, 0, 1, 1], [], []>} : vector<16x128xbf16>, vector<128x128xbf16>, vector<16x128xf32> -> vector<16x128xf32>
    %256 = arith.maximumf %252, %255 : vector<16x128xf32>
    %c3_151 = arith.constant 3 : index
    %c3_152 = arith.constant 3 : index
    %c0_153 = arith.constant 0 : index
    %c0_154 = arith.constant 0 : index
    %257 = vector.load %arg8[%c3_151, %c3_152, %c0_153, %c0_154] : memref<4x4x128x128xbf16, #tpu.memory_space<vmem>>, vector<1x1x128x128xbf16>
    %258 = vector.shape_cast %257 : vector<1x1x128x128xbf16> to vector<128x128xbf16>
    %cst_155 = arith.constant dense<0.000000e+00> : vector<16x128xf32>
    %259 = tpu.matmul %245, %258, %cst_155 {dimension_numbers = #tpu.dot_dimension_numbers<[1], [0], [0], [1], [0, 0, 1, 1], [], []>} : vector<16x128xbf16>, vector<128x128xbf16>, vector<16x128xf32> -> vector<16x128xf32>
    %260 = arith.maximumf %256, %259 : vector<16x128xf32>
    %261 = arith.addf %199, %260 : vector<16x128xf32>
    %262 = arith.truncf %261 : vector<16x128xf32> to vector<16x128xbf16>
    %c0_156 = arith.constant 0 : index
    %c0_157 = arith.constant 0 : index
    %c0_158 = arith.constant 0 : index
    %263 = vector.load %arg10[%c0_156, %c0_157, %c0_158] : memref<1x16x128xbf16, #tpu.memory_space<vmem>>, vector<1x16x128xbf16>
    %264 = vector.shape_cast %263 : vector<1x16x128xbf16> to vector<16x128xbf16>
    %265 = vector.shape_cast %262 : vector<16x128xbf16> to vector<1x16x128xbf16>
    tpu.vector_store %arg10[%c0_156, %c0_157, %c0_158], %265 {strides = array<i32>} : memref<1x16x128xbf16, #tpu.memory_space<vmem>>, vector<1x16x128xbf16>,
    return
  }
  func.func @transform_0(%arg0: i32) -> (i32, i32, i32, i32) {
    %c0_i32 = arith.constant 0 : i32
    %c0_i32_0 = arith.constant 0 : i32
    %c0_i32_1 = arith.constant 0 : i32
    %c0_i32_2 = arith.constant 0 : i32
    return %arg0, %c0_i32, %c0_i32_0, %c0_i32_1 : i32, i32, i32, i32
  }
  func.func @transform_1(%arg0: i32) -> (i32, i32) {
    %c0_i32 = arith.constant 0 : i32
    %c0_i32_0 = arith.constant 0 : i32
    %c0_i32_1 = arith.constant 0 : i32
    return %c0_i32, %c0_i32_0 : i32, i32
  }
  func.func @transform_2(%arg0: i32) -> (i32, i32) {
    %c0_i32 = arith.constant 0 : i32
    %c0_i32_0 = arith.constant 0 : i32
    %c0_i32_1 = arith.constant 0 : i32
    return %c0_i32, %c0_i32_0 : i32, i32
  }
  func.func @transform_3(%arg0: i32) -> (i32, i32) {
    %c0_i32 = arith.constant 0 : i32
    %c0_i32_0 = arith.constant 0 : i32
    %c0_i32_1 = arith.constant 0 : i32
    return %c0_i32, %c0_i32_0 : i32, i32
  }
  func.func @transform_4(%arg0: i32) -> (i32, i32) {
    %c0_i32 = arith.constant 0 : i32
    %c0_i32_0 = arith.constant 0 : i32
    %c0_i32_1 = arith.constant 0 : i32
    return %c0_i32, %c0_i32_0 : i32, i32
  }
  func.func @transform_5(%arg0: i32) -> (i32, i32) {
    %c0_i32 = arith.constant 0 : i32
    %c0_i32_0 = arith.constant 0 : i32
    %c0_i32_1 = arith.constant 0 : i32
    return %c0_i32, %c0_i32_0 : i32, i32
  }
  func.func @transform_6(%arg0: i32) -> (i32, i32) {
    %c0_i32 = arith.constant 0 : i32
    %c0_i32_0 = arith.constant 0 : i32
    %c0_i32_1 = arith.constant 0 : i32
    return %c0_i32, %c0_i32_0 : i32, i32
  }
  func.func @transform_7(%arg0: i32) -> (i32, i32, i32, i32) {
    %c0_i32 = arith.constant 0 : i32
    %c0_i32_0 = arith.constant 0 : i32
    %c0_i32_1 = arith.constant 0 : i32
    %c0_i32_2 = arith.constant 0 : i32
    %c0_i32_3 = arith.constant 0 : i32
    return %c0_i32, %c0_i32_0, %c0_i32_1, %c0_i32_2 : i32, i32, i32, i32
  }
  func.func @transform_8(%arg0: i32) -> (i32, i32) {
    %c0_i32 = arith.constant 0 : i32
    %c0_i32_0 = arith.constant 0 : i32
    %c0_i32_1 = arith.constant 0 : i32
    return %c0_i32, %c0_i32_0 : i32, i32
  }
  func.func @transform_9(%arg0: i32) -> (i32, i32, i32) {
    %c0_i32 = arith.constant 0 : i32
    %c0_i32_0 = arith.constant 0 : i32
    %c0_i32_1 = arith.constant 0 : i32
    return %arg0, %c0_i32, %c0_i32_0 : i32, i32, i32
  }
}

module attributes {stable_mosaic.version = 11 : i64} {
  func.func @_heads_kernel(%arg0: memref<2x2048xbf16, #tpu.memory_space<vmem>>, %arg1: memref<2048x128xbf16, #tpu.memory_space<vmem>>, %arg2: memref<2x128xf32, #tpu.memory_space<vmem>>) attributes {dimension_semantics = [], scalar_prefetch = 0 : i64, scratch_operands = 0 : i64, tpu.core_type = #tpu.core_type<tc>} {
    %c0 = arith.constant 0 : index
    %c0_0 = arith.constant 0 : index
    %0 = vector.load %arg0[%c0, %c0_0] : memref<2x2048xbf16, #tpu.memory_space<vmem>>, vector<2x2048xbf16>
    %c0_1 = arith.constant 0 : index
    %c0_2 = arith.constant 0 : index
    %1 = vector.load %arg1[%c0_1, %c0_2] : memref<2048x128xbf16, #tpu.memory_space<vmem>>, vector<2048x128xbf16>
    %cst = arith.constant dense<0.000000e+00> : vector<2x128xf32>
    %2 = tpu.matmul %0, %1, %cst {dimension_numbers = #tpu.dot_dimension_numbers<[1], [0], [0], [1], [0, 0, 1, 1], [], []>} : vector<2x2048xbf16>, vector<2048x128xbf16>, vector<2x128xf32> -> vector<2x128xf32>
    %c0_3 = arith.constant 0 : index
    %c0_4 = arith.constant 0 : index
    %3 = vector.load %arg2[%c0_3, %c0_4] : memref<2x128xf32, #tpu.memory_space<vmem>>, vector<2x128xf32>
    tpu.vector_store %arg2[%c0_3, %c0_4], %2 {strides = array<i32>} : memref<2x128xf32, #tpu.memory_space<vmem>>, vector<2x128xf32>,
    return
  }
}

</mosaic_0001>

<llo_original>
// kernel: d_res_3d_cnn_forward.5
$region0: #{d_res_3d_cnn_forward.5}
  #allocation0 [shape = 'u32[]', space=smem, size = 0x4, offset = 0x4, fixed_abs, tag = 'smem constant byte address 0x4 - core index']
  #allocation1 [shape = 'u32[72,128]{1,0:T(1,128)}', space=vmem, size = 0x9000, scoped, tag = 'internal scratch']
  %s0 = inlined_call_operand.vmem [shape: bf16[2,2048], index: 0, kind: input, shape index: {}]
  %s1 = inlined_call_operand.vmem [shape: bf16[2048,128], index: 1, kind: input, shape index: {}]
  %s2 = inlined_call_operand.vmem [shape: f32[2,128], index: 2, kind: output, shape index: {}]
  %s3 = sld [smem:[#allocation0]]
  $region18: #{d_res_3d_cnn_forward.5} parent=0
    _
  %s5 = ssub.s32 1, %s3
  %s6 = scalar_select 0, %s5, %s3
  // Predicated region
  $region2: #{d_res_3d_cnn_forward.5} parent=0 // pred_check
    _
  $region3: #{d_res_3d_cnn_forward.5} parent=0 // pred_check_branch
    %8 = sbr.rel (0) target = $region5
  $region4: #{d_res_3d_cnn_forward.5} parent=0 // pred_region
    _
  $region5: #{d_res_3d_cnn_forward.5} parent=0 // pred_fallthru
    _
  // Predicated region
  $region6: #{d_res_3d_cnn_forward.5} parent=0 // pred_check
    _
  $region7: #{d_res_3d_cnn_forward.5} parent=0 // pred_check_branch
    %10 = sbr.rel (0) target = $region9
  $region8: #{d_res_3d_cnn_forward.5} parent=0 // pred_region
    _
  $region9: #{d_res_3d_cnn_forward.5} parent=0 // pred_fallthru
    _
  %v11 = vld [vmem:[%s0] sm:$0xff]
  %v12 = vld [vmem:[%s0 + $0x8] sm:$0xff]
  %v13 = vld [vmem:[%s1] sm:$0xf]
  %v14 = vld [vmem:[%s1 + $0x4] sm:$0xf]
  %v15 = vld [vmem:[%s1 + $0x8] sm:$0xf]
  %v16 = vld [vmem:[%s1 + $0xc] sm:$0xf]
  %v17 = vld [vmem:[%s1 + $0x10] sm:$0xf]
  %v18 = vld [vmem:[%s1 + $0x14] sm:$0xf]
  %v19 = vld [vmem:[%s1 + $0x18] sm:$0xf]
  %v20 = vld [vmem:[%s1 + $0x1c] sm:$0xf]
  %v21 = vld [vmem:[%s1 + $0x20] sm:$0xf]
  %v22 = vld [vmem:[%s1 + $0x24] sm:$0xf]
  %v23 = vld [vmem:[%s1 + $0x28] sm:$0xf]
  %v24 = vld [vmem:[%s1 + $0x2c] sm:$0xf]
  %v25 = vld [vmem:[%s1 + $0x30] sm:$0xf]
  %v26 = vld [vmem:[%s1 + $0x34] sm:$0xf]
  %v27 = vld [vmem:[%s1 + $0x38] sm:$0xf]
  %v28 = vld [vmem:[%s1 + $0x3c] sm:$0xf]
  %v29 = vld [vmem:[%s1 + $0x40] sm:$0xf]
  %v30 = vld [vmem:[%s1 + $0x44] sm:$0xf]
  %v31 = vld [vmem:[%s1 + $0x48] sm:$0xf]
  %v32 = vld [vmem:[%s1 + $0x4c] sm:$0xf]
  %v33 = vld [vmem:[%s1 + $0x50] sm:$0xf]
  %v34 = vld [vmem:[%s1 + $0x54] sm:$0xf]
  %v35 = vld [vmem:[%s1 + $0x58] sm:$0xf]
  %v36 = vld [vmem:[%s1 + $0x5c] sm:$0xf]
  %v37 = vld [vmem:[%s1 + $0x60] sm:$0xf]
  %v38 = vld [vmem:[%s1 + $0x64] sm:$0xf]
  %v39 = vld [vmem:[%s1 + $0x68] sm:$0xf]
  %v40 = vld [vmem:[%s1 + $0x6c] sm:$0xf]
  %v41 = vld [vmem:[%s1 + $0x70] sm:$0xf]
  %v42 = vld [vmem:[%s1 + $0x74] sm:$0xf]
  %v43 = vld [vmem:[%s1 + $0x78] sm:$0xf]
  %v44 = vld [vmem:[%s1 + $0x7c] sm:$0xf]
  %v45 = vld [vmem:[%s1 + $0x80] sm:$0xf]
  %v46 = vld [vmem:[%s1 + $0x84] sm:$0xf]
  %v47 = vld [vmem:[%s1 + $0x88] sm:$0xf]
  %v48 = vld [vmem:[%s1 + $0x8c] sm:$0xf]
  %v49 = vld [vmem:[%s1 + $0x90] sm:$0xf]
  %v50 = vld [vmem:[%s1 + $0x94] sm:$0xf]
  %v51 = vld [vmem:[%s1 + $0x98] sm:$0xf]
  %v52 = vld [vmem:[%s1 + $0x9c] sm:$0xf]
  %v53 = vld [vmem:[%s1 + $0xa0] sm:$0xf]
  %v54 = vld [vmem:[%s1 + $0xa4] sm:$0xf]
  %v55 = vld [vmem:[%s1 + $0xa8] sm:$0xf]
  %v56 = vld [vmem:[%s1 + $0xac] sm:$0xf]
  %v57 = vld [vmem:[%s1 + $0xb0] sm:$0xf]
  %v58 = vld [vmem:[%s1 + $0xb4] sm:$0xf]
  %v59 = vld [vmem:[%s1 + $0xb8] sm:$0xf]
  %v60 = vld [vmem:[%s1 + $0xbc] sm:$0xf]
  %v61 = vld [vmem:[%s1 + $0xc0] sm:$0xf]
  %v62 = vld [vmem:[%s1 + $0xc4] sm:$0xf]
  %v63 = vld [vmem:[%s1 + $0xc8] sm:$0xf]
  %v64 = vld [vmem:[%s1 + $0xcc] sm:$0xf]
  %v65 = vld [vmem:[%s1 + $0xd0] sm:$0xf]
  %v66 = vld [vmem:[%s1 + $0xd4] sm:$0xf]
  %v67 = vld [vmem:[%s1 + $0xd8] sm:$0xf]
  %v68 = vld [vmem:[%s1 + $0xdc] sm:$0xf]
  %v69 = vld [vmem:[%s1 + $0xe0] sm:$0xf]
  %v70 = vld [vmem:[%s1 + $0xe4] sm:$0xf]
  %v71 = vld [vmem:[%s1 + $0xe8] sm:$0xf]
  %v72 = vld [vmem:[%s1 + $0xec] sm:$0xf]
  %v73 = vld [vmem:[%s1 + $0xf0] sm:$0xf]
  %v74 = vld [vmem:[%s1 + $0xf4] sm:$0xf]
  %v75 = vld [vmem:[%s1 + $0xf8] sm:$0xf]
  %v76 = vld [vmem:[%s1 + $0xfc] sm:$0xf]
  %v77 = vld [vmem:[%s1 + $0x100] sm:$0xf]
  %v78 = vld [vmem:[%s1 + $0x104] sm:$0xf]
  %v79 = vld [vmem:[%s1 + $0x108] sm:$0xf]
  %v80 = vld [vmem:[%s1 + $0x10c] sm:$0xf]
  %v81 = vld [vmem:[%s1 + $0x110] sm:$0xf]
  %v82 = vld [vmem:[%s1 + $0x114] sm:$0xf]
  %v83 = vld [vmem:[%s1 + $0x118] sm:$0xf]
  %v84 = vld [vmem:[%s1 + $0x11c] sm:$0xf]
  %v85 = vld [vmem:[%s1 + $0x120] sm:$0xf]
  %v86 = vld [vmem:[%s1 + $0x124] sm:$0xf]
  %v87 = vld [vmem:[%s1 + $0x128] sm:$0xf]
  %v88 = vld [vmem:[%s1 + $0x12c] sm:$0xf]
  %v89 = vld [vmem:[%s1 + $0x130] sm:$0xf]
  %v90 = vld [vmem:[%s1 + $0x134] sm:$0xf]
  %v91 = vld [vmem:[%s1 + $0x138] sm:$0xf]
  %v92 = vld [vmem:[%s1 + $0x13c] sm:$0xf]
  %v93 = vld [vmem:[%s1 + $0x140] sm:$0xf]
  %v94 = vld [vmem:[%s1 + $0x144] sm:$0xf]
  %v95 = vld [vmem:[%s1 + $0x148] sm:$0xf]
  %v96 = vld [vmem:[%s1 + $0x14c] sm:$0xf]
  %v97 = vld [vmem:[%s1 + $0x150] sm:$0xf]
  %v98 = vld [vmem:[%s1 + $0x154] sm:$0xf]
  %v99 = vld [vmem:[%s1 + $0x158] sm:$0xf]
  %v100 = vld [vmem:[%s1 + $0x15c] sm:$0xf]
  %v101 = vld [vmem:[%s1 + $0x160] sm:$0xf]
  %v102 = vld [vmem:[%s1 + $0x164] sm:$0xf]
  %v103 = vld [vmem:[%s1 + $0x168] sm:$0xf]
  %v104 = vld [vmem:[%s1 + $0x16c] sm:$0xf]
  %v105 = vld [vmem:[%s1 + $0x170] sm:$0xf]
  %v106 = vld [vmem:[%s1 + $0x174] sm:$0xf]
  %v107 = vld [vmem:[%s1 + $0x178] sm:$0xf]
  %v108 = vld [vmem:[%s1 + $0x17c] sm:$0xf]
  %v109 = vld [vmem:[%s1 + $0x180] sm:$0xf]
  %v110 = vld [vmem:[%s1 + $0x184] sm:$0xf]
  %v111 = vld [vmem:[%s1 + $0x188] sm:$0xf]
  %v112 = vld [vmem:[%s1 + $0x18c] sm:$0xf]
  %v113 = vld [vmem:[%s1 + $0x190] sm:$0xf]
  %v114 = vld [vmem:[%s1 + $0x194] sm:$0xf]
  %v115 = vld [vmem:[%s1 + $0x198] sm:$0xf]
  %v116 = vld [vmem:[%s1 + $0x19c] sm:$0xf]
  %v117 = vld [vmem:[%s1 + $0x1a0] sm:$0xf]
  %v118 = vld [vmem:[%s1 + $0x1a4] sm:$0xf]
  %v119 = vld [vmem:[%s1 + $0x1a8] sm:$0xf]
  %v120 = vld [vmem:[%s1 + $0x1ac] sm:$0xf]
  %v121 = vld [vmem:[%s1 + $0x1b0] sm:$0xf]
  %v122 = vld [vmem:[%s1 + $0x1b4] sm:$0xf]
  %v123 = vld [vmem:[%s1 + $0x1b8] sm:$0xf]
  %v124 = vld [vmem:[%s1 + $0x1bc] sm:$0xf]
  %v125 = vld [vmem:[%s1 + $0x1c0] sm:$0xf]
  %v126 = vld [vmem:[%s1 + $0x1c4] sm:$0xf]
  %v127 = vld [vmem:[%s1 + $0x1c8] sm:$0xf]
  %v128 = vld [vmem:[%s1 + $0x1cc] sm:$0xf]
  %v129 = vld [vmem:[%s1 + $0x1d0] sm:$0xf]
  %v130 = vld [vmem:[%s1 + $0x1d4] sm:$0xf]
  %v131 = vld [vmem:[%s1 + $0x1d8] sm:$0xf]
  %v132 = vld [vmem:[%s1 + $0x1dc] sm:$0xf]
  %v133 = vld [vmem:[%s1 + $0x1e0] sm:$0xf]
  %v134 = vld [vmem:[%s1 + $0x1e4] sm:$0xf]
  %v135 = vld [vmem:[%s1 + $0x1e8] sm:$0xf]
  %v136 = vld [vmem:[%s1 + $0x1ec] sm:$0xf]
  %v137 = vld [vmem:[%s1 + $0x1f0] sm:$0xf]
  %v138 = vld [vmem:[%s1 + $0x1f4] sm:$0xf]
  %v139 = vld [vmem:[%s1 + $0x1f8] sm:$0xf]
  %v140 = vld [vmem:[%s1 + $0x1fc] sm:$0xf]
  %v141 = vld [vmem:[%s1 + $0x200] sm:$0xf]
  %v142 = vld [vmem:[%s1 + $0x204] sm:$0xf]
  %v143 = vld [vmem:[%s1 + $0x208] sm:$0xf]
  %v144 = vld [vmem:[%s1 + $0x20c] sm:$0xf]
  %v145 = vld [vmem:[%s1 + $0x210] sm:$0xf]
  %v146 = vld [vmem:[%s1 + $0x214] sm:$0xf]
  %v147 = vld [vmem:[%s1 + $0x218] sm:$0xf]
  %v148 = vld [vmem:[%s1 + $0x21c] sm:$0xf]
  %v149 = vld [vmem:[%s1 + $0x220] sm:$0xf]
  %v150 = vld [vmem:[%s1 + $0x224] sm:$0xf]
  %v151 = vld [vmem:[%s1 + $0x228] sm:$0xf]
  %v152 = vld [vmem:[%s1 + $0x22c] sm:$0xf]
  %v153 = vld [vmem:[%s1 + $0x230] sm:$0xf]
  %v154 = vld [vmem:[%s1 + $0x234] sm:$0xf]
  %v155 = vld [vmem:[%s1 + $0x238] sm:$0xf]
  %v156 = vld [vmem:[%s1 + $0x23c] sm:$0xf]
  %v157 = vld [vmem:[%s1 + $0x240] sm:$0xf]
  %v158 = vld [vmem:[%s1 + $0x244] sm:$0xf]
  %v159 = vld [vmem:[%s1 + $0x248] sm:$0xf]
  %v160 = vld [vmem:[%s1 + $0x24c] sm:$0xf]
  %v161 = vld [vmem:[%s1 + $0x250] sm:$0xf]
  %v162 = vld [vmem:[%s1 + $0x254] sm:$0xf]
  %v163 = vld [vmem:[%s1 + $0x258] sm:$0xf]
  %v164 = vld [vmem:[%s1 + $0x25c] sm:$0xf]
  %v165 = vld [vmem:[%s1 + $0x260] sm:$0xf]
  %v166 = vld [vmem:[%s1 + $0x264] sm:$0xf]
  %v167 = vld [vmem:[%s1 + $0x268] sm:$0xf]
  %v168 = vld [vmem:[%s1 + $0x26c] sm:$0xf]
  %v169 = vld [vmem:[%s1 + $0x270] sm:$0xf]
  %v170 = vld [vmem:[%s1 + $0x274] sm:$0xf]
  %v171 = vld [vmem:[%s1 + $0x278] sm:$0xf]
  %v172 = vld [vmem:[%s1 + $0x27c] sm:$0xf]
  %v173 = vld [vmem:[%s1 + $0x280] sm:$0xf]
  %v174 = vld [vmem:[%s1 + $0x284] sm:$0xf]
  %v175 = vld [vmem:[%s1 + $0x288] sm:$0xf]
  %v176 = vld [vmem:[%s1 + $0x28c] sm:$0xf]
  %v177 = vld [vmem:[%s1 + $0x290] sm:$0xf]
  %v178 = vld [vmem:[%s1 + $0x294] sm:$0xf]
  %v179 = vld [vmem:[%s1 + $0x298] sm:$0xf]
  %v180 = vld [vmem:[%s1 + $0x29c] sm:$0xf]
  %v181 = vld [vmem:[%s1 + $0x2a0] sm:$0xf]
  %v182 = vld [vmem:[%s1 + $0x2a4] sm:$0xf]
  %v183 = vld [vmem:[%s1 + $0x2a8] sm:$0xf]
  %v184 = vld [vmem:[%s1 + $0x2ac] sm:$0xf]
  %v185 = vld [vmem:[%s1 + $0x2b0] sm:$0xf]
  %v186 = vld [vmem:[%s1 + $0x2b4] sm:$0xf]
  %v187 = vld [vmem:[%s1 + $0x2b8] sm:$0xf]
  %v188 = vld [vmem:[%s1 + $0x2bc] sm:$0xf]
  %v189 = vld [vmem:[%s1 + $0x2c0] sm:$0xf]
  %v190 = vld [vmem:[%s1 + $0x2c4] sm:$0xf]
  %v191 = vld [vmem:[%s1 + $0x2c8] sm:$0xf]
  %v192 = vld [vmem:[%s1 + $0x2cc] sm:$0xf]
  %v193 = vld [vmem:[%s1 + $0x2d0] sm:$0xf]
  %v194 = vld [vmem:[%s1 + $0x2d4] sm:$0xf]
  %v195 = vld [vmem:[%s1 + $0x2d8] sm:$0xf]
  %v196 = vld [vmem:[%s1 + $0x2dc] sm:$0xf]
  %v197 = vld [vmem:[%s1 + $0x2e0] sm:$0xf]
  %v198 = vld [vmem:[%s1 + $0x2e4] sm:$0xf]
  %v199 = vld [vmem:[%s1 + $0x2e8] sm:$0xf]
  %v200 = vld [vmem:[%s1 + $0x2ec] sm:$0xf]
  %v201 = vld [vmem:[%s1 + $0x2f0] sm:$0xf]
  %v202 = vld [vmem:[%s1 + $0x2f4] sm:$0xf]
  %v203 = vld [vmem:[%s1 + $0x2f8] sm:$0xf]
  %v204 = vld [vmem:[%s1 + $0x2fc] sm:$0xf]
  %v205 = vld [vmem:[%s1 + $0x300] sm:$0xf]
  %v206 = vld [vmem:[%s1 + $0x304] sm:$0xf]
  %v207 = vld [vmem:[%s1 + $0x308] sm:$0xf]
  %v208 = vld [vmem:[%s1 + $0x30c] sm:$0xf]
  %v209 = vld [vmem:[%s1 + $0x310] sm:$0xf]
  %v210 = vld [vmem:[%s1 + $0x314] sm:$0xf]
  %v211 = vld [vmem:[%s1 + $0x318] sm:$0xf]
  %v212 = vld [vmem:[%s1 + $0x31c] sm:$0xf]
  %v213 = vld [vmem:[%s1 + $0x320] sm:$0xf]
  %v214 = vld [vmem:[%s1 + $0x324] sm:$0xf]
  %v215 = vld [vmem:[%s1 + $0x328] sm:$0xf]
  %v216 = vld [vmem:[%s1 + $0x32c] sm:$0xf]
  %v217 = vld [vmem:[%s1 + $0x330] sm:$0xf]
  %v218 = vld [vmem:[%s1 + $0x334] sm:$0xf]
  %v219 = vld [vmem:[%s1 + $0x338] sm:$0xf]
  %v220 = vld [vmem:[%s1 + $0x33c] sm:$0xf]
  %v221 = vld [vmem:[%s1 + $0x340] sm:$0xf]
  %v222 = vld [vmem:[%s1 + $0x344] sm:$0xf]
  %v223 = vld [vmem:[%s1 + $0x348] sm:$0xf]
  %v224 = vld [vmem:[%s1 + $0x34c] sm:$0xf]
  %v225 = vld [vmem:[%s1 + $0x350] sm:$0xf]
  %v226 = vld [vmem:[%s1 + $0x354] sm:$0xf]
  %v227 = vld [vmem:[%s1 + $0x358] sm:$0xf]
  %v228 = vld [vmem:[%s1 + $0x35c] sm:$0xf]
  %v229 = vld [vmem:[%s1 + $0x360] sm:$0xf]
  %v230 = vld [vmem:[%s1 + $0x364] sm:$0xf]
  %v231 = vld [vmem:[%s1 + $0x368] sm:$0xf]
  %v232 = vld [vmem:[%s1 + $0x36c] sm:$0xf]
  %v233 = vld [vmem:[%s1 + $0x370] sm:$0xf]
  %v234 = vld [vmem:[%s1 + $0x374] sm:$0xf]
  %v235 = vld [vmem:[%s1 + $0x378] sm:$0xf]
  %v236 = vld [vmem:[%s1 + $0x37c] sm:$0xf]
  %v237 = vld [vmem:[%s1 + $0x380] sm:$0xf]
  %v238 = vld [vmem:[%s1 + $0x384] sm:$0xf]
  %v239 = vld [vmem:[%s1 + $0x388] sm:$0xf]
  %v240 = vld [vmem:[%s1 + $0x38c] sm:$0xf]
  %v241 = vld [vmem:[%s1 + $0x390] sm:$0xf]
  %v242 = vld [vmem:[%s1 + $0x394] sm:$0xf]
  %v243 = vld [vmem:[%s1 + $0x398] sm:$0xf]
  %v244 = vld [vmem:[%s1 + $0x39c] sm:$0xf]
  %v245 = vld [vmem:[%s1 + $0x3a0] sm:$0xf]
  %v246 = vld [vmem:[%s1 + $0x3a4] sm:$0xf]
  %v247 = vld [vmem:[%s1 + $0x3a8] sm:$0xf]
  %v248 = vld [vmem:[%s1 + $0x3ac] sm:$0xf]
  %v249 = vld [vmem:[%s1 + $0x3b0] sm:$0xf]
  %v250 = vld [vmem:[%s1 + $0x3b4] sm:$0xf]
  %v251 = vld [vmem:[%s1 + $0x3b8] sm:$0xf]
  %v252 = vld [vmem:[%s1 + $0x3bc] sm:$0xf]
  %v253 = vld [vmem:[%s1 + $0x3c0] sm:$0xf]
  %v254 = vld [vmem:[%s1 + $0x3c4] sm:$0xf]
  %v255 = vld [vmem:[%s1 + $0x3c8] sm:$0xf]
  %v256 = vld [vmem:[%s1 + $0x3cc] sm:$0xf]
  %v257 = vld [vmem:[%s1 + $0x3d0] sm:$0xf]
  %v258 = vld [vmem:[%s1 + $0x3d4] sm:$0xf]
  %v259 = vld [vmem:[%s1 + $0x3d8] sm:$0xf]
  %v260 = vld [vmem:[%s1 + $0x3dc] sm:$0xf]
  %v261 = vld [vmem:[%s1 + $0x3e0] sm:$0xf]
  %v262 = vld [vmem:[%s1 + $0x3e4] sm:$0xf]
  %v263 = vld [vmem:[%s1 + $0x3e8] sm:$0xf]
  %v264 = vld [vmem:[%s1 + $0x3ec] sm:$0xf]
  %v265 = vld [vmem:[%s1 + $0x3f0] sm:$0xf]
  %v266 = vld [vmem:[%s1 + $0x3f4] sm:$0xf]
  %v267 = vld [vmem:[%s1 + $0x3f8] sm:$0xf]
  %v268 = vld [vmem:[%s1 + $0x3fc] sm:$0xf]
  %270 = vst [vmem:[#allocation1] ss:$9 sm:$0xff] %v11
  %v271 = vld [vmem:[#allocation1] sm:$0xff]
  %v272 = vld [vmem:[#allocation1 + $0x9] sm:$0xff]
  %v273 = vld [vmem:[#allocation1 + $0x12] sm:$0xff]
  %v274 = vld [vmem:[#allocation1 + $0x1b] sm:$0xff]
  %v275 = vld [vmem:[#allocation1 + $0x24] sm:$0xff]
  %v276 = vld [vmem:[#allocation1 + $0x2d] sm:$0xff]
  %v277 = vld [vmem:[#allocation1 + $0x36] sm:$0xff]
  %v278 = vld [vmem:[#allocation1 + $0x3f] sm:$0xff]
  %280 = vst [vmem:[#allocation1] ss:$9 sm:$0xff] %v12
  %v281 = vld [vmem:[#allocation1] sm:$0xff]
  %v282 = vld [vmem:[#allocation1 + $0x9] sm:$0xff]
  %v283 = vld [vmem:[#allocation1 + $0x12] sm:$0xff]
  %v284 = vld [vmem:[#allocation1 + $0x1b] sm:$0xff]
  %v285 = vld [vmem:[#allocation1 + $0x24] sm:$0xff]
  %v286 = vld [vmem:[#allocation1 + $0x2d] sm:$0xff]
  %v287 = vld [vmem:[#allocation1 + $0x36] sm:$0xff]
  %v288 = vld [vmem:[#allocation1 + $0x3f] sm:$0xff]
  %v561 = vunpack.c.l.b16 %v13
  %v562 = vunpack.c.l.b16 %v14
  %v563 = vunpack.c.l.b16 %v15
  %v564 = vunpack.c.l.b16 %v16
  %v565 = vunpack.c.l.b16 %v17
  %v566 = vunpack.c.l.b16 %v18
  %v567 = vunpack.c.l.b16 %v19
  %v568 = vunpack.c.l.b16 %v20
  %v569 = vunpack.c.l.b16 %v21
  %v570 = vunpack.c.l.b16 %v22
  %v571 = vunpack.c.l.b16 %v23
  %v572 = vunpack.c.l.b16 %v24
  %v573 = vunpack.c.l.b16 %v25
  %v574 = vunpack.c.l.b16 %v26
  %v575 = vunpack.c.l.b16 %v27
  %v576 = vunpack.c.l.b16 %v28
  %v577 = vunpack.c.l.b16 %v29
  %v578 = vunpack.c.l.b16 %v30
  %v579 = vunpack.c.l.b16 %v31
  %v580 = vunpack.c.l.b16 %v32
  %v581 = vunpack.c.l.b16 %v33
  %v582 = vunpack.c.l.b16 %v34
  %v583 = vunpack.c.l.b16 %v35
  %v584 = vunpack.c.l.b16 %v36
  %v585 = vunpack.c.l.b16 %v37
  %v586 = vunpack.c.l.b16 %v38
  %v587 = vunpack.c.l.b16 %v39
  %v588 = vunpack.c.l.b16 %v40
  %v589 = vunpack.c.l.b16 %v41
  %v590 = vunpack.c.l.b16 %v42
  %v591 = vunpack.c.l.b16 %v43
  %v592 = vunpack.c.l.b16 %v44
  %v593 = vunpack.c.l.b16 %v45
  %v594 = vunpack.c.l.b16 %v46
  %v595 = vunpack.c.l.b16 %v47
  %v596 = vunpack.c.l.b16 %v48
  %v597 = vunpack.c.l.b16 %v49
  %v598 = vunpack.c.l.b16 %v50
  %v599 = vunpack.c.l.b16 %v51
  %v600 = vunpack.c.l.b16 %v52
  %v601 = vunpack.c.l.b16 %v53
  %v602 = vunpack.c.l.b16 %v54
  %v603 = vunpack.c.l.b16 %v55
  %v604 = vunpack.c.l.b16 %v56
  %v605 = vunpack.c.l.b16 %v57
  %v606 = vunpack.c.l.b16 %v58
  %v607 = vunpack.c.l.b16 %v59
  %v608 = vunpack.c.l.b16 %v60
  %v609 = vunpack.c.l.b16 %v61
  %v610 = vunpack.c.l.b16 %v62
  %v611 = vunpack.c.l.b16 %v63
  %v612 = vunpack.c.l.b16 %v64
  %v613 = vunpack.c.l.b16 %v65
  %v614 = vunpack.c.l.b16 %v66
  %v615 = vunpack.c.l.b16 %v67
  %v616 = vunpack.c.l.b16 %v68
  %v617 = vunpack.c.l.b16 %v69
  %v618 = vunpack.c.l.b16 %v70
  %v619 = vunpack.c.l.b16 %v71
  %v620 = vunpack.c.l.b16 %v72
  %v621 = vunpack.c.l.b16 %v73
  %v622 = vunpack.c.l.b16 %v74
  %v623 = vunpack.c.l.b16 %v75
  %v624 = vunpack.c.l.b16 %v76
  %v625 = vunpack.c.l.b16 %v77
  %v626 = vunpack.c.l.b16 %v78
  %v627 = vunpack.c.l.b16 %v79
  %v628 = vunpack.c.l.b16 %v80
  %v629 = vunpack.c.l.b16 %v81
  %v630 = vunpack.c.l.b16 %v82
  %v631 = vunpack.c.l.b16 %v83
  %v632 = vunpack.c.l.b16 %v84
  %v633 = vunpack.c.l.b16 %v85
  %v634 = vunpack.c.l.b16 %v86
  %v635 = vunpack.c.l.b16 %v87
  %v636 = vunpack.c.l.b16 %v88
  %v637 = vunpack.c.l.b16 %v89
  %v638 = vunpack.c.l.b16 %v90
  %v639 = vunpack.c.l.b16 %v91
  %v640 = vunpack.c.l.b16 %v92
  %v641 = vunpack.c.l.b16 %v93
  %v642 = vunpack.c.l.b16 %v94
  %v643 = vunpack.c.l.b16 %v95
  %v644 = vunpack.c.l.b16 %v96
  %v645 = vunpack.c.l.b16 %v97
  %v646 = vunpack.c.l.b16 %v98
  %v647 = vunpack.c.l.b16 %v99
  %v648 = vunpack.c.l.b16 %v100
  %v649 = vunpack.c.l.b16 %v101
  %v650 = vunpack.c.l.b16 %v102
  %v651 = vunpack.c.l.b16 %v103
  %v652 = vunpack.c.l.b16 %v104
  %v653 = vunpack.c.l.b16 %v105
  %v654 = vunpack.c.l.b16 %v106
  %v655 = vunpack.c.l.b16 %v107
  %v656 = vunpack.c.l.b16 %v108
  %v657 = vunpack.c.l.b16 %v109
  %v658 = vunpack.c.l.b16 %v110
  %v659 = vunpack.c.l.b16 %v111
  %v660 = vunpack.c.l.b16 %v112
  %v661 = vunpack.c.l.b16 %v113
  %v662 = vunpack.c.l.b16 %v114
  %v663 = vunpack.c.l.b16 %v115
  %v664 = vunpack.c.l.b16 %v116
  %v665 = vunpack.c.l.b16 %v117
  %v666 = vunpack.c.l.b16 %v118
  %v667 = vunpack.c.l.b16 %v119
  %v668 = vunpack.c.l.b16 %v120
  %v669 = vunpack.c.l.b16 %v121
  %v670 = vunpack.c.l.b16 %v122
  %v671 = vunpack.c.l.b16 %v123
  %v672 = vunpack.c.l.b16 %v124
  %v673 = vunpack.c.l.b16 %v125
  %v674 = vunpack.c.l.b16 %v126
  %v675 = vunpack.c.l.b16 %v127
  %v676 = vunpack.c.l.b16 %v128
  %v677 = vunpack.c.l.b16 %v129
  %v678 = vunpack.c.l.b16 %v130
  %v679 = vunpack.c.l.b16 %v131
  %v680 = vunpack.c.l.b16 %v132
  %v681 = vunpack.c.l.b16 %v133
  %v682 = vunpack.c.l.b16 %v134
  %v683 = vunpack.c.l.b16 %v135
  %v684 = vunpack.c.l.b16 %v136
  %v685 = vunpack.c.l.b16 %v137
  %v686 = vunpack.c.l.b16 %v138
  %v687 = vunpack.c.l.b16 %v139
  %v688 = vunpack.c.l.b16 %v140
  %v689 = vunpack.c.l.b16 %v141
  %v690 = vunpack.c.l.b16 %v142
  %v691 = vunpack.c.l.b16 %v143
  %v692 = vunpack.c.l.b16 %v144
  %v693 = vunpack.c.l.b16 %v145
  %v694 = vunpack.c.l.b16 %v146
  %v695 = vunpack.c.l.b16 %v147
  %v696 = vunpack.c.l.b16 %v148
  %v697 = vunpack.c.l.b16 %v149
  %v698 = vunpack.c.l.b16 %v150
  %v699 = vunpack.c.l.b16 %v151
  %v700 = vunpack.c.l.b16 %v152
  %v701 = vunpack.c.l.b16 %v153
  %v702 = vunpack.c.l.b16 %v154
  %v703 = vunpack.c.l.b16 %v155
  %v704 = vunpack.c.l.b16 %v156
  %v705 = vunpack.c.l.b16 %v157
  %v706 = vunpack.c.l.b16 %v158
  %v707 = vunpack.c.l.b16 %v159
  %v708 = vunpack.c.l.b16 %v160
  %v709 = vunpack.c.l.b16 %v161
  %v710 = vunpack.c.l.b16 %v162
  %v711 = vunpack.c.l.b16 %v163
  %v712 = vunpack.c.l.b16 %v164
  %v713 = vunpack.c.l.b16 %v165
  %v714 = vunpack.c.l.b16 %v166
  %v715 = vunpack.c.l.b16 %v167
  %v716 = vunpack.c.l.b16 %v168
  %v717 = vunpack.c.l.b16 %v169
  %v718 = vunpack.c.l.b16 %v170
  %v719 = vunpack.c.l.b16 %v171
  %v720 = vunpack.c.l.b16 %v172
  %v721 = vunpack.c.l.b16 %v173
  %v722 = vunpack.c.l.b16 %v174
  %v723 = vunpack.c.l.b16 %v175
  %v724 = vunpack.c.l.b16 %v176
  %v725 = vunpack.c.l.b16 %v177
  %v726 = vunpack.c.l.b16 %v178
  %v727 = vunpack.c.l.b16 %v179
  %v728 = vunpack.c.l.b16 %v180
  %v729 = vunpack.c.l.b16 %v181
  %v730 = vunpack.c.l.b16 %v182
  %v731 = vunpack.c.l.b16 %v183
  %v732 = vunpack.c.l.b16 %v184
  %v733 = vunpack.c.l.b16 %v185
  %v734 = vunpack.c.l.b16 %v186
  %v735 = vunpack.c.l.b16 %v187
  %v736 = vunpack.c.l.b16 %v188
  %v737 = vunpack.c.l.b16 %v189
  %v738 = vunpack.c.l.b16 %v190
  %v739 = vunpack.c.l.b16 %v191
  %v740 = vunpack.c.l.b16 %v192
  %v741 = vunpack.c.l.b16 %v193
  %v742 = vunpack.c.l.b16 %v194
  %v743 = vunpack.c.l.b16 %v195
  %v744 = vunpack.c.l.b16 %v196
  %v745 = vunpack.c.l.b16 %v197
  %v746 = vunpack.c.l.b16 %v198
  %v747 = vunpack.c.l.b16 %v199
  %v748 = vunpack.c.l.b16 %v200
  %v749 = vunpack.c.l.b16 %v201
  %v750 = vunpack.c.l.b16 %v202
  %v751 = vunpack.c.l.b16 %v203
  %v752 = vunpack.c.l.b16 %v204
  %v753 = vunpack.c.l.b16 %v205
  %v754 = vunpack.c.l.b16 %v206
  %v755 = vunpack.c.l.b16 %v207
  %v756 = vunpack.c.l.b16 %v208
  %v757 = vunpack.c.l.b16 %v209
  %v758 = vunpack.c.l.b16 %v210
  %v759 = vunpack.c.l.b16 %v211
  %v760 = vunpack.c.l.b16 %v212
  %v761 = vunpack.c.l.b16 %v213
  %v762 = vunpack.c.l.b16 %v214
  %v763 = vunpack.c.l.b16 %v215
  %v764 = vunpack.c.l.b16 %v216
  %v765 = vunpack.c.l.b16 %v217
  %v766 = vunpack.c.l.b16 %v218
  %v767 = vunpack.c.l.b16 %v219
  %v768 = vunpack.c.l.b16 %v220
  %v769 = vunpack.c.l.b16 %v221
  %v770 = vunpack.c.l.b16 %v222
  %v771 = vunpack.c.l.b16 %v223
  %v772 = vunpack.c.l.b16 %v224
  %v773 = vunpack.c.l.b16 %v225
  %v774 = vunpack.c.l.b16 %v226
  %v775 = vunpack.c.l.b16 %v227
  %v776 = vunpack.c.l.b16 %v228
  %v777 = vunpack.c.l.b16 %v229
  %v778 = vunpack.c.l.b16 %v230
  %v779 = vunpack.c.l.b16 %v231
  %v780 = vunpack.c.l.b16 %v232
  %v781 = vunpack.c.l.b16 %v233
  %v782 = vunpack.c.l.b16 %v234
  %v783 = vunpack.c.l.b16 %v235
  %v784 = vunpack.c.l.b16 %v236
  %v785 = vunpack.c.l.b16 %v237
  %v786 = vunpack.c.l.b16 %v238
  %v787 = vunpack.c.l.b16 %v239
  %v788 = vunpack.c.l.b16 %v240
  %v789 = vunpack.c.l.b16 %v241
  %v790 = vunpack.c.l.b16 %v242
  %v791 = vunpack.c.l.b16 %v243
  %v792 = vunpack.c.l.b16 %v244
  %v793 = vunpack.c.l.b16 %v245
  %v794 = vunpack.c.l.b16 %v246
  %v795 = vunpack.c.l.b16 %v247
  %v796 = vunpack.c.l.b16 %v248
  %v797 = vunpack.c.l.b16 %v249
  %v798 = vunpack.c.l.b16 %v250
  %v799 = vunpack.c.l.b16 %v251
  %v800 = vunpack.c.l.b16 %v252
  %v801 = vunpack.c.l.b16 %v253
  %v802 = vunpack.c.l.b16 %v254
  %v803 = vunpack.c.l.b16 %v255
  %v804 = vunpack.c.l.b16 %v256
  %v805 = vunpack.c.l.b16 %v257
  %v806 = vunpack.c.l.b16 %v258
  %v807 = vunpack.c.l.b16 %v259
  %v808 = vunpack.c.l.b16 %v260
  %v809 = vunpack.c.l.b16 %v261
  %v810 = vunpack.c.l.b16 %v262
  %v811 = vunpack.c.l.b16 %v263
  %v812 = vunpack.c.l.b16 %v264
  %v813 = vunpack.c.l.b16 %v265
  %v814 = vunpack.c.l.b16 %v266
  %v815 = vunpack.c.l.b16 %v267
  %v816 = vunpack.c.l.b16 %v268
  %v817 = vpack.c.b16 %v562, %v561
  %v818 = vpack.c.b16 %v564, %v563
  %v819 = vpack.c.b16 %v566, %v565
  %v820 = vpack.c.b16 %v568, %v567
  %v821 = vpack.c.b16 %v570, %v569
  %v822 = vpack.c.b16 %v572, %v571
  %v823 = vpack.c.b16 %v574, %v573
  %v824 = vpack.c.b16 %v576, %v575
  %v825 = vpack.c.b16 %v578, %v577
  %v826 = vpack.c.b16 %v580, %v579
  %v827 = vpack.c.b16 %v582, %v581
  %v828 = vpack.c.b16 %v584, %v583
  %v829 = vpack.c.b16 %v586, %v585
  %v830 = vpack.c.b16 %v588, %v587
  %v831 = vpack.c.b16 %v590, %v589
  %v832 = vpack.c.b16 %v592, %v591
  %v833 = vpack.c.b16 %v594, %v593
  %v834 = vpack.c.b16 %v596, %v595
  %v835 = vpack.c.b16 %v598, %v597
  %v836 = vpack.c.b16 %v600, %v599
  %v837 = vpack.c.b16 %v602, %v601
  %v838 = vpack.c.b16 %v604, %v603
  %v839 = vpack.c.b16 %v606, %v605
  %v840 = vpack.c.b16 %v608, %v607
  %v841 = vpack.c.b16 %v610, %v609
  %v842 = vpack.c.b16 %v612, %v611
  %v843 = vpack.c.b16 %v614, %v613
  %v844 = vpack.c.b16 %v616, %v615
  %v845 = vpack.c.b16 %v618, %v617
  %v846 = vpack.c.b16 %v620, %v619
  %v847 = vpack.c.b16 %v622, %v621
  %v848 = vpack.c.b16 %v624, %v623
  %v849 = vpack.c.b16 %v626, %v625
  %v850 = vpack.c.b16 %v628, %v627
  %v851 = vpack.c.b16 %v630, %v629
  %v852 = vpack.c.b16 %v632, %v631
  %v853 = vpack.c.b16 %v634, %v633
  %v854 = vpack.c.b16 %v636, %v635
  %v855 = vpack.c.b16 %v638, %v637
  %v856 = vpack.c.b16 %v640, %v639
  %v857 = vpack.c.b16 %v642, %v641
  %v858 = vpack.c.b16 %v644, %v643
  %v859 = vpack.c.b16 %v646, %v645
  %v860 = vpack.c.b16 %v648, %v647
  %v861 = vpack.c.b16 %v650, %v649
  %v862 = vpack.c.b16 %v652, %v651
  %v863 = vpack.c.b16 %v654, %v653
  %v864 = vpack.c.b16 %v656, %v655
  %v865 = vpack.c.b16 %v658, %v657
  %v866 = vpack.c.b16 %v660, %v659
  %v867 = vpack.c.b16 %v662, %v661
  %v868 = vpack.c.b16 %v664, %v663
  %v869 = vpack.c.b16 %v666, %v665
  %v870 = vpack.c.b16 %v668, %v667
  %v871 = vpack.c.b16 %v670, %v669
  %v872 = vpack.c.b16 %v672, %v671
  %v873 = vpack.c.b16 %v674, %v673
  %v874 = vpack.c.b16 %v676, %v675
  %v875 = vpack.c.b16 %v678, %v677
  %v876 = vpack.c.b16 %v680, %v679
  %v877 = vpack.c.b16 %v682, %v681
  %v878 = vpack.c.b16 %v684, %v683
  %v879 = vpack.c.b16 %v686, %v685
  %v880 = vpack.c.b16 %v688, %v687
  %v881 = vpack.c.b16 %v690, %v689
  %v882 = vpack.c.b16 %v692, %v691
  %v883 = vpack.c.b16 %v694, %v693
  %v884 = vpack.c.b16 %v696, %v695
  %v885 = vpack.c.b16 %v698, %v697
  %v886 = vpack.c.b16 %v700, %v699
  %v887 = vpack.c.b16 %v702, %v701
  %v888 = vpack.c.b16 %v704, %v703
  %v889 = vpack.c.b16 %v706, %v705
  %v890 = vpack.c.b16 %v708, %v707
  %v891 = vpack.c.b16 %v710, %v709
  %v892 = vpack.c.b16 %v712, %v711
  %v893 = vpack.c.b16 %v714, %v713
  %v894 = vpack.c.b16 %v716, %v715
  %v895 = vpack.c.b16 %v718, %v717
  %v896 = vpack.c.b16 %v720, %v719
  %v897 = vpack.c.b16 %v722, %v721
  %v898 = vpack.c.b16 %v724, %v723
  %v899 = vpack.c.b16 %v726, %v725
  %v900 = vpack.c.b16 %v728, %v727
  %v901 = vpack.c.b16 %v730, %v729
  %v902 = vpack.c.b16 %v732, %v731
  %v903 = vpack.c.b16 %v734, %v733
  %v904 = vpack.c.b16 %v736, %v735
  %v905 = vpack.c.b16 %v738, %v737
  %v906 = vpack.c.b16 %v740, %v739
  %v907 = vpack.c.b16 %v742, %v741
  %v908 = vpack.c.b16 %v744, %v743
  %v909 = vpack.c.b16 %v746, %v745
  %v910 = vpack.c.b16 %v748, %v747
  %v911 = vpack.c.b16 %v750, %v749
  %v912 = vpack.c.b16 %v752, %v751
  %v913 = vpack.c.b16 %v754, %v753
  %v914 = vpack.c.b16 %v756, %v755
  %v915 = vpack.c.b16 %v758, %v757
  %v916 = vpack.c.b16 %v760, %v759
  %v917 = vpack.c.b16 %v762, %v761
  %v918 = vpack.c.b16 %v764, %v763
  %v919 = vpack.c.b16 %v766, %v765
  %v920 = vpack.c.b16 %v768, %v767
  %v921 = vpack.c.b16 %v770, %v769
  %v922 = vpack.c.b16 %v772, %v771
  %v923 = vpack.c.b16 %v774, %v773
  %v924 = vpack.c.b16 %v776, %v775
  %v925 = vpack.c.b16 %v778, %v777
  %v926 = vpack.c.b16 %v780, %v779
  %v927 = vpack.c.b16 %v782, %v781
  %v928 = vpack.c.b16 %v784, %v783
  %v929 = vpack.c.b16 %v786, %v785
  %v930 = vpack.c.b16 %v788, %v787
  %v931 = vpack.c.b16 %v790, %v789
  %v932 = vpack.c.b16 %v792, %v791
  %v933 = vpack.c.b16 %v794, %v793
  %v934 = vpack.c.b16 %v796, %v795
  %v935 = vpack.c.b16 %v798, %v797
  %v936 = vpack.c.b16 %v800, %v799
  %v937 = vpack.c.b16 %v802, %v801
  %v938 = vpack.c.b16 %v804, %v803
  %v939 = vpack.c.b16 %v806, %v805
  %v940 = vpack.c.b16 %v808, %v807
  %v941 = vpack.c.b16 %v810, %v809
  %v942 = vpack.c.b16 %v812, %v811
  %v943 = vpack.c.b16 %v814, %v813
  %v944 = vpack.c.b16 %v816, %v815
  %1073 = vmatpush.bf16.msra.mxu0 %v824
  %1074 = vmatpush.bf16.msra.mxu0 %v823
  %1075 = vmatpush.bf16.msra.mxu0 %v822
  %1076 = vmatpush.bf16.msra.mxu0 %v821
  %1077 = vmatpush.bf16.msra.mxu0 %v820
  %1078 = vmatpush.bf16.msra.mxu0 %v819
  %1079 = vmatpush.bf16.msra.mxu0 %v818
  %1080 = vmatpush.bf16.msra.mxu0 %v817
  %1081 = vmatmul.bf16.gmra.mxu0 %v271
  %v1082 = vpop.f32.mrf.mxu0
  %v1083 = vadd.f32 0.0, %v1082
  %v1084 = vpop.f32.mrf.mxu0
  %1085 = vdwg.mxu0
  %1086 = vmatpush.bf16.msra.mxu0 %v832
  %1087 = vmatpush.bf16.msra.mxu0 %v831
  %1088 = vmatpush.bf16.msra.mxu0 %v830
  %1089 = vmatpush.bf16.msra.mxu0 %v829
  %1090 = vmatpush.bf16.msra.mxu0 %v828
  %1091 = vmatpush.bf16.msra.mxu0 %v827
  %1092 = vmatpush.bf16.msra.mxu0 %v826
  %1093 = vmatpush.bf16.msra.mxu0 %v825
  %1094 = vmatmul.bf16.gmra.mxu0 %v272
  %v1095 = vpop.f32.mrf.mxu0
  %v1096 = vadd.f32 %v1083, %v1095
  %v1097 = vpop.f32.mrf.mxu0
  %1098 = vdwg.mxu0
  %1099 = vmatpush.bf16.msra.mxu0 %v840
  %1100 = vmatpush.bf16.msra.mxu0 %v839
  %1101 = vmatpush.bf16.msra.mxu0 %v838
  %1102 = vmatpush.bf16.msra.mxu0 %v837
  %1103 = vmatpush.bf16.msra.mxu0 %v836
  %1104 = vmatpush.bf16.msra.mxu0 %v835
  %1105 = vmatpush.bf16.msra.mxu0 %v834
  %1106 = vmatpush.bf16.msra.mxu0 %v833
  %1107 = vmatmul.bf16.gmra.mxu0 %v273
  %v1108 = vpop.f32.mrf.mxu0
  %v1109 = vadd.f32 %v1096, %v1108
  %v1110 = vpop.f32.mrf.mxu0
  %1111 = vdwg.mxu0
  %1112 = vmatpush.bf16.msra.mxu0 %v848
  %1113 = vmatpush.bf16.msra.mxu0 %v847
  %1114 = vmatpush.bf16.msra.mxu0 %v846
  %1115 = vmatpush.bf16.msra.mxu0 %v845
  %1116 = vmatpush.bf16.msra.mxu0 %v844
  %1117 = vmatpush.bf16.msra.mxu0 %v843
  %1118 = vmatpush.bf16.msra.mxu0 %v842
  %1119 = vmatpush.bf16.msra.mxu0 %v841
  %1120 = vmatmul.bf16.gmra.mxu0 %v274
  %v1121 = vpop.f32.mrf.mxu0
  %v1122 = vadd.f32 %v1109, %v1121
  %v1123 = vpop.f32.mrf.mxu0
  %1124 = vdwg.mxu0
  %1125 = vmatpush.bf16.msra.mxu0 %v856
  %1126 = vmatpush.bf16.msra.mxu0 %v855
  %1127 = vmatpush.bf16.msra.mxu0 %v854
  %1128 = vmatpush.bf16.msra.mxu0 %v853
  %1129 = vmatpush.bf16.msra.mxu0 %v852
  %1130 = vmatpush.bf16.msra.mxu0 %v851
  %1131 = vmatpush.bf16.msra.mxu0 %v850
  %1132 = vmatpush.bf16.msra.mxu0 %v849
  %1133 = vmatmul.bf16.gmra.mxu0 %v275
  %v1134 = vpop.f32.mrf.mxu0
  %v1135 = vadd.f32 %v1122, %v1134
  %v1136 = vpop.f32.mrf.mxu0
  %1137 = vdwg.mxu0
  %1138 = vmatpush.bf16.msra.mxu0 %v864
  %1139 = vmatpush.bf16.msra.mxu0 %v863
  %1140 = vmatpush.bf16.msra.mxu0 %v862
  %1141 = vmatpush.bf16.msra.mxu0 %v861
  %1142 = vmatpush.bf16.msra.mxu0 %v860
  %1143 = vmatpush.bf16.msra.mxu0 %v859
  %1144 = vmatpush.bf16.msra.mxu0 %v858
  %1145 = vmatpush.bf16.msra.mxu0 %v857
  %1146 = vmatmul.bf16.gmra.mxu0 %v276
  %v1147 = vpop.f32.mrf.mxu0
  %v1148 = vadd.f32 %v1135, %v1147
  %v1149 = vpop.f32.mrf.mxu0
  %1150 = vdwg.mxu0
  %1151 = vmatpush.bf16.msra.mxu0 %v872
  %1152 = vmatpush.bf16.msra.mxu0 %v871
  %1153 = vmatpush.bf16.msra.mxu0 %v870
  %1154 = vmatpush.bf16.msra.mxu0 %v869
  %1155 = vmatpush.bf16.msra.mxu0 %v868
  %1156 = vmatpush.bf16.msra.mxu0 %v867
  %1157 = vmatpush.bf16.msra.mxu0 %v866
  %1158 = vmatpush.bf16.msra.mxu0 %v865
  %1159 = vmatmul.bf16.gmra.mxu0 %v277
  %v1160 = vpop.f32.mrf.mxu0
  %v1161 = vadd.f32 %v1148, %v1160
  %v1162 = vpop.f32.mrf.mxu0
  %1163 = vdwg.mxu0
  %1164 = vmatpush.bf16.msra.mxu0 %v880
  %1165 = vmatpush.bf16.msra.mxu0 %v879
  %1166 = vmatpush.bf16.msra.mxu0 %v878
  %1167 = vmatpush.bf16.msra.mxu0 %v877
  %1168 = vmatpush.bf16.msra.mxu0 %v876
  %1169 = vmatpush.bf16.msra.mxu0 %v875
  %1170 = vmatpush.bf16.msra.mxu0 %v874
  %1171 = vmatpush.bf16.msra.mxu0 %v873
  %1172 = vmatmul.bf16.gmra.mxu0 %v278
  %v1173 = vpop.f32.mrf.mxu0
  %v1174 = vadd.f32 %v1161, %v1173
  %v1175 = vpop.f32.mrf.mxu0
  %1176 = vdwg.mxu0
  %1177 = vmatpush.bf16.msra.mxu0 %v888
  %1178 = vmatpush.bf16.msra.mxu0 %v887
  %1179 = vmatpush.bf16.msra.mxu0 %v886
  %1180 = vmatpush.bf16.msra.mxu0 %v885
  %1181 = vmatpush.bf16.msra.mxu0 %v884
  %1182 = vmatpush.bf16.msra.mxu0 %v883
  %1183 = vmatpush.bf16.msra.mxu0 %v882
  %1184 = vmatpush.bf16.msra.mxu0 %v881
  %1185 = vmatmul.bf16.gmra.mxu0 %v281
  %v1186 = vpop.f32.mrf.mxu0
  %v1187 = vadd.f32 %v1174, %v1186
  %v1188 = vpop.f32.mrf.mxu0
  %1189 = vdwg.mxu0
  %1190 = vmatpush.bf16.msra.mxu0 %v896
  %1191 = vmatpush.bf16.msra.mxu0 %v895
  %1192 = vmatpush.bf16.msra.mxu0 %v894
  %1193 = vmatpush.bf16.msra.mxu0 %v893
  %1194 = vmatpush.bf16.msra.mxu0 %v892
  %1195 = vmatpush.bf16.msra.mxu0 %v891
  %1196 = vmatpush.bf16.msra.mxu0 %v890
  %1197 = vmatpush.bf16.msra.mxu0 %v889
  %1198 = vmatmul.bf16.gmra.mxu0 %v282
  %v1199 = vpop.f32.mrf.mxu0
  %v1200 = vadd.f32 %v1187, %v1199
  %v1201 = vpop.f32.mrf.mxu0
  %1202 = vdwg.mxu0
  %1203 = vmatpush.bf16.msra.mxu0 %v904
  %1204 = vmatpush.bf16.msra.mxu0 %v903
  %1205 = vmatpush.bf16.msra.mxu0 %v902
  %1206 = vmatpush.bf16.msra.mxu0 %v901
  %1207 = vmatpush.bf16.msra.mxu0 %v900
  %1208 = vmatpush.bf16.msra.mxu0 %v899
  %1209 = vmatpush.bf16.msra.mxu0 %v898
  %1210 = vmatpush.bf16.msra.mxu0 %v897
  %1211 = vmatmul.bf16.gmra.mxu0 %v283
  %v1212 = vpop.f32.mrf.mxu0
  %v1213 = vadd.f32 %v1200, %v1212
  %v1214 = vpop.f32.mrf.mxu0
  %1215 = vdwg.mxu0
  %1216 = vmatpush.bf16.msra.mxu0 %v912
  %1217 = vmatpush.bf16.msra.mxu0 %v911
  %1218 = vmatpush.bf16.msra.mxu0 %v910
  %1219 = vmatpush.bf16.msra.mxu0 %v909
  %1220 = vmatpush.bf16.msra.mxu0 %v908
  %1221 = vmatpush.bf16.msra.mxu0 %v907
  %1222 = vmatpush.bf16.msra.mxu0 %v906
  %1223 = vmatpush.bf16.msra.mxu0 %v905
  %1224 = vmatmul.bf16.gmra.mxu0 %v284
  %v1225 = vpop.f32.mrf.mxu0
  %v1226 = vadd.f32 %v1213, %v1225
  %v1227 = vpop.f32.mrf.mxu0
  %1228 = vdwg.mxu0
  %1229 = vmatpush.bf16.msra.mxu0 %v920
  %1230 = vmatpush.bf16.msra.mxu0 %v919
  %1231 = vmatpush.bf16.msra.mxu0 %v918
  %1232 = vmatpush.bf16.msra.mxu0 %v917
  %1233 = vmatpush.bf16.msra.mxu0 %v916
  %1234 = vmatpush.bf16.msra.mxu0 %v915
  %1235 = vmatpush.bf16.msra.mxu0 %v914
  %1236 = vmatpush.bf16.msra.mxu0 %v913
  %1237 = vmatmul.bf16.gmra.mxu0 %v285
  %v1238 = vpop.f32.mrf.mxu0
  %v1239 = vadd.f32 %v1226, %v1238
  %v1240 = vpop.f32.mrf.mxu0
  %1241 = vdwg.mxu0
  %1242 = vmatpush.bf16.msra.mxu0 %v928
  %1243 = vmatpush.bf16.msra.mxu0 %v927
  %1244 = vmatpush.bf16.msra.mxu0 %v926
  %1245 = vmatpush.bf16.msra.mxu0 %v925
  %1246 = vmatpush.bf16.msra.mxu0 %v924
  %1247 = vmatpush.bf16.msra.mxu0 %v923
  %1248 = vmatpush.bf16.msra.mxu0 %v922
  %1249 = vmatpush.bf16.msra.mxu0 %v921
  %1250 = vmatmul.bf16.gmra.mxu0 %v286
  %v1251 = vpop.f32.mrf.mxu0
  %v1252 = vadd.f32 %v1239, %v1251
  %v1253 = vpop.f32.mrf.mxu0
  %1254 = vdwg.mxu0
  %1255 = vmatpush.bf16.msra.mxu0 %v936
  %1256 = vmatpush.bf16.msra.mxu0 %v935
  %1257 = vmatpush.bf16.msra.mxu0 %v934
  %1258 = vmatpush.bf16.msra.mxu0 %v933
  %1259 = vmatpush.bf16.msra.mxu0 %v932
  %1260 = vmatpush.bf16.msra.mxu0 %v931
  %1261 = vmatpush.bf16.msra.mxu0 %v930
  %1262 = vmatpush.bf16.msra.mxu0 %v929
  %1263 = vmatmul.bf16.gmra.mxu0 %v287
  %v1264 = vpop.f32.mrf.mxu0
  %v1265 = vadd.f32 %v1252, %v1264
  %v1266 = vpop.f32.mrf.mxu0
  %1267 = vdwg.mxu0
  %1268 = vmatpush.bf16.msra.mxu0 %v944
  %1269 = vmatpush.bf16.msra.mxu0 %v943
  %1270 = vmatpush.bf16.msra.mxu0 %v942
  %1271 = vmatpush.bf16.msra.mxu0 %v941
  %1272 = vmatpush.bf16.msra.mxu0 %v940
  %1273 = vmatpush.bf16.msra.mxu0 %v939
  %1274 = vmatpush.bf16.msra.mxu0 %v938
  %1275 = vmatpush.bf16.msra.mxu0 %v937
  %1276 = vmatmul.bf16.gmra.mxu0 %v288
  %v1277 = vpop.f32.mrf.mxu0
  %v1278 = vadd.f32 %v1265, %v1277
  %v1279 = vpop.f32.mrf.mxu0
  %1280 = vdwg.mxu0
  %1281 = vst [vmem:[%s2] sm:$0x3] %v1278
  // Predicated region
  $region10: #{d_res_3d_cnn_forward.5} parent=0 // pred_check
    _
  $region11: #{d_res_3d_cnn_forward.5} parent=0 // pred_check_branch
    %1283 = sbr.rel (0) target = $region13
  $region12: #{d_res_3d_cnn_forward.5} parent=0 // pred_region
    _
  $region13: #{d_res_3d_cnn_forward.5} parent=0 // pred_fallthru
    _
  // Predicated region
  $region14: #{d_res_3d_cnn_forward.5} parent=0 // pred_check
    _
  $region15: #{d_res_3d_cnn_forward.5} parent=0 // pred_check_branch
    %1285 = sbr.rel (0) target = $region17
  $region16: #{d_res_3d_cnn_forward.5} parent=0 // pred_region
    _
  $region17: #{d_res_3d_cnn_forward.5} parent=0 // pred_fallthru
    _

// kernel: d_res_3d_cnn_forward.4
$region0: #{d_res_3d_cnn_forward.4}
  #allocation0 [shape = 'u32[]', space=smem, size = 0x4, offset = 0x4, fixed_abs, tag = 'smem constant byte address 0x4 - core index']
  #allocation1 [shape = 'u32[72,128]{1,0:T(1,128)}', space=vmem, size = 0x9000, scoped, tag = 'internal scratch']
  #allocation2 [shape = 'bf16[6,16,256]{2,1,0:T(8,128)(2,1)}', space=vmem, size = 0xc000, scoped, tag = 'scratch operand']
  #allocation3 [shape = 'bf16[6,16,256]{2,1,0:T(8,128)(2,1)}', space=vmem, size = 0xc000, scoped, tag = 'scratch operand']
  %s0 = inlined_call_operand.vmem [shape: bf16[2,6,16,256], index: 0, kind: input, shape index: {}]
  %s1 = inlined_call_operand.vmem [shape: bf16[16,432], index: 1, kind: input, shape index: {}]
  %s2 = inlined_call_operand.vmem [shape: f32[16,1], index: 2, kind: input, shape index: {}]
  %s3 = inlined_call_operand.vmem [shape: bf16[16,432], index: 3, kind: input, shape index: {}]
  %s4 = inlined_call_operand.vmem [shape: f32[16,1], index: 4, kind: input, shape index: {}]
  %s5 = inlined_call_operand.vmem [shape: bf16[16,432], index: 5, kind: input, shape index: {}]
  %s6 = inlined_call_operand.vmem [shape: f32[16,1], index: 6, kind: input, shape index: {}]
  %s7 = inlined_call_operand.vmem [shape: bf16[4,4,128,128], index: 7, kind: input, shape index: {}]
  %s8 = inlined_call_operand.vmem [shape: f32[1,128], index: 8, kind: input, shape index: {}]
  %s9 = inlined_call_operand.vmem [shape: bf16[2,16,128], index: 9, kind: output, shape index: {}]
  %s10 = sld [smem:[#allocation0]]
  $region83: #{d_res_3d_cnn_forward.4} parent=0
    _
  %s12 = ssub.s32 1, %s10
  %s13 = scalar_select 0, %s12, %s10
  loop: start=0, step=1, limit=4
  $region2: #{d_res_3d_cnn_forward.4} parent=0 // loop_pre_header
    _
  $region3: #{d_res_3d_cnn_forward.4} parent=0 // loop_header
    %s15 = sphi 0, %s19
    %p16 = scmp.ge.s32.totalorder %s15, 4
    %s25 = sphi 0, %s27
    %s28 = sphi 0, %s25
    %s29 = sphi 0, %s28
    %s45 = sphi 0, %s29
    %s49 = sphi 0, %s49
    %s51 = sphi 0, %s49
    %s52 = sphi 0, %s51
    %s66 = sphi 0, %s52
    %s70 = sphi 0, %s70
    %s72 = sphi 0, %s70
    %s73 = sphi 0, %s72
    %s87 = sphi 0, %s73
    %s91 = sphi 0, %s91
    %s93 = sphi 0, %s91
    %s94 = sphi 0, %s93
    %s108 = sphi 0, %s94
    %s112 = sphi 0, %s112
    %s114 = sphi 0, %s112
    %s115 = sphi 0, %s114
    %s129 = sphi 0, %s115
    %s133 = sphi 0, %s133
    %s135 = sphi 0, %s133
    %s136 = sphi 0, %s135
    %s150 = sphi 0, %s136
    %s154 = sphi 0, %s154
    %s156 = sphi 0, %s154
    %s157 = sphi 0, %s156
    %s171 = sphi 0, %s157
    %s175 = sphi 0, %s175
    %s177 = sphi 0, %s175
    %s178 = sphi 0, %s177
    %s192 = sphi 0, %s178
    %s196 = sphi 0, %s196
    %s198 = sphi 0, %s196
    %s199 = sphi 0, %s198
    %s213 = sphi 0, %s199
    %s219 = sphi 0, %s221
    %s222 = sphi 0, %s219
    %s223 = sphi 0, %s222
    %s239 = sphi 0, %s223
  $region4: #{d_res_3d_cnn_forward.4} parent=0 // loop_header_branch
    %18 = sbr.rel (%p16) target = $region8
  $region5: #{d_res_3d_cnn_forward.4} parent=0 // loop_body
    %s20 = ssub.s32 %s15, 1
    %s21 = ssub.s32 %s15, 2
    %s22 = sadd.s32 %s15, 1
    %s23 = ssub.s32 %s15, %s22
    %p24 = scmp.eq.s32.totalorder %s23, 0
    %s26 = sadd.s32 %s25, 1
    %s27 = scalar_select %p24, %s25, %s26
    %p30 = pneg %p24
    %p31 = scmp.eq.s32.totalorder %s15, 1
    %p32 = por %p30, %p31
    %p33 = scmp.ne.s32.totalorder %s25, %s28
    %p34 = scmp.eq.s32.totalorder %s15, 0
    %p35 = por %p33, %p34
    %p36 = scmp.ne.s32.totalorder %s25, %s28
    %p37 = scmp.eq.s32.totalorder %s20, 1
    %p38 = por %p36, %p37
    %p39 = scmp.ne.s32.totalorder %s28, %s29
    %p40 = scmp.eq.s32.totalorder %s20, 0
    %p41 = por %p39, %p40
    %p42 = scmp.ne.s32.totalorder %s28, %s29
    %p43 = scmp.eq.s32.totalorder %s21, 1
    %p44 = por %p42, %p43
    %p46 = scmp.ne.s32.totalorder %s29, %s45
    %p47 = scmp.eq.s32.totalorder %s21, 0
    %p48 = por %p46, %p47
    %s50 = sadd.s32 %s49, 1
    %p53 = scmp.eq.s32.totalorder %s15, 1
    %p54 = scmp.ne.s32.totalorder %s49, %s51
    %p55 = scmp.eq.s32.totalorder %s15, 0
    %p56 = por %p54, %p55
    %p57 = scmp.ne.s32.totalorder %s49, %s51
    %p58 = scmp.eq.s32.totalorder %s20, 1
    %p59 = por %p57, %p58
    %p60 = scmp.ne.s32.totalorder %s51, %s52
    %p61 = scmp.eq.s32.totalorder %s20, 0
    %p62 = por %p60, %p61
    %p63 = scmp.ne.s32.totalorder %s51, %s52
    %p64 = scmp.eq.s32.totalorder %s21, 1
    %p65 = por %p63, %p64
    %p67 = scmp.ne.s32.totalorder %s52, %s66
    %p68 = scmp.eq.s32.totalorder %s21, 0
    %p69 = por %p67, %p68
    %s71 = sadd.s32 %s70, 1
    %p74 = scmp.eq.s32.totalorder %s15, 1
    %p75 = scmp.ne.s32.totalorder %s70, %s72
    %p76 = scmp.eq.s32.totalorder %s15, 0
    %p77 = por %p75, %p76
    %p78 = scmp.ne.s32.totalorder %s70, %s72
    %p79 = scmp.eq.s32.totalorder %s20, 1
    %p80 = por %p78, %p79
    %p81 = scmp.ne.s32.totalorder %s72, %s73
    %p82 = scmp.eq.s32.totalorder %s20, 0
    %p83 = por %p81, %p82
    %p84 = scmp.ne.s32.totalorder %s72, %s73
    %p85 = scmp.eq.s32.totalorder %s21, 1
    %p86 = por %p84, %p85
    %p88 = scmp.ne.s32.totalorder %s73, %s87
    %p89 = scmp.eq.s32.totalorder %s21, 0
    %p90 = por %p88, %p89
    %s92 = sadd.s32 %s91, 1
    %p95 = scmp.eq.s32.totalorder %s15, 1
    %p96 = scmp.ne.s32.totalorder %s91, %s93
    %p97 = scmp.eq.s32.totalorder %s15, 0
    %p98 = por %p96, %p97
    %p99 = scmp.ne.s32.totalorder %s91, %s93
    %p100 = scmp.eq.s32.totalorder %s20, 1
    %p101 = por %p99, %p100
    %p102 = scmp.ne.s32.totalorder %s93, %s94
    %p103 = scmp.eq.s32.totalorder %s20, 0
    %p104 = por %p102, %p103
    %p105 = scmp.ne.s32.totalorder %s93, %s94
    %p106 = scmp.eq.s32.totalorder %s21, 1
    %p107 = por %p105, %p106
    %p109 = scmp.ne.s32.totalorder %s94, %s108
    %p110 = scmp.eq.s32.totalorder %s21, 0
    %p111 = por %p109, %p110
    %s113 = sadd.s32 %s112, 1
    %p116 = scmp.eq.s32.totalorder %s15, 1
    %p117 = scmp.ne.s32.totalorder %s112, %s114
    %p118 = scmp.eq.s32.totalorder %s15, 0
    %p119 = por %p117, %p118
    %p120 = scmp.ne.s32.totalorder %s112, %s114
    %p121 = scmp.eq.s32.totalorder %s20, 1
    %p122 = por %p120, %p121
    %p123 = scmp.ne.s32.totalorder %s114, %s115
    %p124 = scmp.eq.s32.totalorder %s20, 0
    %p125 = por %p123, %p124
    %p126 = scmp.ne.s32.totalorder %s114, %s115
    %p127 = scmp.eq.s32.totalorder %s21, 1
    %p128 = por %p126, %p127
    %p130 = scmp.ne.s32.totalorder %s115, %s129
    %p131 = scmp.eq.s32.totalorder %s21, 0
    %p132 = por %p130, %p131
    %s134 = sadd.s32 %s133, 1
    %p137 = scmp.eq.s32.totalorder %s15, 1
    %p138 = scmp.ne.s32.totalorder %s133, %s135
    %p139 = scmp.eq.s32.totalorder %s15, 0
    %p140 = por %p138, %p139
    %p141 = scmp.ne.s32.totalorder %s133, %s135
    %p142 = scmp.eq.s32.totalorder %s20, 1
    %p143 = por %p141, %p142
    %p144 = scmp.ne.s32.totalorder %s135, %s136
    %p145 = scmp.eq.s32.totalorder %s20, 0
    %p146 = por %p144, %p145
    %p147 = scmp.ne.s32.totalorder %s135, %s136
    %p148 = scmp.eq.s32.totalorder %s21, 1
    %p149 = por %p147, %p148
    %p151 = scmp.ne.s32.totalorder %s136, %s150
    %p152 = scmp.eq.s32.totalorder %s21, 0
    %p153 = por %p151, %p152
    %s155 = sadd.s32 %s154, 1
    %p158 = scmp.eq.s32.totalorder %s15, 1
    %p159 = scmp.ne.s32.totalorder %s154, %s156
    %p160 = scmp.eq.s32.totalorder %s15, 0
    %p161 = por %p159, %p160
    %p162 = scmp.ne.s32.totalorder %s154, %s156
    %p163 = scmp.eq.s32.totalorder %s20, 1
    %p164 = por %p162, %p163
    %p165 = scmp.ne.s32.totalorder %s156, %s157
    %p166 = scmp.eq.s32.totalorder %s20, 0
    %p167 = por %p165, %p166
    %p168 = scmp.ne.s32.totalorder %s156, %s157
    %p169 = scmp.eq.s32.totalorder %s21, 1
    %p170 = por %p168, %p169
    %p172 = scmp.ne.s32.totalorder %s157, %s171
    %p173 = scmp.eq.s32.totalorder %s21, 0
    %p174 = por %p172, %p173
    %s176 = sadd.s32 %s175, 1
    %p179 = scmp.eq.s32.totalorder %s15, 1
    %p180 = scmp.ne.s32.totalorder %s175, %s177
    %p181 = scmp.eq.s32.totalorder %s15, 0
    %p182 = por %p180, %p181
    %p183 = scmp.ne.s32.totalorder %s175, %s177
    %p184 = scmp.eq.s32.totalorder %s20, 1
    %p185 = por %p183, %p184
    %p186 = scmp.ne.s32.totalorder %s177, %s178
    %p187 = scmp.eq.s32.totalorder %s20, 0
    %p188 = por %p186, %p187
    %p189 = scmp.ne.s32.totalorder %s177, %s178
    %p190 = scmp.eq.s32.totalorder %s21, 1
    %p191 = por %p189, %p190
    %p193 = scmp.ne.s32.totalorder %s178, %s192
    %p194 = scmp.eq.s32.totalorder %s21, 0
    %p195 = por %p193, %p194
    %s197 = sadd.s32 %s196, 1
    %p200 = scmp.eq.s32.totalorder %s15, 1
    %p201 = scmp.ne.s32.totalorder %s196, %s198
    %p202 = scmp.eq.s32.totalorder %s15, 0
    %p203 = por %p201, %p202
    %p204 = scmp.ne.s32.totalorder %s196, %s198
    %p205 = scmp.eq.s32.totalorder %s20, 1
    %p206 = por %p204, %p205
    %p207 = scmp.ne.s32.totalorder %s198, %s199
    %p208 = scmp.eq.s32.totalorder %s20, 0
    %p209 = por %p207, %p208
    %p210 = scmp.ne.s32.totalorder %s198, %s199
    %p211 = scmp.eq.s32.totalorder %s21, 1
    %p212 = por %p210, %p211
    %p214 = scmp.ne.s32.totalorder %s199, %s213
    %p215 = scmp.eq.s32.totalorder %s21, 0
    %p216 = por %p214, %p215
    %s217 = ssub.s32 %s15, %s22
    %p218 = scmp.eq.s32.totalorder %s217, 0
    %s220 = sadd.s32 %s219, 1
    %s221 = scalar_select %p218, %s219, %s220
    %p224 = pneg %p218
    %p225 = scmp.eq.s32.totalorder %s15, 1
    %p226 = por %p224, %p225
    %p227 = scmp.ne.s32.totalorder %s219, %s222
    %p228 = scmp.eq.s32.totalorder %s15, 0
    %p229 = por %p227, %p228
    %p230 = scmp.ne.s32.totalorder %s219, %s222
    %p231 = scmp.eq.s32.totalorder %s20, 1
    %p232 = por %p230, %p231
    %p233 = scmp.ne.s32.totalorder %s222, %s223
    %p234 = scmp.eq.s32.totalorder %s20, 0
    %p235 = por %p233, %p234
    %p236 = scmp.ne.s32.totalorder %s222, %s223
    %p237 = scmp.eq.s32.totalorder %s21, 1
    %p238 = por %p236, %p237
    %p240 = scmp.ne.s32.totalorder %s223, %s239
    %p241 = scmp.eq.s32.totalorder %s21, 0
    %p242 = por %p240, %p241
    %p243 = scmp.le.s32.totalorder 1, %s15
    %p244 = scmp.lt.s32.totalorder %s15, 3
    %p245 = pnand %p243, %p244
    %p246 = pneg %p245
    // Predicated region
    $region9: #{d_res_3d_cnn_forward.4} parent=5 // pred_check
      _
    $region10: #{d_res_3d_cnn_forward.4} parent=5 // pred_check_branch
      %248 = sbr.rel (%p245) target = $region12
    $region11: #{d_res_3d_cnn_forward.4} parent=5 // pred_region
      %s249 = ssub.s32 %s15, 1
      // Predicated region
      $region13: #{d_res_3d_cnn_forward.4} parent=11 // pred_check
        %p250 = pneg %p62
      $region14: #{d_res_3d_cnn_forward.4} parent=11 // pred_check_branch
        %252 = sbr.rel (%p250) target = $region16
      $region15: #{d_res_3d_cnn_forward.4} parent=11 // pred_region
        _
      $region16: #{d_res_3d_cnn_forward.4} parent=11 // pred_fallthru
        _
      // Predicated region
      $region17: #{d_res_3d_cnn_forward.4} parent=11 // pred_check
        %p253 = pneg %p83
      $region18: #{d_res_3d_cnn_forward.4} parent=11 // pred_check_branch
        %255 = sbr.rel (%p253) target = $region20
      $region19: #{d_res_3d_cnn_forward.4} parent=11 // pred_region
        _
      $region20: #{d_res_3d_cnn_forward.4} parent=11 // pred_fallthru
        _
      // Predicated region
      $region21: #{d_res_3d_cnn_forward.4} parent=11 // pred_check
        %p256 = pneg %p104
      $region22: #{d_res_3d_cnn_forward.4} parent=11 // pred_check_branch
        %258 = sbr.rel (%p256) target = $region24
      $region23: #{d_res_3d_cnn_forward.4} parent=11 // pred_region
        _
      $region24: #{d_res_3d_cnn_forward.4} parent=11 // pred_fallthru
        _
      // Predicated region
      $region25: #{d_res_3d_cnn_forward.4} parent=11 // pred_check
        %p259 = pneg %p125
      $region26: #{d_res_3d_cnn_forward.4} parent=11 // pred_check_branch
        %261 = sbr.rel (%p259) target = $region28
      $region27: #{d_res_3d_cnn_forward.4} parent=11 // pred_region
        _
      $region28: #{d_res_3d_cnn_forward.4} parent=11 // pred_fallthru
        _
      // Predicated region
      $region29: #{d_res_3d_cnn_forward.4} parent=11 // pred_check
        %p262 = pneg %p146
      $region30: #{d_res_3d_cnn_forward.4} parent=11 // pred_check_branch
        %264 = sbr.rel (%p262) target = $region32
      $region31: #{d_res_3d_cnn_forward.4} parent=11 // pred_region
        _
      $region32: #{d_res_3d_cnn_forward.4} parent=11 // pred_fallthru
        _
      // Predicated region
      $region33: #{d_res_3d_cnn_forward.4} parent=11 // pred_check
        %p265 = pneg %p167
      $region34: #{d_res_3d_cnn_forward.4} parent=11 // pred_check_branch
        %267 = sbr.rel (%p265) target = $region36
      $region35: #{d_res_3d_cnn_forward.4} parent=11 // pred_region
        _
      $region36: #{d_res_3d_cnn_forward.4} parent=11 // pred_fallthru
        _
      // Predicated region
      $region37: #{d_res_3d_cnn_forward.4} parent=11 // pred_check
        %p268 = pneg %p188
      $region38: #{d_res_3d_cnn_forward.4} parent=11 // pred_check_branch
        %270 = sbr.rel (%p268) target = $region40
      $region39: #{d_res_3d_cnn_forward.4} parent=11 // pred_region
        _
      $region40: #{d_res_3d_cnn_forward.4} parent=11 // pred_fallthru
        _
      // Predicated region
      $region41: #{d_res_3d_cnn_forward.4} parent=11 // pred_check
        %p271 = pneg %p209
      $region42: #{d_res_3d_cnn_forward.4} parent=11 // pred_check_branch
        %273 = sbr.rel (%p271) target = $region44
      $region43: #{d_res_3d_cnn_forward.4} parent=11 // pred_region
        _
      $region44: #{d_res_3d_cnn_forward.4} parent=11 // pred_fallthru
        _
    $region12: #{d_res_3d_cnn_forward.4} parent=5 // pred_fallthru
      _
    %p274 = scmp.lt.s32.totalorder %s15, 2
    // Predicated region
    $region45: #{d_res_3d_cnn_forward.4} parent=5 // pred_check
      %p275 = pneg %p274
    $region46: #{d_res_3d_cnn_forward.4} parent=5 // pred_check_branch
      %277 = sbr.rel (%p275) target = $region48
    $region47: #{d_res_3d_cnn_forward.4} parent=5 // pred_region
      // Predicated region
      $region49: #{d_res_3d_cnn_forward.4} parent=47 // pred_check
        %p278 = pneg %p35
      $region50: #{d_res_3d_cnn_forward.4} parent=47 // pred_check_branch
        %280 = sbr.rel (%p278) target = $region52
      $region51: #{d_res_3d_cnn_forward.4} parent=47 // pred_region
        %p281 = scmp.lt.s32.totalorder %s15, 1
        %s282 = scalar_select %p281, %s15, 1
        %s283 = smul.addr %s282, 24
        %s284 = smul.addr %s283, 4
        %s285 = scalar_lea.vmem %s0, %s284
      $region52: #{d_res_3d_cnn_forward.4} parent=47 // pred_fallthru
        _
    $region48: #{d_res_3d_cnn_forward.4} parent=5 // pred_fallthru
      _
    %p286 = scmp.le.s32.totalorder 1, %s15
    %p287 = scmp.lt.s32.totalorder %s15, 3
    %p288 = pnand %p286, %p287
    %p289 = pneg %p288
    // Predicated region
    $region53: #{d_res_3d_cnn_forward.4} parent=5 // pred_check
      _
    $region54: #{d_res_3d_cnn_forward.4} parent=5 // pred_check_branch
      %291 = sbr.rel (%p288) target = $region56
    $region55: #{d_res_3d_cnn_forward.4} parent=5 // pred_region
      %s292 = ssub.s32 %s15, 1
      %p293 = scmp.lt.s32.totalorder %s20, 1
      %s294 = scalar_select %p293, %s20, 1
      %s295 = smul.addr %s294, 24
      %s296 = smul.addr %s295, 4
      %s297 = scalar_lea.vmem %s0, %s296
      %p298 = pneg %p41
      %p299 = pneg %p38
      %p300 = pneg %p62
      %p301 = pneg %p59
      %p302 = pneg %p83
      %p303 = pneg %p80
      %p304 = pneg %p104
      %p305 = pneg %p101
      %p306 = pneg %p125
      %p307 = pneg %p122
      %p308 = pneg %p146
      %p309 = pneg %p143
      %p310 = pneg %p167
      %p311 = pneg %p164
      %p312 = pneg %p188
      %p313 = pneg %p185
      %p314 = pneg %p209
      %p315 = pneg %p206
      %p316 = pneg %p235
      %p317 = pneg %p232
      %p318 = scmp.lt.s32.totalorder %s20, 1
      %s319 = scalar_select %p318, %s20, 1
      %s320 = smul.addr %s319, 2
      %s321 = smul.addr %s320, 4
      %s322 = scalar_lea.vmem %s9, %s321
      %p323 = scmp.lt.s32.totalorder %s20, 1
      %s324 = scalar_select %p323, %s20, 1
      %s325 = smul.addr %s324, 24
      %s326 = smul.addr %s325, 4
      %s327 = scalar_lea.vmem %s0, %s326
      %p328 = scmp.lt.s32.totalorder %s20, 1
      %s329 = scalar_select %p328, %s20, 1
      %s330 = smul.addr %s329, 2
      %s331 = smul.addr %s330, 4
      %s332 = scalar_lea.vmem %s9, %s331
      %334 = vst [vmem:[#allocation2] sm:$0xff] 0
      %335 = vst [vmem:[#allocation2 + $0x8] sm:$0xff] 0
      %336 = vst [vmem:[#allocation2 + $0x10] sm:$0xff] 0
      %337 = vst [vmem:[#allocation2 + $0x18] sm:$0xff] 0
      %338 = vst [vmem:[#allocation2 + $0x20] sm:$0xff] 0
      %339 = vst [vmem:[#allocation2 + $0x28] sm:$0xff] 0
      %340 = vst [vmem:[#allocation2 + $0x30] sm:$0xff] 0
      %341 = vst [vmem:[#allocation2 + $0x38] sm:$0xff] 0
      %342 = vst [vmem:[#allocation2 + $0x40] sm:$0xff] 0
      %343 = vst [vmem:[#allocation2 + $0x48] sm:$0xff] 0
      %344 = vst [vmem:[#allocation2 + $0x50] sm:$0xff] 0
      %345 = vst [vmem:[#allocation2 + $0x58] sm:$0xff] 0
      %346 = vst [vmem:[#allocation3] sm:$0xff] 0
      %347 = vst [vmem:[#allocation3 + $0x8] sm:$0xff] 0
      %348 = vst [vmem:[#allocation3 + $0x10] sm:$0xff] 0
      %349 = vst [vmem:[#allocation3 + $0x18] sm:$0xff] 0
      %350 = vst [vmem:[#allocation3 + $0x20] sm:$0xff] 0
      %351 = vst [vmem:[#allocation3 + $0x28] sm:$0xff] 0
      %352 = vst [vmem:[#allocation3 + $0x30] sm:$0xff] 0
      %353 = vst [vmem:[#allocation3 + $0x38] sm:$0xff] 0
      %354 = vst [vmem:[#allocation3 + $0x40] sm:$0xff] 0
      %355 = vst [vmem:[#allocation3 + $0x48] sm:$0xff] 0
      %356 = vst [vmem:[#allocation3 + $0x50] sm:$0xff] 0
      %357 = vst [vmem:[#allocation3 + $0x58] sm:$0xff] 0
      %v358 = vld [vmem:[%s8] sm:$0x1]
      %v359 = vld [vmem:[%s1] sm:$0xff]
      %v360 = vld [vmem:[%s1 + $0x8] sm:$0xff]
      %v361 = vld [vmem:[%s1 + $0x10] sm:$0xff]
      %v362 = vld [vmem:[%s1 + $0x18] sm:$0xff]
      %v363 = vld [vmem:[%s2] sm:$0xff]
      %v364 = vld [vmem:[%s2 + $0x8] sm:$0xff]
      loop: start=0, step=1, limit=4
      $region57: #{d_res_3d_cnn_forward.4} parent=55 // loop_pre_header
        _
      $region58: #{d_res_3d_cnn_forward.4} parent=55 // loop_header
        %s366 = sphi 0, %s370
        %p367 = scmp.ge.s32.totalorder %s366, 4
      $region59: #{d_res_3d_cnn_forward.4} parent=55 // loop_header_branch
        %369 = sbr.rel (%p367) target = $region63
      $region60: #{d_res_3d_cnn_forward.4} parent=55 // loop_body
        %s371 = smul.u32 %s366, 4
        %s372 = smul.addr %s371, 4
        %s373 = scalar_lea.vmem %s327, %s372
        %v374 = vld [vmem:[%s373] sm:$0xff]
        %v375 = vld [vmem:[%s373 + $0x8] sm:$0xff]
        %s376 = sadd.s32 %s366, 1
        %s377 = smul.u32 %s376, 4
        %s378 = smul.addr %s377, 4
        %s379 = scalar_lea.vmem %s327, %s378
        %v380 = vld [vmem:[%s379] sm:$0xff]
        %v381 = vld [vmem:[%s379 + $0x8] sm:$0xff]
        %s382 = sadd.s32 %s366, 2
        %s383 = smul.u32 %s382, 4
        %s384 = smul.addr %s383, 4
        %s385 = scalar_lea.vmem %s327, %s384
        %v386 = vld [vmem:[%s385] sm:$0xff]
        %v387 = vld [vmem:[%s385 + $0x8] sm:$0xff]
        %v390 = vunpack.c.l.b16 %v374
        %v391 = vunpack.c.l.b16 %v375
        %v392 = vpack.c.b16 %v391, %v390
        %v394 = vunpack.c.h.b16 %v374
        %v395 = vunpack.c.h.b16 %v375
        %v396 = vpack.c.b16 %v395, %v394
        %397 = vrot.lane.b32.xlu0 %v392, 127
        %v398 = vpop.permute.xlu0 %397
        %399 = vrot.lane.b32.xlu0 %v396, 127
        %v400 = vpop.permute.xlu0 %399
        %vm401 = vcmask 1039360
        %v402 = vsel %vm401, %v398, %v400
        %404 = vrot.lane.b32.xlu0 %v392, 126
        %v405 = vpop.permute.xlu0 %404
        %406 = vrot.lane.b32.xlu0 %v396, 126
        %v407 = vpop.permute.xlu0 %406
        %vm408 = vcmask 1031168
        %v409 = vsel %vm408, %v405, %v407
        %411 = vrot.lane.b32.xlu0 %v392, 121
        %v412 = vpop.permute.xlu0 %411
        %413 = vrot.lane.b32.xlu0 %v396, 121
        %v414 = vpop.permute.xlu0 %413
        %vm415 = vcmask 990208
        %v416 = vsel %vm415, %v412, %v414
        %418 = vrot.lane.b32.xlu0 %v392, 120
        %v419 = vpop.permute.xlu0 %418
        %420 = vrot.lane.b32.xlu0 %v396, 120
        %v421 = vpop.permute.xlu0 %420
        %vm422 = vcmask 982016
        %v423 = vsel %vm422, %v419, %v421
        %425 = vrot.lane.b32.xlu0 %v392, 119
        %v426 = vpop.permute.xlu0 %425
        %427 = vrot.lane.b32.xlu0 %v396, 119
        %v428 = vpop.permute.xlu0 %427
        %vm429 = vcmask 973824
        %v430 = vsel %vm429, %v426, %v428
        %432 = vrot.lane.b32.xlu0 %v392, 114
        %v433 = vpop.permute.xlu0 %432
        %434 = vrot.lane.b32.xlu0 %v396, 114
        %v435 = vpop.permute.xlu0 %434
        %vm436 = vcmask 932864
        %v437 = vsel %vm436, %v433, %v435
        %439 = vrot.lane.b32.xlu0 %v392, 113
        %v440 = vpop.permute.xlu0 %439
        %441 = vrot.lane.b32.xlu0 %v396, 113
        %v442 = vpop.permute.xlu0 %441
        %vm443 = vcmask 924672
        %v444 = vsel %vm443, %v440, %v442
        %446 = vrot.lane.b32.xlu0 %v392, 112
        %v447 = vpop.permute.xlu0 %446
        %448 = vrot.lane.b32.xlu0 %v396, 112
        %v449 = vpop.permute.xlu0 %448
        %vm450 = vcmask 916480
        %v451 = vsel %vm450, %v447, %v449
        %v455 = vunpack.c.l.b16 %v380
        %v456 = vunpack.c.l.b16 %v381
        %v457 = vpack.c.b16 %v456, %v455
        %v459 = vunpack.c.h.b16 %v380
        %v460 = vunpack.c.h.b16 %v381
        %v461 = vpack.c.b16 %v460, %v459
        %462 = vrot.lane.b32.xlu0 %v457, 127
        %v463 = vpop.permute.xlu0 %462
        %464 = vrot.lane.b32.xlu0 %v461, 127
        %v465 = vpop.permute.xlu0 %464
        %v466 = vsel %vm401, %v463, %v465
        %468 = vrot.lane.b32.xlu0 %v457, 126
        %v469 = vpop.permute.xlu0 %468
        %470 = vrot.lane.b32.xlu0 %v461, 126
        %v471 = vpop.permute.xlu0 %470
        %v472 = vsel %vm408, %v469, %v471
        %474 = vrot.lane.b32.xlu0 %v457, 121
        %v475 = vpop.permute.xlu0 %474
        %476 = vrot.lane.b32.xlu0 %v461, 121
        %v477 = vpop.permute.xlu0 %476
        %v478 = vsel %vm415, %v475, %v477
        %480 = vrot.lane.b32.xlu0 %v457, 120
        %v481 = vpop.permute.xlu0 %480
        %482 = vrot.lane.b32.xlu0 %v461, 120
        %v483 = vpop.permute.xlu0 %482
        %v484 = vsel %vm422, %v481, %v483
        %486 = vrot.lane.b32.xlu0 %v457, 119
        %v487 = vpop.permute.xlu0 %486
        %488 = vrot.lane.b32.xlu0 %v461, 119
        %v489 = vpop.permute.xlu0 %488
        %v490 = vsel %vm429, %v487, %v489
        %492 = vrot.lane.b32.xlu0 %v457, 114
        %v493 = vpop.permute.xlu0 %492
        %494 = vrot.lane.b32.xlu0 %v461, 114
        %v495 = vpop.permute.xlu0 %494
        %v496 = vsel %vm436, %v493, %v495
        %v500 = vunpack.c.l.b16 %v386
        %v501 = vunpack.c.l.b16 %v387
        %v502 = vpack.c.b16 %v501, %v500
        %503 = vrot.lane.b32.xlu0 %v502, 15
        %v504 = vpop.permute.xlu0 %503
        %v505 = vunpack.c.h.b16 %v386
        %v506 = vunpack.c.h.b16 %v387
        %v507 = vpack.c.b16 %v506, %v505
        %508 = vrot.lane.b32.xlu0 %v502, 14
        %v509 = vpop.permute.xlu0 %508
        %510 = vrot.lane.b32.xlu0 %v507, 14
        %v511 = vpop.permute.xlu0 %510
        %vm512 = vcmask 113664
        %v513 = vsel %vm512, %v509, %v511
        %514 = vrot.lane.b32.xlu0 %v502, 13
        %v515 = vpop.permute.xlu0 %514
        %516 = vrot.lane.b32.xlu0 %v507, 13
        %v517 = vpop.permute.xlu0 %516
        %vm518 = vcmask 105472
        %v519 = vsel %vm518, %v515, %v517
        %520 = vrot.lane.b32.xlu0 %v502, 8
        %v521 = vpop.permute.xlu0 %520
        %522 = vrot.lane.b32.xlu0 %v507, 8
        %v523 = vpop.permute.xlu0 %522
        %vm524 = vcmask 64512
        %v525 = vsel %vm524, %v521, %v523
        %526 = vrot.lane.b32.xlu0 %v502, 7
        %v527 = vpop.permute.xlu0 %526
        %528 = vrot.lane.b32.xlu0 %v507, 7
        %v529 = vpop.permute.xlu0 %528
        %vm530 = vcmask 56320
        %v531 = vsel %vm530, %v527, %v529
        %532 = vrot.lane.b32.xlu0 %v502, 6
        %v533 = vpop.permute.xlu0 %532
        %534 = vrot.lane.b32.xlu0 %v507, 6
        %v535 = vpop.permute.xlu0 %534
        %vm536 = vcmask 48128
        %v537 = vsel %vm536, %v533, %v535
        %538 = vrot.lane.b32.xlu0 %v502, 1
        %v539 = vpop.permute.xlu0 %538
        %540 = vrot.lane.b32.xlu0 %v507, 1
        %v541 = vpop.permute.xlu0 %540
        %vm542 = vcmask 7168
        %v543 = vsel %vm542, %v539, %v541
        %544 = vrot.lane.b32.xlu0 %v502, 127
        %v545 = vpop.permute.xlu0 %544
        %546 = vrot.lane.b32.xlu0 %v507, 127
        %v547 = vpop.permute.xlu0 %546
        %v548 = vsel %vm401, %v545, %v547
        %549 = vrot.lane.b32.xlu0 %v457, 113
        %v550 = vpop.permute.xlu0 %549
        %551 = vrot.lane.b32.xlu0 %v461, 113
        %v552 = vpop.permute.xlu0 %551
        %553 = vrot.lane.b32.xlu0 %v466, 113
        %v554 = vpop.permute.xlu0 %553
        %555 = vrot.lane.b32.xlu0 %v465, 113
        %v556 = vpop.permute.xlu0 %555
        %557 = vrot.lane.b32.xlu0 %v504, 113
        %v558 = vpop.permute.xlu0 %557
        %559 = vrot.lane.b32.xlu0 %v509, 113
        %v560 = vpop.permute.xlu0 %559
        %561 = vrot.lane.b32.xlu0 %v513, 113
        %v562 = vpop.permute.xlu0 %561
        %563 = vrot.lane.b32.xlu0 %v515, 113
        %v564 = vpop.permute.xlu0 %563
        %565 = vrot.lane.b32.xlu0 %v519, 113
        %v566 = vpop.permute.xlu0 %565
        %567 = vrot.lane.b32.xlu0 %v521, 113
        %v568 = vpop.permute.xlu0 %567
        %569 = vrot.lane.b32.xlu0 %v525, 113
        %v570 = vpop.permute.xlu0 %569
        %571 = vrot.lane.b32.xlu0 %v527, 113
        %v572 = vpop.permute.xlu0 %571
        %573 = vrot.lane.b32.xlu0 %v531, 113
        %v574 = vpop.permute.xlu0 %573
        %575 = vrot.lane.b32.xlu0 %v533, 113
        %v576 = vpop.permute.xlu0 %575
        %577 = vrot.lane.b32.xlu0 %v537, 113
        %v578 = vpop.permute.xlu0 %577
        %579 = vrot.lane.b32.xlu0 %v539, 113
        %v580 = vpop.permute.xlu0 %579
        %581 = vrot.lane.b32.xlu0 %v543, 113
        %v582 = vpop.permute.xlu0 %581
        %583 = vrot.lane.b32.xlu0 %v502, 113
        %v584 = vpop.permute.xlu0 %583
        %585 = vrot.lane.b32.xlu0 %v507, 113
        %v586 = vpop.permute.xlu0 %585
        %587 = vrot.lane.b32.xlu0 %v548, 113
        %v588 = vpop.permute.xlu0 %587
        %589 = vrot.lane.b32.xlu0 %v547, 113
        %v590 = vpop.permute.xlu0 %589
        %v591 = vsel %vm443, %v550, %v552
        %v592 = vsel %vm443, %v554, %v556
        %v593 = vsel %vm443, %v560, %v562
        %v594 = vsel %vm443, %v564, %v566
        %v595 = vsel %vm443, %v568, %v570
        %v596 = vsel %vm443, %v572, %v574
        %v597 = vsel %vm443, %v576, %v578
        %v598 = vsel %vm443, %v580, %v582
        %v599 = vsel %vm443, %v584, %v586
        %v600 = vsel %vm443, %v588, %v590
        %613 = vset.pattern.permute.xlu0 0
        %614 = vperm.xlu0 %613, %v363
        %v615 = vpop.permute.xlu0 %614
        %618 = vset.pattern.permute.xlu0 0
        %619 = vperm.xlu0 %618, %v364
        %v620 = vpop.permute.xlu0 %619
        %v626 = vunpack.c.l.b16 %v359
        %v627 = vunpack.c.h.b16 %v359
        %v628 = vunpack.c.l.b16 %v360
        %v629 = vunpack.c.h.b16 %v360
        %v630 = vunpack.c.l.b16 %v361
        %v631 = vunpack.c.h.b16 %v361
        %v632 = vunpack.c.l.b16 %v362
        %v633 = vunpack.c.h.b16 %v362
        %v634 = vpack.c.b16 %v630, %v626
        %v635 = vpack.c.b16 %v631, %v627
        %v636 = vpack.c.b16 %v632, %v628
        %v637 = vpack.c.b16 %v633, %v629
        %vm641 = vcmask 392192
        %v643 = vsel %vm641, %v637, 0
        %645 = vmatpush.bf16.msra.mxu0 %v444
        %646 = vmatpush.bf16.msra.mxu0 %v437
        %647 = vmatpush.bf16.msra.mxu0 %v430
        %648 = vmatpush.bf16.msra.mxu0 %v423
        %649 = vmatpush.bf16.msra.mxu0 %v416
        %650 = vmatpush.bf16.msra.mxu0 %v409
        %651 = vmatpush.bf16.msra.mxu0 %v402
        %652 = vmatpush.bf16.msra.mxu0 %v392
        %653 = vmatmul.bf16.gmra.mxu0 %v634
        %v654 = vpop.f32.mrf.mxu0
        %v655 = vadd.f32 %v615, %v654
        %v656 = vpop.f32.mrf.mxu0
        %v657 = vadd.f32 %v620, %v656
        %658 = vdwg.mxu0
        %659 = vmatpush.bf16.msra.mxu0 %v496
        %660 = vmatpush.bf16.msra.mxu0 %v490
        %661 = vmatpush.bf16.msra.mxu0 %v484
        %662 = vmatpush.bf16.msra.mxu0 %v478
        %663 = vmatpush.bf16.msra.mxu0 %v472
        %664 = vmatpush.bf16.msra.mxu0 %v466
        %665 = vmatpush.bf16.msra.mxu0 %v457
        %666 = vmatpush.bf16.msra.mxu0 %v451
        %667 = vmatmul.bf16.gmra.mxu0 %v635
        %v668 = vpop.f32.mrf.mxu0
        %v669 = vadd.f32 %v655, %v668
        %v670 = vpop.f32.mrf.mxu0
        %v671 = vadd.f32 %v657, %v670
        %672 = vdwg.mxu0
        %673 = vmatpush.bf16.msra.mxu0 %v597
        %674 = vmatpush.bf16.msra.mxu0 %v596
        %675 = vmatpush.bf16.msra.mxu0 %v595
        %676 = vmatpush.bf16.msra.mxu0 %v594
        %677 = vmatpush.bf16.msra.mxu0 %v593
        %678 = vmatpush.bf16.msra.mxu0 %v558
        %679 = vmatpush.bf16.msra.mxu0 %v592
        %680 = vmatpush.bf16.msra.mxu0 %v591
        %681 = vmatmul.bf16.gmra.mxu0 %v636
        %v682 = vpop.f32.mrf.mxu0
        %v683 = vadd.f32 %v669, %v682
        %v684 = vpop.f32.mrf.mxu0
        %v685 = vadd.f32 %v671, %v684
        %686 = vdwg.mxu0
        %687 = vmatpush.bf16.msra.mxu0 0
        %688 = vmatpush.bf16.msra.mxu0 0
        %689 = vmatpush.bf16.msra.mxu0 0
        %690 = vmatpush.bf16.msra.mxu0 0
        %691 = vmatpush.bf16.msra.mxu0 0
        %692 = vmatpush.bf16.msra.mxu0 %v600
        %693 = vmatpush.bf16.msra.mxu0 %v599
        %694 = vmatpush.bf16.msra.mxu0 %v598
        %695 = vmatmul.bf16.gmra.mxu0 %v643
        %v696 = vpop.f32.mrf.mxu0
        %v697 = vadd.f32 %v683, %v696
        %v698 = vpop.f32.mrf.mxu0
        %v699 = vadd.f32 %v685, %v698
        %700 = vdwg.mxu0
        %v701 = vmax.f32 %v697, 0.0
        %v702 = vmax.f32 %v699, 0.0
        %v704 = vperm.slane %v358, 0
        %v706 = vmul.f32 %v701, %v704
        %v707 = vmul.f32 %v702, %v704
        %v708 = vpack.c.bf16 %v706, %v706
        %v709 = vpack.c.bf16 %v707, %v707
        %712 = vrot.lane.b32.xlu0 %v708, 8
        %v713 = vpop.permute.xlu0 %712
        %714 = vrot.lane.b32.xlu0 %v709, 8
        %v715 = vpop.permute.xlu0 %714
        %v716 = vrot.slane %v713, 4
        %v717 = vrot.slane %v715, 4
        %v718 = vsel %vm524, %v716, %v713
        %v719 = vsel %vm524, %v717, %v715
        %s722 = smul.addr %s377, 4
        %s723 = scalar_lea.vmem [#allocation2], %s722
        %vm724 = vcmask 1043520
        %vm725 = vcmask 64516
        %vm726 = vmor %vm725, %vm724
        %727 = vst.msk [vmem:[%s723] sm:$0xff] %vm726, %v718
        %728 = vst.msk [vmem:[%s723 + $0x8] sm:$0xff] %vm726, %v719
      $region61: #{d_res_3d_cnn_forward.4} parent=55 // loop_footer
        %s370 = sadd.s32 1, %s366
      $region62: #{d_res_3d_cnn_forward.4} parent=55 // loop_footer_branch
        %365 = sbr.rel target = $region58
      $region63: #{d_res_3d_cnn_forward.4} parent=55 // loop_exit
        _
      %v729 = vld [vmem:[%s3] sm:$0xff]
      %v730 = vld [vmem:[%s3 + $0x8] sm:$0xff]
      %v731 = vld [vmem:[%s3 + $0x10] sm:$0xff]
      %v732 = vld [vmem:[%s3 + $0x18] sm:$0xff]
      %v733 = vld [vmem:[%s4] sm:$0xff]
      %v734 = vld [vmem:[%s4 + $0x8] sm:$0xff]
      loop: start=0, step=1, limit=4
      $region64: #{d_res_3d_cnn_forward.4} parent=55 // loop_pre_header
        _
      $region65: #{d_res_3d_cnn_forward.4} parent=55 // loop_header
        %s736 = sphi 0, %s740
        %p737 = scmp.ge.s32.totalorder %s736, 4
      $region66: #{d_res_3d_cnn_forward.4} parent=55 // loop_header_branch
        %739 = sbr.rel (%p737) target = $region70
      $region67: #{d_res_3d_cnn_forward.4} parent=55 // loop_body
        %s741 = smul.u32 %s736, 4
        %s742 = smul.addr %s741, 4
        %s743 = scalar_lea.vmem [#allocation2], %s742
        %v744 = vld [vmem:[%s743] sm:$0xff]
        %v745 = vld [vmem:[%s743 + $0x8] sm:$0xff]
        %s746 = sadd.s32 %s736, 1
        %s747 = smul.u32 %s746, 4
        %s748 = smul.addr %s747, 4
        %s749 = scalar_lea.vmem [#allocation2], %s748
        %v750 = vld [vmem:[%s749] sm:$0xff]
        %v751 = vld [vmem:[%s749 + $0x8] sm:$0xff]
        %s752 = sadd.s32 %s736, 2
        %s753 = smul.u32 %s752, 4
        %s754 = smul.addr %s753, 4
        %s755 = scalar_lea.vmem [#allocation2], %s754
        %v756 = vld [vmem:[%s755] sm:$0xff]
        %v757 = vld [vmem:[%s755 + $0x8] sm:$0xff]
        %v760 = vunpack.c.l.b16 %v744
        %v761 = vunpack.c.l.b16 %v745
        %v762 = vpack.c.b16 %v761, %v760
        %v764 = vunpack.c.h.b16 %v744
        %v765 = vunpack.c.h.b16 %v745
        %v766 = vpack.c.b16 %v765, %v764
        %767 = vrot.lane.b32.xlu0 %v762, 127
        %v768 = vpop.permute.xlu0 %767
        %769 = vrot.lane.b32.xlu0 %v766, 127
        %v770 = vpop.permute.xlu0 %769
        %vm771 = vcmask 1039360
        %v772 = vsel %vm771, %v768, %v770
        %774 = vrot.lane.b32.xlu0 %v762, 126
        %v775 = vpop.permute.xlu0 %774
        %776 = vrot.lane.b32.xlu0 %v766, 126
        %v777 = vpop.permute.xlu0 %776
        %vm778 = vcmask 1031168
        %v779 = vsel %vm778, %v775, %v777
        %781 = vrot.lane.b32.xlu0 %v762, 121
        %v782 = vpop.permute.xlu0 %781
        %783 = vrot.lane.b32.xlu0 %v766, 121
        %v784 = vpop.permute.xlu0 %783
        %vm785 = vcmask 990208
        %v786 = vsel %vm785, %v782, %v784
        %788 = vrot.lane.b32.xlu0 %v762, 120
        %v789 = vpop.permute.xlu0 %788
        %790 = vrot.lane.b32.xlu0 %v766, 120
        %v791 = vpop.permute.xlu0 %790
        %vm792 = vcmask 982016
        %v793 = vsel %vm792, %v789, %v791
        %795 = vrot.lane.b32.xlu0 %v762, 119
        %v796 = vpop.permute.xlu0 %795
        %797 = vrot.lane.b32.xlu0 %v766, 119
        %v798 = vpop.permute.xlu0 %797
        %vm799 = vcmask 973824
        %v800 = vsel %vm799, %v796, %v798
        %802 = vrot.lane.b32.xlu0 %v762, 114
        %v803 = vpop.permute.xlu0 %802
        %804 = vrot.lane.b32.xlu0 %v766, 114
        %v805 = vpop.permute.xlu0 %804
        %vm806 = vcmask 932864
        %v807 = vsel %vm806, %v803, %v805
        %809 = vrot.lane.b32.xlu0 %v762, 113
        %v810 = vpop.permute.xlu0 %809
        %811 = vrot.lane.b32.xlu0 %v766, 113
        %v812 = vpop.permute.xlu0 %811
        %vm813 = vcmask 924672
        %v814 = vsel %vm813, %v810, %v812
        %816 = vrot.lane.b32.xlu0 %v762, 112
        %v817 = vpop.permute.xlu0 %816
        %818 = vrot.lane.b32.xlu0 %v766, 112
        %v819 = vpop.permute.xlu0 %818
        %vm820 = vcmask 916480
        %v821 = vsel %vm820, %v817, %v819
        %v825 = vunpack.c.l.b16 %v750
        %v826 = vunpack.c.l.b16 %v751
        %v827 = vpack.c.b16 %v826, %v825
        %v829 = vunpack.c.h.b16 %v750
        %v830 = vunpack.c.h.b16 %v751
        %v831 = vpack.c.b16 %v830, %v829
        %832 = vrot.lane.b32.xlu0 %v827, 127
        %v833 = vpop.permute.xlu0 %832
        %834 = vrot.lane.b32.xlu0 %v831, 127
        %v835 = vpop.permute.xlu0 %834
        %v836 = vsel %vm771, %v833, %v835
        %838 = vrot.lane.b32.xlu0 %v827, 126
        %v839 = vpop.permute.xlu0 %838
        %840 = vrot.lane.b32.xlu0 %v831, 126
        %v841 = vpop.permute.xlu0 %840
        %v842 = vsel %vm778, %v839, %v841
        %844 = vrot.lane.b32.xlu0 %v827, 121
        %v845 = vpop.permute.xlu0 %844
        %846 = vrot.lane.b32.xlu0 %v831, 121
        %v847 = vpop.permute.xlu0 %846
        %v848 = vsel %vm785, %v845, %v847
        %850 = vrot.lane.b32.xlu0 %v827, 120
        %v851 = vpop.permute.xlu0 %850
        %852 = vrot.lane.b32.xlu0 %v831, 120
        %v853 = vpop.permute.xlu0 %852
        %v854 = vsel %vm792, %v851, %v853
        %856 = vrot.lane.b32.xlu0 %v827, 119
        %v857 = vpop.permute.xlu0 %856
        %858 = vrot.lane.b32.xlu0 %v831, 119
        %v859 = vpop.permute.xlu0 %858
        %v860 = vsel %vm799, %v857, %v859
        %862 = vrot.lane.b32.xlu0 %v827, 114
        %v863 = vpop.permute.xlu0 %862
        %864 = vrot.lane.b32.xlu0 %v831, 114
        %v865 = vpop.permute.xlu0 %864
        %v866 = vsel %vm806, %v863, %v865
        %v870 = vunpack.c.l.b16 %v756
        %v871 = vunpack.c.l.b16 %v757
        %v872 = vpack.c.b16 %v871, %v870
        %873 = vrot.lane.b32.xlu0 %v872, 15
        %v874 = vpop.permute.xlu0 %873
        %v875 = vunpack.c.h.b16 %v756
        %v876 = vunpack.c.h.b16 %v757
        %v877 = vpack.c.b16 %v876, %v875
        %878 = vrot.lane.b32.xlu0 %v872, 14
        %v879 = vpop.permute.xlu0 %878
        %880 = vrot.lane.b32.xlu0 %v877, 14
        %v881 = vpop.permute.xlu0 %880
        %vm882 = vcmask 113664
        %v883 = vsel %vm882, %v879, %v881
        %884 = vrot.lane.b32.xlu0 %v872, 13
        %v885 = vpop.permute.xlu0 %884
        %886 = vrot.lane.b32.xlu0 %v877, 13
        %v887 = vpop.permute.xlu0 %886
        %vm888 = vcmask 105472
        %v889 = vsel %vm888, %v885, %v887
        %890 = vrot.lane.b32.xlu0 %v872, 8
        %v891 = vpop.permute.xlu0 %890
        %892 = vrot.lane.b32.xlu0 %v877, 8
        %v893 = vpop.permute.xlu0 %892
        %vm894 = vcmask 64512
        %v895 = vsel %vm894, %v891, %v893
        %896 = vrot.lane.b32.xlu0 %v872, 7
        %v897 = vpop.permute.xlu0 %896
        %898 = vrot.lane.b32.xlu0 %v877, 7
        %v899 = vpop.permute.xlu0 %898
        %vm900 = vcmask 56320
        %v901 = vsel %vm900, %v897, %v899
        %902 = vrot.lane.b32.xlu0 %v872, 6
        %v903 = vpop.permute.xlu0 %902
        %904 = vrot.lane.b32.xlu0 %v877, 6
        %v905 = vpop.permute.xlu0 %904
        %vm906 = vcmask 48128
        %v907 = vsel %vm906, %v903, %v905
        %908 = vrot.lane.b32.xlu0 %v872, 1
        %v909 = vpop.permute.xlu0 %908
        %910 = vrot.lane.b32.xlu0 %v877, 1
        %v911 = vpop.permute.xlu0 %910
        %vm912 = vcmask 7168
        %v913 = vsel %vm912, %v909, %v911
        %914 = vrot.lane.b32.xlu0 %v872, 127
        %v915 = vpop.permute.xlu0 %914
        %916 = vrot.lane.b32.xlu0 %v877, 127
        %v917 = vpop.permute.xlu0 %916
        %v918 = vsel %vm771, %v915, %v917
        %919 = vrot.lane.b32.xlu0 %v827, 113
        %v920 = vpop.permute.xlu0 %919
        %921 = vrot.lane.b32.xlu0 %v831, 113
        %v922 = vpop.permute.xlu0 %921
        %923 = vrot.lane.b32.xlu0 %v836, 113
        %v924 = vpop.permute.xlu0 %923
        %925 = vrot.lane.b32.xlu0 %v835, 113
        %v926 = vpop.permute.xlu0 %925
        %927 = vrot.lane.b32.xlu0 %v874, 113
        %v928 = vpop.permute.xlu0 %927
        %929 = vrot.lane.b32.xlu0 %v879, 113
        %v930 = vpop.permute.xlu0 %929
        %931 = vrot.lane.b32.xlu0 %v883, 113
        %v932 = vpop.permute.xlu0 %931
        %933 = vrot.lane.b32.xlu0 %v885, 113
        %v934 = vpop.permute.xlu0 %933
        %935 = vrot.lane.b32.xlu0 %v889, 113
        %v936 = vpop.permute.xlu0 %935
        %937 = vrot.lane.b32.xlu0 %v891, 113
        %v938 = vpop.permute.xlu0 %937
        %939 = vrot.lane.b32.xlu0 %v895, 113
        %v940 = vpop.permute.xlu0 %939
        %941 = vrot.lane.b32.xlu0 %v897, 113
        %v942 = vpop.permute.xlu0 %941
        %943 = vrot.lane.b32.xlu0 %v901, 113
        %v944 = vpop.permute.xlu0 %943
        %945 = vrot.lane.b32.xlu0 %v903, 113
        %v946 = vpop.permute.xlu0 %945
        %947 = vrot.lane.b32.xlu0 %v907, 113
        %v948 = vpop.permute.xlu0 %947
        %949 = vrot.lane.b32.xlu0 %v909, 113
        %v950 = vpop.permute.xlu0 %949
        %951 = vrot.lane.b32.xlu0 %v913, 113
        %v952 = vpop.permute.xlu0 %951
        %953 = vrot.lane.b32.xlu0 %v872, 113
        %v954 = vpop.permute.xlu0 %953
        %955 = vrot.lane.b32.xlu0 %v877, 113
        %v956 = vpop.permute.xlu0 %955
        %957 = vrot.lane.b32.xlu0 %v918, 113
        %v958 = vpop.permute.xlu0 %957
        %959 = vrot.lane.b32.xlu0 %v917, 113
        %v960 = vpop.permute.xlu0 %959
        %v961 = vsel %vm813, %v920, %v922
        %v962 = vsel %vm813, %v924, %v926
        %v963 = vsel %vm813, %v930, %v932
        %v964 = vsel %vm813, %v934, %v936
        %v965 = vsel %vm813, %v938, %v940
        %v966 = vsel %vm813, %v942, %v944
        %v967 = vsel %vm813, %v946, %v948
        %v968 = vsel %vm813, %v950, %v952
        %v969 = vsel %vm813, %v954, %v956
        %v970 = vsel %vm813, %v958, %v960
        %983 = vset.pattern.permute.xlu0 0
        %984 = vperm.xlu0 %983, %v733
        %v985 = vpop.permute.xlu0 %984
        %988 = vset.pattern.permute.xlu0 0
        %989 = vperm.xlu0 %988, %v734
        %v990 = vpop.permute.xlu0 %989
        %v996 = vunpack.c.l.b16 %v729
        %v997 = vunpack.c.h.b16 %v729
        %v998 = vunpack.c.l.b16 %v730
        %v999 = vunpack.c.h.b16 %v730
        %v1000 = vunpack.c.l.b16 %v731
        %v1001 = vunpack.c.h.b16 %v731
        %v1002 = vunpack.c.l.b16 %v732
        %v1003 = vunpack.c.h.b16 %v732
        %v1004 = vpack.c.b16 %v1000, %v996
        %v1005 = vpack.c.b16 %v1001, %v997
        %v1006 = vpack.c.b16 %v1002, %v998
        %v1007 = vpack.c.b16 %v1003, %v999
        %vm1011 = vcmask 392192
        %v1013 = vsel %vm1011, %v1007, 0
        %1015 = vmatpush.bf16.msra.mxu0 %v814
        %1016 = vmatpush.bf16.msra.mxu0 %v807
        %1017 = vmatpush.bf16.msra.mxu0 %v800
        %1018 = vmatpush.bf16.msra.mxu0 %v793
        %1019 = vmatpush.bf16.msra.mxu0 %v786
        %1020 = vmatpush.bf16.msra.mxu0 %v779
        %1021 = vmatpush.bf16.msra.mxu0 %v772
        %1022 = vmatpush.bf16.msra.mxu0 %v762
        %1023 = vmatmul.bf16.gmra.mxu0 %v1004
        %v1024 = vpop.f32.mrf.mxu0
        %v1025 = vadd.f32 %v985, %v1024
        %v1026 = vpop.f32.mrf.mxu0
        %v1027 = vadd.f32 %v990, %v1026
        %1028 = vdwg.mxu0
        %1029 = vmatpush.bf16.msra.mxu0 %v866
        %1030 = vmatpush.bf16.msra.mxu0 %v860
        %1031 = vmatpush.bf16.msra.mxu0 %v854
        %1032 = vmatpush.bf16.msra.mxu0 %v848
        %1033 = vmatpush.bf16.msra.mxu0 %v842
        %1034 = vmatpush.bf16.msra.mxu0 %v836
        %1035 = vmatpush.bf16.msra.mxu0 %v827
        %1036 = vmatpush.bf16.msra.mxu0 %v821
        %1037 = vmatmul.bf16.gmra.mxu0 %v1005
        %v1038 = vpop.f32.mrf.mxu0
        %v1039 = vadd.f32 %v1025, %v1038
        %v1040 = vpop.f32.mrf.mxu0
        %v1041 = vadd.f32 %v1027, %v1040
        %1042 = vdwg.mxu0
        %1043 = vmatpush.bf16.msra.mxu0 %v967
        %1044 = vmatpush.bf16.msra.mxu0 %v966
        %1045 = vmatpush.bf16.msra.mxu0 %v965
        %1046 = vmatpush.bf16.msra.mxu0 %v964
        %1047 = vmatpush.bf16.msra.mxu0 %v963
        %1048 = vmatpush.bf16.msra.mxu0 %v928
        %1049 = vmatpush.bf16.msra.mxu0 %v962
        %1050 = vmatpush.bf16.msra.mxu0 %v961
        %1051 = vmatmul.bf16.gmra.mxu0 %v1006
        %v1052 = vpop.f32.mrf.mxu0
        %v1053 = vadd.f32 %v1039, %v1052
        %v1054 = vpop.f32.mrf.mxu0
        %v1055 = vadd.f32 %v1041, %v1054
        %1056 = vdwg.mxu0
        %1057 = vmatpush.bf16.msra.mxu0 0
        %1058 = vmatpush.bf16.msra.mxu0 0
        %1059 = vmatpush.bf16.msra.mxu0 0
        %1060 = vmatpush.bf16.msra.mxu0 0
        %1061 = vmatpush.bf16.msra.mxu0 0
        %1062 = vmatpush.bf16.msra.mxu0 %v970
        %1063 = vmatpush.bf16.msra.mxu0 %v969
        %1064 = vmatpush.bf16.msra.mxu0 %v968
        %1065 = vmatmul.bf16.gmra.mxu0 %v1013
        %v1066 = vpop.f32.mrf.mxu0
        %v1067 = vadd.f32 %v1053, %v1066
        %v1068 = vpop.f32.mrf.mxu0
        %v1069 = vadd.f32 %v1055, %v1068
        %1070 = vdwg.mxu0
        %v1071 = vmax.f32 %v1067, 0.0
        %v1072 = vmax.f32 %v1069, 0.0
        %v1074 = vperm.slane %v358, 0
        %v1076 = vmul.f32 %v1071, %v1074
        %v1077 = vmul.f32 %v1072, %v1074
        %v1078 = vpack.c.bf16 %v1076, %v1076
        %v1079 = vpack.c.bf16 %v1077, %v1077
        %1082 = vrot.lane.b32.xlu0 %v1078, 8
        %v1083 = vpop.permute.xlu0 %1082
        %1084 = vrot.lane.b32.xlu0 %v1079, 8
        %v1085 = vpop.permute.xlu0 %1084
        %v1086 = vrot.slane %v1083, 4
        %v1087 = vrot.slane %v1085, 4
        %v1088 = vsel %vm894, %v1086, %v1083
        %v1089 = vsel %vm894, %v1087, %v1085
        %s1092 = smul.addr %s747, 4
        %s1093 = scalar_lea.vmem [#allocation3], %s1092
        %vm1094 = vcmask 1043520
        %vm1095 = vcmask 64516
        %vm1096 = vmor %vm1095, %vm1094
        %1097 = vst.msk [vmem:[%s1093] sm:$0xff] %vm1096, %v1088
        %1098 = vst.msk [vmem:[%s1093 + $0x8] sm:$0xff] %vm1096, %v1089
      $region68: #{d_res_3d_cnn_forward.4} parent=55 // loop_footer
        %s740 = sadd.s32 1, %s736
      $region69: #{d_res_3d_cnn_forward.4} parent=55 // loop_footer_branch
        %735 = sbr.rel target = $region65
      $region70: #{d_res_3d_cnn_forward.4} parent=55 // loop_exit
        _
      %v1099 = vld [vmem:[%s5] sm:$0xff]
      %v1100 = vld [vmem:[%s5 + $0x8] sm:$0xff]
      %v1101 = vld [vmem:[%s5 + $0x10] sm:$0xff]
      %v1102 = vld [vmem:[%s5 + $0x18] sm:$0xff]
      %v1103 = vld [vmem:[%s6] sm:$0xff]
      %v1104 = vld [vmem:[%s6 + $0x8] sm:$0xff]
      %v1105 = vld [vmem:[#allocation3] sm:$0xff]
      %v1106 = vld [vmem:[#allocation3 + $0x8] sm:$0xff]
      %s1107 = scalar_lea.vmem [#allocation3], 16
      %v1108 = vld [vmem:[%s1107] sm:$0xff]
      %v1109 = vld [vmem:[%s1107 + $0x8] sm:$0xff]
      %s1110 = scalar_lea.vmem [#allocation3], 32
      %v1111 = vld [vmem:[%s1110] sm:$0xff]
      %v1112 = vld [vmem:[%s1110 + $0x8] sm:$0xff]
      %v1115 = vunpack.c.l.b16 %v1105
      %v1116 = vunpack.c.l.b16 %v1106
      %v1117 = vpack.c.b16 %v1116, %v1115
      %v1119 = vunpack.c.h.b16 %v1105
      %v1120 = vunpack.c.h.b16 %v1106
      %v1121 = vpack.c.b16 %v1120, %v1119
      %1122 = vrot.lane.b32.xlu0 %v1117, 127
      %v1123 = vpop.permute.xlu0 %1122
      %1124 = vrot.lane.b32.xlu0 %v1121, 127
      %v1125 = vpop.permute.xlu0 %1124
      %vm1126 = vcmask 1039360
      %v1127 = vsel %vm1126, %v1123, %v1125
      %1129 = vrot.lane.b32.xlu0 %v1117, 126
      %v1130 = vpop.permute.xlu0 %1129
      %1131 = vrot.lane.b32.xlu0 %v1121, 126
      %v1132 = vpop.permute.xlu0 %1131
      %vm1133 = vcmask 1031168
      %v1134 = vsel %vm1133, %v1130, %v1132
      %1136 = vrot.lane.b32.xlu0 %v1117, 121
      %v1137 = vpop.permute.xlu0 %1136
      %1138 = vrot.lane.b32.xlu0 %v1121, 121
      %v1139 = vpop.permute.xlu0 %1138
      %vm1140 = vcmask 990208
      %v1141 = vsel %vm1140, %v1137, %v1139
      %1143 = vrot.lane.b32.xlu0 %v1117, 120
      %v1144 = vpop.permute.xlu0 %1143
      %1145 = vrot.lane.b32.xlu0 %v1121, 120
      %v1146 = vpop.permute.xlu0 %1145
      %vm1147 = vcmask 982016
      %v1148 = vsel %vm1147, %v1144, %v1146
      %1150 = vrot.lane.b32.xlu0 %v1117, 119
      %v1151 = vpop.permute.xlu0 %1150
      %1152 = vrot.lane.b32.xlu0 %v1121, 119
      %v1153 = vpop.permute.xlu0 %1152
      %vm1154 = vcmask 973824
      %v1155 = vsel %vm1154, %v1151, %v1153
      %1157 = vrot.lane.b32.xlu0 %v1117, 114
      %v1158 = vpop.permute.xlu0 %1157
      %1159 = vrot.lane.b32.xlu0 %v1121, 114
      %v1160 = vpop.permute.xlu0 %1159
      %vm1161 = vcmask 932864
      %v1162 = vsel %vm1161, %v1158, %v1160
      %1164 = vrot.lane.b32.xlu0 %v1117, 113
      %v1165 = vpop.permute.xlu0 %1164
      %1166 = vrot.lane.b32.xlu0 %v1121, 113
      %v1167 = vpop.permute.xlu0 %1166
      %vm1168 = vcmask 924672
      %v1169 = vsel %vm1168, %v1165, %v1167
      %1171 = vrot.lane.b32.xlu0 %v1117, 112
      %v1172 = vpop.permute.xlu0 %1171
      %1173 = vrot.lane.b32.xlu0 %v1121, 112
      %v1174 = vpop.permute.xlu0 %1173
      %vm1175 = vcmask 916480
      %v1176 = vsel %vm1175, %v1172, %v1174
      %v1180 = vunpack.c.l.b16 %v1108
      %v1181 = vunpack.c.l.b16 %v1109
      %v1182 = vpack.c.b16 %v1181, %v1180
      %v1184 = vunpack.c.h.b16 %v1108
      %v1185 = vunpack.c.h.b16 %v1109
      %v1186 = vpack.c.b16 %v1185, %v1184
      %1187 = vrot.lane.b32.xlu0 %v1182, 127
      %v1188 = vpop.permute.xlu0 %1187
      %1189 = vrot.lane.b32.xlu0 %v1186, 127
      %v1190 = vpop.permute.xlu0 %1189
      %v1191 = vsel %vm1126, %v1188, %v1190
      %1193 = vrot.lane.b32.xlu0 %v1182, 126
      %v1194 = vpop.permute.xlu0 %1193
      %1195 = vrot.lane.b32.xlu0 %v1186, 126
      %v1196 = vpop.permute.xlu0 %1195
      %v1197 = vsel %vm1133, %v1194, %v1196
      %1199 = vrot.lane.b32.xlu0 %v1182, 121
      %v1200 = vpop.permute.xlu0 %1199
      %1201 = vrot.lane.b32.xlu0 %v1186, 121
      %v1202 = vpop.permute.xlu0 %1201
      %v1203 = vsel %vm1140, %v1200, %v1202
      %1205 = vrot.lane.b32.xlu0 %v1182, 120
      %v1206 = vpop.permute.xlu0 %1205
      %1207 = vrot.lane.b32.xlu0 %v1186, 120
      %v1208 = vpop.permute.xlu0 %1207
      %v1209 = vsel %vm1147, %v1206, %v1208
      %1211 = vrot.lane.b32.xlu0 %v1182, 119
      %v1212 = vpop.permute.xlu0 %1211
      %1213 = vrot.lane.b32.xlu0 %v1186, 119
      %v1214 = vpop.permute.xlu0 %1213
      %v1215 = vsel %vm1154, %v1212, %v1214
      %1217 = vrot.lane.b32.xlu0 %v1182, 114
      %v1218 = vpop.permute.xlu0 %1217
      %1219 = vrot.lane.b32.xlu0 %v1186, 114
      %v1220 = vpop.permute.xlu0 %1219
      %v1221 = vsel %vm1161, %v1218, %v1220
      %v1225 = vunpack.c.l.b16 %v1111
      %v1226 = vunpack.c.l.b16 %v1112
      %v1227 = vpack.c.b16 %v1226, %v1225
      %1228 = vrot.lane.b32.xlu0 %v1227, 15
      %v1229 = vpop.permute.xlu0 %1228
      %v1230 = vunpack.c.h.b16 %v1111
      %v1231 = vunpack.c.h.b16 %v1112
      %v1232 = vpack.c.b16 %v1231, %v1230
      %1233 = vrot.lane.b32.xlu0 %v1227, 14
      %v1234 = vpop.permute.xlu0 %1233
      %1235 = vrot.lane.b32.xlu0 %v1232, 14
      %v1236 = vpop.permute.xlu0 %1235
      %vm1237 = vcmask 113664
      %v1238 = vsel %vm1237, %v1234, %v1236
      %1239 = vrot.lane.b32.xlu0 %v1227, 13
      %v1240 = vpop.permute.xlu0 %1239
      %1241 = vrot.lane.b32.xlu0 %v1232, 13
      %v1242 = vpop.permute.xlu0 %1241
      %vm1243 = vcmask 105472
      %v1244 = vsel %vm1243, %v1240, %v1242
      %1245 = vrot.lane.b32.xlu0 %v1227, 8
      %v1246 = vpop.permute.xlu0 %1245
      %1247 = vrot.lane.b32.xlu0 %v1232, 8
      %v1248 = vpop.permute.xlu0 %1247
      %vm1249 = vcmask 64512
      %v1250 = vsel %vm1249, %v1246, %v1248
      %1251 = vrot.lane.b32.xlu0 %v1227, 7
      %v1252 = vpop.permute.xlu0 %1251
      %1253 = vrot.lane.b32.xlu0 %v1232, 7
      %v1254 = vpop.permute.xlu0 %1253
      %vm1255 = vcmask 56320
      %v1256 = vsel %vm1255, %v1252, %v1254
      %1257 = vrot.lane.b32.xlu0 %v1227, 6
      %v1258 = vpop.permute.xlu0 %1257
      %1259 = vrot.lane.b32.xlu0 %v1232, 6
      %v1260 = vpop.permute.xlu0 %1259
      %vm1261 = vcmask 48128
      %v1262 = vsel %vm1261, %v1258, %v1260
      %1263 = vrot.lane.b32.xlu0 %v1227, 1
      %v1264 = vpop.permute.xlu0 %1263
      %1265 = vrot.lane.b32.xlu0 %v1232, 1
      %v1266 = vpop.permute.xlu0 %1265
      %vm1267 = vcmask 7168
      %v1268 = vsel %vm1267, %v1264, %v1266
      %1269 = vrot.lane.b32.xlu0 %v1227, 127
      %v1270 = vpop.permute.xlu0 %1269
      %1271 = vrot.lane.b32.xlu0 %v1232, 127
      %v1272 = vpop.permute.xlu0 %1271
      %v1273 = vsel %vm1126, %v1270, %v1272
      %1274 = vrot.lane.b32.xlu0 %v1182, 113
      %v1275 = vpop.permute.xlu0 %1274
      %1276 = vrot.lane.b32.xlu0 %v1186, 113
      %v1277 = vpop.permute.xlu0 %1276
      %1278 = vrot.lane.b32.xlu0 %v1191, 113
      %v1279 = vpop.permute.xlu0 %1278
      %1280 = vrot.lane.b32.xlu0 %v1190, 113
      %v1281 = vpop.permute.xlu0 %1280
      %1282 = vrot.lane.b32.xlu0 %v1229, 113
      %v1283 = vpop.permute.xlu0 %1282
      %1284 = vrot.lane.b32.xlu0 %v1234, 113
      %v1285 = vpop.permute.xlu0 %1284
      %1286 = vrot.lane.b32.xlu0 %v1238, 113
      %v1287 = vpop.permute.xlu0 %1286
      %1288 = vrot.lane.b32.xlu0 %v1240, 113
      %v1289 = vpop.permute.xlu0 %1288
      %1290 = vrot.lane.b32.xlu0 %v1244, 113
      %v1291 = vpop.permute.xlu0 %1290
      %1292 = vrot.lane.b32.xlu0 %v1246, 113
      %v1293 = vpop.permute.xlu0 %1292
      %1294 = vrot.lane.b32.xlu0 %v1250, 113
      %v1295 = vpop.permute.xlu0 %1294
      %1296 = vrot.lane.b32.xlu0 %v1252, 113
      %v1297 = vpop.permute.xlu0 %1296
      %1298 = vrot.lane.b32.xlu0 %v1256, 113
      %v1299 = vpop.permute.xlu0 %1298
      %1300 = vrot.lane.b32.xlu0 %v1258, 113
      %v1301 = vpop.permute.xlu0 %1300
      %1302 = vrot.lane.b32.xlu0 %v1262, 113
      %v1303 = vpop.permute.xlu0 %1302
      %1304 = vrot.lane.b32.xlu0 %v1264, 113
      %v1305 = vpop.permute.xlu0 %1304
      %1306 = vrot.lane.b32.xlu0 %v1268, 113
      %v1307 = vpop.permute.xlu0 %1306
      %1308 = vrot.lane.b32.xlu0 %v1227, 113
      %v1309 = vpop.permute.xlu0 %1308
      %1310 = vrot.lane.b32.xlu0 %v1232, 113
      %v1311 = vpop.permute.xlu0 %1310
      %1312 = vrot.lane.b32.xlu0 %v1273, 113
      %v1313 = vpop.permute.xlu0 %1312
      %1314 = vrot.lane.b32.xlu0 %v1272, 113
      %v1315 = vpop.permute.xlu0 %1314
      %v1316 = vsel %vm1168, %v1275, %v1277
      %v1317 = vsel %vm1168, %v1279, %v1281
      %v1318 = vsel %vm1168, %v1285, %v1287
      %v1319 = vsel %vm1168, %v1289, %v1291
      %v1320 = vsel %vm1168, %v1293, %v1295
      %v1321 = vsel %vm1168, %v1297, %v1299
      %v1322 = vsel %vm1168, %v1301, %v1303
      %v1323 = vsel %vm1168, %v1305, %v1307
      %v1324 = vsel %vm1168, %v1309, %v1311
      %v1325 = vsel %vm1168, %v1313, %v1315
      %1338 = vset.pattern.permute.xlu0 0
      %1339 = vperm.xlu0 %1338, %v1103
      %v1340 = vpop.permute.xlu0 %1339
      %1343 = vset.pattern.permute.xlu0 0
      %1344 = vperm.xlu0 %1343, %v1104
      %v1345 = vpop.permute.xlu0 %1344
      %v1351 = vunpack.c.l.b16 %v1099
      %v1352 = vunpack.c.h.b16 %v1099
      %v1353 = vunpack.c.l.b16 %v1100
      %v1354 = vunpack.c.h.b16 %v1100
      %v1355 = vunpack.c.l.b16 %v1101
      %v1356 = vunpack.c.h.b16 %v1101
      %v1357 = vunpack.c.l.b16 %v1102
      %v1358 = vunpack.c.h.b16 %v1102
      %v1359 = vpack.c.b16 %v1355, %v1351
      %v1360 = vpack.c.b16 %v1356, %v1352
      %v1361 = vpack.c.b16 %v1357, %v1353
      %v1362 = vpack.c.b16 %v1358, %v1354
      %vm1366 = vcmask 392192
      %v1368 = vsel %vm1366, %v1362, 0
      %1370 = vmatpush.bf16.msra.mxu0 %v1169
      %1371 = vmatpush.bf16.msra.mxu0 %v1162
      %1372 = vmatpush.bf16.msra.mxu0 %v1155
      %1373 = vmatpush.bf16.msra.mxu0 %v1148
      %1374 = vmatpush.bf16.msra.mxu0 %v1141
      %1375 = vmatpush.bf16.msra.mxu0 %v1134
      %1376 = vmatpush.bf16.msra.mxu0 %v1127
      %1377 = vmatpush.bf16.msra.mxu0 %v1117
      %1378 = vmatmul.bf16.gmra.mxu0 %v1359
      %v1379 = vpop.f32.mrf.mxu0
      %v1380 = vadd.f32 %v1340, %v1379
      %v1381 = vpop.f32.mrf.mxu0
      %v1382 = vadd.f32 %v1345, %v1381
      %1383 = vdwg.mxu0
      %1384 = vmatpush.bf16.msra.mxu0 %v1221
      %1385 = vmatpush.bf16.msra.mxu0 %v1215
      %1386 = vmatpush.bf16.msra.mxu0 %v1209
      %1387 = vmatpush.bf16.msra.mxu0 %v1203
      %1388 = vmatpush.bf16.msra.mxu0 %v1197
      %1389 = vmatpush.bf16.msra.mxu0 %v1191
      %1390 = vmatpush.bf16.msra.mxu0 %v1182
      %1391 = vmatpush.bf16.msra.mxu0 %v1176
      %1392 = vmatmul.bf16.gmra.mxu0 %v1360
      %v1393 = vpop.f32.mrf.mxu0
      %v1394 = vadd.f32 %v1380, %v1393
      %v1395 = vpop.f32.mrf.mxu0
      %v1396 = vadd.f32 %v1382, %v1395
      %1397 = vdwg.mxu0
      %1398 = vmatpush.bf16.msra.mxu0 %v1322
      %1399 = vmatpush.bf16.msra.mxu0 %v1321
      %1400 = vmatpush.bf16.msra.mxu0 %v1320
      %1401 = vmatpush.bf16.msra.mxu0 %v1319
      %1402 = vmatpush.bf16.msra.mxu0 %v1318
      %1403 = vmatpush.bf16.msra.mxu0 %v1283
      %1404 = vmatpush.bf16.msra.mxu0 %v1317
      %1405 = vmatpush.bf16.msra.mxu0 %v1316
      %1406 = vmatmul.bf16.gmra.mxu0 %v1361
      %v1407 = vpop.f32.mrf.mxu0
      %v1408 = vadd.f32 %v1394, %v1407
      %v1409 = vpop.f32.mrf.mxu0
      %v1410 = vadd.f32 %v1396, %v1409
      %1411 = vdwg.mxu0
      %1412 = vmatpush.bf16.msra.mxu0 0
      %1413 = vmatpush.bf16.msra.mxu0 0
      %1414 = vmatpush.bf16.msra.mxu0 0
      %1415 = vmatpush.bf16.msra.mxu0 0
      %1416 = vmatpush.bf16.msra.mxu0 0
      %1417 = vmatpush.bf16.msra.mxu0 %v1325
      %1418 = vmatpush.bf16.msra.mxu0 %v1324
      %1419 = vmatpush.bf16.msra.mxu0 %v1323
      %1420 = vmatmul.bf16.gmra.mxu0 %v1368
      %v1421 = vpop.f32.mrf.mxu0
      %v1422 = vadd.f32 %v1408, %v1421
      %v1423 = vpop.f32.mrf.mxu0
      %v1424 = vadd.f32 %v1410, %v1423
      %1425 = vdwg.mxu0
      %s1426 = scalar_lea.vmem [#allocation2], 16
      %v1427 = vld [vmem:[%s1426] sm:$0xff]
      %v1428 = vld [vmem:[%s1426 + $0x8] sm:$0xff]
      %v1429 = vunpack.c.l.bf16 %v1427
      %v1430 = vunpack.c.h.bf16 %v1427
      %v1431 = vunpack.c.l.bf16 %v1428
      %v1432 = vunpack.c.h.bf16 %v1428
      %1437 = vrot.lane.b32.xlu0 %v1429, 120
      %v1438 = vpop.permute.xlu0 %1437
      %1439 = vrot.lane.b32.xlu0 %v1430, 120
      %v1440 = vpop.permute.xlu0 %1439
      %1441 = vrot.lane.b32.xlu0 %v1431, 120
      %v1442 = vpop.permute.xlu0 %1441
      %1443 = vrot.lane.b32.xlu0 %v1432, 120
      %v1444 = vpop.permute.xlu0 %1443
      %vm1445 = vcmask 982016
      %v1446 = vsel %vm1445, %v1438, %v1440
      %v1447 = vsel %vm1445, %v1442, %v1444
      %v1450 = vadd.f32 %v1422, %v1446
      %v1451 = vadd.f32 %v1424, %v1447
      %v1452 = vmax.f32 %v1450, 0.0
      %v1453 = vmax.f32 %v1451, 0.0
      %v1454 = vpack.c.bf16 %v1453, %v1452
      %v1455 = vld [vmem:[%s7] sm:$0xf]
      %v1456 = vld [vmem:[%s7 + $0x4] sm:$0xf]
      %v1457 = vld [vmem:[%s7 + $0x8] sm:$0xf]
      %v1458 = vld [vmem:[%s7 + $0xc] sm:$0xf]
      %v1459 = vld [vmem:[%s7 + $0x10] sm:$0xf]
      %v1460 = vld [vmem:[%s7 + $0x14] sm:$0xf]
      %v1461 = vld [vmem:[%s7 + $0x18] sm:$0xf]
      %v1462 = vld [vmem:[%s7 + $0x1c] sm:$0xf]
      %v1463 = vld [vmem:[%s7 + $0x20] sm:$0xf]
      %v1464 = vld [vmem:[%s7 + $0x24] sm:$0xf]
      %v1465 = vld [vmem:[%s7 + $0x28] sm:$0xf]
      %v1466 = vld [vmem:[%s7 + $0x2c] sm:$0xf]
      %v1467 = vld [vmem:[%s7 + $0x30] sm:$0xf]
      %v1468 = vld [vmem:[%s7 + $0x34] sm:$0xf]
      %v1469 = vld [vmem:[%s7 + $0x38] sm:$0xf]
      %v1470 = vld [vmem:[%s7 + $0x3c] sm:$0xf]
      %v1487 = vunpack.c.l.b16 %v1455
      %v1488 = vunpack.c.l.b16 %v1456
      %v1489 = vunpack.c.l.b16 %v1457
      %v1490 = vunpack.c.l.b16 %v1458
      %v1491 = vunpack.c.l.b16 %v1459
      %v1492 = vunpack.c.l.b16 %v1460
      %v1493 = vunpack.c.l.b16 %v1461
      %v1494 = vunpack.c.l.b16 %v1462
      %v1495 = vunpack.c.l.b16 %v1463
      %v1496 = vunpack.c.l.b16 %v1464
      %v1497 = vunpack.c.l.b16 %v1465
      %v1498 = vunpack.c.l.b16 %v1466
      %v1499 = vunpack.c.l.b16 %v1467
      %v1500 = vunpack.c.l.b16 %v1468
      %v1501 = vunpack.c.l.b16 %v1469
      %v1502 = vunpack.c.l.b16 %v1470
      %v1503 = vpack.c.b16 %v1488, %v1487
      %v1504 = vpack.c.b16 %v1490, %v1489
      %v1505 = vpack.c.b16 %v1492, %v1491
      %v1506 = vpack.c.b16 %v1494, %v1493
      %v1507 = vpack.c.b16 %v1496, %v1495
      %v1508 = vpack.c.b16 %v1498, %v1497
      %v1509 = vpack.c.b16 %v1500, %v1499
      %v1510 = vpack.c.b16 %v1502, %v1501
      %1519 = vmatpush.bf16.msra.mxu0 %v1510
      %1520 = vmatpush.bf16.msra.mxu0 %v1509
      %1521 = vmatpush.bf16.msra.mxu0 %v1508
      %1522 = vmatpush.bf16.msra.mxu0 %v1507
      %1523 = vmatpush.bf16.msra.mxu0 %v1506
      %1524 = vmatpush.bf16.msra.mxu0 %v1505
      %1525 = vmatpush.bf16.msra.mxu0 %v1504
      %1526 = vmatpush.bf16.msra.mxu0 %v1503
      %1527 = vmatmul.bf16.gmra.mxu0 %v1454
      %v1528 = vpop.f32.mrf.mxu0
      %v1529 = vadd.f32 0.0, %v1528
      %v1530 = vpop.f32.mrf.mxu0
      %v1531 = vadd.f32 0.0, %v1530
      %1532 = vdwg.mxu0
      %s1533 = scalar_lea.vmem %s7, 64
      %v1534 = vld [vmem:[%s1533] sm:$0xf]
      %v1535 = vld [vmem:[%s1533 + $0x4] sm:$0xf]
      %v1536 = vld [vmem:[%s1533 + $0x8] sm:$0xf]
      %v1537 = vld [vmem:[%s1533 + $0xc] sm:$0xf]
      %v1538 = vld [vmem:[%s1533 + $0x10] sm:$0xf]
      %v1539 = vld [vmem:[%s1533 + $0x14] sm:$0xf]
      %v1540 = vld [vmem:[%s1533 + $0x18] sm:$0xf]
      %v1541 = vld [vmem:[%s1533 + $0x1c] sm:$0xf]
      %v1542 = vld [vmem:[%s1533 + $0x20] sm:$0xf]
      %v1543 = vld [vmem:[%s1533 + $0x24] sm:$0xf]
      %v1544 = vld [vmem:[%s1533 + $0x28] sm:$0xf]
      %v1545 = vld [vmem:[%s1533 + $0x2c] sm:$0xf]
      %v1546 = vld [vmem:[%s1533 + $0x30] sm:$0xf]
      %v1547 = vld [vmem:[%s1533 + $0x34] sm:$0xf]
      %v1548 = vld [vmem:[%s1533 + $0x38] sm:$0xf]
      %v1549 = vld [vmem:[%s1533 + $0x3c] sm:$0xf]
      %v1566 = vunpack.c.l.b16 %v1534
      %v1567 = vunpack.c.l.b16 %v1535
      %v1568 = vunpack.c.l.b16 %v1536
      %v1569 = vunpack.c.l.b16 %v1537
      %v1570 = vunpack.c.l.b16 %v1538
      %v1571 = vunpack.c.l.b16 %v1539
      %v1572 = vunpack.c.l.b16 %v1540
      %v1573 = vunpack.c.l.b16 %v1541
      %v1574 = vunpack.c.l.b16 %v1542
      %v1575 = vunpack.c.l.b16 %v1543
      %v1576 = vunpack.c.l.b16 %v1544
      %v1577 = vunpack.c.l.b16 %v1545
      %v1578 = vunpack.c.l.b16 %v1546
      %v1579 = vunpack.c.l.b16 %v1547
      %v1580 = vunpack.c.l.b16 %v1548
      %v1581 = vunpack.c.l.b16 %v1549
      %v1582 = vpack.c.b16 %v1567, %v1566
      %v1583 = vpack.c.b16 %v1569, %v1568
      %v1584 = vpack.c.b16 %v1571, %v1570
      %v1585 = vpack.c.b16 %v1573, %v1572
      %v1586 = vpack.c.b16 %v1575, %v1574
      %v1587 = vpack.c.b16 %v1577, %v1576
      %v1588 = vpack.c.b16 %v1579, %v1578
      %v1589 = vpack.c.b16 %v1581, %v1580
      %1598 = vmatpush.bf16.msra.mxu0 %v1589
      %1599 = vmatpush.bf16.msra.mxu0 %v1588
      %1600 = vmatpush.bf16.msra.mxu0 %v1587
      %1601 = vmatpush.bf16.msra.mxu0 %v1586
      %1602 = vmatpush.bf16.msra.mxu0 %v1585
      %1603 = vmatpush.bf16.msra.mxu0 %v1584
      %1604 = vmatpush.bf16.msra.mxu0 %v1583
      %1605 = vmatpush.bf16.msra.mxu0 %v1582
      %1606 = vmatmul.bf16.gmra.mxu0 %v1454
      %v1607 = vpop.f32.mrf.mxu0
      %v1608 = vadd.f32 0.0, %v1607
      %v1609 = vpop.f32.mrf.mxu0
      %v1610 = vadd.f32 0.0, %v1609
      %1611 = vdwg.mxu0
      %v1612 = vmax.f32 %v1529, %v1608
      %v1613 = vmax.f32 %v1531, %v1610
      %s1614 = scalar_lea.vmem %s7, 128
      %v1615 = vld [vmem:[%s1614] sm:$0xf]
      %v1616 = vld [vmem:[%s1614 + $0x4] sm:$0xf]
      %v1617 = vld [vmem:[%s1614 + $0x8] sm:$0xf]
      %v1618 = vld [vmem:[%s1614 + $0xc] sm:$0xf]
      %v1619 = vld [vmem:[%s1614 + $0x10] sm:$0xf]
      %v1620 = vld [vmem:[%s1614 + $0x14] sm:$0xf]
      %v1621 = vld [vmem:[%s1614 + $0x18] sm:$0xf]
      %v1622 = vld [vmem:[%s1614 + $0x1c] sm:$0xf]
      %v1623 = vld [vmem:[%s1614 + $0x20] sm:$0xf]
      %v1624 = vld [vmem:[%s1614 + $0x24] sm:$0xf]
      %v1625 = vld [vmem:[%s1614 + $0x28] sm:$0xf]
      %v1626 = vld [vmem:[%s1614 + $0x2c] sm:$0xf]
      %v1627 = vld [vmem:[%s1614 + $0x30] sm:$0xf]
      %v1628 = vld [vmem:[%s1614 + $0x34] sm:$0xf]
      %v1629 = vld [vmem:[%s1614 + $0x38] sm:$0xf]
      %v1630 = vld [vmem:[%s1614 + $0x3c] sm:$0xf]
      %v1647 = vunpack.c.l.b16 %v1615
      %v1648 = vunpack.c.l.b16 %v1616
      %v1649 = vunpack.c.l.b16 %v1617
      %v1650 = vunpack.c.l.b16 %v1618
      %v1651 = vunpack.c.l.b16 %v1619
      %v1652 = vunpack.c.l.b16 %v1620
      %v1653 = vunpack.c.l.b16 %v1621
      %v1654 = vunpack.c.l.b16 %v1622
      %v1655 = vunpack.c.l.b16 %v1623
      %v1656 = vunpack.c.l.b16 %v1624
      %v1657 = vunpack.c.l.b16 %v1625
      %v1658 = vunpack.c.l.b16 %v1626
      %v1659 = vunpack.c.l.b16 %v1627
      %v1660 = vunpack.c.l.b16 %v1628
      %v1661 = vunpack.c.l.b16 %v1629
      %v1662 = vunpack.c.l.b16 %v1630
      %v1663 = vpack.c.b16 %v1648, %v1647
      %v1664 = vpack.c.b16 %v1650, %v1649
      %v1665 = vpack.c.b16 %v1652, %v1651
      %v1666 = vpack.c.b16 %v1654, %v1653
      %v1667 = vpack.c.b16 %v1656, %v1655
      %v1668 = vpack.c.b16 %v1658, %v1657
      %v1669 = vpack.c.b16 %v1660, %v1659
      %v1670 = vpack.c.b16 %v1662, %v1661
      %1679 = vmatpush.bf16.msra.mxu0 %v1670
      %1680 = vmatpush.bf16.msra.mxu0 %v1669
      %1681 = vmatpush.bf16.msra.mxu0 %v1668
      %1682 = vmatpush.bf16.msra.mxu0 %v1667
      %1683 = vmatpush.bf16.msra.mxu0 %v1666
      %1684 = vmatpush.bf16.msra.mxu0 %v1665
      %1685 = vmatpush.bf16.msra.mxu0 %v1664
      %1686 = vmatpush.bf16.msra.mxu0 %v1663
      %1687 = vmatmul.bf16.gmra.mxu0 %v1454
      %v1688 = vpop.f32.mrf.mxu0
      %v1689 = vadd.f32 0.0, %v1688
      %v1690 = vpop.f32.mrf.mxu0
      %v1691 = vadd.f32 0.0, %v1690
      %1692 = vdwg.mxu0
      %v1693 = vmax.f32 %v1612, %v1689
      %v1694 = vmax.f32 %v1613, %v1691
      %s1695 = scalar_lea.vmem %s7, 192
      %v1696 = vld [vmem:[%s1695] sm:$0xf]
      %v1697 = vld [vmem:[%s1695 + $0x4] sm:$0xf]
      %v1698 = vld [vmem:[%s1695 + $0x8] sm:$0xf]
      %v1699 = vld [vmem:[%s1695 + $0xc] sm:$0xf]
      %v1700 = vld [vmem:[%s1695 + $0x10] sm:$0xf]
      %v1701 = vld [vmem:[%s1695 + $0x14] sm:$0xf]
      %v1702 = vld [vmem:[%s1695 + $0x18] sm:$0xf]
      %v1703 = vld [vmem:[%s1695 + $0x1c] sm:$0xf]
      %v1704 = vld [vmem:[%s1695 + $0x20] sm:$0xf]
      %v1705 = vld [vmem:[%s1695 + $0x24] sm:$0xf]
      %v1706 = vld [vmem:[%s1695 + $0x28] sm:$0xf]
      %v1707 = vld [vmem:[%s1695 + $0x2c] sm:$0xf]
      %v1708 = vld [vmem:[%s1695 + $0x30] sm:$0xf]
      %v1709 = vld [vmem:[%s1695 + $0x34] sm:$0xf]
      %v1710 = vld [vmem:[%s1695 + $0x38] sm:$0xf]
      %v1711 = vld [vmem:[%s1695 + $0x3c] sm:$0xf]
      %v1728 = vunpack.c.l.b16 %v1696
      %v1729 = vunpack.c.l.b16 %v1697
      %v1730 = vunpack.c.l.b16 %v1698
      %v1731 = vunpack.c.l.b16 %v1699
      %v1732 = vunpack.c.l.b16 %v1700
      %v1733 = vunpack.c.l.b16 %v1701
      %v1734 = vunpack.c.l.b16 %v1702
      %v1735 = vunpack.c.l.b16 %v1703
      %v1736 = vunpack.c.l.b16 %v1704
      %v1737 = vunpack.c.l.b16 %v1705
      %v1738 = vunpack.c.l.b16 %v1706
      %v1739 = vunpack.c.l.b16 %v1707
      %v1740 = vunpack.c.l.b16 %v1708
      %v1741 = vunpack.c.l.b16 %v1709
      %v1742 = vunpack.c.l.b16 %v1710
      %v1743 = vunpack.c.l.b16 %v1711
      %v1744 = vpack.c.b16 %v1729, %v1728
      %v1745 = vpack.c.b16 %v1731, %v1730
      %v1746 = vpack.c.b16 %v1733, %v1732
      %v1747 = vpack.c.b16 %v1735, %v1734
      %v1748 = vpack.c.b16 %v1737, %v1736
      %v1749 = vpack.c.b16 %v1739, %v1738
      %v1750 = vpack.c.b16 %v1741, %v1740
      %v1751 = vpack.c.b16 %v1743, %v1742
      %1760 = vmatpush.bf16.msra.mxu0 %v1751
      %1761 = vmatpush.bf16.msra.mxu0 %v1750
      %1762 = vmatpush.bf16.msra.mxu0 %v1749
      %1763 = vmatpush.bf16.msra.mxu0 %v1748
      %1764 = vmatpush.bf16.msra.mxu0 %v1747
      %1765 = vmatpush.bf16.msra.mxu0 %v1746
      %1766 = vmatpush.bf16.msra.mxu0 %v1745
      %1767 = vmatpush.bf16.msra.mxu0 %v1744
      %1768 = vmatmul.bf16.gmra.mxu0 %v1454
      %v1769 = vpop.f32.mrf.mxu0
      %v1770 = vadd.f32 0.0, %v1769
      %v1771 = vpop.f32.mrf.mxu0
      %v1772 = vadd.f32 0.0, %v1771
      %1773 = vdwg.mxu0
      %v1774 = vmax.f32 %v1693, %v1770
      %v1775 = vmax.f32 %v1694, %v1772
      %v1776 = vadd.f32 %v1774, 0.0
      %v1777 = vadd.f32 %v1775, 0.0
      %s1778 = scalar_lea.vmem [#allocation3], 48
      %v1779 = vld [vmem:[%s1778] sm:$0xff]
      %v1780 = vld [vmem:[%s1778 + $0x8] sm:$0xff]
      %1781 = vrot.lane.b32.xlu0 %v1182, 112
      %v1782 = vpop.permute.xlu0 %1781
      %1783 = vrot.lane.b32.xlu0 %v1186, 112
      %v1784 = vpop.permute.xlu0 %1783
      %v1785 = vsel %vm1175, %v1782, %v1784
      %1789 = vrot.lane.b32.xlu0 %v1227, 126
      %v1790 = vpop.permute.xlu0 %1789
      %1791 = vrot.lane.b32.xlu0 %v1232, 126
      %v1792 = vpop.permute.xlu0 %1791
      %v1793 = vsel %vm1133, %v1790, %v1792
      %1795 = vrot.lane.b32.xlu0 %v1227, 121
      %v1796 = vpop.permute.xlu0 %1795
      %1797 = vrot.lane.b32.xlu0 %v1232, 121
      %v1798 = vpop.permute.xlu0 %1797
      %v1799 = vsel %vm1140, %v1796, %v1798
      %1801 = vrot.lane.b32.xlu0 %v1227, 120
      %v1802 = vpop.permute.xlu0 %1801
      %1803 = vrot.lane.b32.xlu0 %v1232, 120
      %v1804 = vpop.permute.xlu0 %1803
      %v1805 = vsel %vm1147, %v1802, %v1804
      %1807 = vrot.lane.b32.xlu0 %v1227, 119
      %v1808 = vpop.permute.xlu0 %1807
      %1809 = vrot.lane.b32.xlu0 %v1232, 119
      %v1810 = vpop.permute.xlu0 %1809
      %v1811 = vsel %vm1154, %v1808, %v1810
      %1813 = vrot.lane.b32.xlu0 %v1227, 114
      %v1814 = vpop.permute.xlu0 %1813
      %1815 = vrot.lane.b32.xlu0 %v1232, 114
      %v1816 = vpop.permute.xlu0 %1815
      %v1817 = vsel %vm1161, %v1814, %v1816
      %v1821 = vunpack.c.l.b16 %v1779
      %v1822 = vunpack.c.l.b16 %v1780
      %v1823 = vpack.c.b16 %v1822, %v1821
      %1824 = vrot.lane.b32.xlu0 %v1823, 15
      %v1825 = vpop.permute.xlu0 %1824
      %v1826 = vunpack.c.h.b16 %v1779
      %v1827 = vunpack.c.h.b16 %v1780
      %v1828 = vpack.c.b16 %v1827, %v1826
      %1829 = vrot.lane.b32.xlu0 %v1823, 14
      %v1830 = vpop.permute.xlu0 %1829
      %1831 = vrot.lane.b32.xlu0 %v1828, 14
      %v1832 = vpop.permute.xlu0 %1831
      %v1833 = vsel %vm1237, %v1830, %v1832
      %1834 = vrot.lane.b32.xlu0 %v1823, 13
      %v1835 = vpop.permute.xlu0 %1834
      %1836 = vrot.lane.b32.xlu0 %v1828, 13
      %v1837 = vpop.permute.xlu0 %1836
      %v1838 = vsel %vm1243, %v1835, %v1837
      %1839 = vrot.lane.b32.xlu0 %v1823, 8
      %v1840 = vpop.permute.xlu0 %1839
      %1841 = vrot.lane.b32.xlu0 %v1828, 8
      %v1842 = vpop.permute.xlu0 %1841
      %v1843 = vsel %vm1249, %v1840, %v1842
      %1844 = vrot.lane.b32.xlu0 %v1823, 7
      %v1845 = vpop.permute.xlu0 %1844
      %1846 = vrot.lane.b32.xlu0 %v1828, 7
      %v1847 = vpop.permute.xlu0 %1846
      %v1848 = vsel %vm1255, %v1845, %v1847
      %1849 = vrot.lane.b32.xlu0 %v1823, 6
      %v1850 = vpop.permute.xlu0 %1849
      %1851 = vrot.lane.b32.xlu0 %v1828, 6
      %v1852 = vpop.permute.xlu0 %1851
      %v1853 = vsel %vm1261, %v1850, %v1852
      %1854 = vrot.lane.b32.xlu0 %v1823, 1
      %v1855 = vpop.permute.xlu0 %1854
      %1856 = vrot.lane.b32.xlu0 %v1828, 1
      %v1857 = vpop.permute.xlu0 %1856
      %v1858 = vsel %vm1267, %v1855, %v1857
      %1859 = vrot.lane.b32.xlu0 %v1823, 127
      %v1860 = vpop.permute.xlu0 %1859
      %1861 = vrot.lane.b32.xlu0 %v1828, 127
      %v1862 = vpop.permute.xlu0 %1861
      %v1863 = vsel %vm1126, %v1860, %v1862
      %1864 = vrot.lane.b32.xlu0 %v1825, 113
      %v1865 = vpop.permute.xlu0 %1864
      %1866 = vrot.lane.b32.xlu0 %v1830, 113
      %v1867 = vpop.permute.xlu0 %1866
      %1868 = vrot.lane.b32.xlu0 %v1833, 113
      %v1869 = vpop.permute.xlu0 %1868
      %1870 = vrot.lane.b32.xlu0 %v1835, 113
      %v1871 = vpop.permute.xlu0 %1870
      %1872 = vrot.lane.b32.xlu0 %v1838, 113
      %v1873 = vpop.permute.xlu0 %1872
      %1874 = vrot.lane.b32.xlu0 %v1840, 113
      %v1875 = vpop.permute.xlu0 %1874
      %1876 = vrot.lane.b32.xlu0 %v1843, 113
      %v1877 = vpop.permute.xlu0 %1876
      %1878 = vrot.lane.b32.xlu0 %v1845, 113
      %v1879 = vpop.permute.xlu0 %1878
      %1880 = vrot.lane.b32.xlu0 %v1848, 113
      %v1881 = vpop.permute.xlu0 %1880
      %1882 = vrot.lane.b32.xlu0 %v1850, 113
      %v1883 = vpop.permute.xlu0 %1882
      %1884 = vrot.lane.b32.xlu0 %v1853, 113
      %v1885 = vpop.permute.xlu0 %1884
      %1886 = vrot.lane.b32.xlu0 %v1855, 113
      %v1887 = vpop.permute.xlu0 %1886
      %1888 = vrot.lane.b32.xlu0 %v1858, 113
      %v1889 = vpop.permute.xlu0 %1888
      %1890 = vrot.lane.b32.xlu0 %v1823, 113
      %v1891 = vpop.permute.xlu0 %1890
      %1892 = vrot.lane.b32.xlu0 %v1828, 113
      %v1893 = vpop.permute.xlu0 %1892
      %1894 = vrot.lane.b32.xlu0 %v1863, 113
      %v1895 = vpop.permute.xlu0 %1894
      %1896 = vrot.lane.b32.xlu0 %v1862, 113
      %v1897 = vpop.permute.xlu0 %1896
      %v1898 = vsel %vm1168, %v1867, %v1869
      %v1899 = vsel %vm1168, %v1871, %v1873
      %v1900 = vsel %vm1168, %v1875, %v1877
      %v1901 = vsel %vm1168, %v1879, %v1881
      %v1902 = vsel %vm1168, %v1883, %v1885
      %v1903 = vsel %vm1168, %v1887, %v1889
      %v1904 = vsel %vm1168, %v1891, %v1893
      %v1905 = vsel %vm1168, %v1895, %v1897
      %1915 = vmatpush.bf16.msra.mxu0 %v1316
      %1916 = vmatpush.bf16.msra.mxu0 %v1221
      %1917 = vmatpush.bf16.msra.mxu0 %v1215
      %1918 = vmatpush.bf16.msra.mxu0 %v1209
      %1919 = vmatpush.bf16.msra.mxu0 %v1203
      %1920 = vmatpush.bf16.msra.mxu0 %v1197
      %1921 = vmatpush.bf16.msra.mxu0 %v1191
      %1922 = vmatpush.bf16.msra.mxu0 %v1182
      %1923 = vmatmul.bf16.gmra.mxu0 %v1359
      %v1924 = vpop.f32.mrf.mxu0
      %v1925 = vadd.f32 %v1340, %v1924
      %v1926 = vpop.f32.mrf.mxu0
      %v1927 = vadd.f32 %v1345, %v1926
      %1928 = vdwg.mxu0
      %1929 = vmatpush.bf16.msra.mxu0 %v1817
      %1930 = vmatpush.bf16.msra.mxu0 %v1811
      %1931 = vmatpush.bf16.msra.mxu0 %v1805
      %1932 = vmatpush.bf16.msra.mxu0 %v1799
      %1933 = vmatpush.bf16.msra.mxu0 %v1793
      %1934 = vmatpush.bf16.msra.mxu0 %v1273
      %1935 = vmatpush.bf16.msra.mxu0 %v1227
      %1936 = vmatpush.bf16.msra.mxu0 %v1785
      %1937 = vmatmul.bf16.gmra.mxu0 %v1360
      %v1938 = vpop.f32.mrf.mxu0
      %v1939 = vadd.f32 %v1925, %v1938
      %v1940 = vpop.f32.mrf.mxu0
      %v1941 = vadd.f32 %v1927, %v1940
      %1942 = vdwg.mxu0
      %1943 = vmatpush.bf16.msra.mxu0 %v1902
      %1944 = vmatpush.bf16.msra.mxu0 %v1901
      %1945 = vmatpush.bf16.msra.mxu0 %v1900
      %1946 = vmatpush.bf16.msra.mxu0 %v1899
      %1947 = vmatpush.bf16.msra.mxu0 %v1898
      %1948 = vmatpush.bf16.msra.mxu0 %v1865
      %1949 = vmatpush.bf16.msra.mxu0 %v1325
      %1950 = vmatpush.bf16.msra.mxu0 %v1324
      %1951 = vmatmul.bf16.gmra.mxu0 %v1361
      %v1952 = vpop.f32.mrf.mxu0
      %v1953 = vadd.f32 %v1939, %v1952
      %v1954 = vpop.f32.mrf.mxu0
      %v1955 = vadd.f32 %v1941, %v1954
      %1956 = vdwg.mxu0
      %1957 = vmatpush.bf16.msra.mxu0 0
      %1958 = vmatpush.bf16.msra.mxu0 0
      %1959 = vmatpush.bf16.msra.mxu0 0
      %1960 = vmatpush.bf16.msra.mxu0 0
      %1961 = vmatpush.bf16.msra.mxu0 0
      %1962 = vmatpush.bf16.msra.mxu0 %v1905
      %1963 = vmatpush.bf16.msra.mxu0 %v1904
      %1964 = vmatpush.bf16.msra.mxu0 %v1903
      %1965 = vmatmul.bf16.gmra.mxu0 %v1368
      %v1966 = vpop.f32.mrf.mxu0
      %v1967 = vadd.f32 %v1953, %v1966
      %v1968 = vpop.f32.mrf.mxu0
      %v1969 = vadd.f32 %v1955, %v1968
      %1970 = vdwg.mxu0
      %s1971 = scalar_lea.vmem [#allocation2], 32
      %v1972 = vld [vmem:[%s1971] sm:$0xff]
      %v1973 = vld [vmem:[%s1971 + $0x8] sm:$0xff]
      %v1974 = vunpack.c.l.bf16 %v1972
      %v1975 = vunpack.c.h.bf16 %v1972
      %v1976 = vunpack.c.l.bf16 %v1973
      %v1977 = vunpack.c.h.bf16 %v1973
      %1982 = vrot.lane.b32.xlu0 %v1974, 120
      %v1983 = vpop.permute.xlu0 %1982
      %1984 = vrot.lane.b32.xlu0 %v1975, 120
      %v1985 = vpop.permute.xlu0 %1984
      %1986 = vrot.lane.b32.xlu0 %v1976, 120
      %v1987 = vpop.permute.xlu0 %1986
      %1988 = vrot.lane.b32.xlu0 %v1977, 120
      %v1989 = vpop.permute.xlu0 %1988
      %v1990 = vsel %vm1445, %v1983, %v1985
      %v1991 = vsel %vm1445, %v1987, %v1989
      %v1994 = vadd.f32 %v1967, %v1990
      %v1995 = vadd.f32 %v1969, %v1991
      %v1996 = vmax.f32 %v1994, 0.0
      %v1997 = vmax.f32 %v1995, 0.0
      %v1998 = vpack.c.bf16 %v1997, %v1996
      %s1999 = scalar_lea.vmem %s7, 256
      %v2000 = vld [vmem:[%s1999] sm:$0xf]
      %v2001 = vld [vmem:[%s1999 + $0x4] sm:$0xf]
      %v2002 = vld [vmem:[%s1999 + $0x8] sm:$0xf]
      %v2003 = vld [vmem:[%s1999 + $0xc] sm:$0xf]
      %v2004 = vld [vmem:[%s1999 + $0x10] sm:$0xf]
      %v2005 = vld [vmem:[%s1999 + $0x14] sm:$0xf]
      %v2006 = vld [vmem:[%s1999 + $0x18] sm:$0xf]
      %v2007 = vld [vmem:[%s1999 + $0x1c] sm:$0xf]
      %v2008 = vld [vmem:[%s1999 + $0x20] sm:$0xf]
      %v2009 = vld [vmem:[%s1999 + $0x24] sm:$0xf]
      %v2010 = vld [vmem:[%s1999 + $0x28] sm:$0xf]
      %v2011 = vld [vmem:[%s1999 + $0x2c] sm:$0xf]
      %v2012 = vld [vmem:[%s1999 + $0x30] sm:$0xf]
      %v2013 = vld [vmem:[%s1999 + $0x34] sm:$0xf]
      %v2014 = vld [vmem:[%s1999 + $0x38] sm:$0xf]
      %v2015 = vld [vmem:[%s1999 + $0x3c] sm:$0xf]
      %v2032 = vunpack.c.l.b16 %v2000
      %v2033 = vunpack.c.l.b16 %v2001
      %v2034 = vunpack.c.l.b16 %v2002
      %v2035 = vunpack.c.l.b16 %v2003
      %v2036 = vunpack.c.l.b16 %v2004
      %v2037 = vunpack.c.l.b16 %v2005
      %v2038 = vunpack.c.l.b16 %v2006
      %v2039 = vunpack.c.l.b16 %v2007
      %v2040 = vunpack.c.l.b16 %v2008
      %v2041 = vunpack.c.l.b16 %v2009
      %v2042 = vunpack.c.l.b16 %v2010
      %v2043 = vunpack.c.l.b16 %v2011
      %v2044 = vunpack.c.l.b16 %v2012
      %v2045 = vunpack.c.l.b16 %v2013
      %v2046 = vunpack.c.l.b16 %v2014
      %v2047 = vunpack.c.l.b16 %v2015
      %v2048 = vpack.c.b16 %v2033, %v2032
      %v2049 = vpack.c.b16 %v2035, %v2034
      %v2050 = vpack.c.b16 %v2037, %v2036
      %v2051 = vpack.c.b16 %v2039, %v2038
      %v2052 = vpack.c.b16 %v2041, %v2040
      %v2053 = vpack.c.b16 %v2043, %v2042
      %v2054 = vpack.c.b16 %v2045, %v2044
      %v2055 = vpack.c.b16 %v2047, %v2046
      %2064 = vmatpush.bf16.msra.mxu0 %v2055
      %2065 = vmatpush.bf16.msra.mxu0 %v2054
      %2066 = vmatpush.bf16.msra.mxu0 %v2053
      %2067 = vmatpush.bf16.msra.mxu0 %v2052
      %2068 = vmatpush.bf16.msra.mxu0 %v2051
      %2069 = vmatpush.bf16.msra.mxu0 %v2050
      %2070 = vmatpush.bf16.msra.mxu0 %v2049
      %2071 = vmatpush.bf16.msra.mxu0 %v2048
      %2072 = vmatmul.bf16.gmra.mxu0 %v1998
      %v2073 = vpop.f32.mrf.mxu0
      %v2074 = vadd.f32 0.0, %v2073
      %v2075 = vpop.f32.mrf.mxu0
      %v2076 = vadd.f32 0.0, %v2075
      %2077 = vdwg.mxu0
      %s2078 = scalar_lea.vmem %s7, 320
      %v2079 = vld [vmem:[%s2078] sm:$0xf]
      %v2080 = vld [vmem:[%s2078 + $0x4] sm:$0xf]
      %v2081 = vld [vmem:[%s2078 + $0x8] sm:$0xf]
      %v2082 = vld [vmem:[%s2078 + $0xc] sm:$0xf]
      %v2083 = vld [vmem:[%s2078 + $0x10] sm:$0xf]
      %v2084 = vld [vmem:[%s2078 + $0x14] sm:$0xf]
      %v2085 = vld [vmem:[%s2078 + $0x18] sm:$0xf]
      %v2086 = vld [vmem:[%s2078 + $0x1c] sm:$0xf]
      %v2087 = vld [vmem:[%s2078 + $0x20] sm:$0xf]
      %v2088 = vld [vmem:[%s2078 + $0x24] sm:$0xf]
      %v2089 = vld [vmem:[%s2078 + $0x28] sm:$0xf]
      %v2090 = vld [vmem:[%s2078 + $0x2c] sm:$0xf]
      %v2091 = vld [vmem:[%s2078 + $0x30] sm:$0xf]
      %v2092 = vld [vmem:[%s2078 + $0x34] sm:$0xf]
      %v2093 = vld [vmem:[%s2078 + $0x38] sm:$0xf]
      %v2094 = vld [vmem:[%s2078 + $0x3c] sm:$0xf]
      %v2111 = vunpack.c.l.b16 %v2079
      %v2112 = vunpack.c.l.b16 %v2080
      %v2113 = vunpack.c.l.b16 %v2081
      %v2114 = vunpack.c.l.b16 %v2082
      %v2115 = vunpack.c.l.b16 %v2083
      %v2116 = vunpack.c.l.b16 %v2084
      %v2117 = vunpack.c.l.b16 %v2085
      %v2118 = vunpack.c.l.b16 %v2086
      %v2119 = vunpack.c.l.b16 %v2087
      %v2120 = vunpack.c.l.b16 %v2088
      %v2121 = vunpack.c.l.b16 %v2089
      %v2122 = vunpack.c.l.b16 %v2090
      %v2123 = vunpack.c.l.b16 %v2091
      %v2124 = vunpack.c.l.b16 %v2092
      %v2125 = vunpack.c.l.b16 %v2093
      %v2126 = vunpack.c.l.b16 %v2094
      %v2127 = vpack.c.b16 %v2112, %v2111
      %v2128 = vpack.c.b16 %v2114, %v2113
      %v2129 = vpack.c.b16 %v2116, %v2115
      %v2130 = vpack.c.b16 %v2118, %v2117
      %v2131 = vpack.c.b16 %v2120, %v2119
      %v2132 = vpack.c.b16 %v2122, %v2121
      %v2133 = vpack.c.b16 %v2124, %v2123
      %v2134 = vpack.c.b16 %v2126, %v2125
      %2143 = vmatpush.bf16.msra.mxu0 %v2134
      %2144 = vmatpush.bf16.msra.mxu0 %v2133
      %2145 = vmatpush.bf16.msra.mxu0 %v2132
      %2146 = vmatpush.bf16.msra.mxu0 %v2131
      %2147 = vmatpush.bf16.msra.mxu0 %v2130
      %2148 = vmatpush.bf16.msra.mxu0 %v2129
      %2149 = vmatpush.bf16.msra.mxu0 %v2128
      %2150 = vmatpush.bf16.msra.mxu0 %v2127
      %2151 = vmatmul.bf16.gmra.mxu0 %v1998
      %v2152 = vpop.f32.mrf.mxu0
      %v2153 = vadd.f32 0.0, %v2152
      %v2154 = vpop.f32.mrf.mxu0
      %v2155 = vadd.f32 0.0, %v2154
      %2156 = vdwg.mxu0
      %v2157 = vmax.f32 %v2074, %v2153
      %v2158 = vmax.f32 %v2076, %v2155
      %s2159 = scalar_lea.vmem %s7, 384
      %v2160 = vld [vmem:[%s2159] sm:$0xf]
      %v2161 = vld [vmem:[%s2159 + $0x4] sm:$0xf]
      %v2162 = vld [vmem:[%s2159 + $0x8] sm:$0xf]
      %v2163 = vld [vmem:[%s2159 + $0xc] sm:$0xf]
      %v2164 = vld [vmem:[%s2159 + $0x10] sm:$0xf]
      %v2165 = vld [vmem:[%s2159 + $0x14] sm:$0xf]
      %v2166 = vld [vmem:[%s2159 + $0x18] sm:$0xf]
      %v2167 = vld [vmem:[%s2159 + $0x1c] sm:$0xf]
      %v2168 = vld [vmem:[%s2159 + $0x20] sm:$0xf]
      %v2169 = vld [vmem:[%s2159 + $0x24] sm:$0xf]
      %v2170 = vld [vmem:[%s2159 + $0x28] sm:$0xf]
      %v2171 = vld [vmem:[%s2159 + $0x2c] sm:$0xf]
      %v2172 = vld [vmem:[%s2159 + $0x30] sm:$0xf]
      %v2173 = vld [vmem:[%s2159 + $0x34] sm:$0xf]
      %v2174 = vld [vmem:[%s2159 + $0x38] sm:$0xf]
      %v2175 = vld [vmem:[%s2159 + $0x3c] sm:$0xf]
      %v2192 = vunpack.c.l.b16 %v2160
      %v2193 = vunpack.c.l.b16 %v2161
      %v2194 = vunpack.c.l.b16 %v2162
      %v2195 = vunpack.c.l.b16 %v2163
      %v2196 = vunpack.c.l.b16 %v2164
      %v2197 = vunpack.c.l.b16 %v2165
      %v2198 = vunpack.c.l.b16 %v2166
      %v2199 = vunpack.c.l.b16 %v2167
      %v2200 = vunpack.c.l.b16 %v2168
      %v2201 = vunpack.c.l.b16 %v2169
      %v2202 = vunpack.c.l.b16 %v2170
      %v2203 = vunpack.c.l.b16 %v2171
      %v2204 = vunpack.c.l.b16 %v2172
      %v2205 = vunpack.c.l.b16 %v2173
      %v2206 = vunpack.c.l.b16 %v2174
      %v2207 = vunpack.c.l.b16 %v2175
      %v2208 = vpack.c.b16 %v2193, %v2192
      %v2209 = vpack.c.b16 %v2195, %v2194
      %v2210 = vpack.c.b16 %v2197, %v2196
      %v2211 = vpack.c.b16 %v2199, %v2198
      %v2212 = vpack.c.b16 %v2201, %v2200
      %v2213 = vpack.c.b16 %v2203, %v2202
      %v2214 = vpack.c.b16 %v2205, %v2204
      %v2215 = vpack.c.b16 %v2207, %v2206
      %2224 = vmatpush.bf16.msra.mxu0 %v2215
      %2225 = vmatpush.bf16.msra.mxu0 %v2214
      %2226 = vmatpush.bf16.msra.mxu0 %v2213
      %2227 = vmatpush.bf16.msra.mxu0 %v2212
      %2228 = vmatpush.bf16.msra.mxu0 %v2211
      %2229 = vmatpush.bf16.msra.mxu0 %v2210
      %2230 = vmatpush.bf16.msra.mxu0 %v2209
      %2231 = vmatpush.bf16.msra.mxu0 %v2208
      %2232 = vmatmul.bf16.gmra.mxu0 %v1998
      %v2233 = vpop.f32.mrf.mxu0
      %v2234 = vadd.f32 0.0, %v2233
      %v2235 = vpop.f32.mrf.mxu0
      %v2236 = vadd.f32 0.0, %v2235
      %2237 = vdwg.mxu0
      %v2238 = vmax.f32 %v2157, %v2234
      %v2239 = vmax.f32 %v2158, %v2236
      %s2240 = scalar_lea.vmem %s7, 448
      %v2241 = vld [vmem:[%s2240] sm:$0xf]
      %v2242 = vld [vmem:[%s2240 + $0x4] sm:$0xf]
      %v2243 = vld [vmem:[%s2240 + $0x8] sm:$0xf]
      %v2244 = vld [vmem:[%s2240 + $0xc] sm:$0xf]
      %v2245 = vld [vmem:[%s2240 + $0x10] sm:$0xf]
      %v2246 = vld [vmem:[%s2240 + $0x14] sm:$0xf]
      %v2247 = vld [vmem:[%s2240 + $0x18] sm:$0xf]
      %v2248 = vld [vmem:[%s2240 + $0x1c] sm:$0xf]
      %v2249 = vld [vmem:[%s2240 + $0x20] sm:$0xf]
      %v2250 = vld [vmem:[%s2240 + $0x24] sm:$0xf]
      %v2251 = vld [vmem:[%s2240 + $0x28] sm:$0xf]
      %v2252 = vld [vmem:[%s2240 + $0x2c] sm:$0xf]
      %v2253 = vld [vmem:[%s2240 + $0x30] sm:$0xf]
      %v2254 = vld [vmem:[%s2240 + $0x34] sm:$0xf]
      %v2255 = vld [vmem:[%s2240 + $0x38] sm:$0xf]
      %v2256 = vld [vmem:[%s2240 + $0x3c] sm:$0xf]
      %v2273 = vunpack.c.l.b16 %v2241
      %v2274 = vunpack.c.l.b16 %v2242
      %v2275 = vunpack.c.l.b16 %v2243
      %v2276 = vunpack.c.l.b16 %v2244
      %v2277 = vunpack.c.l.b16 %v2245
      %v2278 = vunpack.c.l.b16 %v2246
      %v2279 = vunpack.c.l.b16 %v2247
      %v2280 = vunpack.c.l.b16 %v2248
      %v2281 = vunpack.c.l.b16 %v2249
      %v2282 = vunpack.c.l.b16 %v2250
      %v2283 = vunpack.c.l.b16 %v2251
      %v2284 = vunpack.c.l.b16 %v2252
      %v2285 = vunpack.c.l.b16 %v2253
      %v2286 = vunpack.c.l.b16 %v2254
      %v2287 = vunpack.c.l.b16 %v2255
      %v2288 = vunpack.c.l.b16 %v2256
      %v2289 = vpack.c.b16 %v2274, %v2273
      %v2290 = vpack.c.b16 %v2276, %v2275
      %v2291 = vpack.c.b16 %v2278, %v2277
      %v2292 = vpack.c.b16 %v2280, %v2279
      %v2293 = vpack.c.b16 %v2282, %v2281
      %v2294 = vpack.c.b16 %v2284, %v2283
      %v2295 = vpack.c.b16 %v2286, %v2285
      %v2296 = vpack.c.b16 %v2288, %v2287
      %2305 = vmatpush.bf16.msra.mxu0 %v2296
      %2306 = vmatpush.bf16.msra.mxu0 %v2295
      %2307 = vmatpush.bf16.msra.mxu0 %v2294
      %2308 = vmatpush.bf16.msra.mxu0 %v2293
      %2309 = vmatpush.bf16.msra.mxu0 %v2292
      %2310 = vmatpush.bf16.msra.mxu0 %v2291
      %2311 = vmatpush.bf16.msra.mxu0 %v2290
      %2312 = vmatpush.bf16.msra.mxu0 %v2289
      %2313 = vmatmul.bf16.gmra.mxu0 %v1998
      %v2314 = vpop.f32.mrf.mxu0
      %v2315 = vadd.f32 0.0, %v2314
      %v2316 = vpop.f32.mrf.mxu0
      %v2317 = vadd.f32 0.0, %v2316
      %2318 = vdwg.mxu0
      %v2319 = vmax.f32 %v2238, %v2315
      %v2320 = vmax.f32 %v2239, %v2317
      %v2321 = vadd.f32 %v1776, %v2319
      %v2322 = vadd.f32 %v1777, %v2320
      %s2323 = scalar_lea.vmem [#allocation3], 64
      %v2324 = vld [vmem:[%s2323] sm:$0xff]
      %v2325 = vld [vmem:[%s2323 + $0x8] sm:$0xff]
      %2326 = vrot.lane.b32.xlu0 %v1227, 112
      %v2327 = vpop.permute.xlu0 %2326
      %2328 = vrot.lane.b32.xlu0 %v1232, 112
      %v2329 = vpop.permute.xlu0 %2328
      %v2330 = vsel %vm1175, %v2327, %v2329
      %2334 = vrot.lane.b32.xlu0 %v1823, 126
      %v2335 = vpop.permute.xlu0 %2334
      %2336 = vrot.lane.b32.xlu0 %v1828, 126
      %v2337 = vpop.permute.xlu0 %2336
      %v2338 = vsel %vm1133, %v2335, %v2337
      %2340 = vrot.lane.b32.xlu0 %v1823, 121
      %v2341 = vpop.permute.xlu0 %2340
      %2342 = vrot.lane.b32.xlu0 %v1828, 121
      %v2343 = vpop.permute.xlu0 %2342
      %v2344 = vsel %vm1140, %v2341, %v2343
      %2346 = vrot.lane.b32.xlu0 %v1823, 120
      %v2347 = vpop.permute.xlu0 %2346
      %2348 = vrot.lane.b32.xlu0 %v1828, 120
      %v2349 = vpop.permute.xlu0 %2348
      %v2350 = vsel %vm1147, %v2347, %v2349
      %2352 = vrot.lane.b32.xlu0 %v1823, 119
      %v2353 = vpop.permute.xlu0 %2352
      %2354 = vrot.lane.b32.xlu0 %v1828, 119
      %v2355 = vpop.permute.xlu0 %2354
      %v2356 = vsel %vm1154, %v2353, %v2355
      %2358 = vrot.lane.b32.xlu0 %v1823, 114
      %v2359 = vpop.permute.xlu0 %2358
      %2360 = vrot.lane.b32.xlu0 %v1828, 114
      %v2361 = vpop.permute.xlu0 %2360
      %v2362 = vsel %vm1161, %v2359, %v2361
      %v2366 = vunpack.c.l.b16 %v2324
      %v2367 = vunpack.c.l.b16 %v2325
      %v2368 = vpack.c.b16 %v2367, %v2366
      %2369 = vrot.lane.b32.xlu0 %v2368, 15
      %v2370 = vpop.permute.xlu0 %2369
      %v2371 = vunpack.c.h.b16 %v2324
      %v2372 = vunpack.c.h.b16 %v2325
      %v2373 = vpack.c.b16 %v2372, %v2371
      %2374 = vrot.lane.b32.xlu0 %v2368, 14
      %v2375 = vpop.permute.xlu0 %2374
      %2376 = vrot.lane.b32.xlu0 %v2373, 14
      %v2377 = vpop.permute.xlu0 %2376
      %v2378 = vsel %vm1237, %v2375, %v2377
      %2379 = vrot.lane.b32.xlu0 %v2368, 13
      %v2380 = vpop.permute.xlu0 %2379
      %2381 = vrot.lane.b32.xlu0 %v2373, 13
      %v2382 = vpop.permute.xlu0 %2381
      %v2383 = vsel %vm1243, %v2380, %v2382
      %2384 = vrot.lane.b32.xlu0 %v2368, 8
      %v2385 = vpop.permute.xlu0 %2384
      %2386 = vrot.lane.b32.xlu0 %v2373, 8
      %v2387 = vpop.permute.xlu0 %2386
      %v2388 = vsel %vm1249, %v2385, %v2387
      %2389 = vrot.lane.b32.xlu0 %v2368, 7
      %v2390 = vpop.permute.xlu0 %2389
      %2391 = vrot.lane.b32.xlu0 %v2373, 7
      %v2392 = vpop.permute.xlu0 %2391
      %v2393 = vsel %vm1255, %v2390, %v2392
      %2394 = vrot.lane.b32.xlu0 %v2368, 6
      %v2395 = vpop.permute.xlu0 %2394
      %2396 = vrot.lane.b32.xlu0 %v2373, 6
      %v2397 = vpop.permute.xlu0 %2396
      %v2398 = vsel %vm1261, %v2395, %v2397
      %2399 = vrot.lane.b32.xlu0 %v2368, 1
      %v2400 = vpop.permute.xlu0 %2399
      %2401 = vrot.lane.b32.xlu0 %v2373, 1
      %v2402 = vpop.permute.xlu0 %2401
      %v2403 = vsel %vm1267, %v2400, %v2402
      %2404 = vrot.lane.b32.xlu0 %v2368, 127
      %v2405 = vpop.permute.xlu0 %2404
      %2406 = vrot.lane.b32.xlu0 %v2373, 127
      %v2407 = vpop.permute.xlu0 %2406
      %v2408 = vsel %vm1126, %v2405, %v2407
      %2409 = vrot.lane.b32.xlu0 %v2370, 113
      %v2410 = vpop.permute.xlu0 %2409
      %2411 = vrot.lane.b32.xlu0 %v2375, 113
      %v2412 = vpop.permute.xlu0 %2411
      %2413 = vrot.lane.b32.xlu0 %v2378, 113
      %v2414 = vpop.permute.xlu0 %2413
      %2415 = vrot.lane.b32.xlu0 %v2380, 113
      %v2416 = vpop.permute.xlu0 %2415
      %2417 = vrot.lane.b32.xlu0 %v2383, 113
      %v2418 = vpop.permute.xlu0 %2417
      %2419 = vrot.lane.b32.xlu0 %v2385, 113
      %v2420 = vpop.permute.xlu0 %2419
      %2421 = vrot.lane.b32.xlu0 %v2388, 113
      %v2422 = vpop.permute.xlu0 %2421
      %2423 = vrot.lane.b32.xlu0 %v2390, 113
      %v2424 = vpop.permute.xlu0 %2423
      %2425 = vrot.lane.b32.xlu0 %v2393, 113
      %v2426 = vpop.permute.xlu0 %2425
      %2427 = vrot.lane.b32.xlu0 %v2395, 113
      %v2428 = vpop.permute.xlu0 %2427
      %2429 = vrot.lane.b32.xlu0 %v2398, 113
      %v2430 = vpop.permute.xlu0 %2429
      %2431 = vrot.lane.b32.xlu0 %v2400, 113
      %v2432 = vpop.permute.xlu0 %2431
      %2433 = vrot.lane.b32.xlu0 %v2403, 113
      %v2434 = vpop.permute.xlu0 %2433
      %2435 = vrot.lane.b32.xlu0 %v2368, 113
      %v2436 = vpop.permute.xlu0 %2435
      %2437 = vrot.lane.b32.xlu0 %v2373, 113
      %v2438 = vpop.permute.xlu0 %2437
      %2439 = vrot.lane.b32.xlu0 %v2408, 113
      %v2440 = vpop.permute.xlu0 %2439
      %2441 = vrot.lane.b32.xlu0 %v2407, 113
      %v2442 = vpop.permute.xlu0 %2441
      %v2443 = vsel %vm1168, %v2412, %v2414
      %v2444 = vsel %vm1168, %v2416, %v2418
      %v2445 = vsel %vm1168, %v2420, %v2422
      %v2446 = vsel %vm1168, %v2424, %v2426
      %v2447 = vsel %vm1168, %v2428, %v2430
      %v2448 = vsel %vm1168, %v2432, %v2434
      %v2449 = vsel %vm1168, %v2436, %v2438
      %v2450 = vsel %vm1168, %v2440, %v2442
      %2460 = vmatpush.bf16.msra.mxu0 %v1324
      %2461 = vmatpush.bf16.msra.mxu0 %v1817
      %2462 = vmatpush.bf16.msra.mxu0 %v1811
      %2463 = vmatpush.bf16.msra.mxu0 %v1805
      %2464 = vmatpush.bf16.msra.mxu0 %v1799
      %2465 = vmatpush.bf16.msra.mxu0 %v1793
      %2466 = vmatpush.bf16.msra.mxu0 %v1273
      %2467 = vmatpush.bf16.msra.mxu0 %v1227
      %2468 = vmatmul.bf16.gmra.mxu0 %v1359
      %v2469 = vpop.f32.mrf.mxu0
      %v2470 = vadd.f32 %v1340, %v2469
      %v2471 = vpop.f32.mrf.mxu0
      %v2472 = vadd.f32 %v1345, %v2471
      %2473 = vdwg.mxu0
      %2474 = vmatpush.bf16.msra.mxu0 %v2362
      %2475 = vmatpush.bf16.msra.mxu0 %v2356
      %2476 = vmatpush.bf16.msra.mxu0 %v2350
      %2477 = vmatpush.bf16.msra.mxu0 %v2344
      %2478 = vmatpush.bf16.msra.mxu0 %v2338
      %2479 = vmatpush.bf16.msra.mxu0 %v1863
      %2480 = vmatpush.bf16.msra.mxu0 %v1823
      %2481 = vmatpush.bf16.msra.mxu0 %v2330
      %2482 = vmatmul.bf16.gmra.mxu0 %v1360
      %v2483 = vpop.f32.mrf.mxu0
      %v2484 = vadd.f32 %v2470, %v2483
      %v2485 = vpop.f32.mrf.mxu0
      %v2486 = vadd.f32 %v2472, %v2485
      %2487 = vdwg.mxu0
      %2488 = vmatpush.bf16.msra.mxu0 %v2447
      %2489 = vmatpush.bf16.msra.mxu0 %v2446
      %2490 = vmatpush.bf16.msra.mxu0 %v2445
      %2491 = vmatpush.bf16.msra.mxu0 %v2444
      %2492 = vmatpush.bf16.msra.mxu0 %v2443
      %2493 = vmatpush.bf16.msra.mxu0 %v2410
      %2494 = vmatpush.bf16.msra.mxu0 %v1905
      %2495 = vmatpush.bf16.msra.mxu0 %v1904
      %2496 = vmatmul.bf16.gmra.mxu0 %v1361
      %v2497 = vpop.f32.mrf.mxu0
      %v2498 = vadd.f32 %v2484, %v2497
      %v2499 = vpop.f32.mrf.mxu0
      %v2500 = vadd.f32 %v2486, %v2499
      %2501 = vdwg.mxu0
      %2502 = vmatpush.bf16.msra.mxu0 0
      %2503 = vmatpush.bf16.msra.mxu0 0
      %2504 = vmatpush.bf16.msra.mxu0 0
      %2505 = vmatpush.bf16.msra.mxu0 0
      %2506 = vmatpush.bf16.msra.mxu0 0
      %2507 = vmatpush.bf16.msra.mxu0 %v2450
      %2508 = vmatpush.bf16.msra.mxu0 %v2449
      %2509 = vmatpush.bf16.msra.mxu0 %v2448
      %2510 = vmatmul.bf16.gmra.mxu0 %v1368
      %v2511 = vpop.f32.mrf.mxu0
      %v2512 = vadd.f32 %v2498, %v2511
      %v2513 = vpop.f32.mrf.mxu0
      %v2514 = vadd.f32 %v2500, %v2513
      %2515 = vdwg.mxu0
      %s2516 = scalar_lea.vmem [#allocation2], 48
      %v2517 = vld [vmem:[%s2516] sm:$0xff]
      %v2518 = vld [vmem:[%s2516 + $0x8] sm:$0xff]
      %v2519 = vunpack.c.l.bf16 %v2517
      %v2520 = vunpack.c.h.bf16 %v2517
      %v2521 = vunpack.c.l.bf16 %v2518
      %v2522 = vunpack.c.h.bf16 %v2518
      %2527 = vrot.lane.b32.xlu0 %v2519, 120
      %v2528 = vpop.permute.xlu0 %2527
      %2529 = vrot.lane.b32.xlu0 %v2520, 120
      %v2530 = vpop.permute.xlu0 %2529
      %2531 = vrot.lane.b32.xlu0 %v2521, 120
      %v2532 = vpop.permute.xlu0 %2531
      %2533 = vrot.lane.b32.xlu0 %v2522, 120
      %v2534 = vpop.permute.xlu0 %2533
      %v2535 = vsel %vm1445, %v2528, %v2530
      %v2536 = vsel %vm1445, %v2532, %v2534
      %v2539 = vadd.f32 %v2512, %v2535
      %v2540 = vadd.f32 %v2514, %v2536
      %v2541 = vmax.f32 %v2539, 0.0
      %v2542 = vmax.f32 %v2540, 0.0
      %v2543 = vpack.c.bf16 %v2542, %v2541
      %s2544 = scalar_lea.vmem %s7, 512
      %v2545 = vld [vmem:[%s2544] sm:$0xf]
      %v2546 = vld [vmem:[%s2544 + $0x4] sm:$0xf]
      %v2547 = vld [vmem:[%s2544 + $0x8] sm:$0xf]
      %v2548 = vld [vmem:[%s2544 + $0xc] sm:$0xf]
      %v2549 = vld [vmem:[%s2544 + $0x10] sm:$0xf]
      %v2550 = vld [vmem:[%s2544 + $0x14] sm:$0xf]
      %v2551 = vld [vmem:[%s2544 + $0x18] sm:$0xf]
      %v2552 = vld [vmem:[%s2544 + $0x1c] sm:$0xf]
      %v2553 = vld [vmem:[%s2544 + $0x20] sm:$0xf]
      %v2554 = vld [vmem:[%s2544 + $0x24] sm:$0xf]
      %v2555 = vld [vmem:[%s2544 + $0x28] sm:$0xf]
      %v2556 = vld [vmem:[%s2544 + $0x2c] sm:$0xf]
      %v2557 = vld [vmem:[%s2544 + $0x30] sm:$0xf]
      %v2558 = vld [vmem:[%s2544 + $0x34] sm:$0xf]
      %v2559 = vld [vmem:[%s2544 + $0x38] sm:$0xf]
      %v2560 = vld [vmem:[%s2544 + $0x3c] sm:$0xf]
      %v2577 = vunpack.c.l.b16 %v2545
      %v2578 = vunpack.c.l.b16 %v2546
      %v2579 = vunpack.c.l.b16 %v2547
      %v2580 = vunpack.c.l.b16 %v2548
      %v2581 = vunpack.c.l.b16 %v2549
      %v2582 = vunpack.c.l.b16 %v2550
      %v2583 = vunpack.c.l.b16 %v2551
      %v2584 = vunpack.c.l.b16 %v2552
      %v2585 = vunpack.c.l.b16 %v2553
      %v2586 = vunpack.c.l.b16 %v2554
      %v2587 = vunpack.c.l.b16 %v2555
      %v2588 = vunpack.c.l.b16 %v2556
      %v2589 = vunpack.c.l.b16 %v2557
      %v2590 = vunpack.c.l.b16 %v2558
      %v2591 = vunpack.c.l.b16 %v2559
      %v2592 = vunpack.c.l.b16 %v2560
      %v2593 = vpack.c.b16 %v2578, %v2577
      %v2594 = vpack.c.b16 %v2580, %v2579
      %v2595 = vpack.c.b16 %v2582, %v2581
      %v2596 = vpack.c.b16 %v2584, %v2583
      %v2597 = vpack.c.b16 %v2586, %v2585
      %v2598 = vpack.c.b16 %v2588, %v2587
      %v2599 = vpack.c.b16 %v2590, %v2589
      %v2600 = vpack.c.b16 %v2592, %v2591
      %2609 = vmatpush.bf16.msra.mxu0 %v2600
      %2610 = vmatpush.bf16.msra.mxu0 %v2599
      %2611 = vmatpush.bf16.msra.mxu0 %v2598
      %2612 = vmatpush.bf16.msra.mxu0 %v2597
      %2613 = vmatpush.bf16.msra.mxu0 %v2596
      %2614 = vmatpush.bf16.msra.mxu0 %v2595
      %2615 = vmatpush.bf16.msra.mxu0 %v2594
      %2616 = vmatpush.bf16.msra.mxu0 %v2593
      %2617 = vmatmul.bf16.gmra.mxu0 %v2543
      %v2618 = vpop.f32.mrf.mxu0
      %v2619 = vadd.f32 0.0, %v2618
      %v2620 = vpop.f32.mrf.mxu0
      %v2621 = vadd.f32 0.0, %v2620
      %2622 = vdwg.mxu0
      %s2623 = scalar_lea.vmem %s7, 576
      %v2624 = vld [vmem:[%s2623] sm:$0xf]
      %v2625 = vld [vmem:[%s2623 + $0x4] sm:$0xf]
      %v2626 = vld [vmem:[%s2623 + $0x8] sm:$0xf]
      %v2627 = vld [vmem:[%s2623 + $0xc] sm:$0xf]
      %v2628 = vld [vmem:[%s2623 + $0x10] sm:$0xf]
      %v2629 = vld [vmem:[%s2623 + $0x14] sm:$0xf]
      %v2630 = vld [vmem:[%s2623 + $0x18] sm:$0xf]
      %v2631 = vld [vmem:[%s2623 + $0x1c] sm:$0xf]
      %v2632 = vld [vmem:[%s2623 + $0x20] sm:$0xf]
      %v2633 = vld [vmem:[%s2623 + $0x24] sm:$0xf]
      %v2634 = vld [vmem:[%s2623 + $0x28] sm:$0xf]
      %v2635 = vld [vmem:[%s2623 + $0x2c] sm:$0xf]
      %v2636 = vld [vmem:[%s2623 + $0x30] sm:$0xf]
      %v2637 = vld [vmem:[%s2623 + $0x34] sm:$0xf]
      %v2638 = vld [vmem:[%s2623 + $0x38] sm:$0xf]
      %v2639 = vld [vmem:[%s2623 + $0x3c] sm:$0xf]
      %v2656 = vunpack.c.l.b16 %v2624
      %v2657 = vunpack.c.l.b16 %v2625
      %v2658 = vunpack.c.l.b16 %v2626
      %v2659 = vunpack.c.l.b16 %v2627
      %v2660 = vunpack.c.l.b16 %v2628
      %v2661 = vunpack.c.l.b16 %v2629
      %v2662 = vunpack.c.l.b16 %v2630
      %v2663 = vunpack.c.l.b16 %v2631
      %v2664 = vunpack.c.l.b16 %v2632
      %v2665 = vunpack.c.l.b16 %v2633
      %v2666 = vunpack.c.l.b16 %v2634
      %v2667 = vunpack.c.l.b16 %v2635
      %v2668 = vunpack.c.l.b16 %v2636
      %v2669 = vunpack.c.l.b16 %v2637
      %v2670 = vunpack.c.l.b16 %v2638
      %v2671 = vunpack.c.l.b16 %v2639
      %v2672 = vpack.c.b16 %v2657, %v2656
      %v2673 = vpack.c.b16 %v2659, %v2658
      %v2674 = vpack.c.b16 %v2661, %v2660
      %v2675 = vpack.c.b16 %v2663, %v2662
      %v2676 = vpack.c.b16 %v2665, %v2664
      %v2677 = vpack.c.b16 %v2667, %v2666
      %v2678 = vpack.c.b16 %v2669, %v2668
      %v2679 = vpack.c.b16 %v2671, %v2670
      %2688 = vmatpush.bf16.msra.mxu0 %v2679
      %2689 = vmatpush.bf16.msra.mxu0 %v2678
      %2690 = vmatpush.bf16.msra.mxu0 %v2677
      %2691 = vmatpush.bf16.msra.mxu0 %v2676
      %2692 = vmatpush.bf16.msra.mxu0 %v2675
      %2693 = vmatpush.bf16.msra.mxu0 %v2674
      %2694 = vmatpush.bf16.msra.mxu0 %v2673
      %2695 = vmatpush.bf16.msra.mxu0 %v2672
      %2696 = vmatmul.bf16.gmra.mxu0 %v2543
      %v2697 = vpop.f32.mrf.mxu0
      %v2698 = vadd.f32 0.0, %v2697
      %v2699 = vpop.f32.mrf.mxu0
      %v2700 = vadd.f32 0.0, %v2699
      %2701 = vdwg.mxu0
      %v2702 = vmax.f32 %v2619, %v2698
      %v2703 = vmax.f32 %v2621, %v2700
      %s2704 = scalar_lea.vmem %s7, 640
      %v2705 = vld [vmem:[%s2704] sm:$0xf]
      %v2706 = vld [vmem:[%s2704 + $0x4] sm:$0xf]
      %v2707 = vld [vmem:[%s2704 + $0x8] sm:$0xf]
      %v2708 = vld [vmem:[%s2704 + $0xc] sm:$0xf]
      %v2709 = vld [vmem:[%s2704 + $0x10] sm:$0xf]
      %v2710 = vld [vmem:[%s2704 + $0x14] sm:$0xf]
      %v2711 = vld [vmem:[%s2704 + $0x18] sm:$0xf]
      %v2712 = vld [vmem:[%s2704 + $0x1c] sm:$0xf]
      %v2713 = vld [vmem:[%s2704 + $0x20] sm:$0xf]
      %v2714 = vld [vmem:[%s2704 + $0x24] sm:$0xf]
      %v2715 = vld [vmem:[%s2704 + $0x28] sm:$0xf]
      %v2716 = vld [vmem:[%s2704 + $0x2c] sm:$0xf]
      %v2717 = vld [vmem:[%s2704 + $0x30] sm:$0xf]
      %v2718 = vld [vmem:[%s2704 + $0x34] sm:$0xf]
      %v2719 = vld [vmem:[%s2704 + $0x38] sm:$0xf]
      %v2720 = vld [vmem:[%s2704 + $0x3c] sm:$0xf]
      %v2737 = vunpack.c.l.b16 %v2705
      %v2738 = vunpack.c.l.b16 %v2706
      %v2739 = vunpack.c.l.b16 %v2707
      %v2740 = vunpack.c.l.b16 %v2708
      %v2741 = vunpack.c.l.b16 %v2709
      %v2742 = vunpack.c.l.b16 %v2710
      %v2743 = vunpack.c.l.b16 %v2711
      %v2744 = vunpack.c.l.b16 %v2712
      %v2745 = vunpack.c.l.b16 %v2713
      %v2746 = vunpack.c.l.b16 %v2714
      %v2747 = vunpack.c.l.b16 %v2715
      %v2748 = vunpack.c.l.b16 %v2716
      %v2749 = vunpack.c.l.b16 %v2717
      %v2750 = vunpack.c.l.b16 %v2718
      %v2751 = vunpack.c.l.b16 %v2719
      %v2752 = vunpack.c.l.b16 %v2720
      %v2753 = vpack.c.b16 %v2738, %v2737
      %v2754 = vpack.c.b16 %v2740, %v2739
      %v2755 = vpack.c.b16 %v2742, %v2741
      %v2756 = vpack.c.b16 %v2744, %v2743
      %v2757 = vpack.c.b16 %v2746, %v2745
      %v2758 = vpack.c.b16 %v2748, %v2747
      %v2759 = vpack.c.b16 %v2750, %v2749
      %v2760 = vpack.c.b16 %v2752, %v2751
      %2769 = vmatpush.bf16.msra.mxu0 %v2760
      %2770 = vmatpush.bf16.msra.mxu0 %v2759
      %2771 = vmatpush.bf16.msra.mxu0 %v2758
      %2772 = vmatpush.bf16.msra.mxu0 %v2757
      %2773 = vmatpush.bf16.msra.mxu0 %v2756
      %2774 = vmatpush.bf16.msra.mxu0 %v2755
      %2775 = vmatpush.bf16.msra.mxu0 %v2754
      %2776 = vmatpush.bf16.msra.mxu0 %v2753
      %2777 = vmatmul.bf16.gmra.mxu0 %v2543
      %v2778 = vpop.f32.mrf.mxu0
      %v2779 = vadd.f32 0.0, %v2778
      %v2780 = vpop.f32.mrf.mxu0
      %v2781 = vadd.f32 0.0, %v2780
      %2782 = vdwg.mxu0
      %v2783 = vmax.f32 %v2702, %v2779
      %v2784 = vmax.f32 %v2703, %v2781
      %s2785 = scalar_lea.vmem %s7, 704
      %v2786 = vld [vmem:[%s2785] sm:$0xf]
      %v2787 = vld [vmem:[%s2785 + $0x4] sm:$0xf]
      %v2788 = vld [vmem:[%s2785 + $0x8] sm:$0xf]
      %v2789 = vld [vmem:[%s2785 + $0xc] sm:$0xf]
      %v2790 = vld [vmem:[%s2785 + $0x10] sm:$0xf]
      %v2791 = vld [vmem:[%s2785 + $0x14] sm:$0xf]
      %v2792 = vld [vmem:[%s2785 + $0x18] sm:$0xf]
      %v2793 = vld [vmem:[%s2785 + $0x1c] sm:$0xf]
      %v2794 = vld [vmem:[%s2785 + $0x20] sm:$0xf]
      %v2795 = vld [vmem:[%s2785 + $0x24] sm:$0xf]
      %v2796 = vld [vmem:[%s2785 + $0x28] sm:$0xf]
      %v2797 = vld [vmem:[%s2785 + $0x2c] sm:$0xf]
      %v2798 = vld [vmem:[%s2785 + $0x30] sm:$0xf]
      %v2799 = vld [vmem:[%s2785 + $0x34] sm:$0xf]
      %v2800 = vld [vmem:[%s2785 + $0x38] sm:$0xf]
      %v2801 = vld [vmem:[%s2785 + $0x3c] sm:$0xf]
      %v2818 = vunpack.c.l.b16 %v2786
      %v2819 = vunpack.c.l.b16 %v2787
      %v2820 = vunpack.c.l.b16 %v2788
      %v2821 = vunpack.c.l.b16 %v2789
      %v2822 = vunpack.c.l.b16 %v2790
      %v2823 = vunpack.c.l.b16 %v2791
      %v2824 = vunpack.c.l.b16 %v2792
      %v2825 = vunpack.c.l.b16 %v2793
      %v2826 = vunpack.c.l.b16 %v2794
      %v2827 = vunpack.c.l.b16 %v2795
      %v2828 = vunpack.c.l.b16 %v2796
      %v2829 = vunpack.c.l.b16 %v2797
      %v2830 = vunpack.c.l.b16 %v2798
      %v2831 = vunpack.c.l.b16 %v2799
      %v2832 = vunpack.c.l.b16 %v2800
      %v2833 = vunpack.c.l.b16 %v2801
      %v2834 = vpack.c.b16 %v2819, %v2818
      %v2835 = vpack.c.b16 %v2821, %v2820
      %v2836 = vpack.c.b16 %v2823, %v2822
      %v2837 = vpack.c.b16 %v2825, %v2824
      %v2838 = vpack.c.b16 %v2827, %v2826
      %v2839 = vpack.c.b16 %v2829, %v2828
      %v2840 = vpack.c.b16 %v2831, %v2830
      %v2841 = vpack.c.b16 %v2833, %v2832
      %2850 = vmatpush.bf16.msra.mxu0 %v2841
      %2851 = vmatpush.bf16.msra.mxu0 %v2840
      %2852 = vmatpush.bf16.msra.mxu0 %v2839
      %2853 = vmatpush.bf16.msra.mxu0 %v2838
      %2854 = vmatpush.bf16.msra.mxu0 %v2837
      %2855 = vmatpush.bf16.msra.mxu0 %v2836
      %2856 = vmatpush.bf16.msra.mxu0 %v2835
      %2857 = vmatpush.bf16.msra.mxu0 %v2834
      %2858 = vmatmul.bf16.gmra.mxu0 %v2543
      %v2859 = vpop.f32.mrf.mxu0
      %v2860 = vadd.f32 0.0, %v2859
      %v2861 = vpop.f32.mrf.mxu0
      %v2862 = vadd.f32 0.0, %v2861
      %2863 = vdwg.mxu0
      %v2864 = vmax.f32 %v2783, %v2860
      %v2865 = vmax.f32 %v2784, %v2862
      %v2866 = vadd.f32 %v2321, %v2864
      %v2867 = vadd.f32 %v2322, %v2865
      %s2868 = scalar_lea.vmem [#allocation3], 80
      %v2869 = vld [vmem:[%s2868] sm:$0xff]
      %v2870 = vld [vmem:[%s2868 + $0x8] sm:$0xff]
      %2871 = vrot.lane.b32.xlu0 %v1823, 112
      %v2872 = vpop.permute.xlu0 %2871
      %2873 = vrot.lane.b32.xlu0 %v1828, 112
      %v2874 = vpop.permute.xlu0 %2873
      %v2875 = vsel %vm1175, %v2872, %v2874
      %2879 = vrot.lane.b32.xlu0 %v2368, 126
      %v2880 = vpop.permute.xlu0 %2879
      %2881 = vrot.lane.b32.xlu0 %v2373, 126
      %v2882 = vpop.permute.xlu0 %2881
      %v2883 = vsel %vm1133, %v2880, %v2882
      %2885 = vrot.lane.b32.xlu0 %v2368, 121
      %v2886 = vpop.permute.xlu0 %2885
      %2887 = vrot.lane.b32.xlu0 %v2373, 121
      %v2888 = vpop.permute.xlu0 %2887
      %v2889 = vsel %vm1140, %v2886, %v2888
      %2891 = vrot.lane.b32.xlu0 %v2368, 120
      %v2892 = vpop.permute.xlu0 %2891
      %2893 = vrot.lane.b32.xlu0 %v2373, 120
      %v2894 = vpop.permute.xlu0 %2893
      %v2895 = vsel %vm1147, %v2892, %v2894
      %2897 = vrot.lane.b32.xlu0 %v2368, 119
      %v2898 = vpop.permute.xlu0 %2897
      %2899 = vrot.lane.b32.xlu0 %v2373, 119
      %v2900 = vpop.permute.xlu0 %2899
      %v2901 = vsel %vm1154, %v2898, %v2900
      %2903 = vrot.lane.b32.xlu0 %v2368, 114
      %v2904 = vpop.permute.xlu0 %2903
      %2905 = vrot.lane.b32.xlu0 %v2373, 114
      %v2906 = vpop.permute.xlu0 %2905
      %v2907 = vsel %vm1161, %v2904, %v2906
      %v2911 = vunpack.c.l.b16 %v2869
      %v2912 = vunpack.c.l.b16 %v2870
      %v2913 = vpack.c.b16 %v2912, %v2911
      %2914 = vrot.lane.b32.xlu0 %v2913, 15
      %v2915 = vpop.permute.xlu0 %2914
      %v2916 = vunpack.c.h.b16 %v2869
      %v2917 = vunpack.c.h.b16 %v2870
      %v2918 = vpack.c.b16 %v2917, %v2916
      %2919 = vrot.lane.b32.xlu0 %v2913, 14
      %v2920 = vpop.permute.xlu0 %2919
      %2921 = vrot.lane.b32.xlu0 %v2918, 14
      %v2922 = vpop.permute.xlu0 %2921
      %v2923 = vsel %vm1237, %v2920, %v2922
      %2924 = vrot.lane.b32.xlu0 %v2913, 13
      %v2925 = vpop.permute.xlu0 %2924
      %2926 = vrot.lane.b32.xlu0 %v2918, 13
      %v2927 = vpop.permute.xlu0 %2926
      %v2928 = vsel %vm1243, %v2925, %v2927
      %2929 = vrot.lane.b32.xlu0 %v2913, 8
      %v2930 = vpop.permute.xlu0 %2929
      %2931 = vrot.lane.b32.xlu0 %v2918, 8
      %v2932 = vpop.permute.xlu0 %2931
      %v2933 = vsel %vm1249, %v2930, %v2932
      %2934 = vrot.lane.b32.xlu0 %v2913, 7
      %v2935 = vpop.permute.xlu0 %2934
      %2936 = vrot.lane.b32.xlu0 %v2918, 7
      %v2937 = vpop.permute.xlu0 %2936
      %v2938 = vsel %vm1255, %v2935, %v2937
      %2939 = vrot.lane.b32.xlu0 %v2913, 6
      %v2940 = vpop.permute.xlu0 %2939
      %2941 = vrot.lane.b32.xlu0 %v2918, 6
      %v2942 = vpop.permute.xlu0 %2941
      %v2943 = vsel %vm1261, %v2940, %v2942
      %2944 = vrot.lane.b32.xlu0 %v2913, 1
      %v2945 = vpop.permute.xlu0 %2944
      %2946 = vrot.lane.b32.xlu0 %v2918, 1
      %v2947 = vpop.permute.xlu0 %2946
      %v2948 = vsel %vm1267, %v2945, %v2947
      %2949 = vrot.lane.b32.xlu0 %v2913, 127
      %v2950 = vpop.permute.xlu0 %2949
      %2951 = vrot.lane.b32.xlu0 %v2918, 127
      %v2952 = vpop.permute.xlu0 %2951
      %v2953 = vsel %vm1126, %v2950, %v2952
      %2954 = vrot.lane.b32.xlu0 %v2915, 113
      %v2955 = vpop.permute.xlu0 %2954
      %2956 = vrot.lane.b32.xlu0 %v2920, 113
      %v2957 = vpop.permute.xlu0 %2956
      %2958 = vrot.lane.b32.xlu0 %v2923, 113
      %v2959 = vpop.permute.xlu0 %2958
      %2960 = vrot.lane.b32.xlu0 %v2925, 113
      %v2961 = vpop.permute.xlu0 %2960
      %2962 = vrot.lane.b32.xlu0 %v2928, 113
      %v2963 = vpop.permute.xlu0 %2962
      %2964 = vrot.lane.b32.xlu0 %v2930, 113
      %v2965 = vpop.permute.xlu0 %2964
      %2966 = vrot.lane.b32.xlu0 %v2933, 113
      %v2967 = vpop.permute.xlu0 %2966
      %2968 = vrot.lane.b32.xlu0 %v2935, 113
      %v2969 = vpop.permute.xlu0 %2968
      %2970 = vrot.lane.b32.xlu0 %v2938, 113
      %v2971 = vpop.permute.xlu0 %2970
      %2972 = vrot.lane.b32.xlu0 %v2940, 113
      %v2973 = vpop.permute.xlu0 %2972
      %2974 = vrot.lane.b32.xlu0 %v2943, 113
      %v2975 = vpop.permute.xlu0 %2974
      %2976 = vrot.lane.b32.xlu0 %v2945, 113
      %v2977 = vpop.permute.xlu0 %2976
      %2978 = vrot.lane.b32.xlu0 %v2948, 113
      %v2979 = vpop.permute.xlu0 %2978
      %2980 = vrot.lane.b32.xlu0 %v2913, 113
      %v2981 = vpop.permute.xlu0 %2980
      %2982 = vrot.lane.b32.xlu0 %v2918, 113
      %v2983 = vpop.permute.xlu0 %2982
      %2984 = vrot.lane.b32.xlu0 %v2953, 113
      %v2985 = vpop.permute.xlu0 %2984
      %2986 = vrot.lane.b32.xlu0 %v2952, 113
      %v2987 = vpop.permute.xlu0 %2986
      %v2988 = vsel %vm1168, %v2957, %v2959
      %v2989 = vsel %vm1168, %v2961, %v2963
      %v2990 = vsel %vm1168, %v2965, %v2967
      %v2991 = vsel %vm1168, %v2969, %v2971
      %v2992 = vsel %vm1168, %v2973, %v2975
      %v2993 = vsel %vm1168, %v2977, %v2979
      %v2994 = vsel %vm1168, %v2981, %v2983
      %v2995 = vsel %vm1168, %v2985, %v2987
      %3005 = vmatpush.bf16.msra.mxu0 %v1904
      %3006 = vmatpush.bf16.msra.mxu0 %v2362
      %3007 = vmatpush.bf16.msra.mxu0 %v2356
      %3008 = vmatpush.bf16.msra.mxu0 %v2350
      %3009 = vmatpush.bf16.msra.mxu0 %v2344
      %3010 = vmatpush.bf16.msra.mxu0 %v2338
      %3011 = vmatpush.bf16.msra.mxu0 %v1863
      %3012 = vmatpush.bf16.msra.mxu0 %v1823
      %3013 = vmatmul.bf16.gmra.mxu0 %v1359
      %v3014 = vpop.f32.mrf.mxu0
      %v3015 = vadd.f32 %v1340, %v3014
      %v3016 = vpop.f32.mrf.mxu0
      %v3017 = vadd.f32 %v1345, %v3016
      %3018 = vdwg.mxu0
      %3019 = vmatpush.bf16.msra.mxu0 %v2907
      %3020 = vmatpush.bf16.msra.mxu0 %v2901
      %3021 = vmatpush.bf16.msra.mxu0 %v2895
      %3022 = vmatpush.bf16.msra.mxu0 %v2889
      %3023 = vmatpush.bf16.msra.mxu0 %v2883
      %3024 = vmatpush.bf16.msra.mxu0 %v2408
      %3025 = vmatpush.bf16.msra.mxu0 %v2368
      %3026 = vmatpush.bf16.msra.mxu0 %v2875
      %3027 = vmatmul.bf16.gmra.mxu0 %v1360
      %v3028 = vpop.f32.mrf.mxu0
      %v3029 = vadd.f32 %v3015, %v3028
      %v3030 = vpop.f32.mrf.mxu0
      %v3031 = vadd.f32 %v3017, %v3030
      %3032 = vdwg.mxu0
      %3033 = vmatpush.bf16.msra.mxu0 %v2992
      %3034 = vmatpush.bf16.msra.mxu0 %v2991
      %3035 = vmatpush.bf16.msra.mxu0 %v2990
      %3036 = vmatpush.bf16.msra.mxu0 %v2989
      %3037 = vmatpush.bf16.msra.mxu0 %v2988
      %3038 = vmatpush.bf16.msra.mxu0 %v2955
      %3039 = vmatpush.bf16.msra.mxu0 %v2450
      %3040 = vmatpush.bf16.msra.mxu0 %v2449
      %3041 = vmatmul.bf16.gmra.mxu0 %v1361
      %v3042 = vpop.f32.mrf.mxu0
      %v3043 = vadd.f32 %v3029, %v3042
      %v3044 = vpop.f32.mrf.mxu0
      %v3045 = vadd.f32 %v3031, %v3044
      %3046 = vdwg.mxu0
      %3047 = vmatpush.bf16.msra.mxu0 0
      %3048 = vmatpush.bf16.msra.mxu0 0
      %3049 = vmatpush.bf16.msra.mxu0 0
      %3050 = vmatpush.bf16.msra.mxu0 0
      %3051 = vmatpush.bf16.msra.mxu0 0
      %3052 = vmatpush.bf16.msra.mxu0 %v2995
      %3053 = vmatpush.bf16.msra.mxu0 %v2994
      %3054 = vmatpush.bf16.msra.mxu0 %v2993
      %3055 = vmatmul.bf16.gmra.mxu0 %v1368
      %v3056 = vpop.f32.mrf.mxu0
      %v3057 = vadd.f32 %v3043, %v3056
      %v3058 = vpop.f32.mrf.mxu0
      %v3059 = vadd.f32 %v3045, %v3058
      %3060 = vdwg.mxu0
      %s3061 = scalar_lea.vmem [#allocation2], 64
      %v3062 = vld [vmem:[%s3061] sm:$0xff]
      %v3063 = vld [vmem:[%s3061 + $0x8] sm:$0xff]
      %v3064 = vunpack.c.l.bf16 %v3062
      %v3065 = vunpack.c.h.bf16 %v3062
      %v3066 = vunpack.c.l.bf16 %v3063
      %v3067 = vunpack.c.h.bf16 %v3063
      %3072 = vrot.lane.b32.xlu0 %v3064, 120
      %v3073 = vpop.permute.xlu0 %3072
      %3074 = vrot.lane.b32.xlu0 %v3065, 120
      %v3075 = vpop.permute.xlu0 %3074
      %3076 = vrot.lane.b32.xlu0 %v3066, 120
      %v3077 = vpop.permute.xlu0 %3076
      %3078 = vrot.lane.b32.xlu0 %v3067, 120
      %v3079 = vpop.permute.xlu0 %3078
      %v3080 = vsel %vm1445, %v3073, %v3075
      %v3081 = vsel %vm1445, %v3077, %v3079
      %v3084 = vadd.f32 %v3057, %v3080
      %v3085 = vadd.f32 %v3059, %v3081
      %v3086 = vmax.f32 %v3084, 0.0
      %v3087 = vmax.f32 %v3085, 0.0
      %v3088 = vpack.c.bf16 %v3087, %v3086
      %s3089 = scalar_lea.vmem %s7, 768
      %v3090 = vld [vmem:[%s3089] sm:$0xf]
      %v3091 = vld [vmem:[%s3089 + $0x4] sm:$0xf]
      %v3092 = vld [vmem:[%s3089 + $0x8] sm:$0xf]
      %v3093 = vld [vmem:[%s3089 + $0xc] sm:$0xf]
      %v3094 = vld [vmem:[%s3089 + $0x10] sm:$0xf]
      %v3095 = vld [vmem:[%s3089 + $0x14] sm:$0xf]
      %v3096 = vld [vmem:[%s3089 + $0x18] sm:$0xf]
      %v3097 = vld [vmem:[%s3089 + $0x1c] sm:$0xf]
      %v3098 = vld [vmem:[%s3089 + $0x20] sm:$0xf]
      %v3099 = vld [vmem:[%s3089 + $0x24] sm:$0xf]
      %v3100 = vld [vmem:[%s3089 + $0x28] sm:$0xf]
      %v3101 = vld [vmem:[%s3089 + $0x2c] sm:$0xf]
      %v3102 = vld [vmem:[%s3089 + $0x30] sm:$0xf]
      %v3103 = vld [vmem:[%s3089 + $0x34] sm:$0xf]
      %v3104 = vld [vmem:[%s3089 + $0x38] sm:$0xf]
      %v3105 = vld [vmem:[%s3089 + $0x3c] sm:$0xf]
      %v3122 = vunpack.c.l.b16 %v3090
      %v3123 = vunpack.c.l.b16 %v3091
      %v3124 = vunpack.c.l.b16 %v3092
      %v3125 = vunpack.c.l.b16 %v3093
      %v3126 = vunpack.c.l.b16 %v3094
      %v3127 = vunpack.c.l.b16 %v3095
      %v3128 = vunpack.c.l.b16 %v3096
      %v3129 = vunpack.c.l.b16 %v3097
      %v3130 = vunpack.c.l.b16 %v3098
      %v3131 = vunpack.c.l.b16 %v3099
      %v3132 = vunpack.c.l.b16 %v3100
      %v3133 = vunpack.c.l.b16 %v3101
      %v3134 = vunpack.c.l.b16 %v3102
      %v3135 = vunpack.c.l.b16 %v3103
      %v3136 = vunpack.c.l.b16 %v3104
      %v3137 = vunpack.c.l.b16 %v3105
      %v3138 = vpack.c.b16 %v3123, %v3122
      %v3139 = vpack.c.b16 %v3125, %v3124
      %v3140 = vpack.c.b16 %v3127, %v3126
      %v3141 = vpack.c.b16 %v3129, %v3128
      %v3142 = vpack.c.b16 %v3131, %v3130
      %v3143 = vpack.c.b16 %v3133, %v3132
      %v3144 = vpack.c.b16 %v3135, %v3134
      %v3145 = vpack.c.b16 %v3137, %v3136
      %3154 = vmatpush.bf16.msra.mxu0 %v3145
      %3155 = vmatpush.bf16.msra.mxu0 %v3144
      %3156 = vmatpush.bf16.msra.mxu0 %v3143
      %3157 = vmatpush.bf16.msra.mxu0 %v3142
      %3158 = vmatpush.bf16.msra.mxu0 %v3141
      %3159 = vmatpush.bf16.msra.mxu0 %v3140
      %3160 = vmatpush.bf16.msra.mxu0 %v3139
      %3161 = vmatpush.bf16.msra.mxu0 %v3138
      %3162 = vmatmul.bf16.gmra.mxu0 %v3088
      %v3163 = vpop.f32.mrf.mxu0
      %v3164 = vadd.f32 0.0, %v3163
      %v3165 = vpop.f32.mrf.mxu0
      %v3166 = vadd.f32 0.0, %v3165
      %3167 = vdwg.mxu0
      %s3168 = scalar_lea.vmem %s7, 832
      %v3169 = vld [vmem:[%s3168] sm:$0xf]
      %v3170 = vld [vmem:[%s3168 + $0x4] sm:$0xf]
      %v3171 = vld [vmem:[%s3168 + $0x8] sm:$0xf]
      %v3172 = vld [vmem:[%s3168 + $0xc] sm:$0xf]
      %v3173 = vld [vmem:[%s3168 + $0x10] sm:$0xf]
      %v3174 = vld [vmem:[%s3168 + $0x14] sm:$0xf]
      %v3175 = vld [vmem:[%s3168 + $0x18] sm:$0xf]
      %v3176 = vld [vmem:[%s3168 + $0x1c] sm:$0xf]
      %v3177 = vld [vmem:[%s3168 + $0x20] sm:$0xf]
      %v3178 = vld [vmem:[%s3168 + $0x24] sm:$0xf]
      %v3179 = vld [vmem:[%s3168 + $0x28] sm:$0xf]
      %v3180 = vld [vmem:[%s3168 + $0x2c] sm:$0xf]
      %v3181 = vld [vmem:[%s3168 + $0x30] sm:$0xf]
      %v3182 = vld [vmem:[%s3168 + $0x34] sm:$0xf]
      %v3183 = vld [vmem:[%s3168 + $0x38] sm:$0xf]
      %v3184 = vld [vmem:[%s3168 + $0x3c] sm:$0xf]
      %v3201 = vunpack.c.l.b16 %v3169
      %v3202 = vunpack.c.l.b16 %v3170
      %v3203 = vunpack.c.l.b16 %v3171
      %v3204 = vunpack.c.l.b16 %v3172
      %v3205 = vunpack.c.l.b16 %v3173
      %v3206 = vunpack.c.l.b16 %v3174
      %v3207 = vunpack.c.l.b16 %v3175
      %v3208 = vunpack.c.l.b16 %v3176
      %v3209 = vunpack.c.l.b16 %v3177
      %v3210 = vunpack.c.l.b16 %v3178
      %v3211 = vunpack.c.l.b16 %v3179
      %v3212 = vunpack.c.l.b16 %v3180
      %v3213 = vunpack.c.l.b16 %v3181
      %v3214 = vunpack.c.l.b16 %v3182
      %v3215 = vunpack.c.l.b16 %v3183
      %v3216 = vunpack.c.l.b16 %v3184
      %v3217 = vpack.c.b16 %v3202, %v3201
      %v3218 = vpack.c.b16 %v3204, %v3203
      %v3219 = vpack.c.b16 %v3206, %v3205
      %v3220 = vpack.c.b16 %v3208, %v3207
      %v3221 = vpack.c.b16 %v3210, %v3209
      %v3222 = vpack.c.b16 %v3212, %v3211
      %v3223 = vpack.c.b16 %v3214, %v3213
      %v3224 = vpack.c.b16 %v3216, %v3215
      %3233 = vmatpush.bf16.msra.mxu0 %v3224
      %3234 = vmatpush.bf16.msra.mxu0 %v3223
      %3235 = vmatpush.bf16.msra.mxu0 %v3222
      %3236 = vmatpush.bf16.msra.mxu0 %v3221
      %3237 = vmatpush.bf16.msra.mxu0 %v3220
      %3238 = vmatpush.bf16.msra.mxu0 %v3219
      %3239 = vmatpush.bf16.msra.mxu0 %v3218
      %3240 = vmatpush.bf16.msra.mxu0 %v3217
      %3241 = vmatmul.bf16.gmra.mxu0 %v3088
      %v3242 = vpop.f32.mrf.mxu0
      %v3243 = vadd.f32 0.0, %v3242
      %v3244 = vpop.f32.mrf.mxu0
      %v3245 = vadd.f32 0.0, %v3244
      %3246 = vdwg.mxu0
      %v3247 = vmax.f32 %v3164, %v3243
      %v3248 = vmax.f32 %v3166, %v3245
      %s3249 = scalar_lea.vmem %s7, 896
      %v3250 = vld [vmem:[%s3249] sm:$0xf]
      %v3251 = vld [vmem:[%s3249 + $0x4] sm:$0xf]
      %v3252 = vld [vmem:[%s3249 + $0x8] sm:$0xf]
      %v3253 = vld [vmem:[%s3249 + $0xc] sm:$0xf]
      %v3254 = vld [vmem:[%s3249 + $0x10] sm:$0xf]
      %v3255 = vld [vmem:[%s3249 + $0x14] sm:$0xf]
      %v3256 = vld [vmem:[%s3249 + $0x18] sm:$0xf]
      %v3257 = vld [vmem:[%s3249 + $0x1c] sm:$0xf]
      %v3258 = vld [vmem:[%s3249 + $0x20] sm:$0xf]
      %v3259 = vld [vmem:[%s3249 + $0x24] sm:$0xf]
      %v3260 = vld [vmem:[%s3249 + $0x28] sm:$0xf]
      %v3261 = vld [vmem:[%s3249 + $0x2c] sm:$0xf]
      %v3262 = vld [vmem:[%s3249 + $0x30] sm:$0xf]
      %v3263 = vld [vmem:[%s3249 + $0x34] sm:$0xf]
      %v3264 = vld [vmem:[%s3249 + $0x38] sm:$0xf]
      %v3265 = vld [vmem:[%s3249 + $0x3c] sm:$0xf]
      %v3282 = vunpack.c.l.b16 %v3250
      %v3283 = vunpack.c.l.b16 %v3251
      %v3284 = vunpack.c.l.b16 %v3252
      %v3285 = vunpack.c.l.b16 %v3253
      %v3286 = vunpack.c.l.b16 %v3254
      %v3287 = vunpack.c.l.b16 %v3255
      %v3288 = vunpack.c.l.b16 %v3256
      %v3289 = vunpack.c.l.b16 %v3257
      %v3290 = vunpack.c.l.b16 %v3258
      %v3291 = vunpack.c.l.b16 %v3259
      %v3292 = vunpack.c.l.b16 %v3260
      %v3293 = vunpack.c.l.b16 %v3261
      %v3294 = vunpack.c.l.b16 %v3262
      %v3295 = vunpack.c.l.b16 %v3263
      %v3296 = vunpack.c.l.b16 %v3264
      %v3297 = vunpack.c.l.b16 %v3265
      %v3298 = vpack.c.b16 %v3283, %v3282
      %v3299 = vpack.c.b16 %v3285, %v3284
      %v3300 = vpack.c.b16 %v3287, %v3286
      %v3301 = vpack.c.b16 %v3289, %v3288
      %v3302 = vpack.c.b16 %v3291, %v3290
      %v3303 = vpack.c.b16 %v3293, %v3292
      %v3304 = vpack.c.b16 %v3295, %v3294
      %v3305 = vpack.c.b16 %v3297, %v3296
      %3314 = vmatpush.bf16.msra.mxu0 %v3305
      %3315 = vmatpush.bf16.msra.mxu0 %v3304
      %3316 = vmatpush.bf16.msra.mxu0 %v3303
      %3317 = vmatpush.bf16.msra.mxu0 %v3302
      %3318 = vmatpush.bf16.msra.mxu0 %v3301
      %3319 = vmatpush.bf16.msra.mxu0 %v3300
      %3320 = vmatpush.bf16.msra.mxu0 %v3299
      %3321 = vmatpush.bf16.msra.mxu0 %v3298
      %3322 = vmatmul.bf16.gmra.mxu0 %v3088
      %v3323 = vpop.f32.mrf.mxu0
      %v3324 = vadd.f32 0.0, %v3323
      %v3325 = vpop.f32.mrf.mxu0
      %v3326 = vadd.f32 0.0, %v3325
      %3327 = vdwg.mxu0
      %v3328 = vmax.f32 %v3247, %v3324
      %v3329 = vmax.f32 %v3248, %v3326
      %s3330 = scalar_lea.vmem %s7, 960
      %v3331 = vld [vmem:[%s3330] sm:$0xf]
      %v3332 = vld [vmem:[%s3330 + $0x4] sm:$0xf]
      %v3333 = vld [vmem:[%s3330 + $0x8] sm:$0xf]
      %v3334 = vld [vmem:[%s3330 + $0xc] sm:$0xf]
      %v3335 = vld [vmem:[%s3330 + $0x10] sm:$0xf]
      %v3336 = vld [vmem:[%s3330 + $0x14] sm:$0xf]
      %v3337 = vld [vmem:[%s3330 + $0x18] sm:$0xf]
      %v3338 = vld [vmem:[%s3330 + $0x1c] sm:$0xf]
      %v3339 = vld [vmem:[%s3330 + $0x20] sm:$0xf]
      %v3340 = vld [vmem:[%s3330 + $0x24] sm:$0xf]
      %v3341 = vld [vmem:[%s3330 + $0x28] sm:$0xf]
      %v3342 = vld [vmem:[%s3330 + $0x2c] sm:$0xf]
      %v3343 = vld [vmem:[%s3330 + $0x30] sm:$0xf]
      %v3344 = vld [vmem:[%s3330 + $0x34] sm:$0xf]
      %v3345 = vld [vmem:[%s3330 + $0x38] sm:$0xf]
      %v3346 = vld [vmem:[%s3330 + $0x3c] sm:$0xf]
      %v3363 = vunpack.c.l.b16 %v3331
      %v3364 = vunpack.c.l.b16 %v3332
      %v3365 = vunpack.c.l.b16 %v3333
      %v3366 = vunpack.c.l.b16 %v3334
      %v3367 = vunpack.c.l.b16 %v3335
      %v3368 = vunpack.c.l.b16 %v3336
      %v3369 = vunpack.c.l.b16 %v3337
      %v3370 = vunpack.c.l.b16 %v3338
      %v3371 = vunpack.c.l.b16 %v3339
      %v3372 = vunpack.c.l.b16 %v3340
      %v3373 = vunpack.c.l.b16 %v3341
      %v3374 = vunpack.c.l.b16 %v3342
      %v3375 = vunpack.c.l.b16 %v3343
      %v3376 = vunpack.c.l.b16 %v3344
      %v3377 = vunpack.c.l.b16 %v3345
      %v3378 = vunpack.c.l.b16 %v3346
      %v3379 = vpack.c.b16 %v3364, %v3363
      %v3380 = vpack.c.b16 %v3366, %v3365
      %v3381 = vpack.c.b16 %v3368, %v3367
      %v3382 = vpack.c.b16 %v3370, %v3369
      %v3383 = vpack.c.b16 %v3372, %v3371
      %v3384 = vpack.c.b16 %v3374, %v3373
      %v3385 = vpack.c.b16 %v3376, %v3375
      %v3386 = vpack.c.b16 %v3378, %v3377
      %3395 = vmatpush.bf16.msra.mxu0 %v3386
      %3396 = vmatpush.bf16.msra.mxu0 %v3385
      %3397 = vmatpush.bf16.msra.mxu0 %v3384
      %3398 = vmatpush.bf16.msra.mxu0 %v3383
      %3399 = vmatpush.bf16.msra.mxu0 %v3382
      %3400 = vmatpush.bf16.msra.mxu0 %v3381
      %3401 = vmatpush.bf16.msra.mxu0 %v3380
      %3402 = vmatpush.bf16.msra.mxu0 %v3379
      %3403 = vmatmul.bf16.gmra.mxu0 %v3088
      %v3404 = vpop.f32.mrf.mxu0
      %v3405 = vadd.f32 0.0, %v3404
      %v3406 = vpop.f32.mrf.mxu0
      %v3407 = vadd.f32 0.0, %v3406
      %3408 = vdwg.mxu0
      %v3409 = vmax.f32 %v3328, %v3405
      %v3410 = vmax.f32 %v3329, %v3407
      %v3411 = vadd.f32 %v2866, %v3409
      %v3412 = vadd.f32 %v2867, %v3410
      %v3413 = vpack.c.bf16 %v3411, %v3411
      %v3414 = vpack.c.bf16 %v3412, %v3412
      %3415 = vst [vmem:[%s332] sm:$0xf] %v3413
      %3416 = vst [vmem:[%s332 + $0x4] sm:$0xf] %v3414
      %p3417 = scmp.lt.s32.totalorder %s20, 1
      %s3418 = scalar_select %p3417, %s20, 1
      %s3419 = smul.addr %s3418, 2
      %s3420 = smul.addr %s3419, 4
      %s3421 = scalar_lea.vmem %s9, %s3420
      // Predicated region
      $region71: #{d_res_3d_cnn_forward.4} parent=55 // pred_check
        %p3422 = pneg %p232
      $region72: #{d_res_3d_cnn_forward.4} parent=55 // pred_check_branch
        %3424 = sbr.rel (%p3422) target = $region74
      $region73: #{d_res_3d_cnn_forward.4} parent=55 // pred_region
        _
      $region74: #{d_res_3d_cnn_forward.4} parent=55 // pred_fallthru
        _
    $region56: #{d_res_3d_cnn_forward.4} parent=5 // pred_fallthru
      _
    %p3425 = scmp.le.s32.totalorder 2, %s15
    // Predicated region
    $region75: #{d_res_3d_cnn_forward.4} parent=5 // pred_check
      %p3426 = pneg %p3425
    $region76: #{d_res_3d_cnn_forward.4} parent=5 // pred_check_branch
      %3428 = sbr.rel (%p3426) target = $region78
    $region77: #{d_res_3d_cnn_forward.4} parent=5 // pred_region
      %s3429 = ssub.s32 %s15, 2
      // Predicated region
      $region79: #{d_res_3d_cnn_forward.4} parent=77 // pred_check
        %p3430 = pneg %p238
      $region80: #{d_res_3d_cnn_forward.4} parent=77 // pred_check_branch
        %3432 = sbr.rel (%p3430) target = $region82
      $region81: #{d_res_3d_cnn_forward.4} parent=77 // pred_region
        %p3433 = scmp.lt.s32.totalorder %s21, 1
        %s3434 = scalar_select %p3433, %s21, 1
        %s3435 = smul.addr %s3434, 2
        %s3436 = smul.addr %s3435, 4
        %s3437 = scalar_lea.vmem %s9, %s3436
      $region82: #{d_res_3d_cnn_forward.4} parent=77 // pred_fallthru
        _
    $region78: #{d_res_3d_cnn_forward.4} parent=5 // pred_fallthru
      _
  $region6: #{d_res_3d_cnn_forward.4} parent=0 // loop_footer
    %s19 = sadd.s32 1, %s15
  $region7: #{d_res_3d_cnn_forward.4} parent=0 // loop_footer_branch
    %14 = sbr.rel target = $region3
  $region8: #{d_res_3d_cnn_forward.4} parent=0 // loop_exit
    _

// kernel: d_res_3d_cnn_forward.3
$region0: #{d_res_3d_cnn_forward.3}
  #allocation0 [shape = 'u32[]', space=smem, size = 0x4, offset = 0x4, fixed_abs, tag = 'smem constant byte address 0x4 - core index']
  #allocation1 [shape = 'u32[72,128]{1,0:T(1,128)}', space=vmem, size = 0x9000, scoped, tag = 'internal scratch']
  #allocation2 [shape = 'bf16[18,16,256]{2,1,0:T(8,128)(2,1)}', space=vmem, size = 0x24000, scoped, tag = 'scratch operand']
  #allocation3 [shape = 'bf16[18,16,256]{2,1,0:T(8,128)(2,1)}', space=vmem, size = 0x24000, scoped, tag = 'scratch operand']
  %s0 = inlined_call_operand.vmem [shape: bf16[2,18,16,256], index: 0, kind: input, shape index: {}]
  %s1 = inlined_call_operand.vmem [shape: bf16[16,432], index: 1, kind: input, shape index: {}]
  %s2 = inlined_call_operand.vmem [shape: f32[16,1], index: 2, kind: input, shape index: {}]
  %s3 = inlined_call_operand.vmem [shape: bf16[16,432], index: 3, kind: input, shape index: {}]
  %s4 = inlined_call_operand.vmem [shape: f32[16,1], index: 4, kind: input, shape index: {}]
  %s5 = inlined_call_operand.vmem [shape: bf16[16,432], index: 5, kind: input, shape index: {}]
  %s6 = inlined_call_operand.vmem [shape: f32[16,1], index: 6, kind: input, shape index: {}]
  %s7 = inlined_call_operand.vmem [shape: bf16[4,128,256], index: 7, kind: input, shape index: {}]
  %s8 = inlined_call_operand.vmem [shape: f32[1,128], index: 8, kind: input, shape index: {}]
  %s9 = inlined_call_operand.vmem [shape: bf16[2,6,16,256], index: 9, kind: output, shape index: {}]
  %s10 = sld [smem:[#allocation0]]
  $region83: #{d_res_3d_cnn_forward.3} parent=0
    _
  %s12 = ssub.s32 1, %s10
  %s13 = scalar_select 0, %s12, %s10
  loop: start=0, step=1, limit=4
  $region2: #{d_res_3d_cnn_forward.3} parent=0 // loop_pre_header
    _
  $region3: #{d_res_3d_cnn_forward.3} parent=0 // loop_header
    %s15 = sphi 0, %s19
    %p16 = scmp.ge.s32.totalorder %s15, 4
    %s25 = sphi 0, %s27
    %s28 = sphi 0, %s25
    %s29 = sphi 0, %s28
    %s45 = sphi 0, %s29
    %s49 = sphi 0, %s49
    %s51 = sphi 0, %s49
    %s52 = sphi 0, %s51
    %s66 = sphi 0, %s52
    %s70 = sphi 0, %s70
    %s72 = sphi 0, %s70
    %s73 = sphi 0, %s72
    %s87 = sphi 0, %s73
    %s91 = sphi 0, %s91
    %s93 = sphi 0, %s91
    %s94 = sphi 0, %s93
    %s108 = sphi 0, %s94
    %s112 = sphi 0, %s112
    %s114 = sphi 0, %s112
    %s115 = sphi 0, %s114
    %s129 = sphi 0, %s115
    %s133 = sphi 0, %s133
    %s135 = sphi 0, %s133
    %s136 = sphi 0, %s135
    %s150 = sphi 0, %s136
    %s154 = sphi 0, %s154
    %s156 = sphi 0, %s154
    %s157 = sphi 0, %s156
    %s171 = sphi 0, %s157
    %s175 = sphi 0, %s175
    %s177 = sphi 0, %s175
    %s178 = sphi 0, %s177
    %s192 = sphi 0, %s178
    %s196 = sphi 0, %s196
    %s198 = sphi 0, %s196
    %s199 = sphi 0, %s198
    %s213 = sphi 0, %s199
    %s219 = sphi 0, %s221
    %s222 = sphi 0, %s219
    %s223 = sphi 0, %s222
    %s239 = sphi 0, %s223
  $region4: #{d_res_3d_cnn_forward.3} parent=0 // loop_header_branch
    %18 = sbr.rel (%p16) target = $region8
  $region5: #{d_res_3d_cnn_forward.3} parent=0 // loop_body
    %s20 = ssub.s32 %s15, 1
    %s21 = ssub.s32 %s15, 2
    %s22 = sadd.s32 %s15, 1
    %s23 = ssub.s32 %s15, %s22
    %p24 = scmp.eq.s32.totalorder %s23, 0
    %s26 = sadd.s32 %s25, 1
    %s27 = scalar_select %p24, %s25, %s26
    %p30 = pneg %p24
    %p31 = scmp.eq.s32.totalorder %s15, 1
    %p32 = por %p30, %p31
    %p33 = scmp.ne.s32.totalorder %s25, %s28
    %p34 = scmp.eq.s32.totalorder %s15, 0
    %p35 = por %p33, %p34
    %p36 = scmp.ne.s32.totalorder %s25, %s28
    %p37 = scmp.eq.s32.totalorder %s20, 1
    %p38 = por %p36, %p37
    %p39 = scmp.ne.s32.totalorder %s28, %s29
    %p40 = scmp.eq.s32.totalorder %s20, 0
    %p41 = por %p39, %p40
    %p42 = scmp.ne.s32.totalorder %s28, %s29
    %p43 = scmp.eq.s32.totalorder %s21, 1
    %p44 = por %p42, %p43
    %p46 = scmp.ne.s32.totalorder %s29, %s45
    %p47 = scmp.eq.s32.totalorder %s21, 0
    %p48 = por %p46, %p47
    %s50 = sadd.s32 %s49, 1
    %p53 = scmp.eq.s32.totalorder %s15, 1
    %p54 = scmp.ne.s32.totalorder %s49, %s51
    %p55 = scmp.eq.s32.totalorder %s15, 0
    %p56 = por %p54, %p55
    %p57 = scmp.ne.s32.totalorder %s49, %s51
    %p58 = scmp.eq.s32.totalorder %s20, 1
    %p59 = por %p57, %p58
    %p60 = scmp.ne.s32.totalorder %s51, %s52
    %p61 = scmp.eq.s32.totalorder %s20, 0
    %p62 = por %p60, %p61
    %p63 = scmp.ne.s32.totalorder %s51, %s52
    %p64 = scmp.eq.s32.totalorder %s21, 1
    %p65 = por %p63, %p64
    %p67 = scmp.ne.s32.totalorder %s52, %s66
    %p68 = scmp.eq.s32.totalorder %s21, 0
    %p69 = por %p67, %p68
    %s71 = sadd.s32 %s70, 1
    %p74 = scmp.eq.s32.totalorder %s15, 1
    %p75 = scmp.ne.s32.totalorder %s70, %s72
    %p76 = scmp.eq.s32.totalorder %s15, 0
    %p77 = por %p75, %p76
    %p78 = scmp.ne.s32.totalorder %s70, %s72
    %p79 = scmp.eq.s32.totalorder %s20, 1
    %p80 = por %p78, %p79
    %p81 = scmp.ne.s32.totalorder %s72, %s73
    %p82 = scmp.eq.s32.totalorder %s20, 0
    %p83 = por %p81, %p82
    %p84 = scmp.ne.s32.totalorder %s72, %s73
    %p85 = scmp.eq.s32.totalorder %s21, 1
    %p86 = por %p84, %p85
    %p88 = scmp.ne.s32.totalorder %s73, %s87
    %p89 = scmp.eq.s32.totalorder %s21, 0
    %p90 = por %p88, %p89
    %s92 = sadd.s32 %s91, 1
    %p95 = scmp.eq.s32.totalorder %s15, 1
    %p96 = scmp.ne.s32.totalorder %s91, %s93
    %p97 = scmp.eq.s32.totalorder %s15, 0
    %p98 = por %p96, %p97
    %p99 = scmp.ne.s32.totalorder %s91, %s93
    %p100 = scmp.eq.s32.totalorder %s20, 1
    %p101 = por %p99, %p100
    %p102 = scmp.ne.s32.totalorder %s93, %s94
    %p103 = scmp.eq.s32.totalorder %s20, 0
    %p104 = por %p102, %p103
    %p105 = scmp.ne.s32.totalorder %s93, %s94
    %p106 = scmp.eq.s32.totalorder %s21, 1
    %p107 = por %p105, %p106
    %p109 = scmp.ne.s32.totalorder %s94, %s108
    %p110 = scmp.eq.s32.totalorder %s21, 0
    %p111 = por %p109, %p110
    %s113 = sadd.s32 %s112, 1
    %p116 = scmp.eq.s32.totalorder %s15, 1
    %p117 = scmp.ne.s32.totalorder %s112, %s114
    %p118 = scmp.eq.s32.totalorder %s15, 0
    %p119 = por %p117, %p118
    %p120 = scmp.ne.s32.totalorder %s112, %s114
    %p121 = scmp.eq.s32.totalorder %s20, 1
    %p122 = por %p120, %p121
    %p123 = scmp.ne.s32.totalorder %s114, %s115
    %p124 = scmp.eq.s32.totalorder %s20, 0
    %p125 = por %p123, %p124
    %p126 = scmp.ne.s32.totalorder %s114, %s115
    %p127 = scmp.eq.s32.totalorder %s21, 1
    %p128 = por %p126, %p127
    %p130 = scmp.ne.s32.totalorder %s115, %s129
    %p131 = scmp.eq.s32.totalorder %s21, 0
    %p132 = por %p130, %p131
    %s134 = sadd.s32 %s133, 1
    %p137 = scmp.eq.s32.totalorder %s15, 1
    %p138 = scmp.ne.s32.totalorder %s133, %s135
    %p139 = scmp.eq.s32.totalorder %s15, 0
    %p140 = por %p138, %p139
    %p141 = scmp.ne.s32.totalorder %s133, %s135
    %p142 = scmp.eq.s32.totalorder %s20, 1
    %p143 = por %p141, %p142
    %p144 = scmp.ne.s32.totalorder %s135, %s136
    %p145 = scmp.eq.s32.totalorder %s20, 0
    %p146 = por %p144, %p145
    %p147 = scmp.ne.s32.totalorder %s135, %s136
    %p148 = scmp.eq.s32.totalorder %s21, 1
    %p149 = por %p147, %p148
    %p151 = scmp.ne.s32.totalorder %s136, %s150
    %p152 = scmp.eq.s32.totalorder %s21, 0
    %p153 = por %p151, %p152
    %s155 = sadd.s32 %s154, 1
    %p158 = scmp.eq.s32.totalorder %s15, 1
    %p159 = scmp.ne.s32.totalorder %s154, %s156
    %p160 = scmp.eq.s32.totalorder %s15, 0
    %p161 = por %p159, %p160
    %p162 = scmp.ne.s32.totalorder %s154, %s156
    %p163 = scmp.eq.s32.totalorder %s20, 1
    %p164 = por %p162, %p163
    %p165 = scmp.ne.s32.totalorder %s156, %s157
    %p166 = scmp.eq.s32.totalorder %s20, 0
    %p167 = por %p165, %p166
    %p168 = scmp.ne.s32.totalorder %s156, %s157
    %p169 = scmp.eq.s32.totalorder %s21, 1
    %p170 = por %p168, %p169
    %p172 = scmp.ne.s32.totalorder %s157, %s171
    %p173 = scmp.eq.s32.totalorder %s21, 0
    %p174 = por %p172, %p173
    %s176 = sadd.s32 %s175, 1
    %p179 = scmp.eq.s32.totalorder %s15, 1
    %p180 = scmp.ne.s32.totalorder %s175, %s177
    %p181 = scmp.eq.s32.totalorder %s15, 0
    %p182 = por %p180, %p181
    %p183 = scmp.ne.s32.totalorder %s175, %s177
    %p184 = scmp.eq.s32.totalorder %s20, 1
    %p185 = por %p183, %p184
    %p186 = scmp.ne.s32.totalorder %s177, %s178
    %p187 = scmp.eq.s32.totalorder %s20, 0
    %p188 = por %p186, %p187
    %p189 = scmp.ne.s32.totalorder %s177, %s178
    %p190 = scmp.eq.s32.totalorder %s21, 1
    %p191 = por %p189, %p190
    %p193 = scmp.ne.s32.totalorder %s178, %s192
    %p194 = scmp.eq.s32.totalorder %s21, 0
    %p195 = por %p193, %p194
    %s197 = sadd.s32 %s196, 1
    %p200 = scmp.eq.s32.totalorder %s15, 1
    %p201 = scmp.ne.s32.totalorder %s196, %s198
    %p202 = scmp.eq.s32.totalorder %s15, 0
    %p203 = por %p201, %p202
    %p204 = scmp.ne.s32.totalorder %s196, %s198
    %p205 = scmp.eq.s32.totalorder %s20, 1
    %p206 = por %p204, %p205
    %p207 = scmp.ne.s32.totalorder %s198, %s199
    %p208 = scmp.eq.s32.totalorder %s20, 0
    %p209 = por %p207, %p208
    %p210 = scmp.ne.s32.totalorder %s198, %s199
    %p211 = scmp.eq.s32.totalorder %s21, 1
    %p212 = por %p210, %p211
    %p214 = scmp.ne.s32.totalorder %s199, %s213
    %p215 = scmp.eq.s32.totalorder %s21, 0
    %p216 = por %p214, %p215
    %s217 = ssub.s32 %s15, %s22
    %p218 = scmp.eq.s32.totalorder %s217, 0
    %s220 = sadd.s32 %s219, 1
    %s221 = scalar_select %p218, %s219, %s220
    %p224 = pneg %p218
    %p225 = scmp.eq.s32.totalorder %s15, 1
    %p226 = por %p224, %p225
    %p227 = scmp.ne.s32.totalorder %s219, %s222
    %p228 = scmp.eq.s32.totalorder %s15, 0
    %p229 = por %p227, %p228
    %p230 = scmp.ne.s32.totalorder %s219, %s222
    %p231 = scmp.eq.s32.totalorder %s20, 1
    %p232 = por %p230, %p231
    %p233 = scmp.ne.s32.totalorder %s222, %s223
    %p234 = scmp.eq.s32.totalorder %s20, 0
    %p235 = por %p233, %p234
    %p236 = scmp.ne.s32.totalorder %s222, %s223
    %p237 = scmp.eq.s32.totalorder %s21, 1
    %p238 = por %p236, %p237
    %p240 = scmp.ne.s32.totalorder %s223, %s239
    %p241 = scmp.eq.s32.totalorder %s21, 0
    %p242 = por %p240, %p241
    %p243 = scmp.le.s32.totalorder 1, %s15
    %p244 = scmp.lt.s32.totalorder %s15, 3
    %p245 = pnand %p243, %p244
    %p246 = pneg %p245
    // Predicated region
    $region9: #{d_res_3d_cnn_forward.3} parent=5 // pred_check
      _
    $region10: #{d_res_3d_cnn_forward.3} parent=5 // pred_check_branch
      %248 = sbr.rel (%p245) target = $region12
    $region11: #{d_res_3d_cnn_forward.3} parent=5 // pred_region
      %s249 = ssub.s32 %s15, 1
      // Predicated region
      $region13: #{d_res_3d_cnn_forward.3} parent=11 // pred_check
        %p250 = pneg %p62
      $region14: #{d_res_3d_cnn_forward.3} parent=11 // pred_check_branch
        %252 = sbr.rel (%p250) target = $region16
      $region15: #{d_res_3d_cnn_forward.3} parent=11 // pred_region
        _
      $region16: #{d_res_3d_cnn_forward.3} parent=11 // pred_fallthru
        _
      // Predicated region
      $region17: #{d_res_3d_cnn_forward.3} parent=11 // pred_check
        %p253 = pneg %p83
      $region18: #{d_res_3d_cnn_forward.3} parent=11 // pred_check_branch
        %255 = sbr.rel (%p253) target = $region20
      $region19: #{d_res_3d_cnn_forward.3} parent=11 // pred_region
        _
      $region20: #{d_res_3d_cnn_forward.3} parent=11 // pred_fallthru
        _
      // Predicated region
      $region21: #{d_res_3d_cnn_forward.3} parent=11 // pred_check
        %p256 = pneg %p104
      $region22: #{d_res_3d_cnn_forward.3} parent=11 // pred_check_branch
        %258 = sbr.rel (%p256) target = $region24
      $region23: #{d_res_3d_cnn_forward.3} parent=11 // pred_region
        _
      $region24: #{d_res_3d_cnn_forward.3} parent=11 // pred_fallthru
        _
      // Predicated region
      $region25: #{d_res_3d_cnn_forward.3} parent=11 // pred_check
        %p259 = pneg %p125
      $region26: #{d_res_3d_cnn_forward.3} parent=11 // pred_check_branch
        %261 = sbr.rel (%p259) target = $region28
      $region27: #{d_res_3d_cnn_forward.3} parent=11 // pred_region
        _
      $region28: #{d_res_3d_cnn_forward.3} parent=11 // pred_fallthru
        _
      // Predicated region
      $region29: #{d_res_3d_cnn_forward.3} parent=11 // pred_check
        %p262 = pneg %p146
      $region30: #{d_res_3d_cnn_forward.3} parent=11 // pred_check_branch
        %264 = sbr.rel (%p262) target = $region32
      $region31: #{d_res_3d_cnn_forward.3} parent=11 // pred_region
        _
      $region32: #{d_res_3d_cnn_forward.3} parent=11 // pred_fallthru
        _
      // Predicated region
      $region33: #{d_res_3d_cnn_forward.3} parent=11 // pred_check
        %p265 = pneg %p167
      $region34: #{d_res_3d_cnn_forward.3} parent=11 // pred_check_branch
        %267 = sbr.rel (%p265) target = $region36
      $region35: #{d_res_3d_cnn_forward.3} parent=11 // pred_region
        _
      $region36: #{d_res_3d_cnn_forward.3} parent=11 // pred_fallthru
        _
      // Predicated region
      $region37: #{d_res_3d_cnn_forward.3} parent=11 // pred_check
        %p268 = pneg %p188
      $region38: #{d_res_3d_cnn_forward.3} parent=11 // pred_check_branch
        %270 = sbr.rel (%p268) target = $region40
      $region39: #{d_res_3d_cnn_forward.3} parent=11 // pred_region
        _
      $region40: #{d_res_3d_cnn_forward.3} parent=11 // pred_fallthru
        _
      // Predicated region
      $region41: #{d_res_3d_cnn_forward.3} parent=11 // pred_check
        %p271 = pneg %p209
      $region42: #{d_res_3d_cnn_forward.3} parent=11 // pred_check_branch
        %273 = sbr.rel (%p271) target = $region44
      $region43: #{d_res_3d_cnn_forward.3} parent=11 // pred_region
        _
      $region44: #{d_res_3d_cnn_forward.3} parent=11 // pred_fallthru
        _
    $region12: #{d_res_3d_cnn_forward.3} parent=5 // pred_fallthru
      _
    %p274 = scmp.lt.s32.totalorder %s15, 2
    // Predicated region
    $region45: #{d_res_3d_cnn_forward.3} parent=5 // pred_check
      %p275 = pneg %p274
    $region46: #{d_res_3d_cnn_forward.3} parent=5 // pred_check_branch
      %277 = sbr.rel (%p275) target = $region48
    $region47: #{d_res_3d_cnn_forward.3} parent=5 // pred_region
      // Predicated region
      $region49: #{d_res_3d_cnn_forward.3} parent=47 // pred_check
        %p278 = pneg %p35
      $region50: #{d_res_3d_cnn_forward.3} parent=47 // pred_check_branch
        %280 = sbr.rel (%p278) target = $region52
      $region51: #{d_res_3d_cnn_forward.3} parent=47 // pred_region
        %p281 = scmp.lt.s32.totalorder %s15, 1
        %s282 = scalar_select %p281, %s15, 1
        %s283 = smul.addr %s282, 72
        %s284 = smul.addr %s283, 4
        %s285 = scalar_lea.vmem %s0, %s284
      $region52: #{d_res_3d_cnn_forward.3} parent=47 // pred_fallthru
        _
    $region48: #{d_res_3d_cnn_forward.3} parent=5 // pred_fallthru
      _
    %p286 = scmp.le.s32.totalorder 1, %s15
    %p287 = scmp.lt.s32.totalorder %s15, 3
    %p288 = pnand %p286, %p287
    %p289 = pneg %p288
    // Predicated region
    $region53: #{d_res_3d_cnn_forward.3} parent=5 // pred_check
      _
    $region54: #{d_res_3d_cnn_forward.3} parent=5 // pred_check_branch
      %291 = sbr.rel (%p288) target = $region56
    $region55: #{d_res_3d_cnn_forward.3} parent=5 // pred_region
      %s292 = ssub.s32 %s15, 1
      %p293 = scmp.lt.s32.totalorder %s20, 1
      %s294 = scalar_select %p293, %s20, 1
      %s295 = smul.addr %s294, 72
      %s296 = smul.addr %s295, 4
      %s297 = scalar_lea.vmem %s0, %s296
      %p298 = pneg %p41
      %p299 = pneg %p38
      %p300 = pneg %p62
      %p301 = pneg %p59
      %p302 = pneg %p83
      %p303 = pneg %p80
      %p304 = pneg %p104
      %p305 = pneg %p101
      %p306 = pneg %p125
      %p307 = pneg %p122
      %p308 = pneg %p146
      %p309 = pneg %p143
      %p310 = pneg %p167
      %p311 = pneg %p164
      %p312 = pneg %p188
      %p313 = pneg %p185
      %p314 = pneg %p209
      %p315 = pneg %p206
      %p316 = pneg %p235
      %p317 = pneg %p232
      %p318 = scmp.lt.s32.totalorder %s20, 1
      %s319 = scalar_select %p318, %s20, 1
      %s320 = smul.addr %s319, 24
      %s321 = smul.addr %s320, 4
      %s322 = scalar_lea.vmem %s9, %s321
      %p323 = scmp.lt.s32.totalorder %s20, 1
      %s324 = scalar_select %p323, %s20, 1
      %s325 = smul.addr %s324, 72
      %s326 = smul.addr %s325, 4
      %s327 = scalar_lea.vmem %s0, %s326
      %p328 = scmp.lt.s32.totalorder %s20, 1
      %s329 = scalar_select %p328, %s20, 1
      %s330 = smul.addr %s329, 24
      %s331 = smul.addr %s330, 4
      %s332 = scalar_lea.vmem %s9, %s331
      %334 = vst [vmem:[#allocation2] sm:$0xff] 0
      %335 = vst [vmem:[#allocation2 + $0x8] sm:$0xff] 0
      %336 = vst [vmem:[#allocation2 + $0x10] sm:$0xff] 0
      %337 = vst [vmem:[#allocation2 + $0x18] sm:$0xff] 0
      %338 = vst [vmem:[#allocation2 + $0x20] sm:$0xff] 0
      %339 = vst [vmem:[#allocation2 + $0x28] sm:$0xff] 0
      %340 = vst [vmem:[#allocation2 + $0x30] sm:$0xff] 0
      %341 = vst [vmem:[#allocation2 + $0x38] sm:$0xff] 0
      %342 = vst [vmem:[#allocation2 + $0x40] sm:$0xff] 0
      %343 = vst [vmem:[#allocation2 + $0x48] sm:$0xff] 0
      %344 = vst [vmem:[#allocation2 + $0x50] sm:$0xff] 0
      %345 = vst [vmem:[#allocation2 + $0x58] sm:$0xff] 0
      %346 = vst [vmem:[#allocation2 + $0x60] sm:$0xff] 0
      %347 = vst [vmem:[#allocation2 + $0x68] sm:$0xff] 0
      %348 = vst [vmem:[#allocation2 + $0x70] sm:$0xff] 0
      %349 = vst [vmem:[#allocation2 + $0x78] sm:$0xff] 0
      %350 = vst [vmem:[#allocation2 + $0x80] sm:$0xff] 0
      %351 = vst [vmem:[#allocation2 + $0x88] sm:$0xff] 0
      %352 = vst [vmem:[#allocation2 + $0x90] sm:$0xff] 0
      %353 = vst [vmem:[#allocation2 + $0x98] sm:$0xff] 0
      %354 = vst [vmem:[#allocation2 + $0xa0] sm:$0xff] 0
      %355 = vst [vmem:[#allocation2 + $0xa8] sm:$0xff] 0
      %356 = vst [vmem:[#allocation2 + $0xb0] sm:$0xff] 0
      %357 = vst [vmem:[#allocation2 + $0xb8] sm:$0xff] 0
      %358 = vst [vmem:[#allocation2 + $0xc0] sm:$0xff] 0
      %359 = vst [vmem:[#allocation2 + $0xc8] sm:$0xff] 0
      %360 = vst [vmem:[#allocation2 + $0xd0] sm:$0xff] 0
      %361 = vst [vmem:[#allocation2 + $0xd8] sm:$0xff] 0
      %362 = vst [vmem:[#allocation2 + $0xe0] sm:$0xff] 0
      %363 = vst [vmem:[#allocation2 + $0xe8] sm:$0xff] 0
      %364 = vst [vmem:[#allocation2 + $0xf0] sm:$0xff] 0
      %365 = vst [vmem:[#allocation2 + $0xf8] sm:$0xff] 0
      %366 = vst [vmem:[#allocation2 + $0x100] sm:$0xff] 0
      %367 = vst [vmem:[#allocation2 + $0x108] sm:$0xff] 0
      %368 = vst [vmem:[#allocation2 + $0x110] sm:$0xff] 0
      %369 = vst [vmem:[#allocation2 + $0x118] sm:$0xff] 0
      %370 = vst [vmem:[#allocation3] sm:$0xff] 0
      %371 = vst [vmem:[#allocation3 + $0x8] sm:$0xff] 0
      %372 = vst [vmem:[#allocation3 + $0x10] sm:$0xff] 0
      %373 = vst [vmem:[#allocation3 + $0x18] sm:$0xff] 0
      %374 = vst [vmem:[#allocation3 + $0x20] sm:$0xff] 0
      %375 = vst [vmem:[#allocation3 + $0x28] sm:$0xff] 0
      %376 = vst [vmem:[#allocation3 + $0x30] sm:$0xff] 0
      %377 = vst [vmem:[#allocation3 + $0x38] sm:$0xff] 0
      %378 = vst [vmem:[#allocation3 + $0x40] sm:$0xff] 0
      %379 = vst [vmem:[#allocation3 + $0x48] sm:$0xff] 0
      %380 = vst [vmem:[#allocation3 + $0x50] sm:$0xff] 0
      %381 = vst [vmem:[#allocation3 + $0x58] sm:$0xff] 0
      %382 = vst [vmem:[#allocation3 + $0x60] sm:$0xff] 0
      %383 = vst [vmem:[#allocation3 + $0x68] sm:$0xff] 0
      %384 = vst [vmem:[#allocation3 + $0x70] sm:$0xff] 0
      %385 = vst [vmem:[#allocation3 + $0x78] sm:$0xff] 0
      %386 = vst [vmem:[#allocation3 + $0x80] sm:$0xff] 0
      %387 = vst [vmem:[#allocation3 + $0x88] sm:$0xff] 0
      %388 = vst [vmem:[#allocation3 + $0x90] sm:$0xff] 0
      %389 = vst [vmem:[#allocation3 + $0x98] sm:$0xff] 0
      %390 = vst [vmem:[#allocation3 + $0xa0] sm:$0xff] 0
      %391 = vst [vmem:[#allocation3 + $0xa8] sm:$0xff] 0
      %392 = vst [vmem:[#allocation3 + $0xb0] sm:$0xff] 0
      %393 = vst [vmem:[#allocation3 + $0xb8] sm:$0xff] 0
      %394 = vst [vmem:[#allocation3 + $0xc0] sm:$0xff] 0
      %395 = vst [vmem:[#allocation3 + $0xc8] sm:$0xff] 0
      %396 = vst [vmem:[#allocation3 + $0xd0] sm:$0xff] 0
      %397 = vst [vmem:[#allocation3 + $0xd8] sm:$0xff] 0
      %398 = vst [vmem:[#allocation3 + $0xe0] sm:$0xff] 0
      %399 = vst [vmem:[#allocation3 + $0xe8] sm:$0xff] 0
      %400 = vst [vmem:[#allocation3 + $0xf0] sm:$0xff] 0
      %401 = vst [vmem:[#allocation3 + $0xf8] sm:$0xff] 0
      %402 = vst [vmem:[#allocation3 + $0x100] sm:$0xff] 0
      %403 = vst [vmem:[#allocation3 + $0x108] sm:$0xff] 0
      %404 = vst [vmem:[#allocation3 + $0x110] sm:$0xff] 0
      %405 = vst [vmem:[#allocation3 + $0x118] sm:$0xff] 0
      %406 = vst [vmem:[%s332] sm:$0xff] 0
      %407 = vst [vmem:[%s332 + $0x8] sm:$0xff] 0
      %s408 = scalar_lea.vmem %s332, 80
      %409 = vst [vmem:[%s408] sm:$0xff] 0
      %410 = vst [vmem:[%s408 + $0x8] sm:$0xff] 0
      %v411 = vld [vmem:[%s8] sm:$0x1]
      %v412 = vld [vmem:[%s1] sm:$0xff]
      %v413 = vld [vmem:[%s1 + $0x8] sm:$0xff]
      %v414 = vld [vmem:[%s1 + $0x10] sm:$0xff]
      %v415 = vld [vmem:[%s1 + $0x18] sm:$0xff]
      %v416 = vld [vmem:[%s2] sm:$0xff]
      %v417 = vld [vmem:[%s2 + $0x8] sm:$0xff]
      loop: start=0, step=1, limit=16
      $region57: #{d_res_3d_cnn_forward.3} parent=55 // loop_pre_header
        _
      $region58: #{d_res_3d_cnn_forward.3} parent=55 // loop_header
        %s419 = sphi 0, %s423
        %p420 = scmp.ge.s32.totalorder %s419, 16
      $region59: #{d_res_3d_cnn_forward.3} parent=55 // loop_header_branch
        %422 = sbr.rel (%p420) target = $region63
      $region60: #{d_res_3d_cnn_forward.3} parent=55 // loop_body
        %s424 = smul.u32 %s419, 4
        %s425 = smul.addr %s424, 4
        %s426 = scalar_lea.vmem %s327, %s425
        %v427 = vld [vmem:[%s426] sm:$0xff]
        %v428 = vld [vmem:[%s426 + $0x8] sm:$0xff]
        %s429 = sadd.s32 %s419, 1
        %s430 = smul.u32 %s429, 4
        %s431 = smul.addr %s430, 4
        %s432 = scalar_lea.vmem %s327, %s431
        %v433 = vld [vmem:[%s432] sm:$0xff]
        %v434 = vld [vmem:[%s432 + $0x8] sm:$0xff]
        %s435 = sadd.s32 %s419, 2
        %s436 = smul.u32 %s435, 4
        %s437 = smul.addr %s436, 4
        %s438 = scalar_lea.vmem %s327, %s437
        %v439 = vld [vmem:[%s438] sm:$0xff]
        %v440 = vld [vmem:[%s438 + $0x8] sm:$0xff]
        %v443 = vunpack.c.l.b16 %v427
        %v444 = vunpack.c.l.b16 %v428
        %v445 = vpack.c.b16 %v444, %v443
        %v447 = vunpack.c.h.b16 %v427
        %v448 = vunpack.c.h.b16 %v428
        %v449 = vpack.c.b16 %v448, %v447
        %450 = vrot.lane.b32.xlu0 %v445, 127
        %v451 = vpop.permute.xlu0 %450
        %452 = vrot.lane.b32.xlu0 %v449, 127
        %v453 = vpop.permute.xlu0 %452
        %vm454 = vcmask 1039360
        %v455 = vsel %vm454, %v451, %v453
        %457 = vrot.lane.b32.xlu0 %v445, 126
        %v458 = vpop.permute.xlu0 %457
        %459 = vrot.lane.b32.xlu0 %v449, 126
        %v460 = vpop.permute.xlu0 %459
        %vm461 = vcmask 1031168
        %v462 = vsel %vm461, %v458, %v460
        %464 = vrot.lane.b32.xlu0 %v445, 117
        %v465 = vpop.permute.xlu0 %464
        %466 = vrot.lane.b32.xlu0 %v449, 117
        %v467 = vpop.permute.xlu0 %466
        %vm468 = vcmask 957440
        %v469 = vsel %vm468, %v465, %v467
        %471 = vrot.lane.b32.xlu0 %v445, 116
        %v472 = vpop.permute.xlu0 %471
        %473 = vrot.lane.b32.xlu0 %v449, 116
        %v474 = vpop.permute.xlu0 %473
        %vm475 = vcmask 949248
        %v476 = vsel %vm475, %v472, %v474
        %478 = vrot.lane.b32.xlu0 %v445, 115
        %v479 = vpop.permute.xlu0 %478
        %480 = vrot.lane.b32.xlu0 %v449, 115
        %v481 = vpop.permute.xlu0 %480
        %vm482 = vcmask 941056
        %v483 = vsel %vm482, %v479, %v481
        %485 = vrot.lane.b32.xlu0 %v445, 106
        %v486 = vpop.permute.xlu0 %485
        %487 = vrot.lane.b32.xlu0 %v449, 106
        %v488 = vpop.permute.xlu0 %487
        %vm489 = vcmask 867328
        %v490 = vsel %vm489, %v486, %v488
        %492 = vrot.lane.b32.xlu0 %v445, 105
        %v493 = vpop.permute.xlu0 %492
        %494 = vrot.lane.b32.xlu0 %v449, 105
        %v495 = vpop.permute.xlu0 %494
        %vm496 = vcmask 859136
        %v497 = vsel %vm496, %v493, %v495
        %499 = vrot.lane.b32.xlu0 %v445, 104
        %v500 = vpop.permute.xlu0 %499
        %501 = vrot.lane.b32.xlu0 %v449, 104
        %v502 = vpop.permute.xlu0 %501
        %vm503 = vcmask 850944
        %v504 = vsel %vm503, %v500, %v502
        %v508 = vunpack.c.l.b16 %v433
        %v509 = vunpack.c.l.b16 %v434
        %v510 = vpack.c.b16 %v509, %v508
        %v512 = vunpack.c.h.b16 %v433
        %v513 = vunpack.c.h.b16 %v434
        %v514 = vpack.c.b16 %v513, %v512
        %515 = vrot.lane.b32.xlu0 %v510, 127
        %v516 = vpop.permute.xlu0 %515
        %517 = vrot.lane.b32.xlu0 %v514, 127
        %v518 = vpop.permute.xlu0 %517
        %v519 = vsel %vm454, %v516, %v518
        %521 = vrot.lane.b32.xlu0 %v510, 126
        %v522 = vpop.permute.xlu0 %521
        %523 = vrot.lane.b32.xlu0 %v514, 126
        %v524 = vpop.permute.xlu0 %523
        %v525 = vsel %vm461, %v522, %v524
        %527 = vrot.lane.b32.xlu0 %v510, 117
        %v528 = vpop.permute.xlu0 %527
        %529 = vrot.lane.b32.xlu0 %v514, 117
        %v530 = vpop.permute.xlu0 %529
        %v531 = vsel %vm468, %v528, %v530
        %533 = vrot.lane.b32.xlu0 %v510, 116
        %v534 = vpop.permute.xlu0 %533
        %535 = vrot.lane.b32.xlu0 %v514, 116
        %v536 = vpop.permute.xlu0 %535
        %v537 = vsel %vm475, %v534, %v536
        %539 = vrot.lane.b32.xlu0 %v510, 115
        %v540 = vpop.permute.xlu0 %539
        %541 = vrot.lane.b32.xlu0 %v514, 115
        %v542 = vpop.permute.xlu0 %541
        %v543 = vsel %vm482, %v540, %v542
        %545 = vrot.lane.b32.xlu0 %v510, 106
        %v546 = vpop.permute.xlu0 %545
        %547 = vrot.lane.b32.xlu0 %v514, 106
        %v548 = vpop.permute.xlu0 %547
        %v549 = vsel %vm489, %v546, %v548
        %v553 = vunpack.c.l.b16 %v439
        %v554 = vunpack.c.l.b16 %v440
        %v555 = vpack.c.b16 %v554, %v553
        %556 = vrot.lane.b32.xlu0 %v555, 23
        %v557 = vpop.permute.xlu0 %556
        %v558 = vunpack.c.h.b16 %v439
        %v559 = vunpack.c.h.b16 %v440
        %v560 = vpack.c.b16 %v559, %v558
        %561 = vrot.lane.b32.xlu0 %v555, 22
        %v562 = vpop.permute.xlu0 %561
        %563 = vrot.lane.b32.xlu0 %v560, 22
        %v564 = vpop.permute.xlu0 %563
        %vm565 = vcmask 179200
        %v566 = vsel %vm565, %v562, %v564
        %567 = vrot.lane.b32.xlu0 %v555, 21
        %v568 = vpop.permute.xlu0 %567
        %569 = vrot.lane.b32.xlu0 %v560, 21
        %v570 = vpop.permute.xlu0 %569
        %vm571 = vcmask 171008
        %v572 = vsel %vm571, %v568, %v570
        %573 = vrot.lane.b32.xlu0 %v555, 12
        %v574 = vpop.permute.xlu0 %573
        %575 = vrot.lane.b32.xlu0 %v560, 12
        %v576 = vpop.permute.xlu0 %575
        %vm577 = vcmask 97280
        %v578 = vsel %vm577, %v574, %v576
        %579 = vrot.lane.b32.xlu0 %v555, 11
        %v580 = vpop.permute.xlu0 %579
        %581 = vrot.lane.b32.xlu0 %v560, 11
        %v582 = vpop.permute.xlu0 %581
        %vm583 = vcmask 89088
        %v584 = vsel %vm583, %v580, %v582
        %585 = vrot.lane.b32.xlu0 %v555, 10
        %v586 = vpop.permute.xlu0 %585
        %587 = vrot.lane.b32.xlu0 %v560, 10
        %v588 = vpop.permute.xlu0 %587
        %vm589 = vcmask 80896
        %v590 = vsel %vm589, %v586, %v588
        %591 = vrot.lane.b32.xlu0 %v555, 1
        %v592 = vpop.permute.xlu0 %591
        %593 = vrot.lane.b32.xlu0 %v560, 1
        %v594 = vpop.permute.xlu0 %593
        %vm595 = vcmask 7168
        %v596 = vsel %vm595, %v592, %v594
        %597 = vrot.lane.b32.xlu0 %v555, 127
        %v598 = vpop.permute.xlu0 %597
        %599 = vrot.lane.b32.xlu0 %v560, 127
        %v600 = vpop.permute.xlu0 %599
        %v601 = vsel %vm454, %v598, %v600
        %602 = vrot.lane.b32.xlu0 %v510, 105
        %v603 = vpop.permute.xlu0 %602
        %604 = vrot.lane.b32.xlu0 %v514, 105
        %v605 = vpop.permute.xlu0 %604
        %606 = vrot.lane.b32.xlu0 %v519, 105
        %v607 = vpop.permute.xlu0 %606
        %608 = vrot.lane.b32.xlu0 %v518, 105
        %v609 = vpop.permute.xlu0 %608
        %610 = vrot.lane.b32.xlu0 %v557, 105
        %v611 = vpop.permute.xlu0 %610
        %612 = vrot.lane.b32.xlu0 %v562, 105
        %v613 = vpop.permute.xlu0 %612
        %614 = vrot.lane.b32.xlu0 %v566, 105
        %v615 = vpop.permute.xlu0 %614
        %616 = vrot.lane.b32.xlu0 %v568, 105
        %v617 = vpop.permute.xlu0 %616
        %618 = vrot.lane.b32.xlu0 %v572, 105
        %v619 = vpop.permute.xlu0 %618
        %620 = vrot.lane.b32.xlu0 %v574, 105
        %v621 = vpop.permute.xlu0 %620
        %622 = vrot.lane.b32.xlu0 %v578, 105
        %v623 = vpop.permute.xlu0 %622
        %624 = vrot.lane.b32.xlu0 %v580, 105
        %v625 = vpop.permute.xlu0 %624
        %626 = vrot.lane.b32.xlu0 %v584, 105
        %v627 = vpop.permute.xlu0 %626
        %628 = vrot.lane.b32.xlu0 %v586, 105
        %v629 = vpop.permute.xlu0 %628
        %630 = vrot.lane.b32.xlu0 %v590, 105
        %v631 = vpop.permute.xlu0 %630
        %632 = vrot.lane.b32.xlu0 %v592, 105
        %v633 = vpop.permute.xlu0 %632
        %634 = vrot.lane.b32.xlu0 %v596, 105
        %v635 = vpop.permute.xlu0 %634
        %636 = vrot.lane.b32.xlu0 %v555, 105
        %v637 = vpop.permute.xlu0 %636
        %638 = vrot.lane.b32.xlu0 %v560, 105
        %v639 = vpop.permute.xlu0 %638
        %640 = vrot.lane.b32.xlu0 %v601, 105
        %v641 = vpop.permute.xlu0 %640
        %642 = vrot.lane.b32.xlu0 %v600, 105
        %v643 = vpop.permute.xlu0 %642
        %v644 = vsel %vm496, %v603, %v605
        %v645 = vsel %vm496, %v607, %v609
        %v646 = vsel %vm496, %v613, %v615
        %v647 = vsel %vm496, %v617, %v619
        %v648 = vsel %vm496, %v621, %v623
        %v649 = vsel %vm496, %v625, %v627
        %v650 = vsel %vm496, %v629, %v631
        %v651 = vsel %vm496, %v633, %v635
        %v652 = vsel %vm496, %v637, %v639
        %v653 = vsel %vm496, %v641, %v643
        %666 = vset.pattern.permute.xlu0 0
        %667 = vperm.xlu0 %666, %v416
        %v668 = vpop.permute.xlu0 %667
        %671 = vset.pattern.permute.xlu0 0
        %672 = vperm.xlu0 %671, %v417
        %v673 = vpop.permute.xlu0 %672
        %v679 = vunpack.c.l.b16 %v412
        %v680 = vunpack.c.h.b16 %v412
        %v681 = vunpack.c.l.b16 %v413
        %v682 = vunpack.c.h.b16 %v413
        %v683 = vunpack.c.l.b16 %v414
        %v684 = vunpack.c.h.b16 %v414
        %v685 = vunpack.c.l.b16 %v415
        %v686 = vunpack.c.h.b16 %v415
        %v687 = vpack.c.b16 %v683, %v679
        %v688 = vpack.c.b16 %v684, %v680
        %v689 = vpack.c.b16 %v685, %v681
        %v690 = vpack.c.b16 %v686, %v682
        %vm694 = vcmask 392192
        %v696 = vsel %vm694, %v690, 0
        %698 = vmatpush.bf16.msra.mxu0 %v497
        %699 = vmatpush.bf16.msra.mxu0 %v490
        %700 = vmatpush.bf16.msra.mxu0 %v483
        %701 = vmatpush.bf16.msra.mxu0 %v476
        %702 = vmatpush.bf16.msra.mxu0 %v469
        %703 = vmatpush.bf16.msra.mxu0 %v462
        %704 = vmatpush.bf16.msra.mxu0 %v455
        %705 = vmatpush.bf16.msra.mxu0 %v445
        %706 = vmatmul.bf16.gmra.mxu0 %v687
        %v707 = vpop.f32.mrf.mxu0
        %v708 = vadd.f32 %v668, %v707
        %v709 = vpop.f32.mrf.mxu0
        %v710 = vadd.f32 %v673, %v709
        %711 = vdwg.mxu0
        %712 = vmatpush.bf16.msra.mxu0 %v549
        %713 = vmatpush.bf16.msra.mxu0 %v543
        %714 = vmatpush.bf16.msra.mxu0 %v537
        %715 = vmatpush.bf16.msra.mxu0 %v531
        %716 = vmatpush.bf16.msra.mxu0 %v525
        %717 = vmatpush.bf16.msra.mxu0 %v519
        %718 = vmatpush.bf16.msra.mxu0 %v510
        %719 = vmatpush.bf16.msra.mxu0 %v504
        %720 = vmatmul.bf16.gmra.mxu0 %v688
        %v721 = vpop.f32.mrf.mxu0
        %v722 = vadd.f32 %v708, %v721
        %v723 = vpop.f32.mrf.mxu0
        %v724 = vadd.f32 %v710, %v723
        %725 = vdwg.mxu0
        %726 = vmatpush.bf16.msra.mxu0 %v650
        %727 = vmatpush.bf16.msra.mxu0 %v649
        %728 = vmatpush.bf16.msra.mxu0 %v648
        %729 = vmatpush.bf16.msra.mxu0 %v647
        %730 = vmatpush.bf16.msra.mxu0 %v646
        %731 = vmatpush.bf16.msra.mxu0 %v611
        %732 = vmatpush.bf16.msra.mxu0 %v645
        %733 = vmatpush.bf16.msra.mxu0 %v644
        %734 = vmatmul.bf16.gmra.mxu0 %v689
        %v735 = vpop.f32.mrf.mxu0
        %v736 = vadd.f32 %v722, %v735
        %v737 = vpop.f32.mrf.mxu0
        %v738 = vadd.f32 %v724, %v737
        %739 = vdwg.mxu0
        %740 = vmatpush.bf16.msra.mxu0 0
        %741 = vmatpush.bf16.msra.mxu0 0
        %742 = vmatpush.bf16.msra.mxu0 0
        %743 = vmatpush.bf16.msra.mxu0 0
        %744 = vmatpush.bf16.msra.mxu0 0
        %745 = vmatpush.bf16.msra.mxu0 %v653
        %746 = vmatpush.bf16.msra.mxu0 %v652
        %747 = vmatpush.bf16.msra.mxu0 %v651
        %748 = vmatmul.bf16.gmra.mxu0 %v696
        %v749 = vpop.f32.mrf.mxu0
        %v750 = vadd.f32 %v736, %v749
        %v751 = vpop.f32.mrf.mxu0
        %v752 = vadd.f32 %v738, %v751
        %753 = vdwg.mxu0
        %v754 = vmax.f32 %v750, 0.0
        %v755 = vmax.f32 %v752, 0.0
        %v757 = vperm.slane %v411, 0
        %v759 = vmul.f32 %v754, %v757
        %v760 = vmul.f32 %v755, %v757
        %v761 = vpack.c.bf16 %v759, %v759
        %v762 = vpack.c.bf16 %v760, %v760
        %765 = vrot.lane.b32.xlu0 %v761, 12
        %v766 = vpop.permute.xlu0 %765
        %767 = vrot.lane.b32.xlu0 %v762, 12
        %v768 = vpop.permute.xlu0 %767
        %v769 = vrot.slane %v766, 4
        %v770 = vrot.slane %v768, 4
        %v771 = vsel %vm577, %v769, %v766
        %v772 = vsel %vm577, %v770, %v768
        %s775 = smul.addr %s430, 4
        %s776 = scalar_lea.vmem [#allocation2], %s775
        %vm777 = vcmask 1043552
        %vm778 = vcmask 97284
        %vm779 = vmor %vm778, %vm777
        %780 = vst.msk [vmem:[%s776] sm:$0xff] %vm779, %v771
        %781 = vst.msk [vmem:[%s776 + $0x8] sm:$0xff] %vm779, %v772
      $region61: #{d_res_3d_cnn_forward.3} parent=55 // loop_footer
        %s423 = sadd.s32 1, %s419
      $region62: #{d_res_3d_cnn_forward.3} parent=55 // loop_footer_branch
        %418 = sbr.rel target = $region58
      $region63: #{d_res_3d_cnn_forward.3} parent=55 // loop_exit
        _
      %v782 = vld [vmem:[%s3] sm:$0xff]
      %v783 = vld [vmem:[%s3 + $0x8] sm:$0xff]
      %v784 = vld [vmem:[%s3 + $0x10] sm:$0xff]
      %v785 = vld [vmem:[%s3 + $0x18] sm:$0xff]
      %v786 = vld [vmem:[%s4] sm:$0xff]
      %v787 = vld [vmem:[%s4 + $0x8] sm:$0xff]
      loop: start=0, step=1, limit=16
      $region64: #{d_res_3d_cnn_forward.3} parent=55 // loop_pre_header
        _
      $region65: #{d_res_3d_cnn_forward.3} parent=55 // loop_header
        %s789 = sphi 0, %s793
        %p790 = scmp.ge.s32.totalorder %s789, 16
      $region66: #{d_res_3d_cnn_forward.3} parent=55 // loop_header_branch
        %792 = sbr.rel (%p790) target = $region70
      $region67: #{d_res_3d_cnn_forward.3} parent=55 // loop_body
        %s794 = smul.u32 %s789, 4
        %s795 = smul.addr %s794, 4
        %s796 = scalar_lea.vmem [#allocation2], %s795
        %v797 = vld [vmem:[%s796] sm:$0xff]
        %v798 = vld [vmem:[%s796 + $0x8] sm:$0xff]
        %s799 = sadd.s32 %s789, 1
        %s800 = smul.u32 %s799, 4
        %s801 = smul.addr %s800, 4
        %s802 = scalar_lea.vmem [#allocation2], %s801
        %v803 = vld [vmem:[%s802] sm:$0xff]
        %v804 = vld [vmem:[%s802 + $0x8] sm:$0xff]
        %s805 = sadd.s32 %s789, 2
        %s806 = smul.u32 %s805, 4
        %s807 = smul.addr %s806, 4
        %s808 = scalar_lea.vmem [#allocation2], %s807
        %v809 = vld [vmem:[%s808] sm:$0xff]
        %v810 = vld [vmem:[%s808 + $0x8] sm:$0xff]
        %v813 = vunpack.c.l.b16 %v797
        %v814 = vunpack.c.l.b16 %v798
        %v815 = vpack.c.b16 %v814, %v813
        %v817 = vunpack.c.h.b16 %v797
        %v818 = vunpack.c.h.b16 %v798
        %v819 = vpack.c.b16 %v818, %v817
        %820 = vrot.lane.b32.xlu0 %v815, 127
        %v821 = vpop.permute.xlu0 %820
        %822 = vrot.lane.b32.xlu0 %v819, 127
        %v823 = vpop.permute.xlu0 %822
        %vm824 = vcmask 1039360
        %v825 = vsel %vm824, %v821, %v823
        %827 = vrot.lane.b32.xlu0 %v815, 126
        %v828 = vpop.permute.xlu0 %827
        %829 = vrot.lane.b32.xlu0 %v819, 126
        %v830 = vpop.permute.xlu0 %829
        %vm831 = vcmask 1031168
        %v832 = vsel %vm831, %v828, %v830
        %834 = vrot.lane.b32.xlu0 %v815, 117
        %v835 = vpop.permute.xlu0 %834
        %836 = vrot.lane.b32.xlu0 %v819, 117
        %v837 = vpop.permute.xlu0 %836
        %vm838 = vcmask 957440
        %v839 = vsel %vm838, %v835, %v837
        %841 = vrot.lane.b32.xlu0 %v815, 116
        %v842 = vpop.permute.xlu0 %841
        %843 = vrot.lane.b32.xlu0 %v819, 116
        %v844 = vpop.permute.xlu0 %843
        %vm845 = vcmask 949248
        %v846 = vsel %vm845, %v842, %v844
        %848 = vrot.lane.b32.xlu0 %v815, 115
        %v849 = vpop.permute.xlu0 %848
        %850 = vrot.lane.b32.xlu0 %v819, 115
        %v851 = vpop.permute.xlu0 %850
        %vm852 = vcmask 941056
        %v853 = vsel %vm852, %v849, %v851
        %855 = vrot.lane.b32.xlu0 %v815, 106
        %v856 = vpop.permute.xlu0 %855
        %857 = vrot.lane.b32.xlu0 %v819, 106
        %v858 = vpop.permute.xlu0 %857
        %vm859 = vcmask 867328
        %v860 = vsel %vm859, %v856, %v858
        %862 = vrot.lane.b32.xlu0 %v815, 105
        %v863 = vpop.permute.xlu0 %862
        %864 = vrot.lane.b32.xlu0 %v819, 105
        %v865 = vpop.permute.xlu0 %864
        %vm866 = vcmask 859136
        %v867 = vsel %vm866, %v863, %v865
        %869 = vrot.lane.b32.xlu0 %v815, 104
        %v870 = vpop.permute.xlu0 %869
        %871 = vrot.lane.b32.xlu0 %v819, 104
        %v872 = vpop.permute.xlu0 %871
        %vm873 = vcmask 850944
        %v874 = vsel %vm873, %v870, %v872
        %v878 = vunpack.c.l.b16 %v803
        %v879 = vunpack.c.l.b16 %v804
        %v880 = vpack.c.b16 %v879, %v878
        %v882 = vunpack.c.h.b16 %v803
        %v883 = vunpack.c.h.b16 %v804
        %v884 = vpack.c.b16 %v883, %v882
        %885 = vrot.lane.b32.xlu0 %v880, 127
        %v886 = vpop.permute.xlu0 %885
        %887 = vrot.lane.b32.xlu0 %v884, 127
        %v888 = vpop.permute.xlu0 %887
        %v889 = vsel %vm824, %v886, %v888
        %891 = vrot.lane.b32.xlu0 %v880, 126
        %v892 = vpop.permute.xlu0 %891
        %893 = vrot.lane.b32.xlu0 %v884, 126
        %v894 = vpop.permute.xlu0 %893
        %v895 = vsel %vm831, %v892, %v894
        %897 = vrot.lane.b32.xlu0 %v880, 117
        %v898 = vpop.permute.xlu0 %897
        %899 = vrot.lane.b32.xlu0 %v884, 117
        %v900 = vpop.permute.xlu0 %899
        %v901 = vsel %vm838, %v898, %v900
        %903 = vrot.lane.b32.xlu0 %v880, 116
        %v904 = vpop.permute.xlu0 %903
        %905 = vrot.lane.b32.xlu0 %v884, 116
        %v906 = vpop.permute.xlu0 %905
        %v907 = vsel %vm845, %v904, %v906
        %909 = vrot.lane.b32.xlu0 %v880, 115
        %v910 = vpop.permute.xlu0 %909
        %911 = vrot.lane.b32.xlu0 %v884, 115
        %v912 = vpop.permute.xlu0 %911
        %v913 = vsel %vm852, %v910, %v912
        %915 = vrot.lane.b32.xlu0 %v880, 106
        %v916 = vpop.permute.xlu0 %915
        %917 = vrot.lane.b32.xlu0 %v884, 106
        %v918 = vpop.permute.xlu0 %917
        %v919 = vsel %vm859, %v916, %v918
        %v923 = vunpack.c.l.b16 %v809
        %v924 = vunpack.c.l.b16 %v810
        %v925 = vpack.c.b16 %v924, %v923
        %926 = vrot.lane.b32.xlu0 %v925, 23
        %v927 = vpop.permute.xlu0 %926
        %v928 = vunpack.c.h.b16 %v809
        %v929 = vunpack.c.h.b16 %v810
        %v930 = vpack.c.b16 %v929, %v928
        %931 = vrot.lane.b32.xlu0 %v925, 22
        %v932 = vpop.permute.xlu0 %931
        %933 = vrot.lane.b32.xlu0 %v930, 22
        %v934 = vpop.permute.xlu0 %933
        %vm935 = vcmask 179200
        %v936 = vsel %vm935, %v932, %v934
        %937 = vrot.lane.b32.xlu0 %v925, 21
        %v938 = vpop.permute.xlu0 %937
        %939 = vrot.lane.b32.xlu0 %v930, 21
        %v940 = vpop.permute.xlu0 %939
        %vm941 = vcmask 171008
        %v942 = vsel %vm941, %v938, %v940
        %943 = vrot.lane.b32.xlu0 %v925, 12
        %v944 = vpop.permute.xlu0 %943
        %945 = vrot.lane.b32.xlu0 %v930, 12
        %v946 = vpop.permute.xlu0 %945
        %vm947 = vcmask 97280
        %v948 = vsel %vm947, %v944, %v946
        %949 = vrot.lane.b32.xlu0 %v925, 11
        %v950 = vpop.permute.xlu0 %949
        %951 = vrot.lane.b32.xlu0 %v930, 11
        %v952 = vpop.permute.xlu0 %951
        %vm953 = vcmask 89088
        %v954 = vsel %vm953, %v950, %v952
        %955 = vrot.lane.b32.xlu0 %v925, 10
        %v956 = vpop.permute.xlu0 %955
        %957 = vrot.lane.b32.xlu0 %v930, 10
        %v958 = vpop.permute.xlu0 %957
        %vm959 = vcmask 80896
        %v960 = vsel %vm959, %v956, %v958
        %961 = vrot.lane.b32.xlu0 %v925, 1
        %v962 = vpop.permute.xlu0 %961
        %963 = vrot.lane.b32.xlu0 %v930, 1
        %v964 = vpop.permute.xlu0 %963
        %vm965 = vcmask 7168
        %v966 = vsel %vm965, %v962, %v964
        %967 = vrot.lane.b32.xlu0 %v925, 127
        %v968 = vpop.permute.xlu0 %967
        %969 = vrot.lane.b32.xlu0 %v930, 127
        %v970 = vpop.permute.xlu0 %969
        %v971 = vsel %vm824, %v968, %v970
        %972 = vrot.lane.b32.xlu0 %v880, 105
        %v973 = vpop.permute.xlu0 %972
        %974 = vrot.lane.b32.xlu0 %v884, 105
        %v975 = vpop.permute.xlu0 %974
        %976 = vrot.lane.b32.xlu0 %v889, 105
        %v977 = vpop.permute.xlu0 %976
        %978 = vrot.lane.b32.xlu0 %v888, 105
        %v979 = vpop.permute.xlu0 %978
        %980 = vrot.lane.b32.xlu0 %v927, 105
        %v981 = vpop.permute.xlu0 %980
        %982 = vrot.lane.b32.xlu0 %v932, 105
        %v983 = vpop.permute.xlu0 %982
        %984 = vrot.lane.b32.xlu0 %v936, 105
        %v985 = vpop.permute.xlu0 %984
        %986 = vrot.lane.b32.xlu0 %v938, 105
        %v987 = vpop.permute.xlu0 %986
        %988 = vrot.lane.b32.xlu0 %v942, 105
        %v989 = vpop.permute.xlu0 %988
        %990 = vrot.lane.b32.xlu0 %v944, 105
        %v991 = vpop.permute.xlu0 %990
        %992 = vrot.lane.b32.xlu0 %v948, 105
        %v993 = vpop.permute.xlu0 %992
        %994 = vrot.lane.b32.xlu0 %v950, 105
        %v995 = vpop.permute.xlu0 %994
        %996 = vrot.lane.b32.xlu0 %v954, 105
        %v997 = vpop.permute.xlu0 %996
        %998 = vrot.lane.b32.xlu0 %v956, 105
        %v999 = vpop.permute.xlu0 %998
        %1000 = vrot.lane.b32.xlu0 %v960, 105
        %v1001 = vpop.permute.xlu0 %1000
        %1002 = vrot.lane.b32.xlu0 %v962, 105
        %v1003 = vpop.permute.xlu0 %1002
        %1004 = vrot.lane.b32.xlu0 %v966, 105
        %v1005 = vpop.permute.xlu0 %1004
        %1006 = vrot.lane.b32.xlu0 %v925, 105
        %v1007 = vpop.permute.xlu0 %1006
        %1008 = vrot.lane.b32.xlu0 %v930, 105
        %v1009 = vpop.permute.xlu0 %1008
        %1010 = vrot.lane.b32.xlu0 %v971, 105
        %v1011 = vpop.permute.xlu0 %1010
        %1012 = vrot.lane.b32.xlu0 %v970, 105
        %v1013 = vpop.permute.xlu0 %1012
        %v1014 = vsel %vm866, %v973, %v975
        %v1015 = vsel %vm866, %v977, %v979
        %v1016 = vsel %vm866, %v983, %v985
        %v1017 = vsel %vm866, %v987, %v989
        %v1018 = vsel %vm866, %v991, %v993
        %v1019 = vsel %vm866, %v995, %v997
        %v1020 = vsel %vm866, %v999, %v1001
        %v1021 = vsel %vm866, %v1003, %v1005
        %v1022 = vsel %vm866, %v1007, %v1009
        %v1023 = vsel %vm866, %v1011, %v1013
        %1036 = vset.pattern.permute.xlu0 0
        %1037 = vperm.xlu0 %1036, %v786
        %v1038 = vpop.permute.xlu0 %1037
        %1041 = vset.pattern.permute.xlu0 0
        %1042 = vperm.xlu0 %1041, %v787
        %v1043 = vpop.permute.xlu0 %1042
        %v1049 = vunpack.c.l.b16 %v782
        %v1050 = vunpack.c.h.b16 %v782
        %v1051 = vunpack.c.l.b16 %v783
        %v1052 = vunpack.c.h.b16 %v783
        %v1053 = vunpack.c.l.b16 %v784
        %v1054 = vunpack.c.h.b16 %v784
        %v1055 = vunpack.c.l.b16 %v785
        %v1056 = vunpack.c.h.b16 %v785
        %v1057 = vpack.c.b16 %v1053, %v1049
        %v1058 = vpack.c.b16 %v1054, %v1050
        %v1059 = vpack.c.b16 %v1055, %v1051
        %v1060 = vpack.c.b16 %v1056, %v1052
        %vm1064 = vcmask 392192
        %v1066 = vsel %vm1064, %v1060, 0
        %1068 = vmatpush.bf16.msra.mxu0 %v867
        %1069 = vmatpush.bf16.msra.mxu0 %v860
        %1070 = vmatpush.bf16.msra.mxu0 %v853
        %1071 = vmatpush.bf16.msra.mxu0 %v846
        %1072 = vmatpush.bf16.msra.mxu0 %v839
        %1073 = vmatpush.bf16.msra.mxu0 %v832
        %1074 = vmatpush.bf16.msra.mxu0 %v825
        %1075 = vmatpush.bf16.msra.mxu0 %v815
        %1076 = vmatmul.bf16.gmra.mxu0 %v1057
        %v1077 = vpop.f32.mrf.mxu0
        %v1078 = vadd.f32 %v1038, %v1077
        %v1079 = vpop.f32.mrf.mxu0
        %v1080 = vadd.f32 %v1043, %v1079
        %1081 = vdwg.mxu0
        %1082 = vmatpush.bf16.msra.mxu0 %v919
        %1083 = vmatpush.bf16.msra.mxu0 %v913
        %1084 = vmatpush.bf16.msra.mxu0 %v907
        %1085 = vmatpush.bf16.msra.mxu0 %v901
        %1086 = vmatpush.bf16.msra.mxu0 %v895
        %1087 = vmatpush.bf16.msra.mxu0 %v889
        %1088 = vmatpush.bf16.msra.mxu0 %v880
        %1089 = vmatpush.bf16.msra.mxu0 %v874
        %1090 = vmatmul.bf16.gmra.mxu0 %v1058
        %v1091 = vpop.f32.mrf.mxu0
        %v1092 = vadd.f32 %v1078, %v1091
        %v1093 = vpop.f32.mrf.mxu0
        %v1094 = vadd.f32 %v1080, %v1093
        %1095 = vdwg.mxu0
        %1096 = vmatpush.bf16.msra.mxu0 %v1020
        %1097 = vmatpush.bf16.msra.mxu0 %v1019
        %1098 = vmatpush.bf16.msra.mxu0 %v1018
        %1099 = vmatpush.bf16.msra.mxu0 %v1017
        %1100 = vmatpush.bf16.msra.mxu0 %v1016
        %1101 = vmatpush.bf16.msra.mxu0 %v981
        %1102 = vmatpush.bf16.msra.mxu0 %v1015
        %1103 = vmatpush.bf16.msra.mxu0 %v1014
        %1104 = vmatmul.bf16.gmra.mxu0 %v1059
        %v1105 = vpop.f32.mrf.mxu0
        %v1106 = vadd.f32 %v1092, %v1105
        %v1107 = vpop.f32.mrf.mxu0
        %v1108 = vadd.f32 %v1094, %v1107
        %1109 = vdwg.mxu0
        %1110 = vmatpush.bf16.msra.mxu0 0
        %1111 = vmatpush.bf16.msra.mxu0 0
        %1112 = vmatpush.bf16.msra.mxu0 0
        %1113 = vmatpush.bf16.msra.mxu0 0
        %1114 = vmatpush.bf16.msra.mxu0 0
        %1115 = vmatpush.bf16.msra.mxu0 %v1023
        %1116 = vmatpush.bf16.msra.mxu0 %v1022
        %1117 = vmatpush.bf16.msra.mxu0 %v1021
        %1118 = vmatmul.bf16.gmra.mxu0 %v1066
        %v1119 = vpop.f32.mrf.mxu0
        %v1120 = vadd.f32 %v1106, %v1119
        %v1121 = vpop.f32.mrf.mxu0
        %v1122 = vadd.f32 %v1108, %v1121
        %1123 = vdwg.mxu0
        %v1124 = vmax.f32 %v1120, 0.0
        %v1125 = vmax.f32 %v1122, 0.0
        %v1127 = vperm.slane %v411, 0
        %v1129 = vmul.f32 %v1124, %v1127
        %v1130 = vmul.f32 %v1125, %v1127
        %v1131 = vpack.c.bf16 %v1129, %v1129
        %v1132 = vpack.c.bf16 %v1130, %v1130
        %1135 = vrot.lane.b32.xlu0 %v1131, 12
        %v1136 = vpop.permute.xlu0 %1135
        %1137 = vrot.lane.b32.xlu0 %v1132, 12
        %v1138 = vpop.permute.xlu0 %1137
        %v1139 = vrot.slane %v1136, 4
        %v1140 = vrot.slane %v1138, 4
        %v1141 = vsel %vm947, %v1139, %v1136
        %v1142 = vsel %vm947, %v1140, %v1138
        %s1145 = smul.addr %s800, 4
        %s1146 = scalar_lea.vmem [#allocation3], %s1145
        %vm1147 = vcmask 1043552
        %vm1148 = vcmask 97284
        %vm1149 = vmor %vm1148, %vm1147
        %1150 = vst.msk [vmem:[%s1146] sm:$0xff] %vm1149, %v1141
        %1151 = vst.msk [vmem:[%s1146 + $0x8] sm:$0xff] %vm1149, %v1142
      $region68: #{d_res_3d_cnn_forward.3} parent=55 // loop_footer
        %s793 = sadd.s32 1, %s789
      $region69: #{d_res_3d_cnn_forward.3} parent=55 // loop_footer_branch
        %788 = sbr.rel target = $region65
      $region70: #{d_res_3d_cnn_forward.3} parent=55 // loop_exit
        _
      %v1152 = vld [vmem:[%s5] sm:$0xff]
      %v1153 = vld [vmem:[%s5 + $0x8] sm:$0xff]
      %v1154 = vld [vmem:[%s5 + $0x10] sm:$0xff]
      %v1155 = vld [vmem:[%s5 + $0x18] sm:$0xff]
      %v1156 = vld [vmem:[%s6] sm:$0xff]
      %v1157 = vld [vmem:[%s6 + $0x8] sm:$0xff]
      %v1158 = vld [vmem:[#allocation3] sm:$0xff]
      %v1159 = vld [vmem:[#allocation3 + $0x8] sm:$0xff]
      %s1160 = scalar_lea.vmem [#allocation3], 16
      %v1161 = vld [vmem:[%s1160] sm:$0xff]
      %v1162 = vld [vmem:[%s1160 + $0x8] sm:$0xff]
      %s1163 = scalar_lea.vmem [#allocation3], 32
      %v1164 = vld [vmem:[%s1163] sm:$0xff]
      %v1165 = vld [vmem:[%s1163 + $0x8] sm:$0xff]
      %v1168 = vunpack.c.l.b16 %v1158
      %v1169 = vunpack.c.l.b16 %v1159
      %v1170 = vpack.c.b16 %v1169, %v1168
      %v1172 = vunpack.c.h.b16 %v1158
      %v1173 = vunpack.c.h.b16 %v1159
      %v1174 = vpack.c.b16 %v1173, %v1172
      %1175 = vrot.lane.b32.xlu0 %v1170, 127
      %v1176 = vpop.permute.xlu0 %1175
      %1177 = vrot.lane.b32.xlu0 %v1174, 127
      %v1178 = vpop.permute.xlu0 %1177
      %vm1179 = vcmask 1039360
      %v1180 = vsel %vm1179, %v1176, %v1178
      %1182 = vrot.lane.b32.xlu0 %v1170, 126
      %v1183 = vpop.permute.xlu0 %1182
      %1184 = vrot.lane.b32.xlu0 %v1174, 126
      %v1185 = vpop.permute.xlu0 %1184
      %vm1186 = vcmask 1031168
      %v1187 = vsel %vm1186, %v1183, %v1185
      %1189 = vrot.lane.b32.xlu0 %v1170, 117
      %v1190 = vpop.permute.xlu0 %1189
      %1191 = vrot.lane.b32.xlu0 %v1174, 117
      %v1192 = vpop.permute.xlu0 %1191
      %vm1193 = vcmask 957440
      %v1194 = vsel %vm1193, %v1190, %v1192
      %1196 = vrot.lane.b32.xlu0 %v1170, 116
      %v1197 = vpop.permute.xlu0 %1196
      %1198 = vrot.lane.b32.xlu0 %v1174, 116
      %v1199 = vpop.permute.xlu0 %1198
      %vm1200 = vcmask 949248
      %v1201 = vsel %vm1200, %v1197, %v1199
      %1203 = vrot.lane.b32.xlu0 %v1170, 115
      %v1204 = vpop.permute.xlu0 %1203
      %1205 = vrot.lane.b32.xlu0 %v1174, 115
      %v1206 = vpop.permute.xlu0 %1205
      %vm1207 = vcmask 941056
      %v1208 = vsel %vm1207, %v1204, %v1206
      %1210 = vrot.lane.b32.xlu0 %v1170, 106
      %v1211 = vpop.permute.xlu0 %1210
      %1212 = vrot.lane.b32.xlu0 %v1174, 106
      %v1213 = vpop.permute.xlu0 %1212
      %vm1214 = vcmask 867328
      %v1215 = vsel %vm1214, %v1211, %v1213
      %1217 = vrot.lane.b32.xlu0 %v1170, 105
      %v1218 = vpop.permute.xlu0 %1217
      %1219 = vrot.lane.b32.xlu0 %v1174, 105
      %v1220 = vpop.permute.xlu0 %1219
      %vm1221 = vcmask 859136
      %v1222 = vsel %vm1221, %v1218, %v1220
      %1224 = vrot.lane.b32.xlu0 %v1170, 104
      %v1225 = vpop.permute.xlu0 %1224
      %1226 = vrot.lane.b32.xlu0 %v1174, 104
      %v1227 = vpop.permute.xlu0 %1226
      %vm1228 = vcmask 850944
      %v1229 = vsel %vm1228, %v1225, %v1227
      %v1233 = vunpack.c.l.b16 %v1161
      %v1234 = vunpack.c.l.b16 %v1162
      %v1235 = vpack.c.b16 %v1234, %v1233
      %v1237 = vunpack.c.h.b16 %v1161
      %v1238 = vunpack.c.h.b16 %v1162
      %v1239 = vpack.c.b16 %v1238, %v1237
      %1240 = vrot.lane.b32.xlu0 %v1235, 127
      %v1241 = vpop.permute.xlu0 %1240
      %1242 = vrot.lane.b32.xlu0 %v1239, 127
      %v1243 = vpop.permute.xlu0 %1242
      %v1244 = vsel %vm1179, %v1241, %v1243
      %1246 = vrot.lane.b32.xlu0 %v1235, 126
      %v1247 = vpop.permute.xlu0 %1246
      %1248 = vrot.lane.b32.xlu0 %v1239, 126
      %v1249 = vpop.permute.xlu0 %1248
      %v1250 = vsel %vm1186, %v1247, %v1249
      %1252 = vrot.lane.b32.xlu0 %v1235, 117
      %v1253 = vpop.permute.xlu0 %1252
      %1254 = vrot.lane.b32.xlu0 %v1239, 117
      %v1255 = vpop.permute.xlu0 %1254
      %v1256 = vsel %vm1193, %v1253, %v1255
      %1258 = vrot.lane.b32.xlu0 %v1235, 116
      %v1259 = vpop.permute.xlu0 %1258
      %1260 = vrot.lane.b32.xlu0 %v1239, 116
      %v1261 = vpop.permute.xlu0 %1260
      %v1262 = vsel %vm1200, %v1259, %v1261
      %1264 = vrot.lane.b32.xlu0 %v1235, 115
      %v1265 = vpop.permute.xlu0 %1264
      %1266 = vrot.lane.b32.xlu0 %v1239, 115
      %v1267 = vpop.permute.xlu0 %1266
      %v1268 = vsel %vm1207, %v1265, %v1267
      %1270 = vrot.lane.b32.xlu0 %v1235, 106
      %v1271 = vpop.permute.xlu0 %1270
      %1272 = vrot.lane.b32.xlu0 %v1239, 106
      %v1273 = vpop.permute.xlu0 %1272
      %v1274 = vsel %vm1214, %v1271, %v1273
      %v1278 = vunpack.c.l.b16 %v1164
      %v1279 = vunpack.c.l.b16 %v1165
      %v1280 = vpack.c.b16 %v1279, %v1278
      %1281 = vrot.lane.b32.xlu0 %v1280, 23
      %v1282 = vpop.permute.xlu0 %1281
      %v1283 = vunpack.c.h.b16 %v1164
      %v1284 = vunpack.c.h.b16 %v1165
      %v1285 = vpack.c.b16 %v1284, %v1283
      %1286 = vrot.lane.b32.xlu0 %v1280, 22
      %v1287 = vpop.permute.xlu0 %1286
      %1288 = vrot.lane.b32.xlu0 %v1285, 22
      %v1289 = vpop.permute.xlu0 %1288
      %vm1290 = vcmask 179200
      %v1291 = vsel %vm1290, %v1287, %v1289
      %1292 = vrot.lane.b32.xlu0 %v1280, 21
      %v1293 = vpop.permute.xlu0 %1292
      %1294 = vrot.lane.b32.xlu0 %v1285, 21
      %v1295 = vpop.permute.xlu0 %1294
      %vm1296 = vcmask 171008
      %v1297 = vsel %vm1296, %v1293, %v1295
      %1298 = vrot.lane.b32.xlu0 %v1280, 12
      %v1299 = vpop.permute.xlu0 %1298
      %1300 = vrot.lane.b32.xlu0 %v1285, 12
      %v1301 = vpop.permute.xlu0 %1300
      %vm1302 = vcmask 97280
      %v1303 = vsel %vm1302, %v1299, %v1301
      %1304 = vrot.lane.b32.xlu0 %v1280, 11
      %v1305 = vpop.permute.xlu0 %1304
      %1306 = vrot.lane.b32.xlu0 %v1285, 11
      %v1307 = vpop.permute.xlu0 %1306
      %vm1308 = vcmask 89088
      %v1309 = vsel %vm1308, %v1305, %v1307
      %1310 = vrot.lane.b32.xlu0 %v1280, 10
      %v1311 = vpop.permute.xlu0 %1310
      %1312 = vrot.lane.b32.xlu0 %v1285, 10
      %v1313 = vpop.permute.xlu0 %1312
      %vm1314 = vcmask 80896
      %v1315 = vsel %vm1314, %v1311, %v1313
      %1316 = vrot.lane.b32.xlu0 %v1280, 1
      %v1317 = vpop.permute.xlu0 %1316
      %1318 = vrot.lane.b32.xlu0 %v1285, 1
      %v1319 = vpop.permute.xlu0 %1318
      %vm1320 = vcmask 7168
      %v1321 = vsel %vm1320, %v1317, %v1319
      %1322 = vrot.lane.b32.xlu0 %v1280, 127
      %v1323 = vpop.permute.xlu0 %1322
      %1324 = vrot.lane.b32.xlu0 %v1285, 127
      %v1325 = vpop.permute.xlu0 %1324
      %v1326 = vsel %vm1179, %v1323, %v1325
      %1327 = vrot.lane.b32.xlu0 %v1235, 105
      %v1328 = vpop.permute.xlu0 %1327
      %1329 = vrot.lane.b32.xlu0 %v1239, 105
      %v1330 = vpop.permute.xlu0 %1329
      %1331 = vrot.lane.b32.xlu0 %v1244, 105
      %v1332 = vpop.permute.xlu0 %1331
      %1333 = vrot.lane.b32.xlu0 %v1243, 105
      %v1334 = vpop.permute.xlu0 %1333
      %1335 = vrot.lane.b32.xlu0 %v1282, 105
      %v1336 = vpop.permute.xlu0 %1335
      %1337 = vrot.lane.b32.xlu0 %v1287, 105
      %v1338 = vpop.permute.xlu0 %1337
      %1339 = vrot.lane.b32.xlu0 %v1291, 105
      %v1340 = vpop.permute.xlu0 %1339
      %1341 = vrot.lane.b32.xlu0 %v1293, 105
      %v1342 = vpop.permute.xlu0 %1341
      %1343 = vrot.lane.b32.xlu0 %v1297, 105
      %v1344 = vpop.permute.xlu0 %1343
      %1345 = vrot.lane.b32.xlu0 %v1299, 105
      %v1346 = vpop.permute.xlu0 %1345
      %1347 = vrot.lane.b32.xlu0 %v1303, 105
      %v1348 = vpop.permute.xlu0 %1347
      %1349 = vrot.lane.b32.xlu0 %v1305, 105
      %v1350 = vpop.permute.xlu0 %1349
      %1351 = vrot.lane.b32.xlu0 %v1309, 105
      %v1352 = vpop.permute.xlu0 %1351
      %1353 = vrot.lane.b32.xlu0 %v1311, 105
      %v1354 = vpop.permute.xlu0 %1353
      %1355 = vrot.lane.b32.xlu0 %v1315, 105
      %v1356 = vpop.permute.xlu0 %1355
      %1357 = vrot.lane.b32.xlu0 %v1317, 105
      %v1358 = vpop.permute.xlu0 %1357
      %1359 = vrot.lane.b32.xlu0 %v1321, 105
      %v1360 = vpop.permute.xlu0 %1359
      %1361 = vrot.lane.b32.xlu0 %v1280, 105
      %v1362 = vpop.permute.xlu0 %1361
      %1363 = vrot.lane.b32.xlu0 %v1285, 105
      %v1364 = vpop.permute.xlu0 %1363
      %1365 = vrot.lane.b32.xlu0 %v1326, 105
      %v1366 = vpop.permute.xlu0 %1365
      %1367 = vrot.lane.b32.xlu0 %v1325, 105
      %v1368 = vpop.permute.xlu0 %1367
      %v1369 = vsel %vm1221, %v1328, %v1330
      %v1370 = vsel %vm1221, %v1332, %v1334
      %v1371 = vsel %vm1221, %v1338, %v1340
      %v1372 = vsel %vm1221, %v1342, %v1344
      %v1373 = vsel %vm1221, %v1346, %v1348
      %v1374 = vsel %vm1221, %v1350, %v1352
      %v1375 = vsel %vm1221, %v1354, %v1356
      %v1376 = vsel %vm1221, %v1358, %v1360
      %v1377 = vsel %vm1221, %v1362, %v1364
      %v1378 = vsel %vm1221, %v1366, %v1368
      %1391 = vset.pattern.permute.xlu0 0
      %1392 = vperm.xlu0 %1391, %v1156
      %v1393 = vpop.permute.xlu0 %1392
      %1396 = vset.pattern.permute.xlu0 0
      %1397 = vperm.xlu0 %1396, %v1157
      %v1398 = vpop.permute.xlu0 %1397
      %v1404 = vunpack.c.l.b16 %v1152
      %v1405 = vunpack.c.h.b16 %v1152
      %v1406 = vunpack.c.l.b16 %v1153
      %v1407 = vunpack.c.h.b16 %v1153
      %v1408 = vunpack.c.l.b16 %v1154
      %v1409 = vunpack.c.h.b16 %v1154
      %v1410 = vunpack.c.l.b16 %v1155
      %v1411 = vunpack.c.h.b16 %v1155
      %v1412 = vpack.c.b16 %v1408, %v1404
      %v1413 = vpack.c.b16 %v1409, %v1405
      %v1414 = vpack.c.b16 %v1410, %v1406
      %v1415 = vpack.c.b16 %v1411, %v1407
      %vm1419 = vcmask 392192
      %v1421 = vsel %vm1419, %v1415, 0
      %1423 = vmatpush.bf16.msra.mxu0 %v1222
      %1424 = vmatpush.bf16.msra.mxu0 %v1215
      %1425 = vmatpush.bf16.msra.mxu0 %v1208
      %1426 = vmatpush.bf16.msra.mxu0 %v1201
      %1427 = vmatpush.bf16.msra.mxu0 %v1194
      %1428 = vmatpush.bf16.msra.mxu0 %v1187
      %1429 = vmatpush.bf16.msra.mxu0 %v1180
      %1430 = vmatpush.bf16.msra.mxu0 %v1170
      %1431 = vmatmul.bf16.gmra.mxu0 %v1412
      %v1432 = vpop.f32.mrf.mxu0
      %v1433 = vadd.f32 %v1393, %v1432
      %v1434 = vpop.f32.mrf.mxu0
      %v1435 = vadd.f32 %v1398, %v1434
      %1436 = vdwg.mxu0
      %1437 = vmatpush.bf16.msra.mxu0 %v1274
      %1438 = vmatpush.bf16.msra.mxu0 %v1268
      %1439 = vmatpush.bf16.msra.mxu0 %v1262
      %1440 = vmatpush.bf16.msra.mxu0 %v1256
      %1441 = vmatpush.bf16.msra.mxu0 %v1250
      %1442 = vmatpush.bf16.msra.mxu0 %v1244
      %1443 = vmatpush.bf16.msra.mxu0 %v1235
      %1444 = vmatpush.bf16.msra.mxu0 %v1229
      %1445 = vmatmul.bf16.gmra.mxu0 %v1413
      %v1446 = vpop.f32.mrf.mxu0
      %v1447 = vadd.f32 %v1433, %v1446
      %v1448 = vpop.f32.mrf.mxu0
      %v1449 = vadd.f32 %v1435, %v1448
      %1450 = vdwg.mxu0
      %1451 = vmatpush.bf16.msra.mxu0 %v1375
      %1452 = vmatpush.bf16.msra.mxu0 %v1374
      %1453 = vmatpush.bf16.msra.mxu0 %v1373
      %1454 = vmatpush.bf16.msra.mxu0 %v1372
      %1455 = vmatpush.bf16.msra.mxu0 %v1371
      %1456 = vmatpush.bf16.msra.mxu0 %v1336
      %1457 = vmatpush.bf16.msra.mxu0 %v1370
      %1458 = vmatpush.bf16.msra.mxu0 %v1369
      %1459 = vmatmul.bf16.gmra.mxu0 %v1414
      %v1460 = vpop.f32.mrf.mxu0
      %v1461 = vadd.f32 %v1447, %v1460
      %v1462 = vpop.f32.mrf.mxu0
      %v1463 = vadd.f32 %v1449, %v1462
      %1464 = vdwg.mxu0
      %1465 = vmatpush.bf16.msra.mxu0 0
      %1466 = vmatpush.bf16.msra.mxu0 0
      %1467 = vmatpush.bf16.msra.mxu0 0
      %1468 = vmatpush.bf16.msra.mxu0 0
      %1469 = vmatpush.bf16.msra.mxu0 0
      %1470 = vmatpush.bf16.msra.mxu0 %v1378
      %1471 = vmatpush.bf16.msra.mxu0 %v1377
      %1472 = vmatpush.bf16.msra.mxu0 %v1376
      %1473 = vmatmul.bf16.gmra.mxu0 %v1421
      %v1474 = vpop.f32.mrf.mxu0
      %v1475 = vadd.f32 %v1461, %v1474
      %v1476 = vpop.f32.mrf.mxu0
      %v1477 = vadd.f32 %v1463, %v1476
      %1478 = vdwg.mxu0
      %s1479 = scalar_lea.vmem [#allocation2], 16
      %v1480 = vld [vmem:[%s1479] sm:$0xff]
      %v1481 = vld [vmem:[%s1479 + $0x8] sm:$0xff]
      %v1482 = vunpack.c.l.bf16 %v1480
      %v1483 = vunpack.c.h.bf16 %v1480
      %v1484 = vunpack.c.l.bf16 %v1481
      %v1485 = vunpack.c.h.bf16 %v1481
      %1490 = vrot.lane.b32.xlu0 %v1482, 116
      %v1491 = vpop.permute.xlu0 %1490
      %1492 = vrot.lane.b32.xlu0 %v1483, 116
      %v1493 = vpop.permute.xlu0 %1492
      %1494 = vrot.lane.b32.xlu0 %v1484, 116
      %v1495 = vpop.permute.xlu0 %1494
      %1496 = vrot.lane.b32.xlu0 %v1485, 116
      %v1497 = vpop.permute.xlu0 %1496
      %vm1498 = vcmask 949248
      %v1499 = vsel %vm1498, %v1491, %v1493
      %v1500 = vsel %vm1498, %v1495, %v1497
      %v1503 = vadd.f32 %v1475, %v1499
      %v1504 = vadd.f32 %v1477, %v1500
      %v1505 = vmax.f32 %v1503, 0.0
      %v1506 = vmax.f32 %v1504, 0.0
      %v1507 = vpack.c.bf16 %v1506, %v1505
      %v1508 = vld [vmem:[%s7] sm:$0xff]
      %v1509 = vld [vmem:[%s7 + $0x8] sm:$0xff]
      %v1510 = vld [vmem:[%s7 + $0x10] sm:$0xff]
      %v1511 = vld [vmem:[%s7 + $0x18] sm:$0xff]
      %v1512 = vld [vmem:[%s7 + $0x20] sm:$0xff]
      %v1513 = vld [vmem:[%s7 + $0x28] sm:$0xff]
      %v1514 = vld [vmem:[%s7 + $0x30] sm:$0xff]
      %v1515 = vld [vmem:[%s7 + $0x38] sm:$0xff]
      %v1516 = vld [vmem:[%s7 + $0x40] sm:$0xff]
      %v1517 = vld [vmem:[%s7 + $0x48] sm:$0xff]
      %v1518 = vld [vmem:[%s7 + $0x50] sm:$0xff]
      %v1519 = vld [vmem:[%s7 + $0x58] sm:$0xff]
      %v1520 = vld [vmem:[%s7 + $0x60] sm:$0xff]
      %v1521 = vld [vmem:[%s7 + $0x68] sm:$0xff]
      %v1522 = vld [vmem:[%s7 + $0x70] sm:$0xff]
      %v1523 = vld [vmem:[%s7 + $0x78] sm:$0xff]
      %v1540 = vunpack.c.l.b16 %v1508
      %v1541 = vunpack.c.h.b16 %v1508
      %v1542 = vunpack.c.l.b16 %v1509
      %v1543 = vunpack.c.h.b16 %v1509
      %v1544 = vunpack.c.l.b16 %v1510
      %v1545 = vunpack.c.h.b16 %v1510
      %v1546 = vunpack.c.l.b16 %v1511
      %v1547 = vunpack.c.h.b16 %v1511
      %v1548 = vunpack.c.l.b16 %v1512
      %v1549 = vunpack.c.h.b16 %v1512
      %v1550 = vunpack.c.l.b16 %v1513
      %v1551 = vunpack.c.h.b16 %v1513
      %v1552 = vunpack.c.l.b16 %v1514
      %v1553 = vunpack.c.h.b16 %v1514
      %v1554 = vunpack.c.l.b16 %v1515
      %v1555 = vunpack.c.h.b16 %v1515
      %v1556 = vunpack.c.l.b16 %v1516
      %v1557 = vunpack.c.h.b16 %v1516
      %v1558 = vunpack.c.l.b16 %v1517
      %v1559 = vunpack.c.h.b16 %v1517
      %v1560 = vunpack.c.l.b16 %v1518
      %v1561 = vunpack.c.h.b16 %v1518
      %v1562 = vunpack.c.l.b16 %v1519
      %v1563 = vunpack.c.h.b16 %v1519
      %v1564 = vunpack.c.l.b16 %v1520
      %v1565 = vunpack.c.h.b16 %v1520
      %v1566 = vunpack.c.l.b16 %v1521
      %v1567 = vunpack.c.h.b16 %v1521
      %v1568 = vunpack.c.l.b16 %v1522
      %v1569 = vunpack.c.h.b16 %v1522
      %v1570 = vunpack.c.l.b16 %v1523
      %v1571 = vunpack.c.h.b16 %v1523
      %v1572 = vpack.c.b16 %v1542, %v1540
      %v1573 = vpack.c.b16 %v1543, %v1541
      %v1574 = vpack.c.b16 %v1546, %v1544
      %v1575 = vpack.c.b16 %v1547, %v1545
      %v1576 = vpack.c.b16 %v1550, %v1548
      %v1577 = vpack.c.b16 %v1551, %v1549
      %v1578 = vpack.c.b16 %v1554, %v1552
      %v1579 = vpack.c.b16 %v1555, %v1553
      %v1580 = vpack.c.b16 %v1558, %v1556
      %v1581 = vpack.c.b16 %v1559, %v1557
      %v1582 = vpack.c.b16 %v1562, %v1560
      %v1583 = vpack.c.b16 %v1563, %v1561
      %v1584 = vpack.c.b16 %v1566, %v1564
      %v1585 = vpack.c.b16 %v1567, %v1565
      %v1586 = vpack.c.b16 %v1570, %v1568
      %v1587 = vpack.c.b16 %v1571, %v1569
      %1604 = vmatpush.bf16.msra.mxu0 %v1586
      %1605 = vmatpush.bf16.msra.mxu0 %v1584
      %1606 = vmatpush.bf16.msra.mxu0 %v1582
      %1607 = vmatpush.bf16.msra.mxu0 %v1580
      %1608 = vmatpush.bf16.msra.mxu0 %v1578
      %1609 = vmatpush.bf16.msra.mxu0 %v1576
      %1610 = vmatpush.bf16.msra.mxu0 %v1574
      %1611 = vmatpush.bf16.msra.mxu0 %v1572
      %1612 = vmatmul.bf16.gmra.mxu0 %v1507
      %v1613 = vpop.f32.mrf.mxu0
      %v1614 = vadd.f32 0.0, %v1613
      %v1615 = vpop.f32.mrf.mxu0
      %v1616 = vadd.f32 0.0, %v1615
      %1617 = vdwg.mxu0
      %1618 = vmatpush.bf16.msra.mxu0 %v1587
      %1619 = vmatpush.bf16.msra.mxu0 %v1585
      %1620 = vmatpush.bf16.msra.mxu0 %v1583
      %1621 = vmatpush.bf16.msra.mxu0 %v1581
      %1622 = vmatpush.bf16.msra.mxu0 %v1579
      %1623 = vmatpush.bf16.msra.mxu0 %v1577
      %1624 = vmatpush.bf16.msra.mxu0 %v1575
      %1625 = vmatpush.bf16.msra.mxu0 %v1573
      %1626 = vmatmul.bf16.gmra.mxu0 %v1507
      %v1627 = vpop.f32.mrf.mxu0
      %v1628 = vadd.f32 0.0, %v1627
      %v1629 = vpop.f32.mrf.mxu0
      %v1630 = vadd.f32 0.0, %v1629
      %1631 = vdwg.mxu0
      %s1632 = scalar_lea.vmem %s7, 128
      %v1633 = vld [vmem:[%s1632] sm:$0xff]
      %v1634 = vld [vmem:[%s1632 + $0x8] sm:$0xff]
      %v1635 = vld [vmem:[%s1632 + $0x10] sm:$0xff]
      %v1636 = vld [vmem:[%s1632 + $0x18] sm:$0xff]
      %v1637 = vld [vmem:[%s1632 + $0x20] sm:$0xff]
      %v1638 = vld [vmem:[%s1632 + $0x28] sm:$0xff]
      %v1639 = vld [vmem:[%s1632 + $0x30] sm:$0xff]
      %v1640 = vld [vmem:[%s1632 + $0x38] sm:$0xff]
      %v1641 = vld [vmem:[%s1632 + $0x40] sm:$0xff]
      %v1642 = vld [vmem:[%s1632 + $0x48] sm:$0xff]
      %v1643 = vld [vmem:[%s1632 + $0x50] sm:$0xff]
      %v1644 = vld [vmem:[%s1632 + $0x58] sm:$0xff]
      %v1645 = vld [vmem:[%s1632 + $0x60] sm:$0xff]
      %v1646 = vld [vmem:[%s1632 + $0x68] sm:$0xff]
      %v1647 = vld [vmem:[%s1632 + $0x70] sm:$0xff]
      %v1648 = vld [vmem:[%s1632 + $0x78] sm:$0xff]
      %v1665 = vunpack.c.l.b16 %v1633
      %v1666 = vunpack.c.h.b16 %v1633
      %v1667 = vunpack.c.l.b16 %v1634
      %v1668 = vunpack.c.h.b16 %v1634
      %v1669 = vunpack.c.l.b16 %v1635
      %v1670 = vunpack.c.h.b16 %v1635
      %v1671 = vunpack.c.l.b16 %v1636
      %v1672 = vunpack.c.h.b16 %v1636
      %v1673 = vunpack.c.l.b16 %v1637
      %v1674 = vunpack.c.h.b16 %v1637
      %v1675 = vunpack.c.l.b16 %v1638
      %v1676 = vunpack.c.h.b16 %v1638
      %v1677 = vunpack.c.l.b16 %v1639
      %v1678 = vunpack.c.h.b16 %v1639
      %v1679 = vunpack.c.l.b16 %v1640
      %v1680 = vunpack.c.h.b16 %v1640
      %v1681 = vunpack.c.l.b16 %v1641
      %v1682 = vunpack.c.h.b16 %v1641
      %v1683 = vunpack.c.l.b16 %v1642
      %v1684 = vunpack.c.h.b16 %v1642
      %v1685 = vunpack.c.l.b16 %v1643
      %v1686 = vunpack.c.h.b16 %v1643
      %v1687 = vunpack.c.l.b16 %v1644
      %v1688 = vunpack.c.h.b16 %v1644
      %v1689 = vunpack.c.l.b16 %v1645
      %v1690 = vunpack.c.h.b16 %v1645
      %v1691 = vunpack.c.l.b16 %v1646
      %v1692 = vunpack.c.h.b16 %v1646
      %v1693 = vunpack.c.l.b16 %v1647
      %v1694 = vunpack.c.h.b16 %v1647
      %v1695 = vunpack.c.l.b16 %v1648
      %v1696 = vunpack.c.h.b16 %v1648
      %v1697 = vpack.c.b16 %v1667, %v1665
      %v1698 = vpack.c.b16 %v1668, %v1666
      %v1699 = vpack.c.b16 %v1671, %v1669
      %v1700 = vpack.c.b16 %v1672, %v1670
      %v1701 = vpack.c.b16 %v1675, %v1673
      %v1702 = vpack.c.b16 %v1676, %v1674
      %v1703 = vpack.c.b16 %v1679, %v1677
      %v1704 = vpack.c.b16 %v1680, %v1678
      %v1705 = vpack.c.b16 %v1683, %v1681
      %v1706 = vpack.c.b16 %v1684, %v1682
      %v1707 = vpack.c.b16 %v1687, %v1685
      %v1708 = vpack.c.b16 %v1688, %v1686
      %v1709 = vpack.c.b16 %v1691, %v1689
      %v1710 = vpack.c.b16 %v1692, %v1690
      %v1711 = vpack.c.b16 %v1695, %v1693
      %v1712 = vpack.c.b16 %v1696, %v1694
      %1729 = vmatpush.bf16.msra.mxu0 %v1711
      %1730 = vmatpush.bf16.msra.mxu0 %v1709
      %1731 = vmatpush.bf16.msra.mxu0 %v1707
      %1732 = vmatpush.bf16.msra.mxu0 %v1705
      %1733 = vmatpush.bf16.msra.mxu0 %v1703
      %1734 = vmatpush.bf16.msra.mxu0 %v1701
      %1735 = vmatpush.bf16.msra.mxu0 %v1699
      %1736 = vmatpush.bf16.msra.mxu0 %v1697
      %1737 = vmatmul.bf16.gmra.mxu0 %v1507
      %v1738 = vpop.f32.mrf.mxu0
      %v1739 = vadd.f32 0.0, %v1738
      %v1740 = vpop.f32.mrf.mxu0
      %v1741 = vadd.f32 0.0, %v1740
      %1742 = vdwg.mxu0
      %1743 = vmatpush.bf16.msra.mxu0 %v1712
      %1744 = vmatpush.bf16.msra.mxu0 %v1710
      %1745 = vmatpush.bf16.msra.mxu0 %v1708
      %1746 = vmatpush.bf16.msra.mxu0 %v1706
      %1747 = vmatpush.bf16.msra.mxu0 %v1704
      %1748 = vmatpush.bf16.msra.mxu0 %v1702
      %1749 = vmatpush.bf16.msra.mxu0 %v1700
      %1750 = vmatpush.bf16.msra.mxu0 %v1698
      %1751 = vmatmul.bf16.gmra.mxu0 %v1507
      %v1752 = vpop.f32.mrf.mxu0
      %v1753 = vadd.f32 0.0, %v1752
      %v1754 = vpop.f32.mrf.mxu0
      %v1755 = vadd.f32 0.0, %v1754
      %1756 = vdwg.mxu0
      %v1757 = vmax.f32 %v1614, %v1739
      %v1758 = vmax.f32 %v1628, %v1753
      %v1759 = vmax.f32 %v1616, %v1741
      %v1760 = vmax.f32 %v1630, %v1755
      %s1761 = scalar_lea.vmem %s7, 256
      %v1762 = vld [vmem:[%s1761] sm:$0xff]
      %v1763 = vld [vmem:[%s1761 + $0x8] sm:$0xff]
      %v1764 = vld [vmem:[%s1761 + $0x10] sm:$0xff]
      %v1765 = vld [vmem:[%s1761 + $0x18] sm:$0xff]
      %v1766 = vld [vmem:[%s1761 + $0x20] sm:$0xff]
      %v1767 = vld [vmem:[%s1761 + $0x28] sm:$0xff]
      %v1768 = vld [vmem:[%s1761 + $0x30] sm:$0xff]
      %v1769 = vld [vmem:[%s1761 + $0x38] sm:$0xff]
      %v1770 = vld [vmem:[%s1761 + $0x40] sm:$0xff]
      %v1771 = vld [vmem:[%s1761 + $0x48] sm:$0xff]
      %v1772 = vld [vmem:[%s1761 + $0x50] sm:$0xff]
      %v1773 = vld [vmem:[%s1761 + $0x58] sm:$0xff]
      %v1774 = vld [vmem:[%s1761 + $0x60] sm:$0xff]
      %v1775 = vld [vmem:[%s1761 + $0x68] sm:$0xff]
      %v1776 = vld [vmem:[%s1761 + $0x70] sm:$0xff]
      %v1777 = vld [vmem:[%s1761 + $0x78] sm:$0xff]
      %v1794 = vunpack.c.l.b16 %v1762
      %v1795 = vunpack.c.h.b16 %v1762
      %v1796 = vunpack.c.l.b16 %v1763
      %v1797 = vunpack.c.h.b16 %v1763
      %v1798 = vunpack.c.l.b16 %v1764
      %v1799 = vunpack.c.h.b16 %v1764
      %v1800 = vunpack.c.l.b16 %v1765
      %v1801 = vunpack.c.h.b16 %v1765
      %v1802 = vunpack.c.l.b16 %v1766
      %v1803 = vunpack.c.h.b16 %v1766
      %v1804 = vunpack.c.l.b16 %v1767
      %v1805 = vunpack.c.h.b16 %v1767
      %v1806 = vunpack.c.l.b16 %v1768
      %v1807 = vunpack.c.h.b16 %v1768
      %v1808 = vunpack.c.l.b16 %v1769
      %v1809 = vunpack.c.h.b16 %v1769
      %v1810 = vunpack.c.l.b16 %v1770
      %v1811 = vunpack.c.h.b16 %v1770
      %v1812 = vunpack.c.l.b16 %v1771
      %v1813 = vunpack.c.h.b16 %v1771
      %v1814 = vunpack.c.l.b16 %v1772
      %v1815 = vunpack.c.h.b16 %v1772
      %v1816 = vunpack.c.l.b16 %v1773
      %v1817 = vunpack.c.h.b16 %v1773
      %v1818 = vunpack.c.l.b16 %v1774
      %v1819 = vunpack.c.h.b16 %v1774
      %v1820 = vunpack.c.l.b16 %v1775
      %v1821 = vunpack.c.h.b16 %v1775
      %v1822 = vunpack.c.l.b16 %v1776
      %v1823 = vunpack.c.h.b16 %v1776
      %v1824 = vunpack.c.l.b16 %v1777
      %v1825 = vunpack.c.h.b16 %v1777
      %v1826 = vpack.c.b16 %v1796, %v1794
      %v1827 = vpack.c.b16 %v1797, %v1795
      %v1828 = vpack.c.b16 %v1800, %v1798
      %v1829 = vpack.c.b16 %v1801, %v1799
      %v1830 = vpack.c.b16 %v1804, %v1802
      %v1831 = vpack.c.b16 %v1805, %v1803
      %v1832 = vpack.c.b16 %v1808, %v1806
      %v1833 = vpack.c.b16 %v1809, %v1807
      %v1834 = vpack.c.b16 %v1812, %v1810
      %v1835 = vpack.c.b16 %v1813, %v1811
      %v1836 = vpack.c.b16 %v1816, %v1814
      %v1837 = vpack.c.b16 %v1817, %v1815
      %v1838 = vpack.c.b16 %v1820, %v1818
      %v1839 = vpack.c.b16 %v1821, %v1819
      %v1840 = vpack.c.b16 %v1824, %v1822
      %v1841 = vpack.c.b16 %v1825, %v1823
      %1858 = vmatpush.bf16.msra.mxu0 %v1840
      %1859 = vmatpush.bf16.msra.mxu0 %v1838
      %1860 = vmatpush.bf16.msra.mxu0 %v1836
      %1861 = vmatpush.bf16.msra.mxu0 %v1834
      %1862 = vmatpush.bf16.msra.mxu0 %v1832
      %1863 = vmatpush.bf16.msra.mxu0 %v1830
      %1864 = vmatpush.bf16.msra.mxu0 %v1828
      %1865 = vmatpush.bf16.msra.mxu0 %v1826
      %1866 = vmatmul.bf16.gmra.mxu0 %v1507
      %v1867 = vpop.f32.mrf.mxu0
      %v1868 = vadd.f32 0.0, %v1867
      %v1869 = vpop.f32.mrf.mxu0
      %v1870 = vadd.f32 0.0, %v1869
      %1871 = vdwg.mxu0
      %1872 = vmatpush.bf16.msra.mxu0 %v1841
      %1873 = vmatpush.bf16.msra.mxu0 %v1839
      %1874 = vmatpush.bf16.msra.mxu0 %v1837
      %1875 = vmatpush.bf16.msra.mxu0 %v1835
      %1876 = vmatpush.bf16.msra.mxu0 %v1833
      %1877 = vmatpush.bf16.msra.mxu0 %v1831
      %1878 = vmatpush.bf16.msra.mxu0 %v1829
      %1879 = vmatpush.bf16.msra.mxu0 %v1827
      %1880 = vmatmul.bf16.gmra.mxu0 %v1507
      %v1881 = vpop.f32.mrf.mxu0
      %v1882 = vadd.f32 0.0, %v1881
      %v1883 = vpop.f32.mrf.mxu0
      %v1884 = vadd.f32 0.0, %v1883
      %1885 = vdwg.mxu0
      %v1886 = vmax.f32 %v1757, %v1868
      %v1887 = vmax.f32 %v1758, %v1882
      %v1888 = vmax.f32 %v1759, %v1870
      %v1889 = vmax.f32 %v1760, %v1884
      %s1890 = scalar_lea.vmem %s7, 384
      %v1891 = vld [vmem:[%s1890] sm:$0xff]
      %v1892 = vld [vmem:[%s1890 + $0x8] sm:$0xff]
      %v1893 = vld [vmem:[%s1890 + $0x10] sm:$0xff]
      %v1894 = vld [vmem:[%s1890 + $0x18] sm:$0xff]
      %v1895 = vld [vmem:[%s1890 + $0x20] sm:$0xff]
      %v1896 = vld [vmem:[%s1890 + $0x28] sm:$0xff]
      %v1897 = vld [vmem:[%s1890 + $0x30] sm:$0xff]
      %v1898 = vld [vmem:[%s1890 + $0x38] sm:$0xff]
      %v1899 = vld [vmem:[%s1890 + $0x40] sm:$0xff]
      %v1900 = vld [vmem:[%s1890 + $0x48] sm:$0xff]
      %v1901 = vld [vmem:[%s1890 + $0x50] sm:$0xff]
      %v1902 = vld [vmem:[%s1890 + $0x58] sm:$0xff]
      %v1903 = vld [vmem:[%s1890 + $0x60] sm:$0xff]
      %v1904 = vld [vmem:[%s1890 + $0x68] sm:$0xff]
      %v1905 = vld [vmem:[%s1890 + $0x70] sm:$0xff]
      %v1906 = vld [vmem:[%s1890 + $0x78] sm:$0xff]
      %v1923 = vunpack.c.l.b16 %v1891
      %v1924 = vunpack.c.h.b16 %v1891
      %v1925 = vunpack.c.l.b16 %v1892
      %v1926 = vunpack.c.h.b16 %v1892
      %v1927 = vunpack.c.l.b16 %v1893
      %v1928 = vunpack.c.h.b16 %v1893
      %v1929 = vunpack.c.l.b16 %v1894
      %v1930 = vunpack.c.h.b16 %v1894
      %v1931 = vunpack.c.l.b16 %v1895
      %v1932 = vunpack.c.h.b16 %v1895
      %v1933 = vunpack.c.l.b16 %v1896
      %v1934 = vunpack.c.h.b16 %v1896
      %v1935 = vunpack.c.l.b16 %v1897
      %v1936 = vunpack.c.h.b16 %v1897
      %v1937 = vunpack.c.l.b16 %v1898
      %v1938 = vunpack.c.h.b16 %v1898
      %v1939 = vunpack.c.l.b16 %v1899
      %v1940 = vunpack.c.h.b16 %v1899
      %v1941 = vunpack.c.l.b16 %v1900
      %v1942 = vunpack.c.h.b16 %v1900
      %v1943 = vunpack.c.l.b16 %v1901
      %v1944 = vunpack.c.h.b16 %v1901
      %v1945 = vunpack.c.l.b16 %v1902
      %v1946 = vunpack.c.h.b16 %v1902
      %v1947 = vunpack.c.l.b16 %v1903
      %v1948 = vunpack.c.h.b16 %v1903
      %v1949 = vunpack.c.l.b16 %v1904
      %v1950 = vunpack.c.h.b16 %v1904
      %v1951 = vunpack.c.l.b16 %v1905
      %v1952 = vunpack.c.h.b16 %v1905
      %v1953 = vunpack.c.l.b16 %v1906
      %v1954 = vunpack.c.h.b16 %v1906
      %v1955 = vpack.c.b16 %v1925, %v1923
      %v1956 = vpack.c.b16 %v1926, %v1924
      %v1957 = vpack.c.b16 %v1929, %v1927
      %v1958 = vpack.c.b16 %v1930, %v1928
      %v1959 = vpack.c.b16 %v1933, %v1931
      %v1960 = vpack.c.b16 %v1934, %v1932
      %v1961 = vpack.c.b16 %v1937, %v1935
      %v1962 = vpack.c.b16 %v1938, %v1936
      %v1963 = vpack.c.b16 %v1941, %v1939
      %v1964 = vpack.c.b16 %v1942, %v1940
      %v1965 = vpack.c.b16 %v1945, %v1943
      %v1966 = vpack.c.b16 %v1946, %v1944
      %v1967 = vpack.c.b16 %v1949, %v1947
      %v1968 = vpack.c.b16 %v1950, %v1948
      %v1969 = vpack.c.b16 %v1953, %v1951
      %v1970 = vpack.c.b16 %v1954, %v1952
      %1987 = vmatpush.bf16.msra.mxu0 %v1969
      %1988 = vmatpush.bf16.msra.mxu0 %v1967
      %1989 = vmatpush.bf16.msra.mxu0 %v1965
      %1990 = vmatpush.bf16.msra.mxu0 %v1963
      %1991 = vmatpush.bf16.msra.mxu0 %v1961
      %1992 = vmatpush.bf16.msra.mxu0 %v1959
      %1993 = vmatpush.bf16.msra.mxu0 %v1957
      %1994 = vmatpush.bf16.msra.mxu0 %v1955
      %1995 = vmatmul.bf16.gmra.mxu0 %v1507
      %v1996 = vpop.f32.mrf.mxu0
      %v1997 = vadd.f32 0.0, %v1996
      %v1998 = vpop.f32.mrf.mxu0
      %v1999 = vadd.f32 0.0, %v1998
      %2000 = vdwg.mxu0
      %2001 = vmatpush.bf16.msra.mxu0 %v1970
      %2002 = vmatpush.bf16.msra.mxu0 %v1968
      %2003 = vmatpush.bf16.msra.mxu0 %v1966
      %2004 = vmatpush.bf16.msra.mxu0 %v1964
      %2005 = vmatpush.bf16.msra.mxu0 %v1962
      %2006 = vmatpush.bf16.msra.mxu0 %v1960
      %2007 = vmatpush.bf16.msra.mxu0 %v1958
      %2008 = vmatpush.bf16.msra.mxu0 %v1956
      %2009 = vmatmul.bf16.gmra.mxu0 %v1507
      %v2010 = vpop.f32.mrf.mxu0
      %v2011 = vadd.f32 0.0, %v2010
      %v2012 = vpop.f32.mrf.mxu0
      %v2013 = vadd.f32 0.0, %v2012
      %2014 = vdwg.mxu0
      %v2015 = vmax.f32 %v1886, %v1997
      %v2016 = vmax.f32 %v1887, %v2011
      %v2017 = vmax.f32 %v1888, %v1999
      %v2018 = vmax.f32 %v1889, %v2013
      %v2019 = vpack.c.bf16 %v2016, %v2015
      %v2020 = vpack.c.bf16 %v2018, %v2017
      %s2021 = scalar_lea.vmem %s332, 16
      %2022 = vst [vmem:[%s2021] sm:$0xff] %v2019
      %2023 = vst [vmem:[%s2021 + $0x8] sm:$0xff] %v2020
      %s2024 = scalar_lea.vmem [#allocation3], 64
      %v2025 = vld [vmem:[%s2024] sm:$0xff]
      %v2026 = vld [vmem:[%s2024 + $0x8] sm:$0xff]
      %s2027 = scalar_lea.vmem [#allocation3], 80
      %v2028 = vld [vmem:[%s2027] sm:$0xff]
      %v2029 = vld [vmem:[%s2027 + $0x8] sm:$0xff]
      %s2030 = scalar_lea.vmem [#allocation3], 96
      %v2031 = vld [vmem:[%s2030] sm:$0xff]
      %v2032 = vld [vmem:[%s2030 + $0x8] sm:$0xff]
      %v2035 = vunpack.c.l.b16 %v2025
      %v2036 = vunpack.c.l.b16 %v2026
      %v2037 = vpack.c.b16 %v2036, %v2035
      %v2039 = vunpack.c.h.b16 %v2025
      %v2040 = vunpack.c.h.b16 %v2026
      %v2041 = vpack.c.b16 %v2040, %v2039
      %2042 = vrot.lane.b32.xlu0 %v2037, 127
      %v2043 = vpop.permute.xlu0 %2042
      %2044 = vrot.lane.b32.xlu0 %v2041, 127
      %v2045 = vpop.permute.xlu0 %2044
      %v2046 = vsel %vm1179, %v2043, %v2045
      %2048 = vrot.lane.b32.xlu0 %v2037, 126
      %v2049 = vpop.permute.xlu0 %2048
      %2050 = vrot.lane.b32.xlu0 %v2041, 126
      %v2051 = vpop.permute.xlu0 %2050
      %v2052 = vsel %vm1186, %v2049, %v2051
      %2054 = vrot.lane.b32.xlu0 %v2037, 117
      %v2055 = vpop.permute.xlu0 %2054
      %2056 = vrot.lane.b32.xlu0 %v2041, 117
      %v2057 = vpop.permute.xlu0 %2056
      %v2058 = vsel %vm1193, %v2055, %v2057
      %2060 = vrot.lane.b32.xlu0 %v2037, 116
      %v2061 = vpop.permute.xlu0 %2060
      %2062 = vrot.lane.b32.xlu0 %v2041, 116
      %v2063 = vpop.permute.xlu0 %2062
      %v2064 = vsel %vm1200, %v2061, %v2063
      %2066 = vrot.lane.b32.xlu0 %v2037, 115
      %v2067 = vpop.permute.xlu0 %2066
      %2068 = vrot.lane.b32.xlu0 %v2041, 115
      %v2069 = vpop.permute.xlu0 %2068
      %v2070 = vsel %vm1207, %v2067, %v2069
      %2072 = vrot.lane.b32.xlu0 %v2037, 106
      %v2073 = vpop.permute.xlu0 %2072
      %2074 = vrot.lane.b32.xlu0 %v2041, 106
      %v2075 = vpop.permute.xlu0 %2074
      %v2076 = vsel %vm1214, %v2073, %v2075
      %2078 = vrot.lane.b32.xlu0 %v2037, 105
      %v2079 = vpop.permute.xlu0 %2078
      %2080 = vrot.lane.b32.xlu0 %v2041, 105
      %v2081 = vpop.permute.xlu0 %2080
      %v2082 = vsel %vm1221, %v2079, %v2081
      %2084 = vrot.lane.b32.xlu0 %v2037, 104
      %v2085 = vpop.permute.xlu0 %2084
      %2086 = vrot.lane.b32.xlu0 %v2041, 104
      %v2087 = vpop.permute.xlu0 %2086
      %v2088 = vsel %vm1228, %v2085, %v2087
      %v2092 = vunpack.c.l.b16 %v2028
      %v2093 = vunpack.c.l.b16 %v2029
      %v2094 = vpack.c.b16 %v2093, %v2092
      %v2096 = vunpack.c.h.b16 %v2028
      %v2097 = vunpack.c.h.b16 %v2029
      %v2098 = vpack.c.b16 %v2097, %v2096
      %2099 = vrot.lane.b32.xlu0 %v2094, 127
      %v2100 = vpop.permute.xlu0 %2099
      %2101 = vrot.lane.b32.xlu0 %v2098, 127
      %v2102 = vpop.permute.xlu0 %2101
      %v2103 = vsel %vm1179, %v2100, %v2102
      %2105 = vrot.lane.b32.xlu0 %v2094, 126
      %v2106 = vpop.permute.xlu0 %2105
      %2107 = vrot.lane.b32.xlu0 %v2098, 126
      %v2108 = vpop.permute.xlu0 %2107
      %v2109 = vsel %vm1186, %v2106, %v2108
      %2111 = vrot.lane.b32.xlu0 %v2094, 117
      %v2112 = vpop.permute.xlu0 %2111
      %2113 = vrot.lane.b32.xlu0 %v2098, 117
      %v2114 = vpop.permute.xlu0 %2113
      %v2115 = vsel %vm1193, %v2112, %v2114
      %2117 = vrot.lane.b32.xlu0 %v2094, 116
      %v2118 = vpop.permute.xlu0 %2117
      %2119 = vrot.lane.b32.xlu0 %v2098, 116
      %v2120 = vpop.permute.xlu0 %2119
      %v2121 = vsel %vm1200, %v2118, %v2120
      %2123 = vrot.lane.b32.xlu0 %v2094, 115
      %v2124 = vpop.permute.xlu0 %2123
      %2125 = vrot.lane.b32.xlu0 %v2098, 115
      %v2126 = vpop.permute.xlu0 %2125
      %v2127 = vsel %vm1207, %v2124, %v2126
      %2129 = vrot.lane.b32.xlu0 %v2094, 106
      %v2130 = vpop.permute.xlu0 %2129
      %2131 = vrot.lane.b32.xlu0 %v2098, 106
      %v2132 = vpop.permute.xlu0 %2131
      %v2133 = vsel %vm1214, %v2130, %v2132
      %v2137 = vunpack.c.l.b16 %v2031
      %v2138 = vunpack.c.l.b16 %v2032
      %v2139 = vpack.c.b16 %v2138, %v2137
      %2140 = vrot.lane.b32.xlu0 %v2139, 23
      %v2141 = vpop.permute.xlu0 %2140
      %v2142 = vunpack.c.h.b16 %v2031
      %v2143 = vunpack.c.h.b16 %v2032
      %v2144 = vpack.c.b16 %v2143, %v2142
      %2145 = vrot.lane.b32.xlu0 %v2139, 22
      %v2146 = vpop.permute.xlu0 %2145
      %2147 = vrot.lane.b32.xlu0 %v2144, 22
      %v2148 = vpop.permute.xlu0 %2147
      %v2149 = vsel %vm1290, %v2146, %v2148
      %2150 = vrot.lane.b32.xlu0 %v2139, 21
      %v2151 = vpop.permute.xlu0 %2150
      %2152 = vrot.lane.b32.xlu0 %v2144, 21
      %v2153 = vpop.permute.xlu0 %2152
      %v2154 = vsel %vm1296, %v2151, %v2153
      %2155 = vrot.lane.b32.xlu0 %v2139, 12
      %v2156 = vpop.permute.xlu0 %2155
      %2157 = vrot.lane.b32.xlu0 %v2144, 12
      %v2158 = vpop.permute.xlu0 %2157
      %v2159 = vsel %vm1302, %v2156, %v2158
      %2160 = vrot.lane.b32.xlu0 %v2139, 11
      %v2161 = vpop.permute.xlu0 %2160
      %2162 = vrot.lane.b32.xlu0 %v2144, 11
      %v2163 = vpop.permute.xlu0 %2162
      %v2164 = vsel %vm1308, %v2161, %v2163
      %2165 = vrot.lane.b32.xlu0 %v2139, 10
      %v2166 = vpop.permute.xlu0 %2165
      %2167 = vrot.lane.b32.xlu0 %v2144, 10
      %v2168 = vpop.permute.xlu0 %2167
      %v2169 = vsel %vm1314, %v2166, %v2168
      %2170 = vrot.lane.b32.xlu0 %v2139, 1
      %v2171 = vpop.permute.xlu0 %2170
      %2172 = vrot.lane.b32.xlu0 %v2144, 1
      %v2173 = vpop.permute.xlu0 %2172
      %v2174 = vsel %vm1320, %v2171, %v2173
      %2175 = vrot.lane.b32.xlu0 %v2139, 127
      %v2176 = vpop.permute.xlu0 %2175
      %2177 = vrot.lane.b32.xlu0 %v2144, 127
      %v2178 = vpop.permute.xlu0 %2177
      %v2179 = vsel %vm1179, %v2176, %v2178
      %2180 = vrot.lane.b32.xlu0 %v2094, 105
      %v2181 = vpop.permute.xlu0 %2180
      %2182 = vrot.lane.b32.xlu0 %v2098, 105
      %v2183 = vpop.permute.xlu0 %2182
      %2184 = vrot.lane.b32.xlu0 %v2103, 105
      %v2185 = vpop.permute.xlu0 %2184
      %2186 = vrot.lane.b32.xlu0 %v2102, 105
      %v2187 = vpop.permute.xlu0 %2186
      %2188 = vrot.lane.b32.xlu0 %v2141, 105
      %v2189 = vpop.permute.xlu0 %2188
      %2190 = vrot.lane.b32.xlu0 %v2146, 105
      %v2191 = vpop.permute.xlu0 %2190
      %2192 = vrot.lane.b32.xlu0 %v2149, 105
      %v2193 = vpop.permute.xlu0 %2192
      %2194 = vrot.lane.b32.xlu0 %v2151, 105
      %v2195 = vpop.permute.xlu0 %2194
      %2196 = vrot.lane.b32.xlu0 %v2154, 105
      %v2197 = vpop.permute.xlu0 %2196
      %2198 = vrot.lane.b32.xlu0 %v2156, 105
      %v2199 = vpop.permute.xlu0 %2198
      %2200 = vrot.lane.b32.xlu0 %v2159, 105
      %v2201 = vpop.permute.xlu0 %2200
      %2202 = vrot.lane.b32.xlu0 %v2161, 105
      %v2203 = vpop.permute.xlu0 %2202
      %2204 = vrot.lane.b32.xlu0 %v2164, 105
      %v2205 = vpop.permute.xlu0 %2204
      %2206 = vrot.lane.b32.xlu0 %v2166, 105
      %v2207 = vpop.permute.xlu0 %2206
      %2208 = vrot.lane.b32.xlu0 %v2169, 105
      %v2209 = vpop.permute.xlu0 %2208
      %2210 = vrot.lane.b32.xlu0 %v2171, 105
      %v2211 = vpop.permute.xlu0 %2210
      %2212 = vrot.lane.b32.xlu0 %v2174, 105
      %v2213 = vpop.permute.xlu0 %2212
      %2214 = vrot.lane.b32.xlu0 %v2139, 105
      %v2215 = vpop.permute.xlu0 %2214
      %2216 = vrot.lane.b32.xlu0 %v2144, 105
      %v2217 = vpop.permute.xlu0 %2216
      %2218 = vrot.lane.b32.xlu0 %v2179, 105
      %v2219 = vpop.permute.xlu0 %2218
      %2220 = vrot.lane.b32.xlu0 %v2178, 105
      %v2221 = vpop.permute.xlu0 %2220
      %v2222 = vsel %vm1221, %v2181, %v2183
      %v2223 = vsel %vm1221, %v2185, %v2187
      %v2224 = vsel %vm1221, %v2191, %v2193
      %v2225 = vsel %vm1221, %v2195, %v2197
      %v2226 = vsel %vm1221, %v2199, %v2201
      %v2227 = vsel %vm1221, %v2203, %v2205
      %v2228 = vsel %vm1221, %v2207, %v2209
      %v2229 = vsel %vm1221, %v2211, %v2213
      %v2230 = vsel %vm1221, %v2215, %v2217
      %v2231 = vsel %vm1221, %v2219, %v2221
      %2243 = vmatpush.bf16.msra.mxu0 %v2082
      %2244 = vmatpush.bf16.msra.mxu0 %v2076
      %2245 = vmatpush.bf16.msra.mxu0 %v2070
      %2246 = vmatpush.bf16.msra.mxu0 %v2064
      %2247 = vmatpush.bf16.msra.mxu0 %v2058
      %2248 = vmatpush.bf16.msra.mxu0 %v2052
      %2249 = vmatpush.bf16.msra.mxu0 %v2046
      %2250 = vmatpush.bf16.msra.mxu0 %v2037
      %2251 = vmatmul.bf16.gmra.mxu0 %v1412
      %v2252 = vpop.f32.mrf.mxu0
      %v2253 = vadd.f32 %v1393, %v2252
      %v2254 = vpop.f32.mrf.mxu0
      %v2255 = vadd.f32 %v1398, %v2254
      %2256 = vdwg.mxu0
      %2257 = vmatpush.bf16.msra.mxu0 %v2133
      %2258 = vmatpush.bf16.msra.mxu0 %v2127
      %2259 = vmatpush.bf16.msra.mxu0 %v2121
      %2260 = vmatpush.bf16.msra.mxu0 %v2115
      %2261 = vmatpush.bf16.msra.mxu0 %v2109
      %2262 = vmatpush.bf16.msra.mxu0 %v2103
      %2263 = vmatpush.bf16.msra.mxu0 %v2094
      %2264 = vmatpush.bf16.msra.mxu0 %v2088
      %2265 = vmatmul.bf16.gmra.mxu0 %v1413
      %v2266 = vpop.f32.mrf.mxu0
      %v2267 = vadd.f32 %v2253, %v2266
      %v2268 = vpop.f32.mrf.mxu0
      %v2269 = vadd.f32 %v2255, %v2268
      %2270 = vdwg.mxu0
      %2271 = vmatpush.bf16.msra.mxu0 %v2228
      %2272 = vmatpush.bf16.msra.mxu0 %v2227
      %2273 = vmatpush.bf16.msra.mxu0 %v2226
      %2274 = vmatpush.bf16.msra.mxu0 %v2225
      %2275 = vmatpush.bf16.msra.mxu0 %v2224
      %2276 = vmatpush.bf16.msra.mxu0 %v2189
      %2277 = vmatpush.bf16.msra.mxu0 %v2223
      %2278 = vmatpush.bf16.msra.mxu0 %v2222
      %2279 = vmatmul.bf16.gmra.mxu0 %v1414
      %v2280 = vpop.f32.mrf.mxu0
      %v2281 = vadd.f32 %v2267, %v2280
      %v2282 = vpop.f32.mrf.mxu0
      %v2283 = vadd.f32 %v2269, %v2282
      %2284 = vdwg.mxu0
      %2285 = vmatpush.bf16.msra.mxu0 0
      %2286 = vmatpush.bf16.msra.mxu0 0
      %2287 = vmatpush.bf16.msra.mxu0 0
      %2288 = vmatpush.bf16.msra.mxu0 0
      %2289 = vmatpush.bf16.msra.mxu0 0
      %2290 = vmatpush.bf16.msra.mxu0 %v2231
      %2291 = vmatpush.bf16.msra.mxu0 %v2230
      %2292 = vmatpush.bf16.msra.mxu0 %v2229
      %2293 = vmatmul.bf16.gmra.mxu0 %v1421
      %v2294 = vpop.f32.mrf.mxu0
      %v2295 = vadd.f32 %v2281, %v2294
      %v2296 = vpop.f32.mrf.mxu0
      %v2297 = vadd.f32 %v2283, %v2296
      %2298 = vdwg.mxu0
      %s2299 = scalar_lea.vmem [#allocation2], 80
      %v2300 = vld [vmem:[%s2299] sm:$0xff]
      %v2301 = vld [vmem:[%s2299 + $0x8] sm:$0xff]
      %v2302 = vunpack.c.l.bf16 %v2300
      %v2303 = vunpack.c.h.bf16 %v2300
      %v2304 = vunpack.c.l.bf16 %v2301
      %v2305 = vunpack.c.h.bf16 %v2301
      %2310 = vrot.lane.b32.xlu0 %v2302, 116
      %v2311 = vpop.permute.xlu0 %2310
      %2312 = vrot.lane.b32.xlu0 %v2303, 116
      %v2313 = vpop.permute.xlu0 %2312
      %2314 = vrot.lane.b32.xlu0 %v2304, 116
      %v2315 = vpop.permute.xlu0 %2314
      %2316 = vrot.lane.b32.xlu0 %v2305, 116
      %v2317 = vpop.permute.xlu0 %2316
      %v2318 = vsel %vm1498, %v2311, %v2313
      %v2319 = vsel %vm1498, %v2315, %v2317
      %v2322 = vadd.f32 %v2295, %v2318
      %v2323 = vadd.f32 %v2297, %v2319
      %v2324 = vmax.f32 %v2322, 0.0
      %v2325 = vmax.f32 %v2323, 0.0
      %v2326 = vpack.c.bf16 %v2325, %v2324
      %v2327 = vld [vmem:[%s7] sm:$0xff]
      %v2328 = vld [vmem:[%s7 + $0x8] sm:$0xff]
      %v2329 = vld [vmem:[%s7 + $0x10] sm:$0xff]
      %v2330 = vld [vmem:[%s7 + $0x18] sm:$0xff]
      %v2331 = vld [vmem:[%s7 + $0x20] sm:$0xff]
      %v2332 = vld [vmem:[%s7 + $0x28] sm:$0xff]
      %v2333 = vld [vmem:[%s7 + $0x30] sm:$0xff]
      %v2334 = vld [vmem:[%s7 + $0x38] sm:$0xff]
      %v2335 = vld [vmem:[%s7 + $0x40] sm:$0xff]
      %v2336 = vld [vmem:[%s7 + $0x48] sm:$0xff]
      %v2337 = vld [vmem:[%s7 + $0x50] sm:$0xff]
      %v2338 = vld [vmem:[%s7 + $0x58] sm:$0xff]
      %v2339 = vld [vmem:[%s7 + $0x60] sm:$0xff]
      %v2340 = vld [vmem:[%s7 + $0x68] sm:$0xff]
      %v2341 = vld [vmem:[%s7 + $0x70] sm:$0xff]
      %v2342 = vld [vmem:[%s7 + $0x78] sm:$0xff]
      %v2359 = vunpack.c.l.b16 %v2327
      %v2360 = vunpack.c.h.b16 %v2327
      %v2361 = vunpack.c.l.b16 %v2328
      %v2362 = vunpack.c.h.b16 %v2328
      %v2363 = vunpack.c.l.b16 %v2329
      %v2364 = vunpack.c.h.b16 %v2329
      %v2365 = vunpack.c.l.b16 %v2330
      %v2366 = vunpack.c.h.b16 %v2330
      %v2367 = vunpack.c.l.b16 %v2331
      %v2368 = vunpack.c.h.b16 %v2331
      %v2369 = vunpack.c.l.b16 %v2332
      %v2370 = vunpack.c.h.b16 %v2332
      %v2371 = vunpack.c.l.b16 %v2333
      %v2372 = vunpack.c.h.b16 %v2333
      %v2373 = vunpack.c.l.b16 %v2334
      %v2374 = vunpack.c.h.b16 %v2334
      %v2375 = vunpack.c.l.b16 %v2335
      %v2376 = vunpack.c.h.b16 %v2335
      %v2377 = vunpack.c.l.b16 %v2336
      %v2378 = vunpack.c.h.b16 %v2336
      %v2379 = vunpack.c.l.b16 %v2337
      %v2380 = vunpack.c.h.b16 %v2337
      %v2381 = vunpack.c.l.b16 %v2338
      %v2382 = vunpack.c.h.b16 %v2338
      %v2383 = vunpack.c.l.b16 %v2339
      %v2384 = vunpack.c.h.b16 %v2339
      %v2385 = vunpack.c.l.b16 %v2340
      %v2386 = vunpack.c.h.b16 %v2340
      %v2387 = vunpack.c.l.b16 %v2341
      %v2388 = vunpack.c.h.b16 %v2341
      %v2389 = vunpack.c.l.b16 %v2342
      %v2390 = vunpack.c.h.b16 %v2342
      %v2391 = vpack.c.b16 %v2361, %v2359
      %v2392 = vpack.c.b16 %v2362, %v2360
      %v2393 = vpack.c.b16 %v2365, %v2363
      %v2394 = vpack.c.b16 %v2366, %v2364
      %v2395 = vpack.c.b16 %v2369, %v2367
      %v2396 = vpack.c.b16 %v2370, %v2368
      %v2397 = vpack.c.b16 %v2373, %v2371
      %v2398 = vpack.c.b16 %v2374, %v2372
      %v2399 = vpack.c.b16 %v2377, %v2375
      %v2400 = vpack.c.b16 %v2378, %v2376
      %v2401 = vpack.c.b16 %v2381, %v2379
      %v2402 = vpack.c.b16 %v2382, %v2380
      %v2403 = vpack.c.b16 %v2385, %v2383
      %v2404 = vpack.c.b16 %v2386, %v2384
      %v2405 = vpack.c.b16 %v2389, %v2387
      %v2406 = vpack.c.b16 %v2390, %v2388
      %2423 = vmatpush.bf16.msra.mxu0 %v2405
      %2424 = vmatpush.bf16.msra.mxu0 %v2403
      %2425 = vmatpush.bf16.msra.mxu0 %v2401
      %2426 = vmatpush.bf16.msra.mxu0 %v2399
      %2427 = vmatpush.bf16.msra.mxu0 %v2397
      %2428 = vmatpush.bf16.msra.mxu0 %v2395
      %2429 = vmatpush.bf16.msra.mxu0 %v2393
      %2430 = vmatpush.bf16.msra.mxu0 %v2391
      %2431 = vmatmul.bf16.gmra.mxu0 %v2326
      %v2432 = vpop.f32.mrf.mxu0
      %v2433 = vadd.f32 0.0, %v2432
      %v2434 = vpop.f32.mrf.mxu0
      %v2435 = vadd.f32 0.0, %v2434
      %2436 = vdwg.mxu0
      %2437 = vmatpush.bf16.msra.mxu0 %v2406
      %2438 = vmatpush.bf16.msra.mxu0 %v2404
      %2439 = vmatpush.bf16.msra.mxu0 %v2402
      %2440 = vmatpush.bf16.msra.mxu0 %v2400
      %2441 = vmatpush.bf16.msra.mxu0 %v2398
      %2442 = vmatpush.bf16.msra.mxu0 %v2396
      %2443 = vmatpush.bf16.msra.mxu0 %v2394
      %2444 = vmatpush.bf16.msra.mxu0 %v2392
      %2445 = vmatmul.bf16.gmra.mxu0 %v2326
      %v2446 = vpop.f32.mrf.mxu0
      %v2447 = vadd.f32 0.0, %v2446
      %v2448 = vpop.f32.mrf.mxu0
      %v2449 = vadd.f32 0.0, %v2448
      %2450 = vdwg.mxu0
      %v2451 = vld [vmem:[%s1632] sm:$0xff]
      %v2452 = vld [vmem:[%s1632 + $0x8] sm:$0xff]
      %v2453 = vld [vmem:[%s1632 + $0x10] sm:$0xff]
      %v2454 = vld [vmem:[%s1632 + $0x18] sm:$0xff]
      %v2455 = vld [vmem:[%s1632 + $0x20] sm:$0xff]
      %v2456 = vld [vmem:[%s1632 + $0x28] sm:$0xff]
      %v2457 = vld [vmem:[%s1632 + $0x30] sm:$0xff]
      %v2458 = vld [vmem:[%s1632 + $0x38] sm:$0xff]
      %v2459 = vld [vmem:[%s1632 + $0x40] sm:$0xff]
      %v2460 = vld [vmem:[%s1632 + $0x48] sm:$0xff]
      %v2461 = vld [vmem:[%s1632 + $0x50] sm:$0xff]
      %v2462 = vld [vmem:[%s1632 + $0x58] sm:$0xff]
      %v2463 = vld [vmem:[%s1632 + $0x60] sm:$0xff]
      %v2464 = vld [vmem:[%s1632 + $0x68] sm:$0xff]
      %v2465 = vld [vmem:[%s1632 + $0x70] sm:$0xff]
      %v2466 = vld [vmem:[%s1632 + $0x78] sm:$0xff]
      %v2483 = vunpack.c.l.b16 %v2451
      %v2484 = vunpack.c.h.b16 %v2451
      %v2485 = vunpack.c.l.b16 %v2452
      %v2486 = vunpack.c.h.b16 %v2452
      %v2487 = vunpack.c.l.b16 %v2453
      %v2488 = vunpack.c.h.b16 %v2453
      %v2489 = vunpack.c.l.b16 %v2454
      %v2490 = vunpack.c.h.b16 %v2454
      %v2491 = vunpack.c.l.b16 %v2455
      %v2492 = vunpack.c.h.b16 %v2455
      %v2493 = vunpack.c.l.b16 %v2456
      %v2494 = vunpack.c.h.b16 %v2456
      %v2495 = vunpack.c.l.b16 %v2457
      %v2496 = vunpack.c.h.b16 %v2457
      %v2497 = vunpack.c.l.b16 %v2458
      %v2498 = vunpack.c.h.b16 %v2458
      %v2499 = vunpack.c.l.b16 %v2459
      %v2500 = vunpack.c.h.b16 %v2459
      %v2501 = vunpack.c.l.b16 %v2460
      %v2502 = vunpack.c.h.b16 %v2460
      %v2503 = vunpack.c.l.b16 %v2461
      %v2504 = vunpack.c.h.b16 %v2461
      %v2505 = vunpack.c.l.b16 %v2462
      %v2506 = vunpack.c.h.b16 %v2462
      %v2507 = vunpack.c.l.b16 %v2463
      %v2508 = vunpack.c.h.b16 %v2463
      %v2509 = vunpack.c.l.b16 %v2464
      %v2510 = vunpack.c.h.b16 %v2464
      %v2511 = vunpack.c.l.b16 %v2465
      %v2512 = vunpack.c.h.b16 %v2465
      %v2513 = vunpack.c.l.b16 %v2466
      %v2514 = vunpack.c.h.b16 %v2466
      %v2515 = vpack.c.b16 %v2485, %v2483
      %v2516 = vpack.c.b16 %v2486, %v2484
      %v2517 = vpack.c.b16 %v2489, %v2487
      %v2518 = vpack.c.b16 %v2490, %v2488
      %v2519 = vpack.c.b16 %v2493, %v2491
      %v2520 = vpack.c.b16 %v2494, %v2492
      %v2521 = vpack.c.b16 %v2497, %v2495
      %v2522 = vpack.c.b16 %v2498, %v2496
      %v2523 = vpack.c.b16 %v2501, %v2499
      %v2524 = vpack.c.b16 %v2502, %v2500
      %v2525 = vpack.c.b16 %v2505, %v2503
      %v2526 = vpack.c.b16 %v2506, %v2504
      %v2527 = vpack.c.b16 %v2509, %v2507
      %v2528 = vpack.c.b16 %v2510, %v2508
      %v2529 = vpack.c.b16 %v2513, %v2511
      %v2530 = vpack.c.b16 %v2514, %v2512
      %2547 = vmatpush.bf16.msra.mxu0 %v2529
      %2548 = vmatpush.bf16.msra.mxu0 %v2527
      %2549 = vmatpush.bf16.msra.mxu0 %v2525
      %2550 = vmatpush.bf16.msra.mxu0 %v2523
      %2551 = vmatpush.bf16.msra.mxu0 %v2521
      %2552 = vmatpush.bf16.msra.mxu0 %v2519
      %2553 = vmatpush.bf16.msra.mxu0 %v2517
      %2554 = vmatpush.bf16.msra.mxu0 %v2515
      %2555 = vmatmul.bf16.gmra.mxu0 %v2326
      %v2556 = vpop.f32.mrf.mxu0
      %v2557 = vadd.f32 0.0, %v2556
      %v2558 = vpop.f32.mrf.mxu0
      %v2559 = vadd.f32 0.0, %v2558
      %2560 = vdwg.mxu0
      %2561 = vmatpush.bf16.msra.mxu0 %v2530
      %2562 = vmatpush.bf16.msra.mxu0 %v2528
      %2563 = vmatpush.bf16.msra.mxu0 %v2526
      %2564 = vmatpush.bf16.msra.mxu0 %v2524
      %2565 = vmatpush.bf16.msra.mxu0 %v2522
      %2566 = vmatpush.bf16.msra.mxu0 %v2520
      %2567 = vmatpush.bf16.msra.mxu0 %v2518
      %2568 = vmatpush.bf16.msra.mxu0 %v2516
      %2569 = vmatmul.bf16.gmra.mxu0 %v2326
      %v2570 = vpop.f32.mrf.mxu0
      %v2571 = vadd.f32 0.0, %v2570
      %v2572 = vpop.f32.mrf.mxu0
      %v2573 = vadd.f32 0.0, %v2572
      %2574 = vdwg.mxu0
      %v2575 = vmax.f32 %v2433, %v2557
      %v2576 = vmax.f32 %v2447, %v2571
      %v2577 = vmax.f32 %v2435, %v2559
      %v2578 = vmax.f32 %v2449, %v2573
      %v2579 = vld [vmem:[%s1761] sm:$0xff]
      %v2580 = vld [vmem:[%s1761 + $0x8] sm:$0xff]
      %v2581 = vld [vmem:[%s1761 + $0x10] sm:$0xff]
      %v2582 = vld [vmem:[%s1761 + $0x18] sm:$0xff]
      %v2583 = vld [vmem:[%s1761 + $0x20] sm:$0xff]
      %v2584 = vld [vmem:[%s1761 + $0x28] sm:$0xff]
      %v2585 = vld [vmem:[%s1761 + $0x30] sm:$0xff]
      %v2586 = vld [vmem:[%s1761 + $0x38] sm:$0xff]
      %v2587 = vld [vmem:[%s1761 + $0x40] sm:$0xff]
      %v2588 = vld [vmem:[%s1761 + $0x48] sm:$0xff]
      %v2589 = vld [vmem:[%s1761 + $0x50] sm:$0xff]
      %v2590 = vld [vmem:[%s1761 + $0x58] sm:$0xff]
      %v2591 = vld [vmem:[%s1761 + $0x60] sm:$0xff]
      %v2592 = vld [vmem:[%s1761 + $0x68] sm:$0xff]
      %v2593 = vld [vmem:[%s1761 + $0x70] sm:$0xff]
      %v2594 = vld [vmem:[%s1761 + $0x78] sm:$0xff]
      %v2611 = vunpack.c.l.b16 %v2579
      %v2612 = vunpack.c.h.b16 %v2579
      %v2613 = vunpack.c.l.b16 %v2580
      %v2614 = vunpack.c.h.b16 %v2580
      %v2615 = vunpack.c.l.b16 %v2581
      %v2616 = vunpack.c.h.b16 %v2581
      %v2617 = vunpack.c.l.b16 %v2582
      %v2618 = vunpack.c.h.b16 %v2582
      %v2619 = vunpack.c.l.b16 %v2583
      %v2620 = vunpack.c.h.b16 %v2583
      %v2621 = vunpack.c.l.b16 %v2584
      %v2622 = vunpack.c.h.b16 %v2584
      %v2623 = vunpack.c.l.b16 %v2585
      %v2624 = vunpack.c.h.b16 %v2585
      %v2625 = vunpack.c.l.b16 %v2586
      %v2626 = vunpack.c.h.b16 %v2586
      %v2627 = vunpack.c.l.b16 %v2587
      %v2628 = vunpack.c.h.b16 %v2587
      %v2629 = vunpack.c.l.b16 %v2588
      %v2630 = vunpack.c.h.b16 %v2588
      %v2631 = vunpack.c.l.b16 %v2589
      %v2632 = vunpack.c.h.b16 %v2589
      %v2633 = vunpack.c.l.b16 %v2590
      %v2634 = vunpack.c.h.b16 %v2590
      %v2635 = vunpack.c.l.b16 %v2591
      %v2636 = vunpack.c.h.b16 %v2591
      %v2637 = vunpack.c.l.b16 %v2592
      %v2638 = vunpack.c.h.b16 %v2592
      %v2639 = vunpack.c.l.b16 %v2593
      %v2640 = vunpack.c.h.b16 %v2593
      %v2641 = vunpack.c.l.b16 %v2594
      %v2642 = vunpack.c.h.b16 %v2594
      %v2643 = vpack.c.b16 %v2613, %v2611
      %v2644 = vpack.c.b16 %v2614, %v2612
      %v2645 = vpack.c.b16 %v2617, %v2615
      %v2646 = vpack.c.b16 %v2618, %v2616
      %v2647 = vpack.c.b16 %v2621, %v2619
      %v2648 = vpack.c.b16 %v2622, %v2620
      %v2649 = vpack.c.b16 %v2625, %v2623
      %v2650 = vpack.c.b16 %v2626, %v2624
      %v2651 = vpack.c.b16 %v2629, %v2627
      %v2652 = vpack.c.b16 %v2630, %v2628
      %v2653 = vpack.c.b16 %v2633, %v2631
      %v2654 = vpack.c.b16 %v2634, %v2632
      %v2655 = vpack.c.b16 %v2637, %v2635
      %v2656 = vpack.c.b16 %v2638, %v2636
      %v2657 = vpack.c.b16 %v2641, %v2639
      %v2658 = vpack.c.b16 %v2642, %v2640
      %2675 = vmatpush.bf16.msra.mxu0 %v2657
      %2676 = vmatpush.bf16.msra.mxu0 %v2655
      %2677 = vmatpush.bf16.msra.mxu0 %v2653
      %2678 = vmatpush.bf16.msra.mxu0 %v2651
      %2679 = vmatpush.bf16.msra.mxu0 %v2649
      %2680 = vmatpush.bf16.msra.mxu0 %v2647
      %2681 = vmatpush.bf16.msra.mxu0 %v2645
      %2682 = vmatpush.bf16.msra.mxu0 %v2643
      %2683 = vmatmul.bf16.gmra.mxu0 %v2326
      %v2684 = vpop.f32.mrf.mxu0
      %v2685 = vadd.f32 0.0, %v2684
      %v2686 = vpop.f32.mrf.mxu0
      %v2687 = vadd.f32 0.0, %v2686
      %2688 = vdwg.mxu0
      %2689 = vmatpush.bf16.msra.mxu0 %v2658
      %2690 = vmatpush.bf16.msra.mxu0 %v2656
      %2691 = vmatpush.bf16.msra.mxu0 %v2654
      %2692 = vmatpush.bf16.msra.mxu0 %v2652
      %2693 = vmatpush.bf16.msra.mxu0 %v2650
      %2694 = vmatpush.bf16.msra.mxu0 %v2648
      %2695 = vmatpush.bf16.msra.mxu0 %v2646
      %2696 = vmatpush.bf16.msra.mxu0 %v2644
      %2697 = vmatmul.bf16.gmra.mxu0 %v2326
      %v2698 = vpop.f32.mrf.mxu0
      %v2699 = vadd.f32 0.0, %v2698
      %v2700 = vpop.f32.mrf.mxu0
      %v2701 = vadd.f32 0.0, %v2700
      %2702 = vdwg.mxu0
      %v2703 = vmax.f32 %v2575, %v2685
      %v2704 = vmax.f32 %v2576, %v2699
      %v2705 = vmax.f32 %v2577, %v2687
      %v2706 = vmax.f32 %v2578, %v2701
      %v2707 = vld [vmem:[%s1890] sm:$0xff]
      %v2708 = vld [vmem:[%s1890 + $0x8] sm:$0xff]
      %v2709 = vld [vmem:[%s1890 + $0x10] sm:$0xff]
      %v2710 = vld [vmem:[%s1890 + $0x18] sm:$0xff]
      %v2711 = vld [vmem:[%s1890 + $0x20] sm:$0xff]
      %v2712 = vld [vmem:[%s1890 + $0x28] sm:$0xff]
      %v2713 = vld [vmem:[%s1890 + $0x30] sm:$0xff]
      %v2714 = vld [vmem:[%s1890 + $0x38] sm:$0xff]
      %v2715 = vld [vmem:[%s1890 + $0x40] sm:$0xff]
      %v2716 = vld [vmem:[%s1890 + $0x48] sm:$0xff]
      %v2717 = vld [vmem:[%s1890 + $0x50] sm:$0xff]
      %v2718 = vld [vmem:[%s1890 + $0x58] sm:$0xff]
      %v2719 = vld [vmem:[%s1890 + $0x60] sm:$0xff]
      %v2720 = vld [vmem:[%s1890 + $0x68] sm:$0xff]
      %v2721 = vld [vmem:[%s1890 + $0x70] sm:$0xff]
      %v2722 = vld [vmem:[%s1890 + $0x78] sm:$0xff]
      %v2739 = vunpack.c.l.b16 %v2707
      %v2740 = vunpack.c.h.b16 %v2707
      %v2741 = vunpack.c.l.b16 %v2708
      %v2742 = vunpack.c.h.b16 %v2708
      %v2743 = vunpack.c.l.b16 %v2709
      %v2744 = vunpack.c.h.b16 %v2709
      %v2745 = vunpack.c.l.b16 %v2710
      %v2746 = vunpack.c.h.b16 %v2710
      %v2747 = vunpack.c.l.b16 %v2711
      %v2748 = vunpack.c.h.b16 %v2711
      %v2749 = vunpack.c.l.b16 %v2712
      %v2750 = vunpack.c.h.b16 %v2712
      %v2751 = vunpack.c.l.b16 %v2713
      %v2752 = vunpack.c.h.b16 %v2713
      %v2753 = vunpack.c.l.b16 %v2714
      %v2754 = vunpack.c.h.b16 %v2714
      %v2755 = vunpack.c.l.b16 %v2715
      %v2756 = vunpack.c.h.b16 %v2715
      %v2757 = vunpack.c.l.b16 %v2716
      %v2758 = vunpack.c.h.b16 %v2716
      %v2759 = vunpack.c.l.b16 %v2717
      %v2760 = vunpack.c.h.b16 %v2717
      %v2761 = vunpack.c.l.b16 %v2718
      %v2762 = vunpack.c.h.b16 %v2718
      %v2763 = vunpack.c.l.b16 %v2719
      %v2764 = vunpack.c.h.b16 %v2719
      %v2765 = vunpack.c.l.b16 %v2720
      %v2766 = vunpack.c.h.b16 %v2720
      %v2767 = vunpack.c.l.b16 %v2721
      %v2768 = vunpack.c.h.b16 %v2721
      %v2769 = vunpack.c.l.b16 %v2722
      %v2770 = vunpack.c.h.b16 %v2722
      %v2771 = vpack.c.b16 %v2741, %v2739
      %v2772 = vpack.c.b16 %v2742, %v2740
      %v2773 = vpack.c.b16 %v2745, %v2743
      %v2774 = vpack.c.b16 %v2746, %v2744
      %v2775 = vpack.c.b16 %v2749, %v2747
      %v2776 = vpack.c.b16 %v2750, %v2748
      %v2777 = vpack.c.b16 %v2753, %v2751
      %v2778 = vpack.c.b16 %v2754, %v2752
      %v2779 = vpack.c.b16 %v2757, %v2755
      %v2780 = vpack.c.b16 %v2758, %v2756
      %v2781 = vpack.c.b16 %v2761, %v2759
      %v2782 = vpack.c.b16 %v2762, %v2760
      %v2783 = vpack.c.b16 %v2765, %v2763
      %v2784 = vpack.c.b16 %v2766, %v2764
      %v2785 = vpack.c.b16 %v2769, %v2767
      %v2786 = vpack.c.b16 %v2770, %v2768
      %2803 = vmatpush.bf16.msra.mxu0 %v2785
      %2804 = vmatpush.bf16.msra.mxu0 %v2783
      %2805 = vmatpush.bf16.msra.mxu0 %v2781
      %2806 = vmatpush.bf16.msra.mxu0 %v2779
      %2807 = vmatpush.bf16.msra.mxu0 %v2777
      %2808 = vmatpush.bf16.msra.mxu0 %v2775
      %2809 = vmatpush.bf16.msra.mxu0 %v2773
      %2810 = vmatpush.bf16.msra.mxu0 %v2771
      %2811 = vmatmul.bf16.gmra.mxu0 %v2326
      %v2812 = vpop.f32.mrf.mxu0
      %v2813 = vadd.f32 0.0, %v2812
      %v2814 = vpop.f32.mrf.mxu0
      %v2815 = vadd.f32 0.0, %v2814
      %2816 = vdwg.mxu0
      %2817 = vmatpush.bf16.msra.mxu0 %v2786
      %2818 = vmatpush.bf16.msra.mxu0 %v2784
      %2819 = vmatpush.bf16.msra.mxu0 %v2782
      %2820 = vmatpush.bf16.msra.mxu0 %v2780
      %2821 = vmatpush.bf16.msra.mxu0 %v2778
      %2822 = vmatpush.bf16.msra.mxu0 %v2776
      %2823 = vmatpush.bf16.msra.mxu0 %v2774
      %2824 = vmatpush.bf16.msra.mxu0 %v2772
      %2825 = vmatmul.bf16.gmra.mxu0 %v2326
      %v2826 = vpop.f32.mrf.mxu0
      %v2827 = vadd.f32 0.0, %v2826
      %v2828 = vpop.f32.mrf.mxu0
      %v2829 = vadd.f32 0.0, %v2828
      %2830 = vdwg.mxu0
      %v2831 = vmax.f32 %v2703, %v2813
      %v2832 = vmax.f32 %v2704, %v2827
      %v2833 = vmax.f32 %v2705, %v2815
      %v2834 = vmax.f32 %v2706, %v2829
      %v2835 = vpack.c.bf16 %v2832, %v2831
      %v2836 = vpack.c.bf16 %v2834, %v2833
      %s2837 = scalar_lea.vmem %s332, 32
      %2838 = vst [vmem:[%s2837] sm:$0xff] %v2835
      %2839 = vst [vmem:[%s2837 + $0x8] sm:$0xff] %v2836
      %s2840 = scalar_lea.vmem [#allocation3], 128
      %v2841 = vld [vmem:[%s2840] sm:$0xff]
      %v2842 = vld [vmem:[%s2840 + $0x8] sm:$0xff]
      %s2843 = scalar_lea.vmem [#allocation3], 144
      %v2844 = vld [vmem:[%s2843] sm:$0xff]
      %v2845 = vld [vmem:[%s2843 + $0x8] sm:$0xff]
      %s2846 = scalar_lea.vmem [#allocation3], 160
      %v2847 = vld [vmem:[%s2846] sm:$0xff]
      %v2848 = vld [vmem:[%s2846 + $0x8] sm:$0xff]
      %v2851 = vunpack.c.l.b16 %v2841
      %v2852 = vunpack.c.l.b16 %v2842
      %v2853 = vpack.c.b16 %v2852, %v2851
      %v2855 = vunpack.c.h.b16 %v2841
      %v2856 = vunpack.c.h.b16 %v2842
      %v2857 = vpack.c.b16 %v2856, %v2855
      %2858 = vrot.lane.b32.xlu0 %v2853, 127
      %v2859 = vpop.permute.xlu0 %2858
      %2860 = vrot.lane.b32.xlu0 %v2857, 127
      %v2861 = vpop.permute.xlu0 %2860
      %v2862 = vsel %vm1179, %v2859, %v2861
      %2864 = vrot.lane.b32.xlu0 %v2853, 126
      %v2865 = vpop.permute.xlu0 %2864
      %2866 = vrot.lane.b32.xlu0 %v2857, 126
      %v2867 = vpop.permute.xlu0 %2866
      %v2868 = vsel %vm1186, %v2865, %v2867
      %2870 = vrot.lane.b32.xlu0 %v2853, 117
      %v2871 = vpop.permute.xlu0 %2870
      %2872 = vrot.lane.b32.xlu0 %v2857, 117
      %v2873 = vpop.permute.xlu0 %2872
      %v2874 = vsel %vm1193, %v2871, %v2873
      %2876 = vrot.lane.b32.xlu0 %v2853, 116
      %v2877 = vpop.permute.xlu0 %2876
      %2878 = vrot.lane.b32.xlu0 %v2857, 116
      %v2879 = vpop.permute.xlu0 %2878
      %v2880 = vsel %vm1200, %v2877, %v2879
      %2882 = vrot.lane.b32.xlu0 %v2853, 115
      %v2883 = vpop.permute.xlu0 %2882
      %2884 = vrot.lane.b32.xlu0 %v2857, 115
      %v2885 = vpop.permute.xlu0 %2884
      %v2886 = vsel %vm1207, %v2883, %v2885
      %2888 = vrot.lane.b32.xlu0 %v2853, 106
      %v2889 = vpop.permute.xlu0 %2888
      %2890 = vrot.lane.b32.xlu0 %v2857, 106
      %v2891 = vpop.permute.xlu0 %2890
      %v2892 = vsel %vm1214, %v2889, %v2891
      %2894 = vrot.lane.b32.xlu0 %v2853, 105
      %v2895 = vpop.permute.xlu0 %2894
      %2896 = vrot.lane.b32.xlu0 %v2857, 105
      %v2897 = vpop.permute.xlu0 %2896
      %v2898 = vsel %vm1221, %v2895, %v2897
      %2900 = vrot.lane.b32.xlu0 %v2853, 104
      %v2901 = vpop.permute.xlu0 %2900
      %2902 = vrot.lane.b32.xlu0 %v2857, 104
      %v2903 = vpop.permute.xlu0 %2902
      %v2904 = vsel %vm1228, %v2901, %v2903
      %v2908 = vunpack.c.l.b16 %v2844
      %v2909 = vunpack.c.l.b16 %v2845
      %v2910 = vpack.c.b16 %v2909, %v2908
      %v2912 = vunpack.c.h.b16 %v2844
      %v2913 = vunpack.c.h.b16 %v2845
      %v2914 = vpack.c.b16 %v2913, %v2912
      %2915 = vrot.lane.b32.xlu0 %v2910, 127
      %v2916 = vpop.permute.xlu0 %2915
      %2917 = vrot.lane.b32.xlu0 %v2914, 127
      %v2918 = vpop.permute.xlu0 %2917
      %v2919 = vsel %vm1179, %v2916, %v2918
      %2921 = vrot.lane.b32.xlu0 %v2910, 126
      %v2922 = vpop.permute.xlu0 %2921
      %2923 = vrot.lane.b32.xlu0 %v2914, 126
      %v2924 = vpop.permute.xlu0 %2923
      %v2925 = vsel %vm1186, %v2922, %v2924
      %2927 = vrot.lane.b32.xlu0 %v2910, 117
      %v2928 = vpop.permute.xlu0 %2927
      %2929 = vrot.lane.b32.xlu0 %v2914, 117
      %v2930 = vpop.permute.xlu0 %2929
      %v2931 = vsel %vm1193, %v2928, %v2930
      %2933 = vrot.lane.b32.xlu0 %v2910, 116
      %v2934 = vpop.permute.xlu0 %2933
      %2935 = vrot.lane.b32.xlu0 %v2914, 116
      %v2936 = vpop.permute.xlu0 %2935
      %v2937 = vsel %vm1200, %v2934, %v2936
      %2939 = vrot.lane.b32.xlu0 %v2910, 115
      %v2940 = vpop.permute.xlu0 %2939
      %2941 = vrot.lane.b32.xlu0 %v2914, 115
      %v2942 = vpop.permute.xlu0 %2941
      %v2943 = vsel %vm1207, %v2940, %v2942
      %2945 = vrot.lane.b32.xlu0 %v2910, 106
      %v2946 = vpop.permute.xlu0 %2945
      %2947 = vrot.lane.b32.xlu0 %v2914, 106
      %v2948 = vpop.permute.xlu0 %2947
      %v2949 = vsel %vm1214, %v2946, %v2948
      %v2953 = vunpack.c.l.b16 %v2847
      %v2954 = vunpack.c.l.b16 %v2848
      %v2955 = vpack.c.b16 %v2954, %v2953
      %2956 = vrot.lane.b32.xlu0 %v2955, 23
      %v2957 = vpop.permute.xlu0 %2956
      %v2958 = vunpack.c.h.b16 %v2847
      %v2959 = vunpack.c.h.b16 %v2848
      %v2960 = vpack.c.b16 %v2959, %v2958
      %2961 = vrot.lane.b32.xlu0 %v2955, 22
      %v2962 = vpop.permute.xlu0 %2961
      %2963 = vrot.lane.b32.xlu0 %v2960, 22
      %v2964 = vpop.permute.xlu0 %2963
      %v2965 = vsel %vm1290, %v2962, %v2964
      %2966 = vrot.lane.b32.xlu0 %v2955, 21
      %v2967 = vpop.permute.xlu0 %2966
      %2968 = vrot.lane.b32.xlu0 %v2960, 21
      %v2969 = vpop.permute.xlu0 %2968
      %v2970 = vsel %vm1296, %v2967, %v2969
      %2971 = vrot.lane.b32.xlu0 %v2955, 12
      %v2972 = vpop.permute.xlu0 %2971
      %2973 = vrot.lane.b32.xlu0 %v2960, 12
      %v2974 = vpop.permute.xlu0 %2973
      %v2975 = vsel %vm1302, %v2972, %v2974
      %2976 = vrot.lane.b32.xlu0 %v2955, 11
      %v2977 = vpop.permute.xlu0 %2976
      %2978 = vrot.lane.b32.xlu0 %v2960, 11
      %v2979 = vpop.permute.xlu0 %2978
      %v2980 = vsel %vm1308, %v2977, %v2979
      %2981 = vrot.lane.b32.xlu0 %v2955, 10
      %v2982 = vpop.permute.xlu0 %2981
      %2983 = vrot.lane.b32.xlu0 %v2960, 10
      %v2984 = vpop.permute.xlu0 %2983
      %v2985 = vsel %vm1314, %v2982, %v2984
      %2986 = vrot.lane.b32.xlu0 %v2955, 1
      %v2987 = vpop.permute.xlu0 %2986
      %2988 = vrot.lane.b32.xlu0 %v2960, 1
      %v2989 = vpop.permute.xlu0 %2988
      %v2990 = vsel %vm1320, %v2987, %v2989
      %2991 = vrot.lane.b32.xlu0 %v2955, 127
      %v2992 = vpop.permute.xlu0 %2991
      %2993 = vrot.lane.b32.xlu0 %v2960, 127
      %v2994 = vpop.permute.xlu0 %2993
      %v2995 = vsel %vm1179, %v2992, %v2994
      %2996 = vrot.lane.b32.xlu0 %v2910, 105
      %v2997 = vpop.permute.xlu0 %2996
      %2998 = vrot.lane.b32.xlu0 %v2914, 105
      %v2999 = vpop.permute.xlu0 %2998
      %3000 = vrot.lane.b32.xlu0 %v2919, 105
      %v3001 = vpop.permute.xlu0 %3000
      %3002 = vrot.lane.b32.xlu0 %v2918, 105
      %v3003 = vpop.permute.xlu0 %3002
      %3004 = vrot.lane.b32.xlu0 %v2957, 105
      %v3005 = vpop.permute.xlu0 %3004
      %3006 = vrot.lane.b32.xlu0 %v2962, 105
      %v3007 = vpop.permute.xlu0 %3006
      %3008 = vrot.lane.b32.xlu0 %v2965, 105
      %v3009 = vpop.permute.xlu0 %3008
      %3010 = vrot.lane.b32.xlu0 %v2967, 105
      %v3011 = vpop.permute.xlu0 %3010
      %3012 = vrot.lane.b32.xlu0 %v2970, 105
      %v3013 = vpop.permute.xlu0 %3012
      %3014 = vrot.lane.b32.xlu0 %v2972, 105
      %v3015 = vpop.permute.xlu0 %3014
      %3016 = vrot.lane.b32.xlu0 %v2975, 105
      %v3017 = vpop.permute.xlu0 %3016
      %3018 = vrot.lane.b32.xlu0 %v2977, 105
      %v3019 = vpop.permute.xlu0 %3018
      %3020 = vrot.lane.b32.xlu0 %v2980, 105
      %v3021 = vpop.permute.xlu0 %3020
      %3022 = vrot.lane.b32.xlu0 %v2982, 105
      %v3023 = vpop.permute.xlu0 %3022
      %3024 = vrot.lane.b32.xlu0 %v2985, 105
      %v3025 = vpop.permute.xlu0 %3024
      %3026 = vrot.lane.b32.xlu0 %v2987, 105
      %v3027 = vpop.permute.xlu0 %3026
      %3028 = vrot.lane.b32.xlu0 %v2990, 105
      %v3029 = vpop.permute.xlu0 %3028
      %3030 = vrot.lane.b32.xlu0 %v2955, 105
      %v3031 = vpop.permute.xlu0 %3030
      %3032 = vrot.lane.b32.xlu0 %v2960, 105
      %v3033 = vpop.permute.xlu0 %3032
      %3034 = vrot.lane.b32.xlu0 %v2995, 105
      %v3035 = vpop.permute.xlu0 %3034
      %3036 = vrot.lane.b32.xlu0 %v2994, 105
      %v3037 = vpop.permute.xlu0 %3036
      %v3038 = vsel %vm1221, %v2997, %v2999
      %v3039 = vsel %vm1221, %v3001, %v3003
      %v3040 = vsel %vm1221, %v3007, %v3009
      %v3041 = vsel %vm1221, %v3011, %v3013
      %v3042 = vsel %vm1221, %v3015, %v3017
      %v3043 = vsel %vm1221, %v3019, %v3021
      %v3044 = vsel %vm1221, %v3023, %v3025
      %v3045 = vsel %vm1221, %v3027, %v3029
      %v3046 = vsel %vm1221, %v3031, %v3033
      %v3047 = vsel %vm1221, %v3035, %v3037
      %3059 = vmatpush.bf16.msra.mxu0 %v2898
      %3060 = vmatpush.bf16.msra.mxu0 %v2892
      %3061 = vmatpush.bf16.msra.mxu0 %v2886
      %3062 = vmatpush.bf16.msra.mxu0 %v2880
      %3063 = vmatpush.bf16.msra.mxu0 %v2874
      %3064 = vmatpush.bf16.msra.mxu0 %v2868
      %3065 = vmatpush.bf16.msra.mxu0 %v2862
      %3066 = vmatpush.bf16.msra.mxu0 %v2853
      %3067 = vmatmul.bf16.gmra.mxu0 %v1412
      %v3068 = vpop.f32.mrf.mxu0
      %v3069 = vadd.f32 %v1393, %v3068
      %v3070 = vpop.f32.mrf.mxu0
      %v3071 = vadd.f32 %v1398, %v3070
      %3072 = vdwg.mxu0
      %3073 = vmatpush.bf16.msra.mxu0 %v2949
      %3074 = vmatpush.bf16.msra.mxu0 %v2943
      %3075 = vmatpush.bf16.msra.mxu0 %v2937
      %3076 = vmatpush.bf16.msra.mxu0 %v2931
      %3077 = vmatpush.bf16.msra.mxu0 %v2925
      %3078 = vmatpush.bf16.msra.mxu0 %v2919
      %3079 = vmatpush.bf16.msra.mxu0 %v2910
      %3080 = vmatpush.bf16.msra.mxu0 %v2904
      %3081 = vmatmul.bf16.gmra.mxu0 %v1413
      %v3082 = vpop.f32.mrf.mxu0
      %v3083 = vadd.f32 %v3069, %v3082
      %v3084 = vpop.f32.mrf.mxu0
      %v3085 = vadd.f32 %v3071, %v3084
      %3086 = vdwg.mxu0
      %3087 = vmatpush.bf16.msra.mxu0 %v3044
      %3088 = vmatpush.bf16.msra.mxu0 %v3043
      %3089 = vmatpush.bf16.msra.mxu0 %v3042
      %3090 = vmatpush.bf16.msra.mxu0 %v3041
      %3091 = vmatpush.bf16.msra.mxu0 %v3040
      %3092 = vmatpush.bf16.msra.mxu0 %v3005
      %3093 = vmatpush.bf16.msra.mxu0 %v3039
      %3094 = vmatpush.bf16.msra.mxu0 %v3038
      %3095 = vmatmul.bf16.gmra.mxu0 %v1414
      %v3096 = vpop.f32.mrf.mxu0
      %v3097 = vadd.f32 %v3083, %v3096
      %v3098 = vpop.f32.mrf.mxu0
      %v3099 = vadd.f32 %v3085, %v3098
      %3100 = vdwg.mxu0
      %3101 = vmatpush.bf16.msra.mxu0 0
      %3102 = vmatpush.bf16.msra.mxu0 0
      %3103 = vmatpush.bf16.msra.mxu0 0
      %3104 = vmatpush.bf16.msra.mxu0 0
      %3105 = vmatpush.bf16.msra.mxu0 0
      %3106 = vmatpush.bf16.msra.mxu0 %v3047
      %3107 = vmatpush.bf16.msra.mxu0 %v3046
      %3108 = vmatpush.bf16.msra.mxu0 %v3045
      %3109 = vmatmul.bf16.gmra.mxu0 %v1421
      %v3110 = vpop.f32.mrf.mxu0
      %v3111 = vadd.f32 %v3097, %v3110
      %v3112 = vpop.f32.mrf.mxu0
      %v3113 = vadd.f32 %v3099, %v3112
      %3114 = vdwg.mxu0
      %s3115 = scalar_lea.vmem [#allocation2], 144
      %v3116 = vld [vmem:[%s3115] sm:$0xff]
      %v3117 = vld [vmem:[%s3115 + $0x8] sm:$0xff]
      %v3118 = vunpack.c.l.bf16 %v3116
      %v3119 = vunpack.c.h.bf16 %v3116
      %v3120 = vunpack.c.l.bf16 %v3117
      %v3121 = vunpack.c.h.bf16 %v3117
      %3126 = vrot.lane.b32.xlu0 %v3118, 116
      %v3127 = vpop.permute.xlu0 %3126
      %3128 = vrot.lane.b32.xlu0 %v3119, 116
      %v3129 = vpop.permute.xlu0 %3128
      %3130 = vrot.lane.b32.xlu0 %v3120, 116
      %v3131 = vpop.permute.xlu0 %3130
      %3132 = vrot.lane.b32.xlu0 %v3121, 116
      %v3133 = vpop.permute.xlu0 %3132
      %v3134 = vsel %vm1498, %v3127, %v3129
      %v3135 = vsel %vm1498, %v3131, %v3133
      %v3138 = vadd.f32 %v3111, %v3134
      %v3139 = vadd.f32 %v3113, %v3135
      %v3140 = vmax.f32 %v3138, 0.0
      %v3141 = vmax.f32 %v3139, 0.0
      %v3142 = vpack.c.bf16 %v3141, %v3140
      %v3143 = vld [vmem:[%s7] sm:$0xff]
      %v3144 = vld [vmem:[%s7 + $0x8] sm:$0xff]
      %v3145 = vld [vmem:[%s7 + $0x10] sm:$0xff]
      %v3146 = vld [vmem:[%s7 + $0x18] sm:$0xff]
      %v3147 = vld [vmem:[%s7 + $0x20] sm:$0xff]
      %v3148 = vld [vmem:[%s7 + $0x28] sm:$0xff]
      %v3149 = vld [vmem:[%s7 + $0x30] sm:$0xff]
      %v3150 = vld [vmem:[%s7 + $0x38] sm:$0xff]
      %v3151 = vld [vmem:[%s7 + $0x40] sm:$0xff]
      %v3152 = vld [vmem:[%s7 + $0x48] sm:$0xff]
      %v3153 = vld [vmem:[%s7 + $0x50] sm:$0xff]
      %v3154 = vld [vmem:[%s7 + $0x58] sm:$0xff]
      %v3155 = vld [vmem:[%s7 + $0x60] sm:$0xff]
      %v3156 = vld [vmem:[%s7 + $0x68] sm:$0xff]
      %v3157 = vld [vmem:[%s7 + $0x70] sm:$0xff]
      %v3158 = vld [vmem:[%s7 + $0x78] sm:$0xff]
      %v3175 = vunpack.c.l.b16 %v3143
      %v3176 = vunpack.c.h.b16 %v3143
      %v3177 = vunpack.c.l.b16 %v3144
      %v3178 = vunpack.c.h.b16 %v3144
      %v3179 = vunpack.c.l.b16 %v3145
      %v3180 = vunpack.c.h.b16 %v3145
      %v3181 = vunpack.c.l.b16 %v3146
      %v3182 = vunpack.c.h.b16 %v3146
      %v3183 = vunpack.c.l.b16 %v3147
      %v3184 = vunpack.c.h.b16 %v3147
      %v3185 = vunpack.c.l.b16 %v3148
      %v3186 = vunpack.c.h.b16 %v3148
      %v3187 = vunpack.c.l.b16 %v3149
      %v3188 = vunpack.c.h.b16 %v3149
      %v3189 = vunpack.c.l.b16 %v3150
      %v3190 = vunpack.c.h.b16 %v3150
      %v3191 = vunpack.c.l.b16 %v3151
      %v3192 = vunpack.c.h.b16 %v3151
      %v3193 = vunpack.c.l.b16 %v3152
      %v3194 = vunpack.c.h.b16 %v3152
      %v3195 = vunpack.c.l.b16 %v3153
      %v3196 = vunpack.c.h.b16 %v3153
      %v3197 = vunpack.c.l.b16 %v3154
      %v3198 = vunpack.c.h.b16 %v3154
      %v3199 = vunpack.c.l.b16 %v3155
      %v3200 = vunpack.c.h.b16 %v3155
      %v3201 = vunpack.c.l.b16 %v3156
      %v3202 = vunpack.c.h.b16 %v3156
      %v3203 = vunpack.c.l.b16 %v3157
      %v3204 = vunpack.c.h.b16 %v3157
      %v3205 = vunpack.c.l.b16 %v3158
      %v3206 = vunpack.c.h.b16 %v3158
      %v3207 = vpack.c.b16 %v3177, %v3175
      %v3208 = vpack.c.b16 %v3178, %v3176
      %v3209 = vpack.c.b16 %v3181, %v3179
      %v3210 = vpack.c.b16 %v3182, %v3180
      %v3211 = vpack.c.b16 %v3185, %v3183
      %v3212 = vpack.c.b16 %v3186, %v3184
      %v3213 = vpack.c.b16 %v3189, %v3187
      %v3214 = vpack.c.b16 %v3190, %v3188
      %v3215 = vpack.c.b16 %v3193, %v3191
      %v3216 = vpack.c.b16 %v3194, %v3192
      %v3217 = vpack.c.b16 %v3197, %v3195
      %v3218 = vpack.c.b16 %v3198, %v3196
      %v3219 = vpack.c.b16 %v3201, %v3199
      %v3220 = vpack.c.b16 %v3202, %v3200
      %v3221 = vpack.c.b16 %v3205, %v3203
      %v3222 = vpack.c.b16 %v3206, %v3204
      %3239 = vmatpush.bf16.msra.mxu0 %v3221
      %3240 = vmatpush.bf16.msra.mxu0 %v3219
      %3241 = vmatpush.bf16.msra.mxu0 %v3217
      %3242 = vmatpush.bf16.msra.mxu0 %v3215
      %3243 = vmatpush.bf16.msra.mxu0 %v3213
      %3244 = vmatpush.bf16.msra.mxu0 %v3211
      %3245 = vmatpush.bf16.msra.mxu0 %v3209
      %3246 = vmatpush.bf16.msra.mxu0 %v3207
      %3247 = vmatmul.bf16.gmra.mxu0 %v3142
      %v3248 = vpop.f32.mrf.mxu0
      %v3249 = vadd.f32 0.0, %v3248
      %v3250 = vpop.f32.mrf.mxu0
      %v3251 = vadd.f32 0.0, %v3250
      %3252 = vdwg.mxu0
      %3253 = vmatpush.bf16.msra.mxu0 %v3222
      %3254 = vmatpush.bf16.msra.mxu0 %v3220
      %3255 = vmatpush.bf16.msra.mxu0 %v3218
      %3256 = vmatpush.bf16.msra.mxu0 %v3216
      %3257 = vmatpush.bf16.msra.mxu0 %v3214
      %3258 = vmatpush.bf16.msra.mxu0 %v3212
      %3259 = vmatpush.bf16.msra.mxu0 %v3210
      %3260 = vmatpush.bf16.msra.mxu0 %v3208
      %3261 = vmatmul.bf16.gmra.mxu0 %v3142
      %v3262 = vpop.f32.mrf.mxu0
      %v3263 = vadd.f32 0.0, %v3262
      %v3264 = vpop.f32.mrf.mxu0
      %v3265 = vadd.f32 0.0, %v3264
      %3266 = vdwg.mxu0
      %v3267 = vld [vmem:[%s1632] sm:$0xff]
      %v3268 = vld [vmem:[%s1632 + $0x8] sm:$0xff]
      %v3269 = vld [vmem:[%s1632 + $0x10] sm:$0xff]
      %v3270 = vld [vmem:[%s1632 + $0x18] sm:$0xff]
      %v3271 = vld [vmem:[%s1632 + $0x20] sm:$0xff]
      %v3272 = vld [vmem:[%s1632 + $0x28] sm:$0xff]
      %v3273 = vld [vmem:[%s1632 + $0x30] sm:$0xff]
      %v3274 = vld [vmem:[%s1632 + $0x38] sm:$0xff]
      %v3275 = vld [vmem:[%s1632 + $0x40] sm:$0xff]
      %v3276 = vld [vmem:[%s1632 + $0x48] sm:$0xff]
      %v3277 = vld [vmem:[%s1632 + $0x50] sm:$0xff]
      %v3278 = vld [vmem:[%s1632 + $0x58] sm:$0xff]
      %v3279 = vld [vmem:[%s1632 + $0x60] sm:$0xff]
      %v3280 = vld [vmem:[%s1632 + $0x68] sm:$0xff]
      %v3281 = vld [vmem:[%s1632 + $0x70] sm:$0xff]
      %v3282 = vld [vmem:[%s1632 + $0x78] sm:$0xff]
      %v3299 = vunpack.c.l.b16 %v3267
      %v3300 = vunpack.c.h.b16 %v3267
      %v3301 = vunpack.c.l.b16 %v3268
      %v3302 = vunpack.c.h.b16 %v3268
      %v3303 = vunpack.c.l.b16 %v3269
      %v3304 = vunpack.c.h.b16 %v3269
      %v3305 = vunpack.c.l.b16 %v3270
      %v3306 = vunpack.c.h.b16 %v3270
      %v3307 = vunpack.c.l.b16 %v3271
      %v3308 = vunpack.c.h.b16 %v3271
      %v3309 = vunpack.c.l.b16 %v3272
      %v3310 = vunpack.c.h.b16 %v3272
      %v3311 = vunpack.c.l.b16 %v3273
      %v3312 = vunpack.c.h.b16 %v3273
      %v3313 = vunpack.c.l.b16 %v3274
      %v3314 = vunpack.c.h.b16 %v3274
      %v3315 = vunpack.c.l.b16 %v3275
      %v3316 = vunpack.c.h.b16 %v3275
      %v3317 = vunpack.c.l.b16 %v3276
      %v3318 = vunpack.c.h.b16 %v3276
      %v3319 = vunpack.c.l.b16 %v3277
      %v3320 = vunpack.c.h.b16 %v3277
      %v3321 = vunpack.c.l.b16 %v3278
      %v3322 = vunpack.c.h.b16 %v3278
      %v3323 = vunpack.c.l.b16 %v3279
      %v3324 = vunpack.c.h.b16 %v3279
      %v3325 = vunpack.c.l.b16 %v3280
      %v3326 = vunpack.c.h.b16 %v3280
      %v3327 = vunpack.c.l.b16 %v3281
      %v3328 = vunpack.c.h.b16 %v3281
      %v3329 = vunpack.c.l.b16 %v3282
      %v3330 = vunpack.c.h.b16 %v3282
      %v3331 = vpack.c.b16 %v3301, %v3299
      %v3332 = vpack.c.b16 %v3302, %v3300
      %v3333 = vpack.c.b16 %v3305, %v3303
      %v3334 = vpack.c.b16 %v3306, %v3304
      %v3335 = vpack.c.b16 %v3309, %v3307
      %v3336 = vpack.c.b16 %v3310, %v3308
      %v3337 = vpack.c.b16 %v3313, %v3311
      %v3338 = vpack.c.b16 %v3314, %v3312
      %v3339 = vpack.c.b16 %v3317, %v3315
      %v3340 = vpack.c.b16 %v3318, %v3316
      %v3341 = vpack.c.b16 %v3321, %v3319
      %v3342 = vpack.c.b16 %v3322, %v3320
      %v3343 = vpack.c.b16 %v3325, %v3323
      %v3344 = vpack.c.b16 %v3326, %v3324
      %v3345 = vpack.c.b16 %v3329, %v3327
      %v3346 = vpack.c.b16 %v3330, %v3328
      %3363 = vmatpush.bf16.msra.mxu0 %v3345
      %3364 = vmatpush.bf16.msra.mxu0 %v3343
      %3365 = vmatpush.bf16.msra.mxu0 %v3341
      %3366 = vmatpush.bf16.msra.mxu0 %v3339
      %3367 = vmatpush.bf16.msra.mxu0 %v3337
      %3368 = vmatpush.bf16.msra.mxu0 %v3335
      %3369 = vmatpush.bf16.msra.mxu0 %v3333
      %3370 = vmatpush.bf16.msra.mxu0 %v3331
      %3371 = vmatmul.bf16.gmra.mxu0 %v3142
      %v3372 = vpop.f32.mrf.mxu0
      %v3373 = vadd.f32 0.0, %v3372
      %v3374 = vpop.f32.mrf.mxu0
      %v3375 = vadd.f32 0.0, %v3374
      %3376 = vdwg.mxu0
      %3377 = vmatpush.bf16.msra.mxu0 %v3346
      %3378 = vmatpush.bf16.msra.mxu0 %v3344
      %3379 = vmatpush.bf16.msra.mxu0 %v3342
      %3380 = vmatpush.bf16.msra.mxu0 %v3340
      %3381 = vmatpush.bf16.msra.mxu0 %v3338
      %3382 = vmatpush.bf16.msra.mxu0 %v3336
      %3383 = vmatpush.bf16.msra.mxu0 %v3334
      %3384 = vmatpush.bf16.msra.mxu0 %v3332
      %3385 = vmatmul.bf16.gmra.mxu0 %v3142
      %v3386 = vpop.f32.mrf.mxu0
      %v3387 = vadd.f32 0.0, %v3386
      %v3388 = vpop.f32.mrf.mxu0
      %v3389 = vadd.f32 0.0, %v3388
      %3390 = vdwg.mxu0
      %v3391 = vmax.f32 %v3249, %v3373
      %v3392 = vmax.f32 %v3263, %v3387
      %v3393 = vmax.f32 %v3251, %v3375
      %v3394 = vmax.f32 %v3265, %v3389
      %v3395 = vld [vmem:[%s1761] sm:$0xff]
      %v3396 = vld [vmem:[%s1761 + $0x8] sm:$0xff]
      %v3397 = vld [vmem:[%s1761 + $0x10] sm:$0xff]
      %v3398 = vld [vmem:[%s1761 + $0x18] sm:$0xff]
      %v3399 = vld [vmem:[%s1761 + $0x20] sm:$0xff]
      %v3400 = vld [vmem:[%s1761 + $0x28] sm:$0xff]
      %v3401 = vld [vmem:[%s1761 + $0x30] sm:$0xff]
      %v3402 = vld [vmem:[%s1761 + $0x38] sm:$0xff]
      %v3403 = vld [vmem:[%s1761 + $0x40] sm:$0xff]
      %v3404 = vld [vmem:[%s1761 + $0x48] sm:$0xff]
      %v3405 = vld [vmem:[%s1761 + $0x50] sm:$0xff]
      %v3406 = vld [vmem:[%s1761 + $0x58] sm:$0xff]
      %v3407 = vld [vmem:[%s1761 + $0x60] sm:$0xff]
      %v3408 = vld [vmem:[%s1761 + $0x68] sm:$0xff]
      %v3409 = vld [vmem:[%s1761 + $0x70] sm:$0xff]
      %v3410 = vld [vmem:[%s1761 + $0x78] sm:$0xff]
      %v3427 = vunpack.c.l.b16 %v3395
      %v3428 = vunpack.c.h.b16 %v3395
      %v3429 = vunpack.c.l.b16 %v3396
      %v3430 = vunpack.c.h.b16 %v3396
      %v3431 = vunpack.c.l.b16 %v3397
      %v3432 = vunpack.c.h.b16 %v3397
      %v3433 = vunpack.c.l.b16 %v3398
      %v3434 = vunpack.c.h.b16 %v3398
      %v3435 = vunpack.c.l.b16 %v3399
      %v3436 = vunpack.c.h.b16 %v3399
      %v3437 = vunpack.c.l.b16 %v3400
      %v3438 = vunpack.c.h.b16 %v3400
      %v3439 = vunpack.c.l.b16 %v3401
      %v3440 = vunpack.c.h.b16 %v3401
      %v3441 = vunpack.c.l.b16 %v3402
      %v3442 = vunpack.c.h.b16 %v3402
      %v3443 = vunpack.c.l.b16 %v3403
      %v3444 = vunpack.c.h.b16 %v3403
      %v3445 = vunpack.c.l.b16 %v3404
      %v3446 = vunpack.c.h.b16 %v3404
      %v3447 = vunpack.c.l.b16 %v3405
      %v3448 = vunpack.c.h.b16 %v3405
      %v3449 = vunpack.c.l.b16 %v3406
      %v3450 = vunpack.c.h.b16 %v3406
      %v3451 = vunpack.c.l.b16 %v3407
      %v3452 = vunpack.c.h.b16 %v3407
      %v3453 = vunpack.c.l.b16 %v3408
      %v3454 = vunpack.c.h.b16 %v3408
      %v3455 = vunpack.c.l.b16 %v3409
      %v3456 = vunpack.c.h.b16 %v3409
      %v3457 = vunpack.c.l.b16 %v3410
      %v3458 = vunpack.c.h.b16 %v3410
      %v3459 = vpack.c.b16 %v3429, %v3427
      %v3460 = vpack.c.b16 %v3430, %v3428
      %v3461 = vpack.c.b16 %v3433, %v3431
      %v3462 = vpack.c.b16 %v3434, %v3432
      %v3463 = vpack.c.b16 %v3437, %v3435
      %v3464 = vpack.c.b16 %v3438, %v3436
      %v3465 = vpack.c.b16 %v3441, %v3439
      %v3466 = vpack.c.b16 %v3442, %v3440
      %v3467 = vpack.c.b16 %v3445, %v3443
      %v3468 = vpack.c.b16 %v3446, %v3444
      %v3469 = vpack.c.b16 %v3449, %v3447
      %v3470 = vpack.c.b16 %v3450, %v3448
      %v3471 = vpack.c.b16 %v3453, %v3451
      %v3472 = vpack.c.b16 %v3454, %v3452
      %v3473 = vpack.c.b16 %v3457, %v3455
      %v3474 = vpack.c.b16 %v3458, %v3456
      %3491 = vmatpush.bf16.msra.mxu0 %v3473
      %3492 = vmatpush.bf16.msra.mxu0 %v3471
      %3493 = vmatpush.bf16.msra.mxu0 %v3469
      %3494 = vmatpush.bf16.msra.mxu0 %v3467
      %3495 = vmatpush.bf16.msra.mxu0 %v3465
      %3496 = vmatpush.bf16.msra.mxu0 %v3463
      %3497 = vmatpush.bf16.msra.mxu0 %v3461
      %3498 = vmatpush.bf16.msra.mxu0 %v3459
      %3499 = vmatmul.bf16.gmra.mxu0 %v3142
      %v3500 = vpop.f32.mrf.mxu0
      %v3501 = vadd.f32 0.0, %v3500
      %v3502 = vpop.f32.mrf.mxu0
      %v3503 = vadd.f32 0.0, %v3502
      %3504 = vdwg.mxu0
      %3505 = vmatpush.bf16.msra.mxu0 %v3474
      %3506 = vmatpush.bf16.msra.mxu0 %v3472
      %3507 = vmatpush.bf16.msra.mxu0 %v3470
      %3508 = vmatpush.bf16.msra.mxu0 %v3468
      %3509 = vmatpush.bf16.msra.mxu0 %v3466
      %3510 = vmatpush.bf16.msra.mxu0 %v3464
      %3511 = vmatpush.bf16.msra.mxu0 %v3462
      %3512 = vmatpush.bf16.msra.mxu0 %v3460
      %3513 = vmatmul.bf16.gmra.mxu0 %v3142
      %v3514 = vpop.f32.mrf.mxu0
      %v3515 = vadd.f32 0.0, %v3514
      %v3516 = vpop.f32.mrf.mxu0
      %v3517 = vadd.f32 0.0, %v3516
      %3518 = vdwg.mxu0
      %v3519 = vmax.f32 %v3391, %v3501
      %v3520 = vmax.f32 %v3392, %v3515
      %v3521 = vmax.f32 %v3393, %v3503
      %v3522 = vmax.f32 %v3394, %v3517
      %v3523 = vld [vmem:[%s1890] sm:$0xff]
      %v3524 = vld [vmem:[%s1890 + $0x8] sm:$0xff]
      %v3525 = vld [vmem:[%s1890 + $0x10] sm:$0xff]
      %v3526 = vld [vmem:[%s1890 + $0x18] sm:$0xff]
      %v3527 = vld [vmem:[%s1890 + $0x20] sm:$0xff]
      %v3528 = vld [vmem:[%s1890 + $0x28] sm:$0xff]
      %v3529 = vld [vmem:[%s1890 + $0x30] sm:$0xff]
      %v3530 = vld [vmem:[%s1890 + $0x38] sm:$0xff]
      %v3531 = vld [vmem:[%s1890 + $0x40] sm:$0xff]
      %v3532 = vld [vmem:[%s1890 + $0x48] sm:$0xff]
      %v3533 = vld [vmem:[%s1890 + $0x50] sm:$0xff]
      %v3534 = vld [vmem:[%s1890 + $0x58] sm:$0xff]
      %v3535 = vld [vmem:[%s1890 + $0x60] sm:$0xff]
      %v3536 = vld [vmem:[%s1890 + $0x68] sm:$0xff]
      %v3537 = vld [vmem:[%s1890 + $0x70] sm:$0xff]
      %v3538 = vld [vmem:[%s1890 + $0x78] sm:$0xff]
      %v3555 = vunpack.c.l.b16 %v3523
      %v3556 = vunpack.c.h.b16 %v3523
      %v3557 = vunpack.c.l.b16 %v3524
      %v3558 = vunpack.c.h.b16 %v3524
      %v3559 = vunpack.c.l.b16 %v3525
      %v3560 = vunpack.c.h.b16 %v3525
      %v3561 = vunpack.c.l.b16 %v3526
      %v3562 = vunpack.c.h.b16 %v3526
      %v3563 = vunpack.c.l.b16 %v3527
      %v3564 = vunpack.c.h.b16 %v3527
      %v3565 = vunpack.c.l.b16 %v3528
      %v3566 = vunpack.c.h.b16 %v3528
      %v3567 = vunpack.c.l.b16 %v3529
      %v3568 = vunpack.c.h.b16 %v3529
      %v3569 = vunpack.c.l.b16 %v3530
      %v3570 = vunpack.c.h.b16 %v3530
      %v3571 = vunpack.c.l.b16 %v3531
      %v3572 = vunpack.c.h.b16 %v3531
      %v3573 = vunpack.c.l.b16 %v3532
      %v3574 = vunpack.c.h.b16 %v3532
      %v3575 = vunpack.c.l.b16 %v3533
      %v3576 = vunpack.c.h.b16 %v3533
      %v3577 = vunpack.c.l.b16 %v3534
      %v3578 = vunpack.c.h.b16 %v3534
      %v3579 = vunpack.c.l.b16 %v3535
      %v3580 = vunpack.c.h.b16 %v3535
      %v3581 = vunpack.c.l.b16 %v3536
      %v3582 = vunpack.c.h.b16 %v3536
      %v3583 = vunpack.c.l.b16 %v3537
      %v3584 = vunpack.c.h.b16 %v3537
      %v3585 = vunpack.c.l.b16 %v3538
      %v3586 = vunpack.c.h.b16 %v3538
      %v3587 = vpack.c.b16 %v3557, %v3555
      %v3588 = vpack.c.b16 %v3558, %v3556
      %v3589 = vpack.c.b16 %v3561, %v3559
      %v3590 = vpack.c.b16 %v3562, %v3560
      %v3591 = vpack.c.b16 %v3565, %v3563
      %v3592 = vpack.c.b16 %v3566, %v3564
      %v3593 = vpack.c.b16 %v3569, %v3567
      %v3594 = vpack.c.b16 %v3570, %v3568
      %v3595 = vpack.c.b16 %v3573, %v3571
      %v3596 = vpack.c.b16 %v3574, %v3572
      %v3597 = vpack.c.b16 %v3577, %v3575
      %v3598 = vpack.c.b16 %v3578, %v3576
      %v3599 = vpack.c.b16 %v3581, %v3579
      %v3600 = vpack.c.b16 %v3582, %v3580
      %v3601 = vpack.c.b16 %v3585, %v3583
      %v3602 = vpack.c.b16 %v3586, %v3584
      %3619 = vmatpush.bf16.msra.mxu0 %v3601
      %3620 = vmatpush.bf16.msra.mxu0 %v3599
      %3621 = vmatpush.bf16.msra.mxu0 %v3597
      %3622 = vmatpush.bf16.msra.mxu0 %v3595
      %3623 = vmatpush.bf16.msra.mxu0 %v3593
      %3624 = vmatpush.bf16.msra.mxu0 %v3591
      %3625 = vmatpush.bf16.msra.mxu0 %v3589
      %3626 = vmatpush.bf16.msra.mxu0 %v3587
      %3627 = vmatmul.bf16.gmra.mxu0 %v3142
      %v3628 = vpop.f32.mrf.mxu0
      %v3629 = vadd.f32 0.0, %v3628
      %v3630 = vpop.f32.mrf.mxu0
      %v3631 = vadd.f32 0.0, %v3630
      %3632 = vdwg.mxu0
      %3633 = vmatpush.bf16.msra.mxu0 %v3602
      %3634 = vmatpush.bf16.msra.mxu0 %v3600
      %3635 = vmatpush.bf16.msra.mxu0 %v3598
      %3636 = vmatpush.bf16.msra.mxu0 %v3596
      %3637 = vmatpush.bf16.msra.mxu0 %v3594
      %3638 = vmatpush.bf16.msra.mxu0 %v3592
      %3639 = vmatpush.bf16.msra.mxu0 %v3590
      %3640 = vmatpush.bf16.msra.mxu0 %v3588
      %3641 = vmatmul.bf16.gmra.mxu0 %v3142
      %v3642 = vpop.f32.mrf.mxu0
      %v3643 = vadd.f32 0.0, %v3642
      %v3644 = vpop.f32.mrf.mxu0
      %v3645 = vadd.f32 0.0, %v3644
      %3646 = vdwg.mxu0
      %v3647 = vmax.f32 %v3519, %v3629
      %v3648 = vmax.f32 %v3520, %v3643
      %v3649 = vmax.f32 %v3521, %v3631
      %v3650 = vmax.f32 %v3522, %v3645
      %v3651 = vpack.c.bf16 %v3648, %v3647
      %v3652 = vpack.c.bf16 %v3650, %v3649
      %s3653 = scalar_lea.vmem %s332, 48
      %3654 = vst [vmem:[%s3653] sm:$0xff] %v3651
      %3655 = vst [vmem:[%s3653 + $0x8] sm:$0xff] %v3652
      %s3656 = scalar_lea.vmem [#allocation3], 192
      %v3657 = vld [vmem:[%s3656] sm:$0xff]
      %v3658 = vld [vmem:[%s3656 + $0x8] sm:$0xff]
      %s3659 = scalar_lea.vmem [#allocation3], 208
      %v3660 = vld [vmem:[%s3659] sm:$0xff]
      %v3661 = vld [vmem:[%s3659 + $0x8] sm:$0xff]
      %s3662 = scalar_lea.vmem [#allocation3], 224
      %v3663 = vld [vmem:[%s3662] sm:$0xff]
      %v3664 = vld [vmem:[%s3662 + $0x8] sm:$0xff]
      %v3667 = vunpack.c.l.b16 %v3657
      %v3668 = vunpack.c.l.b16 %v3658
      %v3669 = vpack.c.b16 %v3668, %v3667
      %v3671 = vunpack.c.h.b16 %v3657
      %v3672 = vunpack.c.h.b16 %v3658
      %v3673 = vpack.c.b16 %v3672, %v3671
      %3674 = vrot.lane.b32.xlu0 %v3669, 127
      %v3675 = vpop.permute.xlu0 %3674
      %3676 = vrot.lane.b32.xlu0 %v3673, 127
      %v3677 = vpop.permute.xlu0 %3676
      %v3678 = vsel %vm1179, %v3675, %v3677
      %3680 = vrot.lane.b32.xlu0 %v3669, 126
      %v3681 = vpop.permute.xlu0 %3680
      %3682 = vrot.lane.b32.xlu0 %v3673, 126
      %v3683 = vpop.permute.xlu0 %3682
      %v3684 = vsel %vm1186, %v3681, %v3683
      %3686 = vrot.lane.b32.xlu0 %v3669, 117
      %v3687 = vpop.permute.xlu0 %3686
      %3688 = vrot.lane.b32.xlu0 %v3673, 117
      %v3689 = vpop.permute.xlu0 %3688
      %v3690 = vsel %vm1193, %v3687, %v3689
      %3692 = vrot.lane.b32.xlu0 %v3669, 116
      %v3693 = vpop.permute.xlu0 %3692
      %3694 = vrot.lane.b32.xlu0 %v3673, 116
      %v3695 = vpop.permute.xlu0 %3694
      %v3696 = vsel %vm1200, %v3693, %v3695
      %3698 = vrot.lane.b32.xlu0 %v3669, 115
      %v3699 = vpop.permute.xlu0 %3698
      %3700 = vrot.lane.b32.xlu0 %v3673, 115
      %v3701 = vpop.permute.xlu0 %3700
      %v3702 = vsel %vm1207, %v3699, %v3701
      %3704 = vrot.lane.b32.xlu0 %v3669, 106
      %v3705 = vpop.permute.xlu0 %3704
      %3706 = vrot.lane.b32.xlu0 %v3673, 106
      %v3707 = vpop.permute.xlu0 %3706
      %v3708 = vsel %vm1214, %v3705, %v3707
      %3710 = vrot.lane.b32.xlu0 %v3669, 105
      %v3711 = vpop.permute.xlu0 %3710
      %3712 = vrot.lane.b32.xlu0 %v3673, 105
      %v3713 = vpop.permute.xlu0 %3712
      %v3714 = vsel %vm1221, %v3711, %v3713
      %3716 = vrot.lane.b32.xlu0 %v3669, 104
      %v3717 = vpop.permute.xlu0 %3716
      %3718 = vrot.lane.b32.xlu0 %v3673, 104
      %v3719 = vpop.permute.xlu0 %3718
      %v3720 = vsel %vm1228, %v3717, %v3719
      %v3724 = vunpack.c.l.b16 %v3660
      %v3725 = vunpack.c.l.b16 %v3661
      %v3726 = vpack.c.b16 %v3725, %v3724
      %v3728 = vunpack.c.h.b16 %v3660
      %v3729 = vunpack.c.h.b16 %v3661
      %v3730 = vpack.c.b16 %v3729, %v3728
      %3731 = vrot.lane.b32.xlu0 %v3726, 127
      %v3732 = vpop.permute.xlu0 %3731
      %3733 = vrot.lane.b32.xlu0 %v3730, 127
      %v3734 = vpop.permute.xlu0 %3733
      %v3735 = vsel %vm1179, %v3732, %v3734
      %3737 = vrot.lane.b32.xlu0 %v3726, 126
      %v3738 = vpop.permute.xlu0 %3737
      %3739 = vrot.lane.b32.xlu0 %v3730, 126
      %v3740 = vpop.permute.xlu0 %3739
      %v3741 = vsel %vm1186, %v3738, %v3740
      %3743 = vrot.lane.b32.xlu0 %v3726, 117
      %v3744 = vpop.permute.xlu0 %3743
      %3745 = vrot.lane.b32.xlu0 %v3730, 117
      %v3746 = vpop.permute.xlu0 %3745
      %v3747 = vsel %vm1193, %v3744, %v3746
      %3749 = vrot.lane.b32.xlu0 %v3726, 116
      %v3750 = vpop.permute.xlu0 %3749
      %3751 = vrot.lane.b32.xlu0 %v3730, 116
      %v3752 = vpop.permute.xlu0 %3751
      %v3753 = vsel %vm1200, %v3750, %v3752
      %3755 = vrot.lane.b32.xlu0 %v3726, 115
      %v3756 = vpop.permute.xlu0 %3755
      %3757 = vrot.lane.b32.xlu0 %v3730, 115
      %v3758 = vpop.permute.xlu0 %3757
      %v3759 = vsel %vm1207, %v3756, %v3758
      %3761 = vrot.lane.b32.xlu0 %v3726, 106
      %v3762 = vpop.permute.xlu0 %3761
      %3763 = vrot.lane.b32.xlu0 %v3730, 106
      %v3764 = vpop.permute.xlu0 %3763
      %v3765 = vsel %vm1214, %v3762, %v3764
      %v3769 = vunpack.c.l.b16 %v3663
      %v3770 = vunpack.c.l.b16 %v3664
      %v3771 = vpack.c.b16 %v3770, %v3769
      %3772 = vrot.lane.b32.xlu0 %v3771, 23
      %v3773 = vpop.permute.xlu0 %3772
      %v3774 = vunpack.c.h.b16 %v3663
      %v3775 = vunpack.c.h.b16 %v3664
      %v3776 = vpack.c.b16 %v3775, %v3774
      %3777 = vrot.lane.b32.xlu0 %v3771, 22
      %v3778 = vpop.permute.xlu0 %3777
      %3779 = vrot.lane.b32.xlu0 %v3776, 22
      %v3780 = vpop.permute.xlu0 %3779
      %v3781 = vsel %vm1290, %v3778, %v3780
      %3782 = vrot.lane.b32.xlu0 %v3771, 21
      %v3783 = vpop.permute.xlu0 %3782
      %3784 = vrot.lane.b32.xlu0 %v3776, 21
      %v3785 = vpop.permute.xlu0 %3784
      %v3786 = vsel %vm1296, %v3783, %v3785
      %3787 = vrot.lane.b32.xlu0 %v3771, 12
      %v3788 = vpop.permute.xlu0 %3787
      %3789 = vrot.lane.b32.xlu0 %v3776, 12
      %v3790 = vpop.permute.xlu0 %3789
      %v3791 = vsel %vm1302, %v3788, %v3790
      %3792 = vrot.lane.b32.xlu0 %v3771, 11
      %v3793 = vpop.permute.xlu0 %3792
      %3794 = vrot.lane.b32.xlu0 %v3776, 11
      %v3795 = vpop.permute.xlu0 %3794
      %v3796 = vsel %vm1308, %v3793, %v3795
      %3797 = vrot.lane.b32.xlu0 %v3771, 10
      %v3798 = vpop.permute.xlu0 %3797
      %3799 = vrot.lane.b32.xlu0 %v3776, 10
      %v3800 = vpop.permute.xlu0 %3799
      %v3801 = vsel %vm1314, %v3798, %v3800
      %3802 = vrot.lane.b32.xlu0 %v3771, 1
      %v3803 = vpop.permute.xlu0 %3802
      %3804 = vrot.lane.b32.xlu0 %v3776, 1
      %v3805 = vpop.permute.xlu0 %3804
      %v3806 = vsel %vm1320, %v3803, %v3805
      %3807 = vrot.lane.b32.xlu0 %v3771, 127
      %v3808 = vpop.permute.xlu0 %3807
      %3809 = vrot.lane.b32.xlu0 %v3776, 127
      %v3810 = vpop.permute.xlu0 %3809
      %v3811 = vsel %vm1179, %v3808, %v3810
      %3812 = vrot.lane.b32.xlu0 %v3726, 105
      %v3813 = vpop.permute.xlu0 %3812
      %3814 = vrot.lane.b32.xlu0 %v3730, 105
      %v3815 = vpop.permute.xlu0 %3814
      %3816 = vrot.lane.b32.xlu0 %v3735, 105
      %v3817 = vpop.permute.xlu0 %3816
      %3818 = vrot.lane.b32.xlu0 %v3734, 105
      %v3819 = vpop.permute.xlu0 %3818
      %3820 = vrot.lane.b32.xlu0 %v3773, 105
      %v3821 = vpop.permute.xlu0 %3820
      %3822 = vrot.lane.b32.xlu0 %v3778, 105
      %v3823 = vpop.permute.xlu0 %3822
      %3824 = vrot.lane.b32.xlu0 %v3781, 105
      %v3825 = vpop.permute.xlu0 %3824
      %3826 = vrot.lane.b32.xlu0 %v3783, 105
      %v3827 = vpop.permute.xlu0 %3826
      %3828 = vrot.lane.b32.xlu0 %v3786, 105
      %v3829 = vpop.permute.xlu0 %3828
      %3830 = vrot.lane.b32.xlu0 %v3788, 105
      %v3831 = vpop.permute.xlu0 %3830
      %3832 = vrot.lane.b32.xlu0 %v3791, 105
      %v3833 = vpop.permute.xlu0 %3832
      %3834 = vrot.lane.b32.xlu0 %v3793, 105
      %v3835 = vpop.permute.xlu0 %3834
      %3836 = vrot.lane.b32.xlu0 %v3796, 105
      %v3837 = vpop.permute.xlu0 %3836
      %3838 = vrot.lane.b32.xlu0 %v3798, 105
      %v3839 = vpop.permute.xlu0 %3838
      %3840 = vrot.lane.b32.xlu0 %v3801, 105
      %v3841 = vpop.permute.xlu0 %3840
      %3842 = vrot.lane.b32.xlu0 %v3803, 105
      %v3843 = vpop.permute.xlu0 %3842
      %3844 = vrot.lane.b32.xlu0 %v3806, 105
      %v3845 = vpop.permute.xlu0 %3844
      %3846 = vrot.lane.b32.xlu0 %v3771, 105
      %v3847 = vpop.permute.xlu0 %3846
      %3848 = vrot.lane.b32.xlu0 %v3776, 105
      %v3849 = vpop.permute.xlu0 %3848
      %3850 = vrot.lane.b32.xlu0 %v3811, 105
      %v3851 = vpop.permute.xlu0 %3850
      %3852 = vrot.lane.b32.xlu0 %v3810, 105
      %v3853 = vpop.permute.xlu0 %3852
      %v3854 = vsel %vm1221, %v3813, %v3815
      %v3855 = vsel %vm1221, %v3817, %v3819
      %v3856 = vsel %vm1221, %v3823, %v3825
      %v3857 = vsel %vm1221, %v3827, %v3829
      %v3858 = vsel %vm1221, %v3831, %v3833
      %v3859 = vsel %vm1221, %v3835, %v3837
      %v3860 = vsel %vm1221, %v3839, %v3841
      %v3861 = vsel %vm1221, %v3843, %v3845
      %v3862 = vsel %vm1221, %v3847, %v3849
      %v3863 = vsel %vm1221, %v3851, %v3853
      %3875 = vmatpush.bf16.msra.mxu0 %v3714
      %3876 = vmatpush.bf16.msra.mxu0 %v3708
      %3877 = vmatpush.bf16.msra.mxu0 %v3702
      %3878 = vmatpush.bf16.msra.mxu0 %v3696
      %3879 = vmatpush.bf16.msra.mxu0 %v3690
      %3880 = vmatpush.bf16.msra.mxu0 %v3684
      %3881 = vmatpush.bf16.msra.mxu0 %v3678
      %3882 = vmatpush.bf16.msra.mxu0 %v3669
      %3883 = vmatmul.bf16.gmra.mxu0 %v1412
      %v3884 = vpop.f32.mrf.mxu0
      %v3885 = vadd.f32 %v1393, %v3884
      %v3886 = vpop.f32.mrf.mxu0
      %v3887 = vadd.f32 %v1398, %v3886
      %3888 = vdwg.mxu0
      %3889 = vmatpush.bf16.msra.mxu0 %v3765
      %3890 = vmatpush.bf16.msra.mxu0 %v3759
      %3891 = vmatpush.bf16.msra.mxu0 %v3753
      %3892 = vmatpush.bf16.msra.mxu0 %v3747
      %3893 = vmatpush.bf16.msra.mxu0 %v3741
      %3894 = vmatpush.bf16.msra.mxu0 %v3735
      %3895 = vmatpush.bf16.msra.mxu0 %v3726
      %3896 = vmatpush.bf16.msra.mxu0 %v3720
      %3897 = vmatmul.bf16.gmra.mxu0 %v1413
      %v3898 = vpop.f32.mrf.mxu0
      %v3899 = vadd.f32 %v3885, %v3898
      %v3900 = vpop.f32.mrf.mxu0
      %v3901 = vadd.f32 %v3887, %v3900
      %3902 = vdwg.mxu0
      %3903 = vmatpush.bf16.msra.mxu0 %v3860
      %3904 = vmatpush.bf16.msra.mxu0 %v3859
      %3905 = vmatpush.bf16.msra.mxu0 %v3858
      %3906 = vmatpush.bf16.msra.mxu0 %v3857
      %3907 = vmatpush.bf16.msra.mxu0 %v3856
      %3908 = vmatpush.bf16.msra.mxu0 %v3821
      %3909 = vmatpush.bf16.msra.mxu0 %v3855
      %3910 = vmatpush.bf16.msra.mxu0 %v3854
      %3911 = vmatmul.bf16.gmra.mxu0 %v1414
      %v3912 = vpop.f32.mrf.mxu0
      %v3913 = vadd.f32 %v3899, %v3912
      %v3914 = vpop.f32.mrf.mxu0
      %v3915 = vadd.f32 %v3901, %v3914
      %3916 = vdwg.mxu0
      %3917 = vmatpush.bf16.msra.mxu0 0
      %3918 = vmatpush.bf16.msra.mxu0 0
      %3919 = vmatpush.bf16.msra.mxu0 0
      %3920 = vmatpush.bf16.msra.mxu0 0
      %3921 = vmatpush.bf16.msra.mxu0 0
      %3922 = vmatpush.bf16.msra.mxu0 %v3863
      %3923 = vmatpush.bf16.msra.mxu0 %v3862
      %3924 = vmatpush.bf16.msra.mxu0 %v3861
      %3925 = vmatmul.bf16.gmra.mxu0 %v1421
      %v3926 = vpop.f32.mrf.mxu0
      %v3927 = vadd.f32 %v3913, %v3926
      %v3928 = vpop.f32.mrf.mxu0
      %v3929 = vadd.f32 %v3915, %v3928
      %3930 = vdwg.mxu0
      %s3931 = scalar_lea.vmem [#allocation2], 208
      %v3932 = vld [vmem:[%s3931] sm:$0xff]
      %v3933 = vld [vmem:[%s3931 + $0x8] sm:$0xff]
      %v3934 = vunpack.c.l.bf16 %v3932
      %v3935 = vunpack.c.h.bf16 %v3932
      %v3936 = vunpack.c.l.bf16 %v3933
      %v3937 = vunpack.c.h.bf16 %v3933
      %3942 = vrot.lane.b32.xlu0 %v3934, 116
      %v3943 = vpop.permute.xlu0 %3942
      %3944 = vrot.lane.b32.xlu0 %v3935, 116
      %v3945 = vpop.permute.xlu0 %3944
      %3946 = vrot.lane.b32.xlu0 %v3936, 116
      %v3947 = vpop.permute.xlu0 %3946
      %3948 = vrot.lane.b32.xlu0 %v3937, 116
      %v3949 = vpop.permute.xlu0 %3948
      %v3950 = vsel %vm1498, %v3943, %v3945
      %v3951 = vsel %vm1498, %v3947, %v3949
      %v3954 = vadd.f32 %v3927, %v3950
      %v3955 = vadd.f32 %v3929, %v3951
      %v3956 = vmax.f32 %v3954, 0.0
      %v3957 = vmax.f32 %v3955, 0.0
      %v3958 = vpack.c.bf16 %v3957, %v3956
      %v3959 = vld [vmem:[%s7] sm:$0xff]
      %v3960 = vld [vmem:[%s7 + $0x8] sm:$0xff]
      %v3961 = vld [vmem:[%s7 + $0x10] sm:$0xff]
      %v3962 = vld [vmem:[%s7 + $0x18] sm:$0xff]
      %v3963 = vld [vmem:[%s7 + $0x20] sm:$0xff]
      %v3964 = vld [vmem:[%s7 + $0x28] sm:$0xff]
      %v3965 = vld [vmem:[%s7 + $0x30] sm:$0xff]
      %v3966 = vld [vmem:[%s7 + $0x38] sm:$0xff]
      %v3967 = vld [vmem:[%s7 + $0x40] sm:$0xff]
      %v3968 = vld [vmem:[%s7 + $0x48] sm:$0xff]
      %v3969 = vld [vmem:[%s7 + $0x50] sm:$0xff]
      %v3970 = vld [vmem:[%s7 + $0x58] sm:$0xff]
      %v3971 = vld [vmem:[%s7 + $0x60] sm:$0xff]
      %v3972 = vld [vmem:[%s7 + $0x68] sm:$0xff]
      %v3973 = vld [vmem:[%s7 + $0x70] sm:$0xff]
      %v3974 = vld [vmem:[%s7 + $0x78] sm:$0xff]
      %v3991 = vunpack.c.l.b16 %v3959
      %v3992 = vunpack.c.h.b16 %v3959
      %v3993 = vunpack.c.l.b16 %v3960
      %v3994 = vunpack.c.h.b16 %v3960
      %v3995 = vunpack.c.l.b16 %v3961
      %v3996 = vunpack.c.h.b16 %v3961
      %v3997 = vunpack.c.l.b16 %v3962
      %v3998 = vunpack.c.h.b16 %v3962
      %v3999 = vunpack.c.l.b16 %v3963
      %v4000 = vunpack.c.h.b16 %v3963
      %v4001 = vunpack.c.l.b16 %v3964
      %v4002 = vunpack.c.h.b16 %v3964
      %v4003 = vunpack.c.l.b16 %v3965
      %v4004 = vunpack.c.h.b16 %v3965
      %v4005 = vunpack.c.l.b16 %v3966
      %v4006 = vunpack.c.h.b16 %v3966
      %v4007 = vunpack.c.l.b16 %v3967
      %v4008 = vunpack.c.h.b16 %v3967
      %v4009 = vunpack.c.l.b16 %v3968
      %v4010 = vunpack.c.h.b16 %v3968
      %v4011 = vunpack.c.l.b16 %v3969
      %v4012 = vunpack.c.h.b16 %v3969
      %v4013 = vunpack.c.l.b16 %v3970
      %v4014 = vunpack.c.h.b16 %v3970
      %v4015 = vunpack.c.l.b16 %v3971
      %v4016 = vunpack.c.h.b16 %v3971
      %v4017 = vunpack.c.l.b16 %v3972
      %v4018 = vunpack.c.h.b16 %v3972
      %v4019 = vunpack.c.l.b16 %v3973
      %v4020 = vunpack.c.h.b16 %v3973
      %v4021 = vunpack.c.l.b16 %v3974
      %v4022 = vunpack.c.h.b16 %v3974
      %v4023 = vpack.c.b16 %v3993, %v3991
      %v4024 = vpack.c.b16 %v3994, %v3992
      %v4025 = vpack.c.b16 %v3997, %v3995
      %v4026 = vpack.c.b16 %v3998, %v3996
      %v4027 = vpack.c.b16 %v4001, %v3999
      %v4028 = vpack.c.b16 %v4002, %v4000
      %v4029 = vpack.c.b16 %v4005, %v4003
      %v4030 = vpack.c.b16 %v4006, %v4004
      %v4031 = vpack.c.b16 %v4009, %v4007
      %v4032 = vpack.c.b16 %v4010, %v4008
      %v4033 = vpack.c.b16 %v4013, %v4011
      %v4034 = vpack.c.b16 %v4014, %v4012
      %v4035 = vpack.c.b16 %v4017, %v4015
      %v4036 = vpack.c.b16 %v4018, %v4016
      %v4037 = vpack.c.b16 %v4021, %v4019
      %v4038 = vpack.c.b16 %v4022, %v4020
      %4055 = vmatpush.bf16.msra.mxu0 %v4037
      %4056 = vmatpush.bf16.msra.mxu0 %v4035
      %4057 = vmatpush.bf16.msra.mxu0 %v4033
      %4058 = vmatpush.bf16.msra.mxu0 %v4031
      %4059 = vmatpush.bf16.msra.mxu0 %v4029
      %4060 = vmatpush.bf16.msra.mxu0 %v4027
      %4061 = vmatpush.bf16.msra.mxu0 %v4025
      %4062 = vmatpush.bf16.msra.mxu0 %v4023
      %4063 = vmatmul.bf16.gmra.mxu0 %v3958
      %v4064 = vpop.f32.mrf.mxu0
      %v4065 = vadd.f32 0.0, %v4064
      %v4066 = vpop.f32.mrf.mxu0
      %v4067 = vadd.f32 0.0, %v4066
      %4068 = vdwg.mxu0
      %4069 = vmatpush.bf16.msra.mxu0 %v4038
      %4070 = vmatpush.bf16.msra.mxu0 %v4036
      %4071 = vmatpush.bf16.msra.mxu0 %v4034
      %4072 = vmatpush.bf16.msra.mxu0 %v4032
      %4073 = vmatpush.bf16.msra.mxu0 %v4030
      %4074 = vmatpush.bf16.msra.mxu0 %v4028
      %4075 = vmatpush.bf16.msra.mxu0 %v4026
      %4076 = vmatpush.bf16.msra.mxu0 %v4024
      %4077 = vmatmul.bf16.gmra.mxu0 %v3958
      %v4078 = vpop.f32.mrf.mxu0
      %v4079 = vadd.f32 0.0, %v4078
      %v4080 = vpop.f32.mrf.mxu0
      %v4081 = vadd.f32 0.0, %v4080
      %4082 = vdwg.mxu0
      %v4083 = vld [vmem:[%s1632] sm:$0xff]
      %v4084 = vld [vmem:[%s1632 + $0x8] sm:$0xff]
      %v4085 = vld [vmem:[%s1632 + $0x10] sm:$0xff]
      %v4086 = vld [vmem:[%s1632 + $0x18] sm:$0xff]
      %v4087 = vld [vmem:[%s1632 + $0x20] sm:$0xff]
      %v4088 = vld [vmem:[%s1632 + $0x28] sm:$0xff]
      %v4089 = vld [vmem:[%s1632 + $0x30] sm:$0xff]
      %v4090 = vld [vmem:[%s1632 + $0x38] sm:$0xff]
      %v4091 = vld [vmem:[%s1632 + $0x40] sm:$0xff]
      %v4092 = vld [vmem:[%s1632 + $0x48] sm:$0xff]
      %v4093 = vld [vmem:[%s1632 + $0x50] sm:$0xff]
      %v4094 = vld [vmem:[%s1632 + $0x58] sm:$0xff]
      %v4095 = vld [vmem:[%s1632 + $0x60] sm:$0xff]
      %v4096 = vld [vmem:[%s1632 + $0x68] sm:$0xff]
      %v4097 = vld [vmem:[%s1632 + $0x70] sm:$0xff]
      %v4098 = vld [vmem:[%s1632 + $0x78] sm:$0xff]
      %v4115 = vunpack.c.l.b16 %v4083
      %v4116 = vunpack.c.h.b16 %v4083
      %v4117 = vunpack.c.l.b16 %v4084
      %v4118 = vunpack.c.h.b16 %v4084
      %v4119 = vunpack.c.l.b16 %v4085
      %v4120 = vunpack.c.h.b16 %v4085
      %v4121 = vunpack.c.l.b16 %v4086
      %v4122 = vunpack.c.h.b16 %v4086
      %v4123 = vunpack.c.l.b16 %v4087
      %v4124 = vunpack.c.h.b16 %v4087
      %v4125 = vunpack.c.l.b16 %v4088
      %v4126 = vunpack.c.h.b16 %v4088
      %v4127 = vunpack.c.l.b16 %v4089
      %v4128 = vunpack.c.h.b16 %v4089
      %v4129 = vunpack.c.l.b16 %v4090
      %v4130 = vunpack.c.h.b16 %v4090
      %v4131 = vunpack.c.l.b16 %v4091
      %v4132 = vunpack.c.h.b16 %v4091
      %v4133 = vunpack.c.l.b16 %v4092
      %v4134 = vunpack.c.h.b16 %v4092
      %v4135 = vunpack.c.l.b16 %v4093
      %v4136 = vunpack.c.h.b16 %v4093
      %v4137 = vunpack.c.l.b16 %v4094
      %v4138 = vunpack.c.h.b16 %v4094
      %v4139 = vunpack.c.l.b16 %v4095
      %v4140 = vunpack.c.h.b16 %v4095
      %v4141 = vunpack.c.l.b16 %v4096
      %v4142 = vunpack.c.h.b16 %v4096
      %v4143 = vunpack.c.l.b16 %v4097
      %v4144 = vunpack.c.h.b16 %v4097
      %v4145 = vunpack.c.l.b16 %v4098
      %v4146 = vunpack.c.h.b16 %v4098
      %v4147 = vpack.c.b16 %v4117, %v4115
      %v4148 = vpack.c.b16 %v4118, %v4116
      %v4149 = vpack.c.b16 %v4121, %v4119
      %v4150 = vpack.c.b16 %v4122, %v4120
      %v4151 = vpack.c.b16 %v4125, %v4123
      %v4152 = vpack.c.b16 %v4126, %v4124
      %v4153 = vpack.c.b16 %v4129, %v4127
      %v4154 = vpack.c.b16 %v4130, %v4128
      %v4155 = vpack.c.b16 %v4133, %v4131
      %v4156 = vpack.c.b16 %v4134, %v4132
      %v4157 = vpack.c.b16 %v4137, %v4135
      %v4158 = vpack.c.b16 %v4138, %v4136
      %v4159 = vpack.c.b16 %v4141, %v4139
      %v4160 = vpack.c.b16 %v4142, %v4140
      %v4161 = vpack.c.b16 %v4145, %v4143
      %v4162 = vpack.c.b16 %v4146, %v4144
      %4179 = vmatpush.bf16.msra.mxu0 %v4161
      %4180 = vmatpush.bf16.msra.mxu0 %v4159
      %4181 = vmatpush.bf16.msra.mxu0 %v4157
      %4182 = vmatpush.bf16.msra.mxu0 %v4155
      %4183 = vmatpush.bf16.msra.mxu0 %v4153
      %4184 = vmatpush.bf16.msra.mxu0 %v4151
      %4185 = vmatpush.bf16.msra.mxu0 %v4149
      %4186 = vmatpush.bf16.msra.mxu0 %v4147
      %4187 = vmatmul.bf16.gmra.mxu0 %v3958
      %v4188 = vpop.f32.mrf.mxu0
      %v4189 = vadd.f32 0.0, %v4188
      %v4190 = vpop.f32.mrf.mxu0
      %v4191 = vadd.f32 0.0, %v4190
      %4192 = vdwg.mxu0
      %4193 = vmatpush.bf16.msra.mxu0 %v4162
      %4194 = vmatpush.bf16.msra.mxu0 %v4160
      %4195 = vmatpush.bf16.msra.mxu0 %v4158
      %4196 = vmatpush.bf16.msra.mxu0 %v4156
      %4197 = vmatpush.bf16.msra.mxu0 %v4154
      %4198 = vmatpush.bf16.msra.mxu0 %v4152
      %4199 = vmatpush.bf16.msra.mxu0 %v4150
      %4200 = vmatpush.bf16.msra.mxu0 %v4148
      %4201 = vmatmul.bf16.gmra.mxu0 %v3958
      %v4202 = vpop.f32.mrf.mxu0
      %v4203 = vadd.f32 0.0, %v4202
      %v4204 = vpop.f32.mrf.mxu0
      %v4205 = vadd.f32 0.0, %v4204
      %4206 = vdwg.mxu0
      %v4207 = vmax.f32 %v4065, %v4189
      %v4208 = vmax.f32 %v4079, %v4203
      %v4209 = vmax.f32 %v4067, %v4191
      %v4210 = vmax.f32 %v4081, %v4205
      %v4211 = vld [vmem:[%s1761] sm:$0xff]
      %v4212 = vld [vmem:[%s1761 + $0x8] sm:$0xff]
      %v4213 = vld [vmem:[%s1761 + $0x10] sm:$0xff]
      %v4214 = vld [vmem:[%s1761 + $0x18] sm:$0xff]
      %v4215 = vld [vmem:[%s1761 + $0x20] sm:$0xff]
      %v4216 = vld [vmem:[%s1761 + $0x28] sm:$0xff]
      %v4217 = vld [vmem:[%s1761 + $0x30] sm:$0xff]
      %v4218 = vld [vmem:[%s1761 + $0x38] sm:$0xff]
      %v4219 = vld [vmem:[%s1761 + $0x40] sm:$0xff]
      %v4220 = vld [vmem:[%s1761 + $0x48] sm:$0xff]
      %v4221 = vld [vmem:[%s1761 + $0x50] sm:$0xff]
      %v4222 = vld [vmem:[%s1761 + $0x58] sm:$0xff]
      %v4223 = vld [vmem:[%s1761 + $0x60] sm:$0xff]
      %v4224 = vld [vmem:[%s1761 + $0x68] sm:$0xff]
      %v4225 = vld [vmem:[%s1761 + $0x70] sm:$0xff]
      %v4226 = vld [vmem:[%s1761 + $0x78] sm:$0xff]
      %v4243 = vunpack.c.l.b16 %v4211
      %v4244 = vunpack.c.h.b16 %v4211
      %v4245 = vunpack.c.l.b16 %v4212
      %v4246 = vunpack.c.h.b16 %v4212
      %v4247 = vunpack.c.l.b16 %v4213
      %v4248 = vunpack.c.h.b16 %v4213
      %v4249 = vunpack.c.l.b16 %v4214
      %v4250 = vunpack.c.h.b16 %v4214
      %v4251 = vunpack.c.l.b16 %v4215
      %v4252 = vunpack.c.h.b16 %v4215
      %v4253 = vunpack.c.l.b16 %v4216
      %v4254 = vunpack.c.h.b16 %v4216
      %v4255 = vunpack.c.l.b16 %v4217
      %v4256 = vunpack.c.h.b16 %v4217
      %v4257 = vunpack.c.l.b16 %v4218
      %v4258 = vunpack.c.h.b16 %v4218
      %v4259 = vunpack.c.l.b16 %v4219
      %v4260 = vunpack.c.h.b16 %v4219
      %v4261 = vunpack.c.l.b16 %v4220
      %v4262 = vunpack.c.h.b16 %v4220
      %v4263 = vunpack.c.l.b16 %v4221
      %v4264 = vunpack.c.h.b16 %v4221
      %v4265 = vunpack.c.l.b16 %v4222
      %v4266 = vunpack.c.h.b16 %v4222
      %v4267 = vunpack.c.l.b16 %v4223
      %v4268 = vunpack.c.h.b16 %v4223
      %v4269 = vunpack.c.l.b16 %v4224
      %v4270 = vunpack.c.h.b16 %v4224
      %v4271 = vunpack.c.l.b16 %v4225
      %v4272 = vunpack.c.h.b16 %v4225
      %v4273 = vunpack.c.l.b16 %v4226
      %v4274 = vunpack.c.h.b16 %v4226
      %v4275 = vpack.c.b16 %v4245, %v4243
      %v4276 = vpack.c.b16 %v4246, %v4244
      %v4277 = vpack.c.b16 %v4249, %v4247
      %v4278 = vpack.c.b16 %v4250, %v4248
      %v4279 = vpack.c.b16 %v4253, %v4251
      %v4280 = vpack.c.b16 %v4254, %v4252
      %v4281 = vpack.c.b16 %v4257, %v4255
      %v4282 = vpack.c.b16 %v4258, %v4256
      %v4283 = vpack.c.b16 %v4261, %v4259
      %v4284 = vpack.c.b16 %v4262, %v4260
      %v4285 = vpack.c.b16 %v4265, %v4263
      %v4286 = vpack.c.b16 %v4266, %v4264
      %v4287 = vpack.c.b16 %v4269, %v4267
      %v4288 = vpack.c.b16 %v4270, %v4268
      %v4289 = vpack.c.b16 %v4273, %v4271
      %v4290 = vpack.c.b16 %v4274, %v4272
      %4307 = vmatpush.bf16.msra.mxu0 %v4289
      %4308 = vmatpush.bf16.msra.mxu0 %v4287
      %4309 = vmatpush.bf16.msra.mxu0 %v4285
      %4310 = vmatpush.bf16.msra.mxu0 %v4283
      %4311 = vmatpush.bf16.msra.mxu0 %v4281
      %4312 = vmatpush.bf16.msra.mxu0 %v4279
      %4313 = vmatpush.bf16.msra.mxu0 %v4277
      %4314 = vmatpush.bf16.msra.mxu0 %v4275
      %4315 = vmatmul.bf16.gmra.mxu0 %v3958
      %v4316 = vpop.f32.mrf.mxu0
      %v4317 = vadd.f32 0.0, %v4316
      %v4318 = vpop.f32.mrf.mxu0
      %v4319 = vadd.f32 0.0, %v4318
      %4320 = vdwg.mxu0
      %4321 = vmatpush.bf16.msra.mxu0 %v4290
      %4322 = vmatpush.bf16.msra.mxu0 %v4288
      %4323 = vmatpush.bf16.msra.mxu0 %v4286
      %4324 = vmatpush.bf16.msra.mxu0 %v4284
      %4325 = vmatpush.bf16.msra.mxu0 %v4282
      %4326 = vmatpush.bf16.msra.mxu0 %v4280
      %4327 = vmatpush.bf16.msra.mxu0 %v4278
      %4328 = vmatpush.bf16.msra.mxu0 %v4276
      %4329 = vmatmul.bf16.gmra.mxu0 %v3958
      %v4330 = vpop.f32.mrf.mxu0
      %v4331 = vadd.f32 0.0, %v4330
      %v4332 = vpop.f32.mrf.mxu0
      %v4333 = vadd.f32 0.0, %v4332
      %4334 = vdwg.mxu0
      %v4335 = vmax.f32 %v4207, %v4317
      %v4336 = vmax.f32 %v4208, %v4331
      %v4337 = vmax.f32 %v4209, %v4319
      %v4338 = vmax.f32 %v4210, %v4333
      %v4339 = vld [vmem:[%s1890] sm:$0xff]
      %v4340 = vld [vmem:[%s1890 + $0x8] sm:$0xff]
      %v4341 = vld [vmem:[%s1890 + $0x10] sm:$0xff]
      %v4342 = vld [vmem:[%s1890 + $0x18] sm:$0xff]
      %v4343 = vld [vmem:[%s1890 + $0x20] sm:$0xff]
      %v4344 = vld [vmem:[%s1890 + $0x28] sm:$0xff]
      %v4345 = vld [vmem:[%s1890 + $0x30] sm:$0xff]
      %v4346 = vld [vmem:[%s1890 + $0x38] sm:$0xff]
      %v4347 = vld [vmem:[%s1890 + $0x40] sm:$0xff]
      %v4348 = vld [vmem:[%s1890 + $0x48] sm:$0xff]
      %v4349 = vld [vmem:[%s1890 + $0x50] sm:$0xff]
      %v4350 = vld [vmem:[%s1890 + $0x58] sm:$0xff]
      %v4351 = vld [vmem:[%s1890 + $0x60] sm:$0xff]
      %v4352 = vld [vmem:[%s1890 + $0x68] sm:$0xff]
      %v4353 = vld [vmem:[%s1890 + $0x70] sm:$0xff]
      %v4354 = vld [vmem:[%s1890 + $0x78] sm:$0xff]
      %v4371 = vunpack.c.l.b16 %v4339
      %v4372 = vunpack.c.h.b16 %v4339
      %v4373 = vunpack.c.l.b16 %v4340
      %v4374 = vunpack.c.h.b16 %v4340
      %v4375 = vunpack.c.l.b16 %v4341
      %v4376 = vunpack.c.h.b16 %v4341
      %v4377 = vunpack.c.l.b16 %v4342
      %v4378 = vunpack.c.h.b16 %v4342
      %v4379 = vunpack.c.l.b16 %v4343
      %v4380 = vunpack.c.h.b16 %v4343
      %v4381 = vunpack.c.l.b16 %v4344
      %v4382 = vunpack.c.h.b16 %v4344
      %v4383 = vunpack.c.l.b16 %v4345
      %v4384 = vunpack.c.h.b16 %v4345
      %v4385 = vunpack.c.l.b16 %v4346
      %v4386 = vunpack.c.h.b16 %v4346
      %v4387 = vunpack.c.l.b16 %v4347
      %v4388 = vunpack.c.h.b16 %v4347
      %v4389 = vunpack.c.l.b16 %v4348
      %v4390 = vunpack.c.h.b16 %v4348
      %v4391 = vunpack.c.l.b16 %v4349
      %v4392 = vunpack.c.h.b16 %v4349
      %v4393 = vunpack.c.l.b16 %v4350
      %v4394 = vunpack.c.h.b16 %v4350
      %v4395 = vunpack.c.l.b16 %v4351
      %v4396 = vunpack.c.h.b16 %v4351
      %v4397 = vunpack.c.l.b16 %v4352
      %v4398 = vunpack.c.h.b16 %v4352
      %v4399 = vunpack.c.l.b16 %v4353
      %v4400 = vunpack.c.h.b16 %v4353
      %v4401 = vunpack.c.l.b16 %v4354
      %v4402 = vunpack.c.h.b16 %v4354
      %v4403 = vpack.c.b16 %v4373, %v4371
      %v4404 = vpack.c.b16 %v4374, %v4372
      %v4405 = vpack.c.b16 %v4377, %v4375
      %v4406 = vpack.c.b16 %v4378, %v4376
      %v4407 = vpack.c.b16 %v4381, %v4379
      %v4408 = vpack.c.b16 %v4382, %v4380
      %v4409 = vpack.c.b16 %v4385, %v4383
      %v4410 = vpack.c.b16 %v4386, %v4384
      %v4411 = vpack.c.b16 %v4389, %v4387
      %v4412 = vpack.c.b16 %v4390, %v4388
      %v4413 = vpack.c.b16 %v4393, %v4391
      %v4414 = vpack.c.b16 %v4394, %v4392
      %v4415 = vpack.c.b16 %v4397, %v4395
      %v4416 = vpack.c.b16 %v4398, %v4396
      %v4417 = vpack.c.b16 %v4401, %v4399
      %v4418 = vpack.c.b16 %v4402, %v4400
      %4435 = vmatpush.bf16.msra.mxu0 %v4417
      %4436 = vmatpush.bf16.msra.mxu0 %v4415
      %4437 = vmatpush.bf16.msra.mxu0 %v4413
      %4438 = vmatpush.bf16.msra.mxu0 %v4411
      %4439 = vmatpush.bf16.msra.mxu0 %v4409
      %4440 = vmatpush.bf16.msra.mxu0 %v4407
      %4441 = vmatpush.bf16.msra.mxu0 %v4405
      %4442 = vmatpush.bf16.msra.mxu0 %v4403
      %4443 = vmatmul.bf16.gmra.mxu0 %v3958
      %v4444 = vpop.f32.mrf.mxu0
      %v4445 = vadd.f32 0.0, %v4444
      %v4446 = vpop.f32.mrf.mxu0
      %v4447 = vadd.f32 0.0, %v4446
      %4448 = vdwg.mxu0
      %4449 = vmatpush.bf16.msra.mxu0 %v4418
      %4450 = vmatpush.bf16.msra.mxu0 %v4416
      %4451 = vmatpush.bf16.msra.mxu0 %v4414
      %4452 = vmatpush.bf16.msra.mxu0 %v4412
      %4453 = vmatpush.bf16.msra.mxu0 %v4410
      %4454 = vmatpush.bf16.msra.mxu0 %v4408
      %4455 = vmatpush.bf16.msra.mxu0 %v4406
      %4456 = vmatpush.bf16.msra.mxu0 %v4404
      %4457 = vmatmul.bf16.gmra.mxu0 %v3958
      %v4458 = vpop.f32.mrf.mxu0
      %v4459 = vadd.f32 0.0, %v4458
      %v4460 = vpop.f32.mrf.mxu0
      %v4461 = vadd.f32 0.0, %v4460
      %4462 = vdwg.mxu0
      %v4463 = vmax.f32 %v4335, %v4445
      %v4464 = vmax.f32 %v4336, %v4459
      %v4465 = vmax.f32 %v4337, %v4447
      %v4466 = vmax.f32 %v4338, %v4461
      %v4467 = vpack.c.bf16 %v4464, %v4463
      %v4468 = vpack.c.bf16 %v4466, %v4465
      %s4469 = scalar_lea.vmem %s332, 64
      %4470 = vst [vmem:[%s4469] sm:$0xff] %v4467
      %4471 = vst [vmem:[%s4469 + $0x8] sm:$0xff] %v4468
      %p4472 = scmp.lt.s32.totalorder %s20, 1
      %s4473 = scalar_select %p4472, %s20, 1
      %s4474 = smul.addr %s4473, 24
      %s4475 = smul.addr %s4474, 4
      %s4476 = scalar_lea.vmem %s9, %s4475
      // Predicated region
      $region71: #{d_res_3d_cnn_forward.3} parent=55 // pred_check
        %p4477 = pneg %p232
      $region72: #{d_res_3d_cnn_forward.3} parent=55 // pred_check_branch
        %4479 = sbr.rel (%p4477) target = $region74
      $region73: #{d_res_3d_cnn_forward.3} parent=55 // pred_region
        _
      $region74: #{d_res_3d_cnn_forward.3} parent=55 // pred_fallthru
        _
    $region56: #{d_res_3d_cnn_forward.3} parent=5 // pred_fallthru
      _
    %p4480 = scmp.le.s32.totalorder 2, %s15
    // Predicated region
    $region75: #{d_res_3d_cnn_forward.3} parent=5 // pred_check
      %p4481 = pneg %p4480
    $region76: #{d_res_3d_cnn_forward.3} parent=5 // pred_check_branch
      %4483 = sbr.rel (%p4481) target = $region78
    $region77: #{d_res_3d_cnn_forward.3} parent=5 // pred_region
      %s4484 = ssub.s32 %s15, 2
      // Predicated region
      $region79: #{d_res_3d_cnn_forward.3} parent=77 // pred_check
        %p4485 = pneg %p238
      $region80: #{d_res_3d_cnn_forward.3} parent=77 // pred_check_branch
        %4487 = sbr.rel (%p4485) target = $region82
      $region81: #{d_res_3d_cnn_forward.3} parent=77 // pred_region
        %p4488 = scmp.lt.s32.totalorder %s21, 1
        %s4489 = scalar_select %p4488, %s21, 1
        %s4490 = smul.addr %s4489, 24
        %s4491 = smul.addr %s4490, 4
        %s4492 = scalar_lea.vmem %s9, %s4491
      $region82: #{d_res_3d_cnn_forward.3} parent=77 // pred_fallthru
        _
    $region78: #{d_res_3d_cnn_forward.3} parent=5 // pred_fallthru
      _
  $region6: #{d_res_3d_cnn_forward.3} parent=0 // loop_footer
    %s19 = sadd.s32 1, %s15
  $region7: #{d_res_3d_cnn_forward.3} parent=0 // loop_footer_branch
    %14 = sbr.rel target = $region3
  $region8: #{d_res_3d_cnn_forward.3} parent=0 // loop_exit
    _

</llo_original>
